<compile_context>
chip_gen: v7x
topology: tpu7x:2x2x1
jax: 0.10.0
libtpu: 0.0.40
codegen_flags: <defaults>
</compile_context>

<pallas_src>
import jax
import jax.numpy as jnp
from jax.experimental import pallas as pl
from jax.experimental.pallas import tpu as pltpu

_EPS_IN = 1e-5          # PyTorch InstanceNorm2d default eps

# ----------------------------------------------------------------------------
# compiler params (chip-aware VMEM budget)
# ----------------------------------------------------------------------------
_VMEM_LIMIT = None


def _vmem_limit_bytes():
    global _VMEM_LIMIT
    if _VMEM_LIMIT is None:
        try:
            cap = int(pltpu.get_tpu_info().vmem_capacity_bytes)
        except Exception:
            cap = 128 * 1024 * 1024
        _VMEM_LIMIT = min(96 * 1024 * 1024, max(32 * 1024 * 1024, cap // 2))
    return _VMEM_LIMIT


def _compiler_params():
    return pltpu.CompilerParams(
        dimension_semantics=("parallel",),          # shard batch across TCs (v7x)
        vmem_limit_bytes=_vmem_limit_bytes())


# ----------------------------------------------------------------------------
# host-side layout glue
# ----------------------------------------------------------------------------
def _im2col_nhwc(x, kh, kw, stride, pad):
    """x: (N,H,W,C) -> patches (N, OH*OW, KH*KW*C); K ordered (i, j, c)."""
    x = jnp.pad(x, ((0, 0), (pad, pad), (pad, pad), (0, 0)))
    n, h, w, c = x.shape
    oh = (h - kh) // stride + 1
    ow = (w - kw) // stride + 1
    cols = []
    for i in range(kh):
        for j in range(kw):
            cols.append(x[:, i:i + stride * (oh - 1) + 1:stride,
                          j:j + stride * (ow - 1) + 1:stride, :])
    patches = jnp.concatenate(cols, axis=-1)             # (N, OH, OW, KH*KW*C)
    return patches.reshape(n, oh * ow, kh * kw * c), oh, ow


# ----------------------------------------------------------------------------
# generic fused conv kernel: matmul [+bias] [+IN affine] [+residual] [+ReLU|tanh]
# ----------------------------------------------------------------------------
def _conv_kernel(p, add_bias, do_norm, add_res, relu, tanh):
    def kernel(*refs):
        it = iter(refs)
        x_ref = next(it)                                  # (P, K)   bf16
        w_ref = next(it)                                  # (K, OC)  bf16
        b_ref = next(it) if add_bias else None            # (1, OC)  f32
        g_ref = next(it) if do_norm else None
        bt_ref = next(it) if do_norm else None
        r_ref = next(it) if add_res else None             # (P, OC)  bf16
        o_ref = next(it)

        y = jnp.dot(x_ref[...], w_ref[...],
                    preferred_element_type=jnp.float32)   # (P, OC) f32 on MXU
        if add_bias:
            y = y + b_ref[...]
        if do_norm:
            inv_p = 1.0 / p
            mean = jnp.sum(y, axis=0, keepdims=True) * inv_p
            yc = y - mean
            var = jnp.sum(yc * yc, axis=0, keepdims=True) * inv_p
            y = yc * jax.lax.rsqrt(var + _EPS_IN) * g_ref[...] + bt_ref[...]
        if add_res:
            y = y + r_ref[...].astype(jnp.float32)
        if relu:
            y = jnp.maximum(y, 0.0)
        if tanh:
            y = jnp.tanh(y)
        o_ref[...] = y.astype(o_ref.dtype)
    return kernel


def _fused_conv_call(patches, wmat, *, bias=None, gamma=None, beta=None,
                     residual=None, relu=False, tanh=False,
                     out_dtype=jnp.bfloat16):
    n, p, k = patches.shape
    oc = wmat.shape[1]
    add_bias = bias is not None
    do_norm = gamma is not None
    add_res = residual is not None

    inputs = [patches.astype(jnp.bfloat16), wmat.astype(jnp.bfloat16)]
    in_specs = [pl.BlockSpec((None, p, k), lambda i: (i, 0, 0)),
                pl.BlockSpec((k, oc), lambda i: (0, 0))]

    def add_row(v):
        inputs.append(v.reshape(1, oc).astype(jnp.float32))
        in_specs.append(pl.BlockSpec((1, oc), lambda i: (0, 0)))

    if add_bias:
        add_row(bias)
    if do_norm:
        add_row(gamma)
        add_row(beta)
    if add_res:
        inputs.append(residual.reshape(n, p, oc).astype(jnp.bfloat16))
        in_specs.append(pl.BlockSpec((None, p, oc), lambda i: (i, 0, 0)))

    kernel = _conv_kernel(p, add_bias, do_norm, add_res, relu, tanh)
    flops = 2 * n * p * k * oc + 12 * n * p * oc
    bytes_acc = int(sum(int(a.size) * a.dtype.itemsize for a in inputs)
                    + n * p * oc * jnp.dtype(out_dtype).itemsize)
    return pl.pallas_call(
        kernel,
        grid=(n,),
        in_specs=in_specs,
        out_specs=pl.BlockSpec((None, p, oc), lambda i: (i, 0, 0)),
        out_shape=jax.ShapeDtypeStruct((n, p, oc), out_dtype),
        cost_estimate=pl.CostEstimate(
            flops=flops,
            transcendentals=n * p * oc if tanh else 0,
            bytes_accessed=bytes_acc),
        compiler_params=_compiler_params(),
    )(*inputs)


def conv_layer(x, w, *, stride, pad, gamma=None, beta=None, relu=False,
               tanh=False, residual=None, out_dtype=jnp.bfloat16):
    """x: (N,H,W,C) NHWC bf16; w: PyTorch (OC, Cin, KH, KW). Returns NHWC."""
    n = x.shape[0]
    oc, cin, kh, kw = w.shape
    patches, oh, ow = _im2col_nhwc(x, kh, kw, stride, pad)
    wmat = jnp.transpose(w, (2, 3, 1, 0)).reshape(kh * kw * cin, oc)
    res = None if residual is None else residual.reshape(n, oh * ow, oc)
    out = _fused_conv_call(patches, wmat, gamma=gamma, beta=beta,
                           residual=res, relu=relu, tanh=tanh,
                           out_dtype=out_dtype)
    return out.reshape(n, oh, ow, oc)


# ----------------------------------------------------------------------------
# AugmentedConv kernel A: fused [conv_out | qkv] conv + softmax attention
# ----------------------------------------------------------------------------
def _aug_conv_kernel(ocd, dk, dv):
    def kernel(x_ref, w_ref, b_ref, co_ref, at_ref):
        y = jnp.dot(x_ref[...], w_ref[...],
                    preferred_element_type=jnp.float32)   # (P, ocd+2dk+dv)
        y = y + b_ref[...]
        co_ref[...] = y[:, :ocd].astype(co_ref.dtype)
        q = y[:, ocd:ocd + dk].astype(jnp.bfloat16)        # dk^-0.5 folded in W
        kk = y[:, ocd + dk:ocd + 2 * dk].astype(jnp.bfloat16)
        v = y[:, ocd + 2 * dk:ocd + 2 * dk + dv].astype(jnp.bfloat16)
        logits = jax.lax.dot_general(q, kk, (((1,), (1,)), ((), ())),
                                     preferred_element_type=jnp.float32)
        m = jnp.max(logits, axis=-1, keepdims=True)
        e = jnp.exp(logits - m)
        denom = jnp.sum(e, axis=-1, keepdims=True)
        wgt = (e * pl.reciprocal(denom, approx=True)).astype(jnp.bfloat16)
        at_ref[...] = jnp.dot(wgt, v,
                              preferred_element_type=jnp.float32
                              ).astype(at_ref.dtype)
    return kernel


def _aug_conv_call(patches, wmat, bias, *, ocd, dk, dv):
    n, p, k = patches.shape
    octot = wmat.shape[1]
    inputs = [patches.astype(jnp.bfloat16), wmat.astype(jnp.bfloat16),
              bias.reshape(1, octot).astype(jnp.float32)]
    in_specs = [pl.BlockSpec((None, p, k), lambda i: (i, 0, 0)),
                pl.BlockSpec((k, octot), lambda i: (0, 0)),
                pl.BlockSpec((1, octot), lambda i: (0, 0))]
    out_shape = (jax.ShapeDtypeStruct((n, p, ocd), jnp.bfloat16),
                 jax.ShapeDtypeStruct((n, p, dv), jnp.bfloat16))
    out_specs = (pl.BlockSpec((None, p, ocd), lambda i: (i, 0, 0)),
                 pl.BlockSpec((None, p, dv), lambda i: (i, 0, 0)))
    flops = 2 * n * p * k * octot + 2 * n * p * p * (dk + dv)
    bytes_acc = int(sum(int(a.size) * a.dtype.itemsize for a in inputs)
                    + n * p * (ocd + dv) * 2)
    return pl.pallas_call(
        _aug_conv_kernel(ocd, dk, dv),
        grid=(n,),
        in_specs=in_specs,
        out_specs=out_specs,
        out_shape=out_shape,
        cost_estimate=pl.CostEstimate(flops=flops, transcendentals=n * p * p,
                                      bytes_accessed=bytes_acc),
        compiler_params=_compiler_params(),
    )(*inputs)


# ----------------------------------------------------------------------------
# AugmentedConv kernel B: 1x1 attn conv + concat-IN + ReLU (per-channel)
# ----------------------------------------------------------------------------
def _aug_post_kernel(p, ocd, dv):
    inv_p = 1.0 / p

    def _norm_relu(y, g, b):
        mean = jnp.sum(y, axis=0, keepdims=True) * inv_p
        yc = y - mean
        var = jnp.sum(yc * yc, axis=0, keepdims=True) * inv_p
        return jnp.maximum(yc * jax.lax.rsqrt(var + _EPS_IN) * g + b, 0.0)

    def kernel(co_ref, sc_ref, w1_ref, b1_ref, g_ref, bt_ref, o_ref):
        g = g_ref[...]
        b = bt_ref[...]
        a = jnp.dot(sc_ref[...], w1_ref[...],
                    preferred_element_type=jnp.float32) + b1_ref[...]
        c = co_ref[...].astype(jnp.float32)
        # InstanceNorm is per-channel, so it commutes with the channel concat:
        # normalize each piece and write it into its channel slice.
        o_ref[:, :ocd] = _norm_relu(c, g[:, :ocd], b[:, :ocd]).astype(o_ref.dtype)
        o_ref[:, ocd:ocd + dv] = _norm_relu(
            a, g[:, ocd:ocd + dv], b[:, ocd:ocd + dv]).astype(o_ref.dtype)
    return kernel


def _aug_post_call(co, scr, w1, b1, gamma, beta, *, ocd, dv):
    n, p, _ = co.shape
    oc = ocd + dv
    inputs = [co.astype(jnp.bfloat16), scr.astype(jnp.bfloat16),
              w1.astype(jnp.bfloat16),
              b1.reshape(1, dv).astype(jnp.float32),
              gamma.reshape(1, oc).astype(jnp.float32),
              beta.reshape(1, oc).astype(jnp.float32)]
    in_specs = [pl.BlockSpec((None, p, ocd), lambda i: (i, 0, 0)),
                pl.BlockSpec((None, p, dv), lambda i: (i, 0, 0)),
                pl.BlockSpec((dv, dv), lambda i: (0, 0)),
                pl.BlockSpec((1, dv), lambda i: (0, 0)),
                pl.BlockSpec((1, oc), lambda i: (0, 0)),
                pl.BlockSpec((1, oc), lambda i: (0, 0))]
    flops = 2 * n * p * dv * dv + 12 * n * p * oc
    bytes_acc = int(sum(int(a.size) * a.dtype.itemsize for a in inputs)
                    + n * p * oc * 2)
    return pl.pallas_call(
        _aug_post_kernel(p, ocd, dv),
        grid=(n,),
        in_specs=in_specs,
        out_specs=pl.BlockSpec((None, p, oc), lambda i: (i, 0, 0)),
        out_shape=jax.ShapeDtypeStruct((n, p, oc), jnp.bfloat16),
        cost_estimate=pl.CostEstimate(flops=flops, transcendentals=0,
                                      bytes_accessed=bytes_acc),
        compiler_params=_compiler_params(),
    )(*inputs)


def augmented_conv_block(x, blk, gamma, beta, *, dk=40, dv=4):
    """AugmentedConv(k=4, s=2, p=1, Nh=1, relative=False) + IN(affine) + ReLU."""
    n, _, _, cin = x.shape
    ocd = blk['conv_out_w'].shape[0]
    scale = float(dk) ** -0.5                  # dkh = dk (Nh == 1)
    w_qkv, b_qkv = blk['qkv_w'], blk['qkv_b']
    # Combined weight [conv_out | q*scale | k | v]; scale folded in host-side.
    w_all = jnp.concatenate([blk['conv_out_w'], w_qkv[:dk] * scale, w_qkv[dk:]],
                            axis=0)
    b_all = jnp.concatenate([blk['conv_out_b'], b_qkv[:dk] * scale, b_qkv[dk:]],
                            axis=0)
    wmat = jnp.transpose(w_all, (2, 3, 1, 0)).reshape(16 * cin, -1)
    patches, oh, ow = _im2col_nhwc(x, 4, 4, 2, 1)
    p = oh * ow
    co, attn = _aug_conv_call(patches, wmat, b_all, ocd=ocd, dk=dk, dv=dv)
    # torch's raw reshape of (N, HW, dv) -> (N, Nh=1, dv, H, W): row-major
    # reinterpretation, then back to NHWC. Tiny (~2 KB) host-side transpose.
    scr = attn.reshape(n, p * dv).reshape(n, dv, p).transpose(0, 2, 1)
    w1 = blk['attn_w'][:, :, 0, 0].T                        # (dv_in, dv_out)
    out = _aug_post_call(co, scr, w1, blk['attn_b'], gamma, beta,
                         ocd=ocd, dv=dv)
    return out.reshape(n, oh, ow, ocd + dv)


# ----------------------------------------------------------------------------
# ConvTranspose2d(k=4, s=2, p=1, bias=False) via 4 stride phases + IN + ReLU
# ----------------------------------------------------------------------------
def _deconv_weight_matrix(wt):
    """wt: (Cin, Cout, 4, 4) -> phase weight (9*Cin, 4*Cout); K ordered (di,dj,ci),
    output columns ordered (phase = r*2 + t, co)."""
    cin, cout = wt.shape[0], wt.shape[1]
    zero = jnp.zeros((cin, cout), wt.dtype)
    rows = []
    for di in range(3):
        for dj in range(3):
            phases = []
            for r in range(2):
                for t in range(2):
                    ky = 3 + r - 2 * di
                    kx = 3 + t - 2 * dj
                    if 0 <= ky < 4 and 0 <= kx < 4:
                        phases.append(wt[:, :, ky, kx])
                    else:
                        phases.append(zero)
            rows.append(jnp.concatenate(phases, axis=1))     # (cin, 4*cout)
    return jnp.concatenate(rows, axis=0)                     # (9*cin, 4*cout)


def _deconv_kernel(p, cout):
    inv = 1.0 / (4 * p)                 # IN stats over rows x 4 phases

    def kernel(x_ref, w_ref, g_ref, bt_ref, o_ref):
        y = jnp.dot(x_ref[...], w_ref[...],
                    preferred_element_type=jnp.float32)      # (P, 4*cout)
        s = jnp.sum(y, axis=0, keepdims=True)
        mean = (s[:, 0:cout] + s[:, cout:2 * cout]
                + s[:, 2 * cout:3 * cout] + s[:, 3 * cout:4 * cout]) * inv
        ss = jnp.zeros_like(mean)
        for ph in range(4):
            d = y[:, ph * cout:(ph + 1) * cout] - mean
            ss = ss + jnp.sum(d * d, axis=0, keepdims=True)
        scale = jax.lax.rsqrt(ss * inv + _EPS_IN) * g_ref[...]
        shift = bt_ref[...] - mean * scale
        for ph in range(4):
            yp = y[:, ph * cout:(ph + 1) * cout] * scale + shift
            o_ref[:, ph * cout:(ph + 1) * cout] = (
                jnp.maximum(yp, 0.0).astype(o_ref.dtype))
    return kernel


def _deconv_call(patches, wbig, gamma, beta, *, cout):
    n, p, k = patches.shape
    oc4 = 4 * cout
    inputs = [patches.astype(jnp.bfloat16), wbig.astype(jnp.bfloat16),
              gamma.reshape(1, cout).astype(jnp.float32),
              beta.reshape(1, cout).astype(jnp.float32)]
    in_specs = [pl.BlockSpec((None, p, k), lambda i: (i, 0, 0)),
                pl.BlockSpec((k, oc4), lambda i: (0, 0)),
                pl.BlockSpec((1, cout), lambda i: (0, 0)),
                pl.BlockSpec((1, cout), lambda i: (0, 0))]
    flops = 2 * n * p * k * oc4 + 12 * n * p * oc4
    bytes_acc = int(sum(int(a.size) * a.dtype.itemsize for a in inputs)
                    + n * p * oc4 * 2)
    return pl.pallas_call(
        _deconv_kernel(p, cout),
        grid=(n,),
        in_specs=in_specs,
        out_specs=pl.BlockSpec((None, p, oc4), lambda i: (i, 0, 0)),
        out_shape=jax.ShapeDtypeStruct((n, p, oc4), jnp.bfloat16),
        cost_estimate=pl.CostEstimate(flops=flops, transcendentals=0,
                                      bytes_accessed=bytes_acc),
        compiler_params=_compiler_params(),
    )(*inputs)


def conv_transpose_layer(x, wt, gamma, beta):
    """ConvTranspose2d(k=4, s=2, p=1, bias=False) + IN(affine) + ReLU."""
    n, h, w, _ = x.shape
    cout = wt.shape[1]
    patches, _, _ = _im2col_nhwc(x, 3, 3, 1, 1)               # (N, H*W, 9*Cin)
    wbig = _deconv_weight_matrix(wt)
    y = _deconv_call(patches, wbig, gamma, beta, cout=cout)   # (N, H*W, 4*Cout)
    y = y.reshape(n, h, w, 2, 2, cout)
    y = jnp.transpose(y, (0, 1, 3, 2, 4, 5)).reshape(n, 2 * h, 2 * w, cout)
    return y


# ----------------------------------------------------------------------------
# parameters + forward
# ----------------------------------------------------------------------------
def init_params(key, conv_dim=8, repeat_num=2, dk=40, dv=4):
    """Deterministic synthetic parameters mirroring AAExpressionGenerater."""
    keys = iter(jax.random.split(key, 48))

    def nrm(shape, scale=0.05):
        return jax.random.normal(next(keys), shape, jnp.float32) * scale

    p = {}
    p['w0'] = nrm((conv_dim, 6, 7, 7))
    p['g0'] = 1.0 + nrm((conv_dim,))
    p['b0'] = nrm((conv_dim,))

    cur = conv_dim
    p['aug'] = []
    for _ in range(2):
        out = cur * 2
        p['aug'].append({
            'conv_out_w': nrm((out - dv, cur, 4, 4)),
            'conv_out_b': nrm((out - dv,), 0.01),
            'qkv_w': nrm((2 * dk + dv, cur, 4, 4)),
            'qkv_b': nrm((2 * dk + dv,), 0.01),
            'attn_w': nrm((dv, dv, 1, 1), 0.2),
            'attn_b': nrm((dv,), 0.01),
            'in_g': 1.0 + nrm((out,)),
            'in_b': nrm((out,)),
        })
        cur = out

    p['res'] = []
    for _ in range(repeat_num):
        p['res'].append({
            'w1': nrm((cur, cur, 3, 3)), 'g1': 1.0 + nrm((cur,)), 'b1': nrm((cur,)),
            'w2': nrm((cur, cur, 3, 3)), 'g2': 1.0 + nrm((cur,)), 'b2': nrm((cur,)),
        })

    p['up'] = []
    for _ in range(2):
        nxt = cur // 2
        p['up'].append({
            'wt': nrm((cur, nxt, 4, 4)),   # ConvTranspose2d weight (Cin,Cout,kh,kw)
            'g': 1.0 + nrm((nxt,)),
            'b': nrm((nxt,)),
        })
        cur = nxt

    p['wf'] = nrm((3, cur, 7, 7))
    return p


def aa_expression_generator_forward(x, c, params, dk=40, dv=4):
    """Matches AAExpressionGenerater.forward(x, c): cat on channels -> main."""
    h = jnp.concatenate([x, c], axis=1)                       # NCHW (N, 6, H, W)
    h = jnp.transpose(h, (0, 2, 3, 1)).astype(jnp.bfloat16)   # NHWC bf16 once

    # stem: Conv(6->conv_dim, k7 s1 p3, no bias) + IN(affine) + ReLU
    h = conv_layer(h, params['w0'], stride=1, pad=3,
                   gamma=params['g0'], beta=params['b0'], relu=True)

    # two AugmentedConv(k4 s2) + IN(affine) + ReLU (fully fused, 2 calls each)
    for blk in params['aug']:
        h = augmented_conv_block(h, blk, blk['in_g'], blk['in_b'], dk=dk, dv=dv)

    # residual blocks: conv3 + IN + ReLU + conv3 + IN, plus skip
    for rb in params['res']:
        t = conv_layer(h, rb['w1'], stride=1, pad=1,
                       gamma=rb['g1'], beta=rb['b1'], relu=True)
        h = conv_layer(t, rb['w2'], stride=1, pad=1,
                       gamma=rb['g2'], beta=rb['b2'], residual=h)

    # two ConvTranspose(k4 s2 p1, no bias) + IN(affine) + ReLU (phase-decomposed)
    for up in params['up']:
        h = conv_transpose_layer(h, up['wt'], up['g'], up['b'])

    # final Conv(->3, k7 s1 p3, no bias) + Tanh
    h = conv_layer(h, params['wf'], stride=1, pad=3, tanh=True,
                   out_dtype=jnp.float32)
    return jnp.transpose(h, (0, 3, 1, 2))                     # back to NCHW


if __name__ == "__main__":
    key = jax.random.PRNGKey(0)
    kp, kx, kc = jax.random.split(key, 3)

    # Small shapes consistent with the module: conv_dim=8, repeat_num=2,
    # RGB inputs 16x16 (x and the expression/condition image c), batch 2.
    params = init_params(kp, conv_dim=8, repeat_num=2)
    x = jax.random.normal(kx, (2, 3, 16, 16), jnp.float32)
    c = jax.random.normal(kc, (2, 3, 16, 16), jnp.float32)

    fwd = jax.jit(lambda a, b: aa_expression_generator_forward(a, b, params))
    out = fwd(x, c)
    jax.block_until_ready(out)

    assert out.shape == (2, 3, 16, 16), out.shape
    assert bool(jnp.all(jnp.isfinite(out)))
    assert bool(jnp.all(jnp.abs(out) <= 1.0 + 1e-5))   # tanh range
    print("KERNEL_OK")
</pallas_src>

<mosaic_0001>
module attributes {stable_mosaic.version = 11 : i64} {
  func.func @kernel(%arg0: i32, %arg1: memref<1x256x294xbf16, #tpu.memory_space<vmem>>, %arg2: memref<294x8xbf16, #tpu.memory_space<vmem>>, %arg3: memref<1x8xf32, #tpu.memory_space<vmem>>, %arg4: memref<1x8xf32, #tpu.memory_space<vmem>>, %arg5: memref<1x256x8xbf16, #tpu.memory_space<vmem>>) attributes {dimension_semantics = [#tpu.dimension_semantics<parallel>], iteration_bounds = array<i64: 2>, scalar_prefetch = 0 : i64, scratch_operands = 0 : i64, tpu.core_type = #tpu.core_type<tc>, window_params = [{transform_indices = @transform_0, window_bounds = array<i64: 1, 256, 294>}, {pipeline_mode = #tpu.pipeline_mode<synchronous>, transform_indices = @transform_1, window_bounds = array<i64: 294, 8>}, {pipeline_mode = #tpu.pipeline_mode<synchronous>, transform_indices = @transform_2, window_bounds = array<i64: 1, 8>}, {pipeline_mode = #tpu.pipeline_mode<synchronous>, transform_indices = @transform_3, window_bounds = array<i64: 1, 8>}, {transform_indices = @transform_4, window_bounds = array<i64: 1, 256, 8>}]} {
    %c0 = arith.constant 0 : index
    %c0_0 = arith.constant 0 : index
    %c0_1 = arith.constant 0 : index
    %0 = vector.load %arg1[%c0, %c0_0, %c0_1] : memref<1x256x294xbf16, #tpu.memory_space<vmem>>, vector<1x256x294xbf16>
    %1 = vector.shape_cast %0 : vector<1x256x294xbf16> to vector<256x294xbf16>
    %c0_2 = arith.constant 0 : index
    %c0_3 = arith.constant 0 : index
    %2 = vector.load %arg2[%c0_2, %c0_3] : memref<294x8xbf16, #tpu.memory_space<vmem>>, vector<294x8xbf16>
    %cst = arith.constant dense<0.000000e+00> : vector<256x8xf32>
    %3 = tpu.matmul %1, %2, %cst {dimension_numbers = #tpu.dot_dimension_numbers<[1], [0], [0], [1], [0, 0, 1, 1], [], []>} : vector<256x294xbf16>, vector<294x8xbf16>, vector<256x8xf32> -> vector<256x8xf32>
    %cst_4 = arith.constant dense<0.000000e+00> : vector<8xf32>
    %4 = vector.multi_reduction <add>, %3, %cst_4 [0] : vector<256x8xf32> to vector<8xf32>
    %5 = vector.shape_cast %4 : vector<8xf32> to vector<1x8xf32>
    %cst_5 = arith.constant 3.906250e-03 : f32
    %6 = vector.broadcast %cst_5 : f32 to vector<1x8xf32>
    %7 = arith.mulf %5, %6 : vector<1x8xf32>
    %8 = vector.broadcast %7 : vector<1x8xf32> to vector<256x8xf32>
    %9 = arith.subf %3, %8 : vector<256x8xf32>
    %10 = arith.mulf %9, %9 : vector<256x8xf32>
    %cst_6 = arith.constant dense<0.000000e+00> : vector<8xf32>
    %11 = vector.multi_reduction <add>, %10, %cst_6 [0] : vector<256x8xf32> to vector<8xf32>
    %12 = vector.shape_cast %11 : vector<8xf32> to vector<1x8xf32>
    %cst_7 = arith.constant 3.906250e-03 : f32
    %13 = vector.broadcast %cst_7 : f32 to vector<1x8xf32>
    %14 = arith.mulf %12, %13 : vector<1x8xf32>
    %cst_8 = arith.constant 9.99999974E-6 : f32
    %15 = vector.broadcast %cst_8 : f32 to vector<1x8xf32>
    %16 = arith.addf %14, %15 : vector<1x8xf32>
    %17 = math.rsqrt %16 : vector<1x8xf32>
    %18 = vector.broadcast %17 : vector<1x8xf32> to vector<256x8xf32>
    %19 = arith.mulf %9, %18 : vector<256x8xf32>
    %c0_9 = arith.constant 0 : index
    %c0_10 = arith.constant 0 : index
    %20 = vector.load %arg3[%c0_9, %c0_10] : memref<1x8xf32, #tpu.memory_space<vmem>>, vector<1x8xf32>
    %21 = vector.broadcast %20 : vector<1x8xf32> to vector<256x8xf32>
    %22 = arith.mulf %19, %21 : vector<256x8xf32>
    %c0_11 = arith.constant 0 : index
    %c0_12 = arith.constant 0 : index
    %23 = vector.load %arg4[%c0_11, %c0_12] : memref<1x8xf32, #tpu.memory_space<vmem>>, vector<1x8xf32>
    %24 = vector.broadcast %23 : vector<1x8xf32> to vector<256x8xf32>
    %25 = arith.addf %22, %24 : vector<256x8xf32>
    %cst_13 = arith.constant 0.000000e+00 : f32
    %26 = vector.broadcast %cst_13 : f32 to vector<256x8xf32>
    %27 = arith.maximumf %25, %26 : vector<256x8xf32>
    %28 = arith.truncf %27 : vector<256x8xf32> to vector<256x8xbf16>
    %c0_14 = arith.constant 0 : index
    %c0_15 = arith.constant 0 : index
    %c0_16 = arith.constant 0 : index
    %29 = vector.load %arg5[%c0_14, %c0_15, %c0_16] : memref<1x256x8xbf16, #tpu.memory_space<vmem>>, vector<1x256x8xbf16>
    %30 = vector.shape_cast %29 : vector<1x256x8xbf16> to vector<256x8xbf16>
    %31 = vector.shape_cast %28 : vector<256x8xbf16> to vector<1x256x8xbf16>
    tpu.vector_store %arg5[%c0_14, %c0_15, %c0_16], %31 {strides = array<i32>} : memref<1x256x8xbf16, #tpu.memory_space<vmem>>, vector<1x256x8xbf16>,
    return
  }
  func.func @transform_0(%arg0: i32) -> (i32, i32, i32) {
    %c0_i32 = arith.constant 0 : i32
    %c0_i32_0 = arith.constant 0 : i32
    %c0_i32_1 = arith.constant 0 : i32
    return %arg0, %c0_i32, %c0_i32_0 : i32, i32, i32
  }
  func.func @transform_1(%arg0: i32) -> (i32, i32) {
    %c0_i32 = arith.constant 0 : i32
    %c0_i32_0 = arith.constant 0 : i32
    %c0_i32_1 = arith.constant 0 : i32
    return %c0_i32, %c0_i32_0 : i32, i32
  }
  func.func @transform_2(%arg0: i32) -> (i32, i32) {
    %c0_i32 = arith.constant 0 : i32
    %c0_i32_0 = arith.constant 0 : i32
    %c0_i32_1 = arith.constant 0 : i32
    return %c0_i32, %c0_i32_0 : i32, i32
  }
  func.func @transform_3(%arg0: i32) -> (i32, i32) {
    %c0_i32 = arith.constant 0 : i32
    %c0_i32_0 = arith.constant 0 : i32
    %c0_i32_1 = arith.constant 0 : i32
    return %c0_i32, %c0_i32_0 : i32, i32
  }
  func.func @transform_4(%arg0: i32) -> (i32, i32, i32) {
    %c0_i32 = arith.constant 0 : i32
    %c0_i32_0 = arith.constant 0 : i32
    %c0_i32_1 = arith.constant 0 : i32
    return %arg0, %c0_i32, %c0_i32_0 : i32, i32, i32
  }
}

module attributes {stable_mosaic.version = 11 : i64} {
  func.func @kernel(%arg0: i32, %arg1: memref<1x64x128xbf16, #tpu.memory_space<vmem>>, %arg2: memref<128x96xbf16, #tpu.memory_space<vmem>>, %arg3: memref<1x96xf32, #tpu.memory_space<vmem>>, %arg4: memref<1x64x12xbf16, #tpu.memory_space<vmem>>, %arg5: memref<1x64x4xbf16, #tpu.memory_space<vmem>>) attributes {dimension_semantics = [#tpu.dimension_semantics<parallel>], iteration_bounds = array<i64: 2>, scalar_prefetch = 0 : i64, scratch_operands = 0 : i64, tpu.core_type = #tpu.core_type<tc>, window_params = [{transform_indices = @transform_0, window_bounds = array<i64: 1, 64, 128>}, {pipeline_mode = #tpu.pipeline_mode<synchronous>, transform_indices = @transform_1, window_bounds = array<i64: 128, 96>}, {pipeline_mode = #tpu.pipeline_mode<synchronous>, transform_indices = @transform_2, window_bounds = array<i64: 1, 96>}, {transform_indices = @transform_3, window_bounds = array<i64: 1, 64, 12>}, {transform_indices = @transform_4, window_bounds = array<i64: 1, 64, 4>}]} {
    %c0 = arith.constant 0 : index
    %c0_0 = arith.constant 0 : index
    %c0_1 = arith.constant 0 : index
    %0 = vector.load %arg1[%c0, %c0_0, %c0_1] : memref<1x64x128xbf16, #tpu.memory_space<vmem>>, vector<1x64x128xbf16>
    %1 = vector.shape_cast %0 : vector<1x64x128xbf16> to vector<64x128xbf16>
    %c0_2 = arith.constant 0 : index
    %c0_3 = arith.constant 0 : index
    %2 = vector.load %arg2[%c0_2, %c0_3] : memref<128x96xbf16, #tpu.memory_space<vmem>>, vector<128x96xbf16>
    %cst = arith.constant dense<0.000000e+00> : vector<64x96xf32>
    %3 = tpu.matmul %1, %2, %cst {dimension_numbers = #tpu.dot_dimension_numbers<[1], [0], [0], [1], [0, 0, 1, 1], [], []>} : vector<64x128xbf16>, vector<128x96xbf16>, vector<64x96xf32> -> vector<64x96xf32>
    %c0_4 = arith.constant 0 : index
    %c0_5 = arith.constant 0 : index
    %4 = vector.load %arg3[%c0_4, %c0_5] : memref<1x96xf32, #tpu.memory_space<vmem>>, vector<1x96xf32>
    %5 = vector.broadcast %4 : vector<1x96xf32> to vector<64x96xf32>
    %6 = arith.addf %3, %5 : vector<64x96xf32>
    %7 = vector.extract_strided_slice %6 {offsets = [0, 0], sizes = [64, 12], strides = [1, 1]} : vector<64x96xf32> to vector<64x12xf32>
    %8 = arith.truncf %7 : vector<64x12xf32> to vector<64x12xbf16>
    %c0_6 = arith.constant 0 : index
    %c0_7 = arith.constant 0 : index
    %c0_8 = arith.constant 0 : index
    %9 = vector.load %arg4[%c0_6, %c0_7, %c0_8] : memref<1x64x12xbf16, #tpu.memory_space<vmem>>, vector<1x64x12xbf16>
    %10 = vector.shape_cast %9 : vector<1x64x12xbf16> to vector<64x12xbf16>
    %11 = vector.shape_cast %8 : vector<64x12xbf16> to vector<1x64x12xbf16>
    tpu.vector_store %arg4[%c0_6, %c0_7, %c0_8], %11 {strides = array<i32>} : memref<1x64x12xbf16, #tpu.memory_space<vmem>>, vector<1x64x12xbf16>,
    %12 = vector.extract_strided_slice %6 {offsets = [0, 12], sizes = [64, 40], strides = [1, 1]} : vector<64x96xf32> to vector<64x40xf32>
    %13 = arith.truncf %12 : vector<64x40xf32> to vector<64x40xbf16>
    %14 = vector.extract_strided_slice %6 {offsets = [0, 52], sizes = [64, 40], strides = [1, 1]} : vector<64x96xf32> to vector<64x40xf32>
    %15 = arith.truncf %14 : vector<64x40xf32> to vector<64x40xbf16>
    %16 = vector.extract_strided_slice %6 {offsets = [0, 92], sizes = [64, 4], strides = [1, 1]} : vector<64x96xf32> to vector<64x4xf32>
    %17 = arith.truncf %16 : vector<64x4xf32> to vector<64x4xbf16>
    %cst_9 = arith.constant dense<0.000000e+00> : vector<64x64xf32>
    %18 = tpu.matmul %13, %15, %cst_9 {dimension_numbers = #tpu.dot_dimension_numbers<[1], [1], [0], [0], [0, 0, 1, 0], [], []>} : vector<64x40xbf16>, vector<64x40xbf16>, vector<64x64xf32> -> vector<64x64xf32>
    %cst_10 = arith.constant dense<0xFF800000> : vector<64xf32>
    %19 = vector.multi_reduction <maximumf>, %18, %cst_10 [1] : vector<64x64xf32> to vector<64xf32>
    %20 = vector.shape_cast %19 : vector<64xf32> to vector<64x1xf32>
    %21 = vector.broadcast %20 : vector<64x1xf32> to vector<64x64xf32>
    %22 = arith.subf %18, %21 : vector<64x64xf32>
    %23 = math.exp %22 : vector<64x64xf32>
    %cst_11 = arith.constant dense<0.000000e+00> : vector<64xf32>
    %24 = vector.multi_reduction <add>, %23, %cst_11 [1] : vector<64x64xf32> to vector<64xf32>
    %25 = vector.shape_cast %24 : vector<64xf32> to vector<64x1xf32>
    %26 = tpu.reciprocal %25 {approx = true} : vector<64x1xf32> -> vector<64x1xf32>
    %27 = vector.broadcast %26 : vector<64x1xf32> to vector<64x64xf32>
    %28 = arith.mulf %23, %27 : vector<64x64xf32>
    %29 = arith.truncf %28 : vector<64x64xf32> to vector<64x64xbf16>
    %cst_12 = arith.constant dense<0.000000e+00> : vector<64x4xf32>
    %30 = tpu.matmul %29, %17, %cst_12 {dimension_numbers = #tpu.dot_dimension_numbers<[1], [0], [0], [1], [0, 0, 1, 1], [], []>} : vector<64x64xbf16>, vector<64x4xbf16>, vector<64x4xf32> -> vector<64x4xf32>
    %31 = arith.truncf %30 : vector<64x4xf32> to vector<64x4xbf16>
    %c0_13 = arith.constant 0 : index
    %c0_14 = arith.constant 0 : index
    %c0_15 = arith.constant 0 : index
    %32 = vector.load %arg5[%c0_13, %c0_14, %c0_15] : memref<1x64x4xbf16, #tpu.memory_space<vmem>>, vector<1x64x4xbf16>
    %33 = vector.shape_cast %32 : vector<1x64x4xbf16> to vector<64x4xbf16>
    %34 = vector.shape_cast %31 : vector<64x4xbf16> to vector<1x64x4xbf16>
    tpu.vector_store %arg5[%c0_13, %c0_14, %c0_15], %34 {strides = array<i32>} : memref<1x64x4xbf16, #tpu.memory_space<vmem>>, vector<1x64x4xbf16>,
    return
  }
  func.func @transform_0(%arg0: i32) -> (i32, i32, i32) {
    %c0_i32 = arith.constant 0 : i32
    %c0_i32_0 = arith.constant 0 : i32
    %c0_i32_1 = arith.constant 0 : i32
    return %arg0, %c0_i32, %c0_i32_0 : i32, i32, i32
  }
  func.func @transform_1(%arg0: i32) -> (i32, i32) {
    %c0_i32 = arith.constant 0 : i32
    %c0_i32_0 = arith.constant 0 : i32
    %c0_i32_1 = arith.constant 0 : i32
    return %c0_i32, %c0_i32_0 : i32, i32
  }
  func.func @transform_2(%arg0: i32) -> (i32, i32) {
    %c0_i32 = arith.constant 0 : i32
    %c0_i32_0 = arith.constant 0 : i32
    %c0_i32_1 = arith.constant 0 : i32
    return %c0_i32, %c0_i32_0 : i32, i32
  }
  func.func @transform_3(%arg0: i32) -> (i32, i32, i32) {
    %c0_i32 = arith.constant 0 : i32
    %c0_i32_0 = arith.constant 0 : i32
    %c0_i32_1 = arith.constant 0 : i32
    return %arg0, %c0_i32, %c0_i32_0 : i32, i32, i32
  }
  func.func @transform_4(%arg0: i32) -> (i32, i32, i32) {
    %c0_i32 = arith.constant 0 : i32
    %c0_i32_0 = arith.constant 0 : i32
    %c0_i32_1 = arith.constant 0 : i32
    return %arg0, %c0_i32, %c0_i32_0 : i32, i32, i32
  }
}

module attributes {stable_mosaic.version = 11 : i64} {
  func.func @kernel(%arg0: i32, %arg1: memref<1x64x12xbf16, #tpu.memory_space<vmem>>, %arg2: memref<1x64x4xbf16, #tpu.memory_space<vmem>>, %arg3: memref<4x4xbf16, #tpu.memory_space<vmem>>, %arg4: memref<1x4xf32, #tpu.memory_space<vmem>>, %arg5: memref<1x16xf32, #tpu.memory_space<vmem>>, %arg6: memref<1x16xf32, #tpu.memory_space<vmem>>, %arg7: memref<1x64x16xbf16, #tpu.memory_space<vmem>>) attributes {dimension_semantics = [#tpu.dimension_semantics<parallel>], iteration_bounds = array<i64: 2>, scalar_prefetch = 0 : i64, scratch_operands = 0 : i64, tpu.core_type = #tpu.core_type<tc>, window_params = [{transform_indices = @transform_0, window_bounds = array<i64: 1, 64, 12>}, {transform_indices = @transform_1, window_bounds = array<i64: 1, 64, 4>}, {pipeline_mode = #tpu.pipeline_mode<synchronous>, transform_indices = @transform_2, window_bounds = array<i64: 4, 4>}, {pipeline_mode = #tpu.pipeline_mode<synchronous>, transform_indices = @transform_3, window_bounds = array<i64: 1, 4>}, {pipeline_mode = #tpu.pipeline_mode<synchronous>, transform_indices = @transform_4, window_bounds = array<i64: 1, 16>}, {pipeline_mode = #tpu.pipeline_mode<synchronous>, transform_indices = @transform_5, window_bounds = array<i64: 1, 16>}, {transform_indices = @transform_6, window_bounds = array<i64: 1, 64, 16>}]} {
    %c0 = arith.constant 0 : index
    %c0_0 = arith.constant 0 : index
    %0 = vector.load %arg5[%c0, %c0_0] : memref<1x16xf32, #tpu.memory_space<vmem>>, vector<1x16xf32>
    %c0_1 = arith.constant 0 : index
    %c0_2 = arith.constant 0 : index
    %1 = vector.load %arg6[%c0_1, %c0_2] : memref<1x16xf32, #tpu.memory_space<vmem>>, vector<1x16xf32>
    %c0_3 = arith.constant 0 : index
    %c0_4 = arith.constant 0 : index
    %c0_5 = arith.constant 0 : index
    %2 = vector.load %arg2[%c0_3, %c0_4, %c0_5] : memref<1x64x4xbf16, #tpu.memory_space<vmem>>, vector<1x64x4xbf16>
    %3 = vector.shape_cast %2 : vector<1x64x4xbf16> to vector<64x4xbf16>
    %c0_6 = arith.constant 0 : index
    %c0_7 = arith.constant 0 : index
    %4 = vector.load %arg3[%c0_6, %c0_7] : memref<4x4xbf16, #tpu.memory_space<vmem>>, vector<4x4xbf16>
    %cst = arith.constant dense<0.000000e+00> : vector<64x4xf32>
    %5 = tpu.matmul %3, %4, %cst {dimension_numbers = #tpu.dot_dimension_numbers<[1], [0], [0], [1], [0, 0, 1, 1], [], []>} : vector<64x4xbf16>, vector<4x4xbf16>, vector<64x4xf32> -> vector<64x4xf32>
    %c0_8 = arith.constant 0 : index
    %c0_9 = arith.constant 0 : index
    %6 = vector.load %arg4[%c0_8, %c0_9] : memref<1x4xf32, #tpu.memory_space<vmem>>, vector<1x4xf32>
    %7 = vector.broadcast %6 : vector<1x4xf32> to vector<64x4xf32>
    %8 = arith.addf %5, %7 : vector<64x4xf32>
    %c0_10 = arith.constant 0 : index
    %c0_11 = arith.constant 0 : index
    %c0_12 = arith.constant 0 : index
    %9 = vector.load %arg1[%c0_10, %c0_11, %c0_12] : memref<1x64x12xbf16, #tpu.memory_space<vmem>>, vector<1x64x12xbf16>
    %10 = vector.shape_cast %9 : vector<1x64x12xbf16> to vector<64x12xbf16>
    %11 = arith.extf %10 : vector<64x12xbf16> to vector<64x12xf32>
    %12 = vector.extract_strided_slice %0 {offsets = [0, 0], sizes = [1, 12], strides = [1, 1]} : vector<1x16xf32> to vector<1x12xf32>
    %13 = vector.extract_strided_slice %1 {offsets = [0, 0], sizes = [1, 12], strides = [1, 1]} : vector<1x16xf32> to vector<1x12xf32>
    %cst_13 = arith.constant dense<0.000000e+00> : vector<12xf32>
    %14 = vector.multi_reduction <add>, %11, %cst_13 [0] : vector<64x12xf32> to vector<12xf32>
    %15 = vector.shape_cast %14 : vector<12xf32> to vector<1x12xf32>
    %cst_14 = arith.constant 1.562500e-02 : f32
    %16 = vector.broadcast %cst_14 : f32 to vector<1x12xf32>
    %17 = arith.mulf %15, %16 : vector<1x12xf32>
    %18 = vector.broadcast %17 : vector<1x12xf32> to vector<64x12xf32>
    %19 = arith.subf %11, %18 : vector<64x12xf32>
    %20 = arith.mulf %19, %19 : vector<64x12xf32>
    %cst_15 = arith.constant dense<0.000000e+00> : vector<12xf32>
    %21 = vector.multi_reduction <add>, %20, %cst_15 [0] : vector<64x12xf32> to vector<12xf32>
    %22 = vector.shape_cast %21 : vector<12xf32> to vector<1x12xf32>
    %cst_16 = arith.constant 1.562500e-02 : f32
    %23 = vector.broadcast %cst_16 : f32 to vector<1x12xf32>
    %24 = arith.mulf %22, %23 : vector<1x12xf32>
    %cst_17 = arith.constant 9.99999974E-6 : f32
    %25 = vector.broadcast %cst_17 : f32 to vector<1x12xf32>
    %26 = arith.addf %24, %25 : vector<1x12xf32>
    %27 = math.rsqrt %26 : vector<1x12xf32>
    %28 = vector.broadcast %27 : vector<1x12xf32> to vector<64x12xf32>
    %29 = arith.mulf %19, %28 : vector<64x12xf32>
    %30 = vector.broadcast %12 : vector<1x12xf32> to vector<64x12xf32>
    %31 = arith.mulf %29, %30 : vector<64x12xf32>
    %32 = vector.broadcast %13 : vector<1x12xf32> to vector<64x12xf32>
    %33 = arith.addf %31, %32 : vector<64x12xf32>
    %cst_18 = arith.constant 0.000000e+00 : f32
    %34 = vector.broadcast %cst_18 : f32 to vector<64x12xf32>
    %35 = arith.maximumf %33, %34 : vector<64x12xf32>
    %36 = arith.truncf %35 : vector<64x12xf32> to vector<64x12xbf16>
    %c0_19 = arith.constant 0 : index
    %c0_20 = arith.constant 0 : index
    %c0_21 = arith.constant 0 : index
    %37 = vector.load %arg7[%c0_19, %c0_20, %c0_21] : memref<1x64x16xbf16, #tpu.memory_space<vmem>>, vector<1x64x12xbf16>
    %38 = vector.shape_cast %37 : vector<1x64x12xbf16> to vector<64x12xbf16>
    %39 = vector.shape_cast %36 : vector<64x12xbf16> to vector<1x64x12xbf16>
    tpu.vector_store %arg7[%c0_19, %c0_20, %c0_21], %39 {strides = array<i32>} : memref<1x64x16xbf16, #tpu.memory_space<vmem>>, vector<1x64x12xbf16>,
    %40 = vector.extract_strided_slice %0 {offsets = [0, 12], sizes = [1, 4], strides = [1, 1]} : vector<1x16xf32> to vector<1x4xf32>
    %41 = vector.extract_strided_slice %1 {offsets = [0, 12], sizes = [1, 4], strides = [1, 1]} : vector<1x16xf32> to vector<1x4xf32>
    %cst_22 = arith.constant dense<0.000000e+00> : vector<4xf32>
    %42 = vector.multi_reduction <add>, %8, %cst_22 [0] : vector<64x4xf32> to vector<4xf32>
    %43 = vector.shape_cast %42 : vector<4xf32> to vector<1x4xf32>
    %cst_23 = arith.constant 1.562500e-02 : f32
    %44 = vector.broadcast %cst_23 : f32 to vector<1x4xf32>
    %45 = arith.mulf %43, %44 : vector<1x4xf32>
    %46 = vector.broadcast %45 : vector<1x4xf32> to vector<64x4xf32>
    %47 = arith.subf %8, %46 : vector<64x4xf32>
    %48 = arith.mulf %47, %47 : vector<64x4xf32>
    %cst_24 = arith.constant dense<0.000000e+00> : vector<4xf32>
    %49 = vector.multi_reduction <add>, %48, %cst_24 [0] : vector<64x4xf32> to vector<4xf32>
    %50 = vector.shape_cast %49 : vector<4xf32> to vector<1x4xf32>
    %cst_25 = arith.constant 1.562500e-02 : f32
    %51 = vector.broadcast %cst_25 : f32 to vector<1x4xf32>
    %52 = arith.mulf %50, %51 : vector<1x4xf32>
    %cst_26 = arith.constant 9.99999974E-6 : f32
    %53 = vector.broadcast %cst_26 : f32 to vector<1x4xf32>
    %54 = arith.addf %52, %53 : vector<1x4xf32>
    %55 = math.rsqrt %54 : vector<1x4xf32>
    %56 = vector.broadcast %55 : vector<1x4xf32> to vector<64x4xf32>
    %57 = arith.mulf %47, %56 : vector<64x4xf32>
    %58 = vector.broadcast %40 : vector<1x4xf32> to vector<64x4xf32>
    %59 = arith.mulf %57, %58 : vector<64x4xf32>
    %60 = vector.broadcast %41 : vector<1x4xf32> to vector<64x4xf32>
    %61 = arith.addf %59, %60 : vector<64x4xf32>
    %cst_27 = arith.constant 0.000000e+00 : f32
    %62 = vector.broadcast %cst_27 : f32 to vector<64x4xf32>
    %63 = arith.maximumf %61, %62 : vector<64x4xf32>
    %64 = arith.truncf %63 : vector<64x4xf32> to vector<64x4xbf16>
    %c0_28 = arith.constant 0 : index
    %c0_29 = arith.constant 0 : index
    %c12 = arith.constant 12 : index
    %65 = vector.load %arg7[%c0_28, %c0_29, %c12] : memref<1x64x16xbf16, #tpu.memory_space<vmem>>, vector<1x64x4xbf16>
    %66 = vector.shape_cast %65 : vector<1x64x4xbf16> to vector<64x4xbf16>
    %67 = vector.shape_cast %64 : vector<64x4xbf16> to vector<1x64x4xbf16>
    tpu.vector_store %arg7[%c0_28, %c0_29, %c12], %67 {strides = array<i32>} : memref<1x64x16xbf16, #tpu.memory_space<vmem>>, vector<1x64x4xbf16>,
    return
  }
  func.func @transform_0(%arg0: i32) -> (i32, i32, i32) {
    %c0_i32 = arith.constant 0 : i32
    %c0_i32_0 = arith.constant 0 : i32
    %c0_i32_1 = arith.constant 0 : i32
    return %arg0, %c0_i32, %c0_i32_0 : i32, i32, i32
  }
  func.func @transform_1(%arg0: i32) -> (i32, i32, i32) {
    %c0_i32 = arith.constant 0 : i32
    %c0_i32_0 = arith.constant 0 : i32
    %c0_i32_1 = arith.constant 0 : i32
    return %arg0, %c0_i32, %c0_i32_0 : i32, i32, i32
  }
  func.func @transform_2(%arg0: i32) -> (i32, i32) {
    %c0_i32 = arith.constant 0 : i32
    %c0_i32_0 = arith.constant 0 : i32
    %c0_i32_1 = arith.constant 0 : i32
    return %c0_i32, %c0_i32_0 : i32, i32
  }
  func.func @transform_3(%arg0: i32) -> (i32, i32) {
    %c0_i32 = arith.constant 0 : i32
    %c0_i32_0 = arith.constant 0 : i32
    %c0_i32_1 = arith.constant 0 : i32
    return %c0_i32, %c0_i32_0 : i32, i32
  }
  func.func @transform_4(%arg0: i32) -> (i32, i32) {
    %c0_i32 = arith.constant 0 : i32
    %c0_i32_0 = arith.constant 0 : i32
    %c0_i32_1 = arith.constant 0 : i32
    return %c0_i32, %c0_i32_0 : i32, i32
  }
  func.func @transform_5(%arg0: i32) -> (i32, i32) {
    %c0_i32 = arith.constant 0 : i32
    %c0_i32_0 = arith.constant 0 : i32
    %c0_i32_1 = arith.constant 0 : i32
    return %c0_i32, %c0_i32_0 : i32, i32
  }
  func.func @transform_6(%arg0: i32) -> (i32, i32, i32) {
    %c0_i32 = arith.constant 0 : i32
    %c0_i32_0 = arith.constant 0 : i32
    %c0_i32_1 = arith.constant 0 : i32
    return %arg0, %c0_i32, %c0_i32_0 : i32, i32, i32
  }
}

module attributes {stable_mosaic.version = 11 : i64} {
  func.func @kernel(%arg0: i32, %arg1: memref<1x16x256xbf16, #tpu.memory_space<vmem>>, %arg2: memref<256x112xbf16, #tpu.memory_space<vmem>>, %arg3: memref<1x112xf32, #tpu.memory_space<vmem>>, %arg4: memref<1x16x28xbf16, #tpu.memory_space<vmem>>, %arg5: memref<1x16x4xbf16, #tpu.memory_space<vmem>>) attributes {dimension_semantics = [#tpu.dimension_semantics<parallel>], iteration_bounds = array<i64: 2>, scalar_prefetch = 0 : i64, scratch_operands = 0 : i64, tpu.core_type = #tpu.core_type<tc>, window_params = [{transform_indices = @transform_0, window_bounds = array<i64: 1, 16, 256>}, {pipeline_mode = #tpu.pipeline_mode<synchronous>, transform_indices = @transform_1, window_bounds = array<i64: 256, 112>}, {pipeline_mode = #tpu.pipeline_mode<synchronous>, transform_indices = @transform_2, window_bounds = array<i64: 1, 112>}, {transform_indices = @transform_3, window_bounds = array<i64: 1, 16, 28>}, {transform_indices = @transform_4, window_bounds = array<i64: 1, 16, 4>}]} {
    %c0 = arith.constant 0 : index
    %c0_0 = arith.constant 0 : index
    %c0_1 = arith.constant 0 : index
    %0 = vector.load %arg1[%c0, %c0_0, %c0_1] : memref<1x16x256xbf16, #tpu.memory_space<vmem>>, vector<1x16x256xbf16>
    %1 = vector.shape_cast %0 : vector<1x16x256xbf16> to vector<16x256xbf16>
    %c0_2 = arith.constant 0 : index
    %c0_3 = arith.constant 0 : index
    %2 = vector.load %arg2[%c0_2, %c0_3] : memref<256x112xbf16, #tpu.memory_space<vmem>>, vector<256x112xbf16>
    %cst = arith.constant dense<0.000000e+00> : vector<16x112xf32>
    %3 = tpu.matmul %1, %2, %cst {dimension_numbers = #tpu.dot_dimension_numbers<[1], [0], [0], [1], [0, 0, 1, 1], [], []>} : vector<16x256xbf16>, vector<256x112xbf16>, vector<16x112xf32> -> vector<16x112xf32>
    %c0_4 = arith.constant 0 : index
    %c0_5 = arith.constant 0 : index
    %4 = vector.load %arg3[%c0_4, %c0_5] : memref<1x112xf32, #tpu.memory_space<vmem>>, vector<1x112xf32>
    %5 = vector.broadcast %4 : vector<1x112xf32> to vector<16x112xf32>
    %6 = arith.addf %3, %5 : vector<16x112xf32>
    %7 = vector.extract_strided_slice %6 {offsets = [0, 0], sizes = [16, 28], strides = [1, 1]} : vector<16x112xf32> to vector<16x28xf32>
    %8 = arith.truncf %7 : vector<16x28xf32> to vector<16x28xbf16>
    %c0_6 = arith.constant 0 : index
    %c0_7 = arith.constant 0 : index
    %c0_8 = arith.constant 0 : index
    %9 = vector.load %arg4[%c0_6, %c0_7, %c0_8] : memref<1x16x28xbf16, #tpu.memory_space<vmem>>, vector<1x16x28xbf16>
    %10 = vector.shape_cast %9 : vector<1x16x28xbf16> to vector<16x28xbf16>
    %11 = vector.shape_cast %8 : vector<16x28xbf16> to vector<1x16x28xbf16>
    tpu.vector_store %arg4[%c0_6, %c0_7, %c0_8], %11 {strides = array<i32>} : memref<1x16x28xbf16, #tpu.memory_space<vmem>>, vector<1x16x28xbf16>,
    %12 = vector.extract_strided_slice %6 {offsets = [0, 28], sizes = [16, 40], strides = [1, 1]} : vector<16x112xf32> to vector<16x40xf32>
    %13 = arith.truncf %12 : vector<16x40xf32> to vector<16x40xbf16>
    %14 = vector.extract_strided_slice %6 {offsets = [0, 68], sizes = [16, 40], strides = [1, 1]} : vector<16x112xf32> to vector<16x40xf32>
    %15 = arith.truncf %14 : vector<16x40xf32> to vector<16x40xbf16>
    %16 = vector.extract_strided_slice %6 {offsets = [0, 108], sizes = [16, 4], strides = [1, 1]} : vector<16x112xf32> to vector<16x4xf32>
    %17 = arith.truncf %16 : vector<16x4xf32> to vector<16x4xbf16>
    %cst_9 = arith.constant dense<0.000000e+00> : vector<16x16xf32>
    %18 = tpu.matmul %13, %15, %cst_9 {dimension_numbers = #tpu.dot_dimension_numbers<[1], [1], [0], [0], [0, 0, 1, 0], [], []>} : vector<16x40xbf16>, vector<16x40xbf16>, vector<16x16xf32> -> vector<16x16xf32>
    %cst_10 = arith.constant dense<0xFF800000> : vector<16xf32>
    %19 = vector.multi_reduction <maximumf>, %18, %cst_10 [1] : vector<16x16xf32> to vector<16xf32>
    %20 = vector.shape_cast %19 : vector<16xf32> to vector<16x1xf32>
    %21 = vector.broadcast %20 : vector<16x1xf32> to vector<16x16xf32>
    %22 = arith.subf %18, %21 : vector<16x16xf32>
    %23 = math.exp %22 : vector<16x16xf32>
    %cst_11 = arith.constant dense<0.000000e+00> : vector<16xf32>
    %24 = vector.multi_reduction <add>, %23, %cst_11 [1] : vector<16x16xf32> to vector<16xf32>
    %25 = vector.shape_cast %24 : vector<16xf32> to vector<16x1xf32>
    %26 = tpu.reciprocal %25 {approx = true} : vector<16x1xf32> -> vector<16x1xf32>
    %27 = vector.broadcast %26 : vector<16x1xf32> to vector<16x16xf32>
    %28 = arith.mulf %23, %27 : vector<16x16xf32>
    %29 = arith.truncf %28 : vector<16x16xf32> to vector<16x16xbf16>
    %cst_12 = arith.constant dense<0.000000e+00> : vector<16x4xf32>
    %30 = tpu.matmul %29, %17, %cst_12 {dimension_numbers = #tpu.dot_dimension_numbers<[1], [0], [0], [1], [0, 0, 1, 1], [], []>} : vector<16x16xbf16>, vector<16x4xbf16>, vector<16x4xf32> -> vector<16x4xf32>
    %31 = arith.truncf %30 : vector<16x4xf32> to vector<16x4xbf16>
    %c0_13 = arith.constant 0 : index
    %c0_14 = arith.constant 0 : index
    %c0_15 = arith.constant 0 : index
    %32 = vector.load %arg5[%c0_13, %c0_14, %c0_15] : memref<1x16x4xbf16, #tpu.memory_space<vmem>>, vector<1x16x4xbf16>
    %33 = vector.shape_cast %32 : vector<1x16x4xbf16> to vector<16x4xbf16>
    %34 = vector.shape_cast %31 : vector<16x4xbf16> to vector<1x16x4xbf16>
    tpu.vector_store %arg5[%c0_13, %c0_14, %c0_15], %34 {strides = array<i32>} : memref<1x16x4xbf16, #tpu.memory_space<vmem>>, vector<1x16x4xbf16>,
    return
  }
  func.func @transform_0(%arg0: i32) -> (i32, i32, i32) {
    %c0_i32 = arith.constant 0 : i32
    %c0_i32_0 = arith.constant 0 : i32
    %c0_i32_1 = arith.constant 0 : i32
    return %arg0, %c0_i32, %c0_i32_0 : i32, i32, i32
  }
  func.func @transform_1(%arg0: i32) -> (i32, i32) {
    %c0_i32 = arith.constant 0 : i32
    %c0_i32_0 = arith.constant 0 : i32
    %c0_i32_1 = arith.constant 0 : i32
    return %c0_i32, %c0_i32_0 : i32, i32
  }
  func.func @transform_2(%arg0: i32) -> (i32, i32) {
    %c0_i32 = arith.constant 0 : i32
    %c0_i32_0 = arith.constant 0 : i32
    %c0_i32_1 = arith.constant 0 : i32
    return %c0_i32, %c0_i32_0 : i32, i32
  }
  func.func @transform_3(%arg0: i32) -> (i32, i32, i32) {
    %c0_i32 = arith.constant 0 : i32
    %c0_i32_0 = arith.constant 0 : i32
    %c0_i32_1 = arith.constant 0 : i32
    return %arg0, %c0_i32, %c0_i32_0 : i32, i32, i32
  }
  func.func @transform_4(%arg0: i32) -> (i32, i32, i32) {
    %c0_i32 = arith.constant 0 : i32
    %c0_i32_0 = arith.constant 0 : i32
    %c0_i32_1 = arith.constant 0 : i32
    return %arg0, %c0_i32, %c0_i32_0 : i32, i32, i32
  }
}

module attributes {stable_mosaic.version = 11 : i64} {
  func.func @kernel(%arg0: i32, %arg1: memref<1x16x28xbf16, #tpu.memory_space<vmem>>, %arg2: memref<1x16x4xbf16, #tpu.memory_space<vmem>>, %arg3: memref<4x4xbf16, #tpu.memory_space<vmem>>, %arg4: memref<1x4xf32, #tpu.memory_space<vmem>>, %arg5: memref<1x32xf32, #tpu.memory_space<vmem>>, %arg6: memref<1x32xf32, #tpu.memory_space<vmem>>, %arg7: memref<1x16x32xbf16, #tpu.memory_space<vmem>>) attributes {dimension_semantics = [#tpu.dimension_semantics<parallel>], iteration_bounds = array<i64: 2>, scalar_prefetch = 0 : i64, scratch_operands = 0 : i64, tpu.core_type = #tpu.core_type<tc>, window_params = [{transform_indices = @transform_0, window_bounds = array<i64: 1, 16, 28>}, {transform_indices = @transform_1, window_bounds = array<i64: 1, 16, 4>}, {pipeline_mode = #tpu.pipeline_mode<synchronous>, transform_indices = @transform_2, window_bounds = array<i64: 4, 4>}, {pipeline_mode = #tpu.pipeline_mode<synchronous>, transform_indices = @transform_3, window_bounds = array<i64: 1, 4>}, {pipeline_mode = #tpu.pipeline_mode<synchronous>, transform_indices = @transform_4, window_bounds = array<i64: 1, 32>}, {pipeline_mode = #tpu.pipeline_mode<synchronous>, transform_indices = @transform_5, window_bounds = array<i64: 1, 32>}, {transform_indices = @transform_6, window_bounds = array<i64: 1, 16, 32>}]} {
    %c0 = arith.constant 0 : index
    %c0_0 = arith.constant 0 : index
    %0 = vector.load %arg5[%c0, %c0_0] : memref<1x32xf32, #tpu.memory_space<vmem>>, vector<1x32xf32>
    %c0_1 = arith.constant 0 : index
    %c0_2 = arith.constant 0 : index
    %1 = vector.load %arg6[%c0_1, %c0_2] : memref<1x32xf32, #tpu.memory_space<vmem>>, vector<1x32xf32>
    %c0_3 = arith.constant 0 : index
    %c0_4 = arith.constant 0 : index
    %c0_5 = arith.constant 0 : index
    %2 = vector.load %arg2[%c0_3, %c0_4, %c0_5] : memref<1x16x4xbf16, #tpu.memory_space<vmem>>, vector<1x16x4xbf16>
    %3 = vector.shape_cast %2 : vector<1x16x4xbf16> to vector<16x4xbf16>
    %c0_6 = arith.constant 0 : index
    %c0_7 = arith.constant 0 : index
    %4 = vector.load %arg3[%c0_6, %c0_7] : memref<4x4xbf16, #tpu.memory_space<vmem>>, vector<4x4xbf16>
    %cst = arith.constant dense<0.000000e+00> : vector<16x4xf32>
    %5 = tpu.matmul %3, %4, %cst {dimension_numbers = #tpu.dot_dimension_numbers<[1], [0], [0], [1], [0, 0, 1, 1], [], []>} : vector<16x4xbf16>, vector<4x4xbf16>, vector<16x4xf32> -> vector<16x4xf32>
    %c0_8 = arith.constant 0 : index
    %c0_9 = arith.constant 0 : index
    %6 = vector.load %arg4[%c0_8, %c0_9] : memref<1x4xf32, #tpu.memory_space<vmem>>, vector<1x4xf32>
    %7 = vector.broadcast %6 : vector<1x4xf32> to vector<16x4xf32>
    %8 = arith.addf %5, %7 : vector<16x4xf32>
    %c0_10 = arith.constant 0 : index
    %c0_11 = arith.constant 0 : index
    %c0_12 = arith.constant 0 : index
    %9 = vector.load %arg1[%c0_10, %c0_11, %c0_12] : memref<1x16x28xbf16, #tpu.memory_space<vmem>>, vector<1x16x28xbf16>
    %10 = vector.shape_cast %9 : vector<1x16x28xbf16> to vector<16x28xbf16>
    %11 = arith.extf %10 : vector<16x28xbf16> to vector<16x28xf32>
    %12 = vector.extract_strided_slice %0 {offsets = [0, 0], sizes = [1, 28], strides = [1, 1]} : vector<1x32xf32> to vector<1x28xf32>
    %13 = vector.extract_strided_slice %1 {offsets = [0, 0], sizes = [1, 28], strides = [1, 1]} : vector<1x32xf32> to vector<1x28xf32>
    %cst_13 = arith.constant dense<0.000000e+00> : vector<28xf32>
    %14 = vector.multi_reduction <add>, %11, %cst_13 [0] : vector<16x28xf32> to vector<28xf32>
    %15 = vector.shape_cast %14 : vector<28xf32> to vector<1x28xf32>
    %cst_14 = arith.constant 6.250000e-02 : f32
    %16 = vector.broadcast %cst_14 : f32 to vector<1x28xf32>
    %17 = arith.mulf %15, %16 : vector<1x28xf32>
    %18 = vector.broadcast %17 : vector<1x28xf32> to vector<16x28xf32>
    %19 = arith.subf %11, %18 : vector<16x28xf32>
    %20 = arith.mulf %19, %19 : vector<16x28xf32>
    %cst_15 = arith.constant dense<0.000000e+00> : vector<28xf32>
    %21 = vector.multi_reduction <add>, %20, %cst_15 [0] : vector<16x28xf32> to vector<28xf32>
    %22 = vector.shape_cast %21 : vector<28xf32> to vector<1x28xf32>
    %cst_16 = arith.constant 6.250000e-02 : f32
    %23 = vector.broadcast %cst_16 : f32 to vector<1x28xf32>
    %24 = arith.mulf %22, %23 : vector<1x28xf32>
    %cst_17 = arith.constant 9.99999974E-6 : f32
    %25 = vector.broadcast %cst_17 : f32 to vector<1x28xf32>
    %26 = arith.addf %24, %25 : vector<1x28xf32>
    %27 = math.rsqrt %26 : vector<1x28xf32>
    %28 = vector.broadcast %27 : vector<1x28xf32> to vector<16x28xf32>
    %29 = arith.mulf %19, %28 : vector<16x28xf32>
    %30 = vector.broadcast %12 : vector<1x28xf32> to vector<16x28xf32>
    %31 = arith.mulf %29, %30 : vector<16x28xf32>
    %32 = vector.broadcast %13 : vector<1x28xf32> to vector<16x28xf32>
    %33 = arith.addf %31, %32 : vector<16x28xf32>
    %cst_18 = arith.constant 0.000000e+00 : f32
    %34 = vector.broadcast %cst_18 : f32 to vector<16x28xf32>
    %35 = arith.maximumf %33, %34 : vector<16x28xf32>
    %36 = arith.truncf %35 : vector<16x28xf32> to vector<16x28xbf16>
    %c0_19 = arith.constant 0 : index
    %c0_20 = arith.constant 0 : index
    %c0_21 = arith.constant 0 : index
    %37 = vector.load %arg7[%c0_19, %c0_20, %c0_21] : memref<1x16x32xbf16, #tpu.memory_space<vmem>>, vector<1x16x28xbf16>
    %38 = vector.shape_cast %37 : vector<1x16x28xbf16> to vector<16x28xbf16>
    %39 = vector.shape_cast %36 : vector<16x28xbf16> to vector<1x16x28xbf16>
    tpu.vector_store %arg7[%c0_19, %c0_20, %c0_21], %39 {strides = array<i32>} : memref<1x16x32xbf16, #tpu.memory_space<vmem>>, vector<1x16x28xbf16>,
    %40 = vector.extract_strided_slice %0 {offsets = [0, 28], sizes = [1, 4], strides = [1, 1]} : vector<1x32xf32> to vector<1x4xf32>
    %41 = vector.extract_strided_slice %1 {offsets = [0, 28], sizes = [1, 4], strides = [1, 1]} : vector<1x32xf32> to vector<1x4xf32>
    %cst_22 = arith.constant dense<0.000000e+00> : vector<4xf32>
    %42 = vector.multi_reduction <add>, %8, %cst_22 [0] : vector<16x4xf32> to vector<4xf32>
    %43 = vector.shape_cast %42 : vector<4xf32> to vector<1x4xf32>
    %cst_23 = arith.constant 6.250000e-02 : f32
    %44 = vector.broadcast %cst_23 : f32 to vector<1x4xf32>
    %45 = arith.mulf %43, %44 : vector<1x4xf32>
    %46 = vector.broadcast %45 : vector<1x4xf32> to vector<16x4xf32>
    %47 = arith.subf %8, %46 : vector<16x4xf32>
    %48 = arith.mulf %47, %47 : vector<16x4xf32>
    %cst_24 = arith.constant dense<0.000000e+00> : vector<4xf32>
    %49 = vector.multi_reduction <add>, %48, %cst_24 [0] : vector<16x4xf32> to vector<4xf32>
    %50 = vector.shape_cast %49 : vector<4xf32> to vector<1x4xf32>
    %cst_25 = arith.constant 6.250000e-02 : f32
    %51 = vector.broadcast %cst_25 : f32 to vector<1x4xf32>
    %52 = arith.mulf %50, %51 : vector<1x4xf32>
    %cst_26 = arith.constant 9.99999974E-6 : f32
    %53 = vector.broadcast %cst_26 : f32 to vector<1x4xf32>
    %54 = arith.addf %52, %53 : vector<1x4xf32>
    %55 = math.rsqrt %54 : vector<1x4xf32>
    %56 = vector.broadcast %55 : vector<1x4xf32> to vector<16x4xf32>
    %57 = arith.mulf %47, %56 : vector<16x4xf32>
    %58 = vector.broadcast %40 : vector<1x4xf32> to vector<16x4xf32>
    %59 = arith.mulf %57, %58 : vector<16x4xf32>
    %60 = vector.broadcast %41 : vector<1x4xf32> to vector<16x4xf32>
    %61 = arith.addf %59, %60 : vector<16x4xf32>
    %cst_27 = arith.constant 0.000000e+00 : f32
    %62 = vector.broadcast %cst_27 : f32 to vector<16x4xf32>
    %63 = arith.maximumf %61, %62 : vector<16x4xf32>
    %64 = arith.truncf %63 : vector<16x4xf32> to vector<16x4xbf16>
    %c0_28 = arith.constant 0 : index
    %c0_29 = arith.constant 0 : index
    %c28 = arith.constant 28 : index
    %65 = vector.load %arg7[%c0_28, %c0_29, %c28] : memref<1x16x32xbf16, #tpu.memory_space<vmem>>, vector<1x16x4xbf16>
    %66 = vector.shape_cast %65 : vector<1x16x4xbf16> to vector<16x4xbf16>
    %67 = vector.shape_cast %64 : vector<16x4xbf16> to vector<1x16x4xbf16>
    tpu.vector_store %arg7[%c0_28, %c0_29, %c28], %67 {strides = array<i32>} : memref<1x16x32xbf16, #tpu.memory_space<vmem>>, vector<1x16x4xbf16>,
    return
  }
  func.func @transform_0(%arg0: i32) -> (i32, i32, i32) {
    %c0_i32 = arith.constant 0 : i32
    %c0_i32_0 = arith.constant 0 : i32
    %c0_i32_1 = arith.constant 0 : i32
    return %arg0, %c0_i32, %c0_i32_0 : i32, i32, i32
  }
  func.func @transform_1(%arg0: i32) -> (i32, i32, i32) {
    %c0_i32 = arith.constant 0 : i32
    %c0_i32_0 = arith.constant 0 : i32
    %c0_i32_1 = arith.constant 0 : i32
    return %arg0, %c0_i32, %c0_i32_0 : i32, i32, i32
  }
  func.func @transform_2(%arg0: i32) -> (i32, i32) {
    %c0_i32 = arith.constant 0 : i32
    %c0_i32_0 = arith.constant 0 : i32
    %c0_i32_1 = arith.constant 0 : i32
    return %c0_i32, %c0_i32_0 : i32, i32
  }
  func.func @transform_3(%arg0: i32) -> (i32, i32) {
    %c0_i32 = arith.constant 0 : i32
    %c0_i32_0 = arith.constant 0 : i32
    %c0_i32_1 = arith.constant 0 : i32
    return %c0_i32, %c0_i32_0 : i32, i32
  }
  func.func @transform_4(%arg0: i32) -> (i32, i32) {
    %c0_i32 = arith.constant 0 : i32
    %c0_i32_0 = arith.constant 0 : i32
    %c0_i32_1 = arith.constant 0 : i32
    return %c0_i32, %c0_i32_0 : i32, i32
  }
  func.func @transform_5(%arg0: i32) -> (i32, i32) {
    %c0_i32 = arith.constant 0 : i32
    %c0_i32_0 = arith.constant 0 : i32
    %c0_i32_1 = arith.constant 0 : i32
    return %c0_i32, %c0_i32_0 : i32, i32
  }
  func.func @transform_6(%arg0: i32) -> (i32, i32, i32) {
    %c0_i32 = arith.constant 0 : i32
    %c0_i32_0 = arith.constant 0 : i32
    %c0_i32_1 = arith.constant 0 : i32
    return %arg0, %c0_i32, %c0_i32_0 : i32, i32, i32
  }
}

module attributes {stable_mosaic.version = 11 : i64} {
  func.func @kernel(%arg0: i32, %arg1: memref<1x16x288xbf16, #tpu.memory_space<vmem>>, %arg2: memref<288x32xbf16, #tpu.memory_space<vmem>>, %arg3: memref<1x32xf32, #tpu.memory_space<vmem>>, %arg4: memref<1x32xf32, #tpu.memory_space<vmem>>, %arg5: memref<1x16x32xbf16, #tpu.memory_space<vmem>>, %arg6: memref<1x16x32xbf16, #tpu.memory_space<vmem>>) attributes {dimension_semantics = [#tpu.dimension_semantics<parallel>], iteration_bounds = array<i64: 2>, scalar_prefetch = 0 : i64, scratch_operands = 0 : i64, tpu.core_type = #tpu.core_type<tc>, window_params = [{transform_indices = @transform_0, window_bounds = array<i64: 1, 16, 288>}, {pipeline_mode = #tpu.pipeline_mode<synchronous>, transform_indices = @transform_1, window_bounds = array<i64: 288, 32>}, {pipeline_mode = #tpu.pipeline_mode<synchronous>, transform_indices = @transform_2, window_bounds = array<i64: 1, 32>}, {pipeline_mode = #tpu.pipeline_mode<synchronous>, transform_indices = @transform_3, window_bounds = array<i64: 1, 32>}, {transform_indices = @transform_4, window_bounds = array<i64: 1, 16, 32>}, {transform_indices = @transform_5, window_bounds = array<i64: 1, 16, 32>}]} {
    %c0 = arith.constant 0 : index
    %c0_0 = arith.constant 0 : index
    %c0_1 = arith.constant 0 : index
    %0 = vector.load %arg1[%c0, %c0_0, %c0_1] : memref<1x16x288xbf16, #tpu.memory_space<vmem>>, vector<1x16x288xbf16>
    %1 = vector.shape_cast %0 : vector<1x16x288xbf16> to vector<16x288xbf16>
    %c0_2 = arith.constant 0 : index
    %c0_3 = arith.constant 0 : index
    %2 = vector.load %arg2[%c0_2, %c0_3] : memref<288x32xbf16, #tpu.memory_space<vmem>>, vector<288x32xbf16>
    %cst = arith.constant dense<0.000000e+00> : vector<16x32xf32>
    %3 = tpu.matmul %1, %2, %cst {dimension_numbers = #tpu.dot_dimension_numbers<[1], [0], [0], [1], [0, 0, 1, 1], [], []>} : vector<16x288xbf16>, vector<288x32xbf16>, vector<16x32xf32> -> vector<16x32xf32>
    %cst_4 = arith.constant dense<0.000000e+00> : vector<32xf32>
    %4 = vector.multi_reduction <add>, %3, %cst_4 [0] : vector<16x32xf32> to vector<32xf32>
    %5 = vector.shape_cast %4 : vector<32xf32> to vector<1x32xf32>
    %cst_5 = arith.constant 6.250000e-02 : f32
    %6 = vector.broadcast %cst_5 : f32 to vector<1x32xf32>
    %7 = arith.mulf %5, %6 : vector<1x32xf32>
    %8 = vector.broadcast %7 : vector<1x32xf32> to vector<16x32xf32>
    %9 = arith.subf %3, %8 : vector<16x32xf32>
    %10 = arith.mulf %9, %9 : vector<16x32xf32>
    %cst_6 = arith.constant dense<0.000000e+00> : vector<32xf32>
    %11 = vector.multi_reduction <add>, %10, %cst_6 [0] : vector<16x32xf32> to vector<32xf32>
    %12 = vector.shape_cast %11 : vector<32xf32> to vector<1x32xf32>
    %cst_7 = arith.constant 6.250000e-02 : f32
    %13 = vector.broadcast %cst_7 : f32 to vector<1x32xf32>
    %14 = arith.mulf %12, %13 : vector<1x32xf32>
    %cst_8 = arith.constant 9.99999974E-6 : f32
    %15 = vector.broadcast %cst_8 : f32 to vector<1x32xf32>
    %16 = arith.addf %14, %15 : vector<1x32xf32>
    %17 = math.rsqrt %16 : vector<1x32xf32>
    %18 = vector.broadcast %17 : vector<1x32xf32> to vector<16x32xf32>
    %19 = arith.mulf %9, %18 : vector<16x32xf32>
    %c0_9 = arith.constant 0 : index
    %c0_10 = arith.constant 0 : index
    %20 = vector.load %arg3[%c0_9, %c0_10] : memref<1x32xf32, #tpu.memory_space<vmem>>, vector<1x32xf32>
    %21 = vector.broadcast %20 : vector<1x32xf32> to vector<16x32xf32>
    %22 = arith.mulf %19, %21 : vector<16x32xf32>
    %c0_11 = arith.constant 0 : index
    %c0_12 = arith.constant 0 : index
    %23 = vector.load %arg4[%c0_11, %c0_12] : memref<1x32xf32, #tpu.memory_space<vmem>>, vector<1x32xf32>
    %24 = vector.broadcast %23 : vector<1x32xf32> to vector<16x32xf32>
    %25 = arith.addf %22, %24 : vector<16x32xf32>
    %c0_13 = arith.constant 0 : index
    %c0_14 = arith.constant 0 : index
    %c0_15 = arith.constant 0 : index
    %26 = vector.load %arg5[%c0_13, %c0_14, %c0_15] : memref<1x16x32xbf16, #tpu.memory_space<vmem>>, vector<1x16x32xbf16>
    %27 = vector.shape_cast %26 : vector<1x16x32xbf16> to vector<16x32xbf16>
    %28 = arith.extf %27 : vector<16x32xbf16> to vector<16x32xf32>
    %29 = arith.addf %25, %28 : vector<16x32xf32>
    %30 = arith.truncf %29 : vector<16x32xf32> to vector<16x32xbf16>
    %c0_16 = arith.constant 0 : index
    %c0_17 = arith.constant 0 : index
    %c0_18 = arith.constant 0 : index
    %31 = vector.load %arg6[%c0_16, %c0_17, %c0_18] : memref<1x16x32xbf16, #tpu.memory_space<vmem>>, vector<1x16x32xbf16>
    %32 = vector.shape_cast %31 : vector<1x16x32xbf16> to vector<16x32xbf16>
    %33 = vector.shape_cast %30 : vector<16x32xbf16> to vector<1x16x32xbf16>
    tpu.vector_store %arg6[%c0_16, %c0_17, %c0_18], %33 {strides = array<i32>} : memref<1x16x32xbf16, #tpu.memory_space<vmem>>, vector<1x16x32xbf16>,
    return
  }
  func.func @transform_0(%arg0: i32) -> (i32, i32, i32) {
    %c0_i32 = arith.constant 0 : i32
    %c0_i32_0 = arith.constant 0 : i32
    %c0_i32_1 = arith.constant 0 : i32
    return %arg0, %c0_i32, %c0_i32_0 : i32, i32, i32
  }
  func.func @transform_1(%arg0: i32) -> (i32, i32) {
    %c0_i32 = arith.constant 0 : i32
    %c0_i32_0 = arith.constant 0 : i32
    %c0_i32_1 = arith.constant 0 : i32
    return %c0_i32, %c0_i32_0 : i32, i32
  }
  func.func @transform_2(%arg0: i32) -> (i32, i32) {
    %c0_i32 = arith.constant 0 : i32
    %c0_i32_0 = arith.constant 0 : i32
    %c0_i32_1 = arith.constant 0 : i32
    return %c0_i32, %c0_i32_0 : i32, i32
  }
  func.func @transform_3(%arg0: i32) -> (i32, i32) {
    %c0_i32 = arith.constant 0 : i32
    %c0_i32_0 = arith.constant 0 : i32
    %c0_i32_1 = arith.constant 0 : i32
    return %c0_i32, %c0_i32_0 : i32, i32
  }
  func.func @transform_4(%arg0: i32) -> (i32, i32, i32) {
    %c0_i32 = arith.constant 0 : i32
    %c0_i32_0 = arith.constant 0 : i32
    %c0_i32_1 = arith.constant 0 : i32
    return %arg0, %c0_i32, %c0_i32_0 : i32, i32, i32
  }
  func.func @transform_5(%arg0: i32) -> (i32, i32, i32) {
    %c0_i32 = arith.constant 0 : i32
    %c0_i32_0 = arith.constant 0 : i32
    %c0_i32_1 = arith.constant 0 : i32
    return %arg0, %c0_i32, %c0_i32_0 : i32, i32, i32
  }
}

module attributes {stable_mosaic.version = 11 : i64} {
  func.func @kernel(%arg0: i32, %arg1: memref<1x16x288xbf16, #tpu.memory_space<vmem>>, %arg2: memref<288x32xbf16, #tpu.memory_space<vmem>>, %arg3: memref<1x32xf32, #tpu.memory_space<vmem>>, %arg4: memref<1x32xf32, #tpu.memory_space<vmem>>, %arg5: memref<1x16x32xbf16, #tpu.memory_space<vmem>>) attributes {dimension_semantics = [#tpu.dimension_semantics<parallel>], iteration_bounds = array<i64: 2>, scalar_prefetch = 0 : i64, scratch_operands = 0 : i64, tpu.core_type = #tpu.core_type<tc>, window_params = [{transform_indices = @transform_0, window_bounds = array<i64: 1, 16, 288>}, {pipeline_mode = #tpu.pipeline_mode<synchronous>, transform_indices = @transform_1, window_bounds = array<i64: 288, 32>}, {pipeline_mode = #tpu.pipeline_mode<synchronous>, transform_indices = @transform_2, window_bounds = array<i64: 1, 32>}, {pipeline_mode = #tpu.pipeline_mode<synchronous>, transform_indices = @transform_3, window_bounds = array<i64: 1, 32>}, {transform_indices = @transform_4, window_bounds = array<i64: 1, 16, 32>}]} {
    %c0 = arith.constant 0 : index
    %c0_0 = arith.constant 0 : index
    %c0_1 = arith.constant 0 : index
    %0 = vector.load %arg1[%c0, %c0_0, %c0_1] : memref<1x16x288xbf16, #tpu.memory_space<vmem>>, vector<1x16x288xbf16>
    %1 = vector.shape_cast %0 : vector<1x16x288xbf16> to vector<16x288xbf16>
    %c0_2 = arith.constant 0 : index
    %c0_3 = arith.constant 0 : index
    %2 = vector.load %arg2[%c0_2, %c0_3] : memref<288x32xbf16, #tpu.memory_space<vmem>>, vector<288x32xbf16>
    %cst = arith.constant dense<0.000000e+00> : vector<16x32xf32>
    %3 = tpu.matmul %1, %2, %cst {dimension_numbers = #tpu.dot_dimension_numbers<[1], [0], [0], [1], [0, 0, 1, 1], [], []>} : vector<16x288xbf16>, vector<288x32xbf16>, vector<16x32xf32> -> vector<16x32xf32>
    %cst_4 = arith.constant dense<0.000000e+00> : vector<32xf32>
    %4 = vector.multi_reduction <add>, %3, %cst_4 [0] : vector<16x32xf32> to vector<32xf32>
    %5 = vector.shape_cast %4 : vector<32xf32> to vector<1x32xf32>
    %cst_5 = arith.constant 6.250000e-02 : f32
    %6 = vector.broadcast %cst_5 : f32 to vector<1x32xf32>
    %7 = arith.mulf %5, %6 : vector<1x32xf32>
    %8 = vector.broadcast %7 : vector<1x32xf32> to vector<16x32xf32>
    %9 = arith.subf %3, %8 : vector<16x32xf32>
    %10 = arith.mulf %9, %9 : vector<16x32xf32>
    %cst_6 = arith.constant dense<0.000000e+00> : vector<32xf32>
    %11 = vector.multi_reduction <add>, %10, %cst_6 [0] : vector<16x32xf32> to vector<32xf32>
    %12 = vector.shape_cast %11 : vector<32xf32> to vector<1x32xf32>
    %cst_7 = arith.constant 6.250000e-02 : f32
    %13 = vector.broadcast %cst_7 : f32 to vector<1x32xf32>
    %14 = arith.mulf %12, %13 : vector<1x32xf32>
    %cst_8 = arith.constant 9.99999974E-6 : f32
    %15 = vector.broadcast %cst_8 : f32 to vector<1x32xf32>
    %16 = arith.addf %14, %15 : vector<1x32xf32>
    %17 = math.rsqrt %16 : vector<1x32xf32>
    %18 = vector.broadcast %17 : vector<1x32xf32> to vector<16x32xf32>
    %19 = arith.mulf %9, %18 : vector<16x32xf32>
    %c0_9 = arith.constant 0 : index
    %c0_10 = arith.constant 0 : index
    %20 = vector.load %arg3[%c0_9, %c0_10] : memref<1x32xf32, #tpu.memory_space<vmem>>, vector<1x32xf32>
    %21 = vector.broadcast %20 : vector<1x32xf32> to vector<16x32xf32>
    %22 = arith.mulf %19, %21 : vector<16x32xf32>
    %c0_11 = arith.constant 0 : index
    %c0_12 = arith.constant 0 : index
    %23 = vector.load %arg4[%c0_11, %c0_12] : memref<1x32xf32, #tpu.memory_space<vmem>>, vector<1x32xf32>
    %24 = vector.broadcast %23 : vector<1x32xf32> to vector<16x32xf32>
    %25 = arith.addf %22, %24 : vector<16x32xf32>
    %cst_13 = arith.constant 0.000000e+00 : f32
    %26 = vector.broadcast %cst_13 : f32 to vector<16x32xf32>
    %27 = arith.maximumf %25, %26 : vector<16x32xf32>
    %28 = arith.truncf %27 : vector<16x32xf32> to vector<16x32xbf16>
    %c0_14 = arith.constant 0 : index
    %c0_15 = arith.constant 0 : index
    %c0_16 = arith.constant 0 : index
    %29 = vector.load %arg5[%c0_14, %c0_15, %c0_16] : memref<1x16x32xbf16, #tpu.memory_space<vmem>>, vector<1x16x32xbf16>
    %30 = vector.shape_cast %29 : vector<1x16x32xbf16> to vector<16x32xbf16>
    %31 = vector.shape_cast %28 : vector<16x32xbf16> to vector<1x16x32xbf16>
    tpu.vector_store %arg5[%c0_14, %c0_15, %c0_16], %31 {strides = array<i32>} : memref<1x16x32xbf16, #tpu.memory_space<vmem>>, vector<1x16x32xbf16>,
    return
  }
  func.func @transform_0(%arg0: i32) -> (i32, i32, i32) {
    %c0_i32 = arith.constant 0 : i32
    %c0_i32_0 = arith.constant 0 : i32
    %c0_i32_1 = arith.constant 0 : i32
    return %arg0, %c0_i32, %c0_i32_0 : i32, i32, i32
  }
  func.func @transform_1(%arg0: i32) -> (i32, i32) {
    %c0_i32 = arith.constant 0 : i32
    %c0_i32_0 = arith.constant 0 : i32
    %c0_i32_1 = arith.constant 0 : i32
    return %c0_i32, %c0_i32_0 : i32, i32
  }
  func.func @transform_2(%arg0: i32) -> (i32, i32) {
    %c0_i32 = arith.constant 0 : i32
    %c0_i32_0 = arith.constant 0 : i32
    %c0_i32_1 = arith.constant 0 : i32
    return %c0_i32, %c0_i32_0 : i32, i32
  }
  func.func @transform_3(%arg0: i32) -> (i32, i32) {
    %c0_i32 = arith.constant 0 : i32
    %c0_i32_0 = arith.constant 0 : i32
    %c0_i32_1 = arith.constant 0 : i32
    return %c0_i32, %c0_i32_0 : i32, i32
  }
  func.func @transform_4(%arg0: i32) -> (i32, i32, i32) {
    %c0_i32 = arith.constant 0 : i32
    %c0_i32_0 = arith.constant 0 : i32
    %c0_i32_1 = arith.constant 0 : i32
    return %arg0, %c0_i32, %c0_i32_0 : i32, i32, i32
  }
}

module attributes {stable_mosaic.version = 11 : i64} {
  func.func @kernel(%arg0: i32, %arg1: memref<1x16x288xbf16, #tpu.memory_space<vmem>>, %arg2: memref<288x64xbf16, #tpu.memory_space<vmem>>, %arg3: memref<1x16xf32, #tpu.memory_space<vmem>>, %arg4: memref<1x16xf32, #tpu.memory_space<vmem>>, %arg5: memref<1x16x64xbf16, #tpu.memory_space<vmem>>) attributes {dimension_semantics = [#tpu.dimension_semantics<parallel>], iteration_bounds = array<i64: 2>, scalar_prefetch = 0 : i64, scratch_operands = 0 : i64, tpu.core_type = #tpu.core_type<tc>, window_params = [{transform_indices = @transform_0, window_bounds = array<i64: 1, 16, 288>}, {pipeline_mode = #tpu.pipeline_mode<synchronous>, transform_indices = @transform_1, window_bounds = array<i64: 288, 64>}, {pipeline_mode = #tpu.pipeline_mode<synchronous>, transform_indices = @transform_2, window_bounds = array<i64: 1, 16>}, {pipeline_mode = #tpu.pipeline_mode<synchronous>, transform_indices = @transform_3, window_bounds = array<i64: 1, 16>}, {transform_indices = @transform_4, window_bounds = array<i64: 1, 16, 64>}]} {
    %c0 = arith.constant 0 : index
    %c0_0 = arith.constant 0 : index
    %c0_1 = arith.constant 0 : index
    %0 = vector.load %arg1[%c0, %c0_0, %c0_1] : memref<1x16x288xbf16, #tpu.memory_space<vmem>>, vector<1x16x288xbf16>
    %1 = vector.shape_cast %0 : vector<1x16x288xbf16> to vector<16x288xbf16>
    %c0_2 = arith.constant 0 : index
    %c0_3 = arith.constant 0 : index
    %2 = vector.load %arg2[%c0_2, %c0_3] : memref<288x64xbf16, #tpu.memory_space<vmem>>, vector<288x64xbf16>
    %cst = arith.constant dense<0.000000e+00> : vector<16x64xf32>
    %3 = tpu.matmul %1, %2, %cst {dimension_numbers = #tpu.dot_dimension_numbers<[1], [0], [0], [1], [0, 0, 1, 1], [], []>} : vector<16x288xbf16>, vector<288x64xbf16>, vector<16x64xf32> -> vector<16x64xf32>
    %cst_4 = arith.constant dense<0.000000e+00> : vector<64xf32>
    %4 = vector.multi_reduction <add>, %3, %cst_4 [0] : vector<16x64xf32> to vector<64xf32>
    %5 = vector.shape_cast %4 : vector<64xf32> to vector<1x64xf32>
    %6 = vector.extract_strided_slice %5 {offsets = [0, 0], sizes = [1, 16], strides = [1, 1]} : vector<1x64xf32> to vector<1x16xf32>
    %7 = vector.extract_strided_slice %5 {offsets = [0, 16], sizes = [1, 16], strides = [1, 1]} : vector<1x64xf32> to vector<1x16xf32>
    %8 = arith.addf %6, %7 : vector<1x16xf32>
    %9 = vector.extract_strided_slice %5 {offsets = [0, 32], sizes = [1, 16], strides = [1, 1]} : vector<1x64xf32> to vector<1x16xf32>
    %10 = arith.addf %8, %9 : vector<1x16xf32>
    %11 = vector.extract_strided_slice %5 {offsets = [0, 48], sizes = [1, 16], strides = [1, 1]} : vector<1x64xf32> to vector<1x16xf32>
    %12 = arith.addf %10, %11 : vector<1x16xf32>
    %cst_5 = arith.constant 1.562500e-02 : f32
    %13 = vector.broadcast %cst_5 : f32 to vector<1x16xf32>
    %14 = arith.mulf %12, %13 : vector<1x16xf32>
    %cst_6 = arith.constant 0.000000e+00 : f32
    %15 = vector.broadcast %cst_6 : f32 to vector<1x16xf32>
    %16 = vector.extract_strided_slice %3 {offsets = [0, 0], sizes = [16, 16], strides = [1, 1]} : vector<16x64xf32> to vector<16x16xf32>
    %17 = vector.broadcast %14 : vector<1x16xf32> to vector<16x16xf32>
    %18 = arith.subf %16, %17 : vector<16x16xf32>
    %19 = arith.mulf %18, %18 : vector<16x16xf32>
    %cst_7 = arith.constant dense<0.000000e+00> : vector<16xf32>
    %20 = vector.multi_reduction <add>, %19, %cst_7 [0] : vector<16x16xf32> to vector<16xf32>
    %21 = vector.shape_cast %20 : vector<16xf32> to vector<1x16xf32>
    %22 = arith.addf %15, %21 : vector<1x16xf32>
    %23 = vector.extract_strided_slice %3 {offsets = [0, 16], sizes = [16, 16], strides = [1, 1]} : vector<16x64xf32> to vector<16x16xf32>
    %24 = vector.broadcast %14 : vector<1x16xf32> to vector<16x16xf32>
    %25 = arith.subf %23, %24 : vector<16x16xf32>
    %26 = arith.mulf %25, %25 : vector<16x16xf32>
    %cst_8 = arith.constant dense<0.000000e+00> : vector<16xf32>
    %27 = vector.multi_reduction <add>, %26, %cst_8 [0] : vector<16x16xf32> to vector<16xf32>
    %28 = vector.shape_cast %27 : vector<16xf32> to vector<1x16xf32>
    %29 = arith.addf %22, %28 : vector<1x16xf32>
    %30 = vector.extract_strided_slice %3 {offsets = [0, 32], sizes = [16, 16], strides = [1, 1]} : vector<16x64xf32> to vector<16x16xf32>
    %31 = vector.broadcast %14 : vector<1x16xf32> to vector<16x16xf32>
    %32 = arith.subf %30, %31 : vector<16x16xf32>
    %33 = arith.mulf %32, %32 : vector<16x16xf32>
    %cst_9 = arith.constant dense<0.000000e+00> : vector<16xf32>
    %34 = vector.multi_reduction <add>, %33, %cst_9 [0] : vector<16x16xf32> to vector<16xf32>
    %35 = vector.shape_cast %34 : vector<16xf32> to vector<1x16xf32>
    %36 = arith.addf %29, %35 : vector<1x16xf32>
    %37 = vector.extract_strided_slice %3 {offsets = [0, 48], sizes = [16, 16], strides = [1, 1]} : vector<16x64xf32> to vector<16x16xf32>
    %38 = vector.broadcast %14 : vector<1x16xf32> to vector<16x16xf32>
    %39 = arith.subf %37, %38 : vector<16x16xf32>
    %40 = arith.mulf %39, %39 : vector<16x16xf32>
    %cst_10 = arith.constant dense<0.000000e+00> : vector<16xf32>
    %41 = vector.multi_reduction <add>, %40, %cst_10 [0] : vector<16x16xf32> to vector<16xf32>
    %42 = vector.shape_cast %41 : vector<16xf32> to vector<1x16xf32>
    %43 = arith.addf %36, %42 : vector<1x16xf32>
    %cst_11 = arith.constant 1.562500e-02 : f32
    %44 = vector.broadcast %cst_11 : f32 to vector<1x16xf32>
    %45 = arith.mulf %43, %44 : vector<1x16xf32>
    %cst_12 = arith.constant 9.99999974E-6 : f32
    %46 = vector.broadcast %cst_12 : f32 to vector<1x16xf32>
    %47 = arith.addf %45, %46 : vector<1x16xf32>
    %48 = math.rsqrt %47 : vector<1x16xf32>
    %c0_13 = arith.constant 0 : index
    %c0_14 = arith.constant 0 : index
    %49 = vector.load %arg3[%c0_13, %c0_14] : memref<1x16xf32, #tpu.memory_space<vmem>>, vector<1x16xf32>
    %50 = arith.mulf %48, %49 : vector<1x16xf32>
    %c0_15 = arith.constant 0 : index
    %c0_16 = arith.constant 0 : index
    %51 = vector.load %arg4[%c0_15, %c0_16] : memref<1x16xf32, #tpu.memory_space<vmem>>, vector<1x16xf32>
    %52 = arith.mulf %14, %50 : vector<1x16xf32>
    %53 = arith.subf %51, %52 : vector<1x16xf32>
    %54 = vector.extract_strided_slice %3 {offsets = [0, 0], sizes = [16, 16], strides = [1, 1]} : vector<16x64xf32> to vector<16x16xf32>
    %55 = vector.broadcast %50 : vector<1x16xf32> to vector<16x16xf32>
    %56 = arith.mulf %54, %55 : vector<16x16xf32>
    %57 = vector.broadcast %53 : vector<1x16xf32> to vector<16x16xf32>
    %58 = arith.addf %56, %57 : vector<16x16xf32>
    %cst_17 = arith.constant 0.000000e+00 : f32
    %59 = vector.broadcast %cst_17 : f32 to vector<16x16xf32>
    %60 = arith.maximumf %58, %59 : vector<16x16xf32>
    %61 = arith.truncf %60 : vector<16x16xf32> to vector<16x16xbf16>
    %c0_18 = arith.constant 0 : index
    %c0_19 = arith.constant 0 : index
    %c0_20 = arith.constant 0 : index
    %62 = vector.load %arg5[%c0_18, %c0_19, %c0_20] : memref<1x16x64xbf16, #tpu.memory_space<vmem>>, vector<1x16x16xbf16>
    %63 = vector.shape_cast %62 : vector<1x16x16xbf16> to vector<16x16xbf16>
    %64 = vector.shape_cast %61 : vector<16x16xbf16> to vector<1x16x16xbf16>
    tpu.vector_store %arg5[%c0_18, %c0_19, %c0_20], %64 {strides = array<i32>} : memref<1x16x64xbf16, #tpu.memory_space<vmem>>, vector<1x16x16xbf16>,
    %65 = vector.extract_strided_slice %3 {offsets = [0, 16], sizes = [16, 16], strides = [1, 1]} : vector<16x64xf32> to vector<16x16xf32>
    %66 = vector.broadcast %50 : vector<1x16xf32> to vector<16x16xf32>
    %67 = arith.mulf %65, %66 : vector<16x16xf32>
    %68 = vector.broadcast %53 : vector<1x16xf32> to vector<16x16xf32>
    %69 = arith.addf %67, %68 : vector<16x16xf32>
    %cst_21 = arith.constant 0.000000e+00 : f32
    %70 = vector.broadcast %cst_21 : f32 to vector<16x16xf32>
    %71 = arith.maximumf %69, %70 : vector<16x16xf32>
    %72 = arith.truncf %71 : vector<16x16xf32> to vector<16x16xbf16>
    %c0_22 = arith.constant 0 : index
    %c0_23 = arith.constant 0 : index
    %c16 = arith.constant 16 : index
    %73 = vector.load %arg5[%c0_22, %c0_23, %c16] : memref<1x16x64xbf16, #tpu.memory_space<vmem>>, vector<1x16x16xbf16>
    %74 = vector.shape_cast %73 : vector<1x16x16xbf16> to vector<16x16xbf16>
    %75 = vector.shape_cast %72 : vector<16x16xbf16> to vector<1x16x16xbf16>
    tpu.vector_store %arg5[%c0_22, %c0_23, %c16], %75 {strides = array<i32>} : memref<1x16x64xbf16, #tpu.memory_space<vmem>>, vector<1x16x16xbf16>,
    %76 = vector.extract_strided_slice %3 {offsets = [0, 32], sizes = [16, 16], strides = [1, 1]} : vector<16x64xf32> to vector<16x16xf32>
    %77 = vector.broadcast %50 : vector<1x16xf32> to vector<16x16xf32>
    %78 = arith.mulf %76, %77 : vector<16x16xf32>
    %79 = vector.broadcast %53 : vector<1x16xf32> to vector<16x16xf32>
    %80 = arith.addf %78, %79 : vector<16x16xf32>
    %cst_24 = arith.constant 0.000000e+00 : f32
    %81 = vector.broadcast %cst_24 : f32 to vector<16x16xf32>
    %82 = arith.maximumf %80, %81 : vector<16x16xf32>
    %83 = arith.truncf %82 : vector<16x16xf32> to vector<16x16xbf16>
    %c0_25 = arith.constant 0 : index
    %c0_26 = arith.constant 0 : index
    %c32 = arith.constant 32 : index
    %84 = vector.load %arg5[%c0_25, %c0_26, %c32] : memref<1x16x64xbf16, #tpu.memory_space<vmem>>, vector<1x16x16xbf16>
    %85 = vector.shape_cast %84 : vector<1x16x16xbf16> to vector<16x16xbf16>
    %86 = vector.shape_cast %83 : vector<16x16xbf16> to vector<1x16x16xbf16>
    tpu.vector_store %arg5[%c0_25, %c0_26, %c32], %86 {strides = array<i32>} : memref<1x16x64xbf16, #tpu.memory_space<vmem>>, vector<1x16x16xbf16>,
    %87 = vector.extract_strided_slice %3 {offsets = [0, 48], sizes = [16, 16], strides = [1, 1]} : vector<16x64xf32> to vector<16x16xf32>
    %88 = vector.broadcast %50 : vector<1x16xf32> to vector<16x16xf32>
    %89 = arith.mulf %87, %88 : vector<16x16xf32>
    %90 = vector.broadcast %53 : vector<1x16xf32> to vector<16x16xf32>
    %91 = arith.addf %89, %90 : vector<16x16xf32>
    %cst_27 = arith.constant 0.000000e+00 : f32
    %92 = vector.broadcast %cst_27 : f32 to vector<16x16xf32>
    %93 = arith.maximumf %91, %92 : vector<16x16xf32>
    %94 = arith.truncf %93 : vector<16x16xf32> to vector<16x16xbf16>
    %c0_28 = arith.constant 0 : index
    %c0_29 = arith.constant 0 : index
    %c48 = arith.constant 48 : index
    %95 = vector.load %arg5[%c0_28, %c0_29, %c48] : memref<1x16x64xbf16, #tpu.memory_space<vmem>>, vector<1x16x16xbf16>
    %96 = vector.shape_cast %95 : vector<1x16x16xbf16> to vector<16x16xbf16>
    %97 = vector.shape_cast %94 : vector<16x16xbf16> to vector<1x16x16xbf16>
    tpu.vector_store %arg5[%c0_28, %c0_29, %c48], %97 {strides = array<i32>} : memref<1x16x64xbf16, #tpu.memory_space<vmem>>, vector<1x16x16xbf16>,
    return
  }
  func.func @transform_0(%arg0: i32) -> (i32, i32, i32) {
    %c0_i32 = arith.constant 0 : i32
    %c0_i32_0 = arith.constant 0 : i32
    %c0_i32_1 = arith.constant 0 : i32
    return %arg0, %c0_i32, %c0_i32_0 : i32, i32, i32
  }
  func.func @transform_1(%arg0: i32) -> (i32, i32) {
    %c0_i32 = arith.constant 0 : i32
    %c0_i32_0 = arith.constant 0 : i32
    %c0_i32_1 = arith.constant 0 : i32
    return %c0_i32, %c0_i32_0 : i32, i32
  }
  func.func @transform_2(%arg0: i32) -> (i32, i32) {
    %c0_i32 = arith.constant 0 : i32
    %c0_i32_0 = arith.constant 0 : i32
    %c0_i32_1 = arith.constant 0 : i32
    return %c0_i32, %c0_i32_0 : i32, i32
  }
  func.func @transform_3(%arg0: i32) -> (i32, i32) {
    %c0_i32 = arith.constant 0 : i32
    %c0_i32_0 = arith.constant 0 : i32
    %c0_i32_1 = arith.constant 0 : i32
    return %c0_i32, %c0_i32_0 : i32, i32
  }
  func.func @transform_4(%arg0: i32) -> (i32, i32, i32) {
    %c0_i32 = arith.constant 0 : i32
    %c0_i32_0 = arith.constant 0 : i32
    %c0_i32_1 = arith.constant 0 : i32
    return %arg0, %c0_i32, %c0_i32_0 : i32, i32, i32
  }
}

module attributes {stable_mosaic.version = 11 : i64} {
  func.func @kernel(%arg0: i32, %arg1: memref<1x64x144xbf16, #tpu.memory_space<vmem>>, %arg2: memref<144x32xbf16, #tpu.memory_space<vmem>>, %arg3: memref<1x8xf32, #tpu.memory_space<vmem>>, %arg4: memref<1x8xf32, #tpu.memory_space<vmem>>, %arg5: memref<1x64x32xbf16, #tpu.memory_space<vmem>>) attributes {dimension_semantics = [#tpu.dimension_semantics<parallel>], iteration_bounds = array<i64: 2>, scalar_prefetch = 0 : i64, scratch_operands = 0 : i64, tpu.core_type = #tpu.core_type<tc>, window_params = [{transform_indices = @transform_0, window_bounds = array<i64: 1, 64, 144>}, {pipeline_mode = #tpu.pipeline_mode<synchronous>, transform_indices = @transform_1, window_bounds = array<i64: 144, 32>}, {pipeline_mode = #tpu.pipeline_mode<synchronous>, transform_indices = @transform_2, window_bounds = array<i64: 1, 8>}, {pipeline_mode = #tpu.pipeline_mode<synchronous>, transform_indices = @transform_3, window_bounds = array<i64: 1, 8>}, {transform_indices = @transform_4, window_bounds = array<i64: 1, 64, 32>}]} {
    %c0 = arith.constant 0 : index
    %c0_0 = arith.constant 0 : index
    %c0_1 = arith.constant 0 : index
    %0 = vector.load %arg1[%c0, %c0_0, %c0_1] : memref<1x64x144xbf16, #tpu.memory_space<vmem>>, vector<1x64x144xbf16>
    %1 = vector.shape_cast %0 : vector<1x64x144xbf16> to vector<64x144xbf16>
    %c0_2 = arith.constant 0 : index
    %c0_3 = arith.constant 0 : index
    %2 = vector.load %arg2[%c0_2, %c0_3] : memref<144x32xbf16, #tpu.memory_space<vmem>>, vector<144x32xbf16>
    %cst = arith.constant dense<0.000000e+00> : vector<64x32xf32>
    %3 = tpu.matmul %1, %2, %cst {dimension_numbers = #tpu.dot_dimension_numbers<[1], [0], [0], [1], [0, 0, 1, 1], [], []>} : vector<64x144xbf16>, vector<144x32xbf16>, vector<64x32xf32> -> vector<64x32xf32>
    %cst_4 = arith.constant dense<0.000000e+00> : vector<32xf32>
    %4 = vector.multi_reduction <add>, %3, %cst_4 [0] : vector<64x32xf32> to vector<32xf32>
    %5 = vector.shape_cast %4 : vector<32xf32> to vector<1x32xf32>
    %6 = vector.extract_strided_slice %5 {offsets = [0, 0], sizes = [1, 8], strides = [1, 1]} : vector<1x32xf32> to vector<1x8xf32>
    %7 = vector.extract_strided_slice %5 {offsets = [0, 8], sizes = [1, 8], strides = [1, 1]} : vector<1x32xf32> to vector<1x8xf32>
    %8 = arith.addf %6, %7 : vector<1x8xf32>
    %9 = vector.extract_strided_slice %5 {offsets = [0, 16], sizes = [1, 8], strides = [1, 1]} : vector<1x32xf32> to vector<1x8xf32>
    %10 = arith.addf %8, %9 : vector<1x8xf32>
    %11 = vector.extract_strided_slice %5 {offsets = [0, 24], sizes = [1, 8], strides = [1, 1]} : vector<1x32xf32> to vector<1x8xf32>
    %12 = arith.addf %10, %11 : vector<1x8xf32>
    %cst_5 = arith.constant 3.906250e-03 : f32
    %13 = vector.broadcast %cst_5 : f32 to vector<1x8xf32>
    %14 = arith.mulf %12, %13 : vector<1x8xf32>
    %cst_6 = arith.constant 0.000000e+00 : f32
    %15 = vector.broadcast %cst_6 : f32 to vector<1x8xf32>
    %16 = vector.extract_strided_slice %3 {offsets = [0, 0], sizes = [64, 8], strides = [1, 1]} : vector<64x32xf32> to vector<64x8xf32>
    %17 = vector.broadcast %14 : vector<1x8xf32> to vector<64x8xf32>
    %18 = arith.subf %16, %17 : vector<64x8xf32>
    %19 = arith.mulf %18, %18 : vector<64x8xf32>
    %cst_7 = arith.constant dense<0.000000e+00> : vector<8xf32>
    %20 = vector.multi_reduction <add>, %19, %cst_7 [0] : vector<64x8xf32> to vector<8xf32>
    %21 = vector.shape_cast %20 : vector<8xf32> to vector<1x8xf32>
    %22 = arith.addf %15, %21 : vector<1x8xf32>
    %23 = vector.extract_strided_slice %3 {offsets = [0, 8], sizes = [64, 8], strides = [1, 1]} : vector<64x32xf32> to vector<64x8xf32>
    %24 = vector.broadcast %14 : vector<1x8xf32> to vector<64x8xf32>
    %25 = arith.subf %23, %24 : vector<64x8xf32>
    %26 = arith.mulf %25, %25 : vector<64x8xf32>
    %cst_8 = arith.constant dense<0.000000e+00> : vector<8xf32>
    %27 = vector.multi_reduction <add>, %26, %cst_8 [0] : vector<64x8xf32> to vector<8xf32>
    %28 = vector.shape_cast %27 : vector<8xf32> to vector<1x8xf32>
    %29 = arith.addf %22, %28 : vector<1x8xf32>
    %30 = vector.extract_strided_slice %3 {offsets = [0, 16], sizes = [64, 8], strides = [1, 1]} : vector<64x32xf32> to vector<64x8xf32>
    %31 = vector.broadcast %14 : vector<1x8xf32> to vector<64x8xf32>
    %32 = arith.subf %30, %31 : vector<64x8xf32>
    %33 = arith.mulf %32, %32 : vector<64x8xf32>
    %cst_9 = arith.constant dense<0.000000e+00> : vector<8xf32>
    %34 = vector.multi_reduction <add>, %33, %cst_9 [0] : vector<64x8xf32> to vector<8xf32>
    %35 = vector.shape_cast %34 : vector<8xf32> to vector<1x8xf32>
    %36 = arith.addf %29, %35 : vector<1x8xf32>
    %37 = vector.extract_strided_slice %3 {offsets = [0, 24], sizes = [64, 8], strides = [1, 1]} : vector<64x32xf32> to vector<64x8xf32>
    %38 = vector.broadcast %14 : vector<1x8xf32> to vector<64x8xf32>
    %39 = arith.subf %37, %38 : vector<64x8xf32>
    %40 = arith.mulf %39, %39 : vector<64x8xf32>
    %cst_10 = arith.constant dense<0.000000e+00> : vector<8xf32>
    %41 = vector.multi_reduction <add>, %40, %cst_10 [0] : vector<64x8xf32> to vector<8xf32>
    %42 = vector.shape_cast %41 : vector<8xf32> to vector<1x8xf32>
    %43 = arith.addf %36, %42 : vector<1x8xf32>
    %cst_11 = arith.constant 3.906250e-03 : f32
    %44 = vector.broadcast %cst_11 : f32 to vector<1x8xf32>
    %45 = arith.mulf %43, %44 : vector<1x8xf32>
    %cst_12 = arith.constant 9.99999974E-6 : f32
    %46 = vector.broadcast %cst_12 : f32 to vector<1x8xf32>
    %47 = arith.addf %45, %46 : vector<1x8xf32>
    %48 = math.rsqrt %47 : vector<1x8xf32>
    %c0_13 = arith.constant 0 : index
    %c0_14 = arith.constant 0 : index
    %49 = vector.load %arg3[%c0_13, %c0_14] : memref<1x8xf32, #tpu.memory_space<vmem>>, vector<1x8xf32>
    %50 = arith.mulf %48, %49 : vector<1x8xf32>
    %c0_15 = arith.constant 0 : index
    %c0_16 = arith.constant 0 : index
    %51 = vector.load %arg4[%c0_15, %c0_16] : memref<1x8xf32, #tpu.memory_space<vmem>>, vector<1x8xf32>
    %52 = arith.mulf %14, %50 : vector<1x8xf32>
    %53 = arith.subf %51, %52 : vector<1x8xf32>
    %54 = vector.extract_strided_slice %3 {offsets = [0, 0], sizes = [64, 8], strides = [1, 1]} : vector<64x32xf32> to vector<64x8xf32>
    %55 = vector.broadcast %50 : vector<1x8xf32> to vector<64x8xf32>
    %56 = arith.mulf %54, %55 : vector<64x8xf32>
    %57 = vector.broadcast %53 : vector<1x8xf32> to vector<64x8xf32>
    %58 = arith.addf %56, %57 : vector<64x8xf32>
    %cst_17 = arith.constant 0.000000e+00 : f32
    %59 = vector.broadcast %cst_17 : f32 to vector<64x8xf32>
    %60 = arith.maximumf %58, %59 : vector<64x8xf32>
    %61 = arith.truncf %60 : vector<64x8xf32> to vector<64x8xbf16>
    %c0_18 = arith.constant 0 : index
    %c0_19 = arith.constant 0 : index
    %c0_20 = arith.constant 0 : index
    %62 = vector.load %arg5[%c0_18, %c0_19, %c0_20] : memref<1x64x32xbf16, #tpu.memory_space<vmem>>, vector<1x64x8xbf16>
    %63 = vector.shape_cast %62 : vector<1x64x8xbf16> to vector<64x8xbf16>
    %64 = vector.shape_cast %61 : vector<64x8xbf16> to vector<1x64x8xbf16>
    tpu.vector_store %arg5[%c0_18, %c0_19, %c0_20], %64 {strides = array<i32>} : memref<1x64x32xbf16, #tpu.memory_space<vmem>>, vector<1x64x8xbf16>,
    %65 = vector.extract_strided_slice %3 {offsets = [0, 8], sizes = [64, 8], strides = [1, 1]} : vector<64x32xf32> to vector<64x8xf32>
    %66 = vector.broadcast %50 : vector<1x8xf32> to vector<64x8xf32>
    %67 = arith.mulf %65, %66 : vector<64x8xf32>
    %68 = vector.broadcast %53 : vector<1x8xf32> to vector<64x8xf32>
    %69 = arith.addf %67, %68 : vector<64x8xf32>
    %cst_21 = arith.constant 0.000000e+00 : f32
    %70 = vector.broadcast %cst_21 : f32 to vector<64x8xf32>
    %71 = arith.maximumf %69, %70 : vector<64x8xf32>
    %72 = arith.truncf %71 : vector<64x8xf32> to vector<64x8xbf16>
    %c0_22 = arith.constant 0 : index
    %c0_23 = arith.constant 0 : index
    %c8 = arith.constant 8 : index
    %73 = vector.load %arg5[%c0_22, %c0_23, %c8] : memref<1x64x32xbf16, #tpu.memory_space<vmem>>, vector<1x64x8xbf16>
    %74 = vector.shape_cast %73 : vector<1x64x8xbf16> to vector<64x8xbf16>
    %75 = vector.shape_cast %72 : vector<64x8xbf16> to vector<1x64x8xbf16>
    tpu.vector_store %arg5[%c0_22, %c0_23, %c8], %75 {strides = array<i32>} : memref<1x64x32xbf16, #tpu.memory_space<vmem>>, vector<1x64x8xbf16>,
    %76 = vector.extract_strided_slice %3 {offsets = [0, 16], sizes = [64, 8], strides = [1, 1]} : vector<64x32xf32> to vector<64x8xf32>
    %77 = vector.broadcast %50 : vector<1x8xf32> to vector<64x8xf32>
    %78 = arith.mulf %76, %77 : vector<64x8xf32>
    %79 = vector.broadcast %53 : vector<1x8xf32> to vector<64x8xf32>
    %80 = arith.addf %78, %79 : vector<64x8xf32>
    %cst_24 = arith.constant 0.000000e+00 : f32
    %81 = vector.broadcast %cst_24 : f32 to vector<64x8xf32>
    %82 = arith.maximumf %80, %81 : vector<64x8xf32>
    %83 = arith.truncf %82 : vector<64x8xf32> to vector<64x8xbf16>
    %c0_25 = arith.constant 0 : index
    %c0_26 = arith.constant 0 : index
    %c16 = arith.constant 16 : index
    %84 = vector.load %arg5[%c0_25, %c0_26, %c16] : memref<1x64x32xbf16, #tpu.memory_space<vmem>>, vector<1x64x8xbf16>
    %85 = vector.shape_cast %84 : vector<1x64x8xbf16> to vector<64x8xbf16>
    %86 = vector.shape_cast %83 : vector<64x8xbf16> to vector<1x64x8xbf16>
    tpu.vector_store %arg5[%c0_25, %c0_26, %c16], %86 {strides = array<i32>} : memref<1x64x32xbf16, #tpu.memory_space<vmem>>, vector<1x64x8xbf16>,
    %87 = vector.extract_strided_slice %3 {offsets = [0, 24], sizes = [64, 8], strides = [1, 1]} : vector<64x32xf32> to vector<64x8xf32>
    %88 = vector.broadcast %50 : vector<1x8xf32> to vector<64x8xf32>
    %89 = arith.mulf %87, %88 : vector<64x8xf32>
    %90 = vector.broadcast %53 : vector<1x8xf32> to vector<64x8xf32>
    %91 = arith.addf %89, %90 : vector<64x8xf32>
    %cst_27 = arith.constant 0.000000e+00 : f32
    %92 = vector.broadcast %cst_27 : f32 to vector<64x8xf32>
    %93 = arith.maximumf %91, %92 : vector<64x8xf32>
    %94 = arith.truncf %93 : vector<64x8xf32> to vector<64x8xbf16>
    %c0_28 = arith.constant 0 : index
    %c0_29 = arith.constant 0 : index
    %c24 = arith.constant 24 : index
    %95 = vector.load %arg5[%c0_28, %c0_29, %c24] : memref<1x64x32xbf16, #tpu.memory_space<vmem>>, vector<1x64x8xbf16>
    %96 = vector.shape_cast %95 : vector<1x64x8xbf16> to vector<64x8xbf16>
    %97 = vector.shape_cast %94 : vector<64x8xbf16> to vector<1x64x8xbf16>
    tpu.vector_store %arg5[%c0_28, %c0_29, %c24], %97 {strides = array<i32>} : memref<1x64x32xbf16, #tpu.memory_space<vmem>>, vector<1x64x8xbf16>,
    return
  }
  func.func @transform_0(%arg0: i32) -> (i32, i32, i32) {
    %c0_i32 = arith.constant 0 : i32
    %c0_i32_0 = arith.constant 0 : i32
    %c0_i32_1 = arith.constant 0 : i32
    return %arg0, %c0_i32, %c0_i32_0 : i32, i32, i32
  }
  func.func @transform_1(%arg0: i32) -> (i32, i32) {
    %c0_i32 = arith.constant 0 : i32
    %c0_i32_0 = arith.constant 0 : i32
    %c0_i32_1 = arith.constant 0 : i32
    return %c0_i32, %c0_i32_0 : i32, i32
  }
  func.func @transform_2(%arg0: i32) -> (i32, i32) {
    %c0_i32 = arith.constant 0 : i32
    %c0_i32_0 = arith.constant 0 : i32
    %c0_i32_1 = arith.constant 0 : i32
    return %c0_i32, %c0_i32_0 : i32, i32
  }
  func.func @transform_3(%arg0: i32) -> (i32, i32) {
    %c0_i32 = arith.constant 0 : i32
    %c0_i32_0 = arith.constant 0 : i32
    %c0_i32_1 = arith.constant 0 : i32
    return %c0_i32, %c0_i32_0 : i32, i32
  }
  func.func @transform_4(%arg0: i32) -> (i32, i32, i32) {
    %c0_i32 = arith.constant 0 : i32
    %c0_i32_0 = arith.constant 0 : i32
    %c0_i32_1 = arith.constant 0 : i32
    return %arg0, %c0_i32, %c0_i32_0 : i32, i32, i32
  }
}

module attributes {stable_mosaic.version = 11 : i64} {
  func.func @kernel(%arg0: i32, %arg1: memref<1x256x392xbf16, #tpu.memory_space<vmem>>, %arg2: memref<392x3xbf16, #tpu.memory_space<vmem>>, %arg3: memref<1x256x3xf32, #tpu.memory_space<vmem>>) attributes {dimension_semantics = [#tpu.dimension_semantics<parallel>], iteration_bounds = array<i64: 2>, scalar_prefetch = 0 : i64, scratch_operands = 0 : i64, tpu.core_type = #tpu.core_type<tc>, window_params = [{transform_indices = @transform_0, window_bounds = array<i64: 1, 256, 392>}, {pipeline_mode = #tpu.pipeline_mode<synchronous>, transform_indices = @transform_1, window_bounds = array<i64: 392, 3>}, {transform_indices = @transform_2, window_bounds = array<i64: 1, 256, 3>}]} {
    %c0 = arith.constant 0 : index
    %c0_0 = arith.constant 0 : index
    %c0_1 = arith.constant 0 : index
    %0 = vector.load %arg1[%c0, %c0_0, %c0_1] : memref<1x256x392xbf16, #tpu.memory_space<vmem>>, vector<1x256x392xbf16>
    %1 = vector.shape_cast %0 : vector<1x256x392xbf16> to vector<256x392xbf16>
    %c0_2 = arith.constant 0 : index
    %c0_3 = arith.constant 0 : index
    %2 = vector.load %arg2[%c0_2, %c0_3] : memref<392x3xbf16, #tpu.memory_space<vmem>>, vector<392x3xbf16>
    %cst = arith.constant dense<0.000000e+00> : vector<256x3xf32>
    %3 = tpu.matmul %1, %2, %cst {dimension_numbers = #tpu.dot_dimension_numbers<[1], [0], [0], [1], [0, 0, 1, 1], [], []>} : vector<256x392xbf16>, vector<392x3xbf16>, vector<256x3xf32> -> vector<256x3xf32>
    %4 = math.tanh %3 : vector<256x3xf32>
    %c0_4 = arith.constant 0 : index
    %c0_5 = arith.constant 0 : index
    %c0_6 = arith.constant 0 : index
    %5 = vector.load %arg3[%c0_4, %c0_5, %c0_6] : memref<1x256x3xf32, #tpu.memory_space<vmem>>, vector<1x256x3xf32>
    %6 = vector.shape_cast %5 : vector<1x256x3xf32> to vector<256x3xf32>
    %7 = vector.shape_cast %4 : vector<256x3xf32> to vector<1x256x3xf32>
    tpu.vector_store %arg3[%c0_4, %c0_5, %c0_6], %7 {strides = array<i32>} : memref<1x256x3xf32, #tpu.memory_space<vmem>>, vector<1x256x3xf32>,
    return
  }
  func.func @transform_0(%arg0: i32) -> (i32, i32, i32) {
    %c0_i32 = arith.constant 0 : i32
    %c0_i32_0 = arith.constant 0 : i32
    %c0_i32_1 = arith.constant 0 : i32
    return %arg0, %c0_i32, %c0_i32_0 : i32, i32, i32
  }
  func.func @transform_1(%arg0: i32) -> (i32, i32) {
    %c0_i32 = arith.constant 0 : i32
    %c0_i32_0 = arith.constant 0 : i32
    %c0_i32_1 = arith.constant 0 : i32
    return %c0_i32, %c0_i32_0 : i32, i32
  }
  func.func @transform_2(%arg0: i32) -> (i32, i32, i32) {
    %c0_i32 = arith.constant 0 : i32
    %c0_i32_0 = arith.constant 0 : i32
    %c0_i32_1 = arith.constant 0 : i32
    return %arg0, %c0_i32, %c0_i32_0 : i32, i32, i32
  }
}

</mosaic_0001>

<llo_original>
// kernel: _lambda_.12
$region0: #{_lambda_.12}
  #allocation0 [shape = 'u32[]', space=smem, size = 0x4, offset = 0x4, fixed_abs, tag = 'smem constant byte address 0x4 - core index']
  #allocation1 [shape = 'u32[144,128]{1,0:T(1,128)}', space=vmem, size = 0x12000, scoped, tag = 'internal scratch']
  %s0 = inlined_call_operand.hbm [shape: bf16[2,256,294], index: 0, kind: input, shape index: {}]
  %s1 = inlined_call_operand.hbm [shape: bf16[294,8], index: 1, kind: input, shape index: {}]
  %s2 = inlined_call_operand.hbm [shape: f32[1,8], index: 2, kind: input, shape index: {}]
  %s3 = inlined_call_operand.hbm [shape: f32[1,8], index: 3, kind: input, shape index: {}]
  %s4 = inlined_call_operand.hbm [shape: bf16[2,256,8], index: 4, kind: output, shape index: {}]
  %s5 = sld [smem:[#allocation0]]
  $region65: #{_lambda_.12} parent=0
    _
  %s7 = ssub.s32 1, %s5
  %s8 = scalar_select 0, %s7, %s5
  $region1: #{_lambda_.12} parent=0
    #allocation2 [shape = 'u8[393216]{0}', space=vmem, size = 0x60000, scoped, tag = 'input window, operand 0']
    #allocation3 [shape = 's32[2]{0}', space=sflag, size = 0x8, scoped, tag = 'scoped memory for _lambda_.12']
    #allocation4 [shape = 's32[2]{0}', space=sflag, size = 0x8, scoped, tag = 'scoped memory for _lambda_.12']
    #allocation5 [shape = 'u8[75776]{0}', space=vmem, size = 0x12800, scoped, tag = 'input window, operand 1, single buffered']
    #allocation6 [shape = 's32[1]{0}', space=sflag, size = 0x4, scoped, tag = 'scoped memory for _lambda_.12']
    #allocation7 [shape = 'u8[512]{0}', space=vmem, size = 0x400, scoped, tag = 'input window, operand 2, single buffered']
    #allocation8 [shape = 'u8[512]{0}', space=vmem, size = 0x400, scoped, tag = 'input window, operand 3, single buffered']
    #allocation9 [shape = 's32[1]{0}', space=sflag, size = 0x4, scoped, tag = 'scoped memory for _lambda_.12']
    #allocation10 [shape = 'u8[131072]{0}', space=vmem, size = 0x20000, scoped, tag = 'output window, operand 0']
    %9 = vsyncpa [#allocation3], 0
    %s10 = scalar_lea.sflag [#allocation3], 1
    %11 = vsyncpa %s10, 0
    %12 = vsyncpa [#allocation6], 0
    %13 = vsyncpa [#allocation9], 0
    %14 = vsyncpa [#allocation4], 0
    %s15 = scalar_lea.sflag [#allocation4], 1
    %16 = vsyncpa %s15, 0
    loop: start=0, step=1, limit=4
    $region2: #{_lambda_.12} parent=1 // loop_pre_header
      _
    $region3: #{_lambda_.12} parent=1 // loop_header
      %s18 = sphi 0, %s22
      %p19 = scmp.ge.s32.totalorder %s18, 4
      %s28 = sphi 0, %s30
      %s31 = sphi 0, %s28
      %s32 = sphi 0, %s31
      %s48 = sphi 0, %s32
      %s52 = sphi 0, %s52
      %s54 = sphi 0, %s52
      %s55 = sphi 0, %s54
      %s69 = sphi 0, %s55
      %s73 = sphi 0, %s73
      %s75 = sphi 0, %s73
      %s76 = sphi 0, %s75
      %s90 = sphi 0, %s76
      %s94 = sphi 0, %s94
      %s96 = sphi 0, %s94
      %s97 = sphi 0, %s96
      %s111 = sphi 0, %s97
      %s117 = sphi 0, %s119
      %s120 = sphi 0, %s117
      %s121 = sphi 0, %s120
      %s137 = sphi 0, %s121
    $region4: #{_lambda_.12} parent=1 // loop_header_branch
      %21 = sbr.rel (%p19) target = $region8
    $region5: #{_lambda_.12} parent=1 // loop_body
      %s23 = ssub.s32 %s18, 1
      %s24 = ssub.s32 %s18, 2
      %s25 = sadd.s32 %s18, 1
      %s26 = ssub.s32 %s18, %s25
      %p27 = scmp.eq.s32.totalorder %s26, 0
      %s29 = sadd.s32 %s28, 1
      %s30 = scalar_select %p27, %s28, %s29
      %p33 = pneg %p27
      %p34 = scmp.eq.s32.totalorder %s18, 1
      %p35 = por %p33, %p34
      %p36 = scmp.ne.s32.totalorder %s28, %s31
      %p37 = scmp.eq.s32.totalorder %s18, 0
      %p38 = por %p36, %p37
      %p39 = scmp.ne.s32.totalorder %s28, %s31
      %p40 = scmp.eq.s32.totalorder %s23, 1
      %p41 = por %p39, %p40
      %p42 = scmp.ne.s32.totalorder %s31, %s32
      %p43 = scmp.eq.s32.totalorder %s23, 0
      %p44 = por %p42, %p43
      %p45 = scmp.ne.s32.totalorder %s31, %s32
      %p46 = scmp.eq.s32.totalorder %s24, 1
      %p47 = por %p45, %p46
      %p49 = scmp.ne.s32.totalorder %s32, %s48
      %p50 = scmp.eq.s32.totalorder %s24, 0
      %p51 = por %p49, %p50
      %s53 = sadd.s32 %s52, 1
      %p56 = scmp.eq.s32.totalorder %s18, 1
      %p57 = scmp.ne.s32.totalorder %s52, %s54
      %p58 = scmp.eq.s32.totalorder %s18, 0
      %p59 = por %p57, %p58
      %p60 = scmp.ne.s32.totalorder %s52, %s54
      %p61 = scmp.eq.s32.totalorder %s23, 1
      %p62 = por %p60, %p61
      %p63 = scmp.ne.s32.totalorder %s54, %s55
      %p64 = scmp.eq.s32.totalorder %s23, 0
      %p65 = por %p63, %p64
      %p66 = scmp.ne.s32.totalorder %s54, %s55
      %p67 = scmp.eq.s32.totalorder %s24, 1
      %p68 = por %p66, %p67
      %p70 = scmp.ne.s32.totalorder %s55, %s69
      %p71 = scmp.eq.s32.totalorder %s24, 0
      %p72 = por %p70, %p71
      %s74 = sadd.s32 %s73, 1
      %p77 = scmp.eq.s32.totalorder %s18, 1
      %p78 = scmp.ne.s32.totalorder %s73, %s75
      %p79 = scmp.eq.s32.totalorder %s18, 0
      %p80 = por %p78, %p79
      %p81 = scmp.ne.s32.totalorder %s73, %s75
      %p82 = scmp.eq.s32.totalorder %s23, 1
      %p83 = por %p81, %p82
      %p84 = scmp.ne.s32.totalorder %s75, %s76
      %p85 = scmp.eq.s32.totalorder %s23, 0
      %p86 = por %p84, %p85
      %p87 = scmp.ne.s32.totalorder %s75, %s76
      %p88 = scmp.eq.s32.totalorder %s24, 1
      %p89 = por %p87, %p88
      %p91 = scmp.ne.s32.totalorder %s76, %s90
      %p92 = scmp.eq.s32.totalorder %s24, 0
      %p93 = por %p91, %p92
      %s95 = sadd.s32 %s94, 1
      %p98 = scmp.eq.s32.totalorder %s18, 1
      %p99 = scmp.ne.s32.totalorder %s94, %s96
      %p100 = scmp.eq.s32.totalorder %s18, 0
      %p101 = por %p99, %p100
      %p102 = scmp.ne.s32.totalorder %s94, %s96
      %p103 = scmp.eq.s32.totalorder %s23, 1
      %p104 = por %p102, %p103
      %p105 = scmp.ne.s32.totalorder %s96, %s97
      %p106 = scmp.eq.s32.totalorder %s23, 0
      %p107 = por %p105, %p106
      %p108 = scmp.ne.s32.totalorder %s96, %s97
      %p109 = scmp.eq.s32.totalorder %s24, 1
      %p110 = por %p108, %p109
      %p112 = scmp.ne.s32.totalorder %s97, %s111
      %p113 = scmp.eq.s32.totalorder %s24, 0
      %p114 = por %p112, %p113
      %s115 = ssub.s32 %s18, %s25
      %p116 = scmp.eq.s32.totalorder %s115, 0
      %s118 = sadd.s32 %s117, 1
      %s119 = scalar_select %p116, %s117, %s118
      %p122 = pneg %p116
      %p123 = scmp.eq.s32.totalorder %s18, 1
      %p124 = por %p122, %p123
      %p125 = scmp.ne.s32.totalorder %s117, %s120
      %p126 = scmp.eq.s32.totalorder %s18, 0
      %p127 = por %p125, %p126
      %p128 = scmp.ne.s32.totalorder %s117, %s120
      %p129 = scmp.eq.s32.totalorder %s23, 1
      %p130 = por %p128, %p129
      %p131 = scmp.ne.s32.totalorder %s120, %s121
      %p132 = scmp.eq.s32.totalorder %s23, 0
      %p133 = por %p131, %p132
      %p134 = scmp.ne.s32.totalorder %s120, %s121
      %p135 = scmp.eq.s32.totalorder %s24, 1
      %p136 = por %p134, %p135
      %p138 = scmp.ne.s32.totalorder %s121, %s137
      %p139 = scmp.eq.s32.totalorder %s24, 0
      %p140 = por %p138, %p139
      %p141 = scmp.le.s32.totalorder 1, %s18
      %p142 = scmp.lt.s32.totalorder %s18, 3
      %p143 = pnand %p141, %p142
      %p144 = pneg %p143
      // Predicated region
      $region9: #{_lambda_.12} parent=5 // pred_check
        _
      $region10: #{_lambda_.12} parent=5 // pred_check_branch
        %146 = sbr.rel (%p143) target = $region12
      $region11: #{_lambda_.12} parent=5 // pred_region
        %s147 = ssub.s32 %s18, 1
        // Predicated region
        $region13: #{_lambda_.12} parent=11 // pred_check
          %p148 = pneg %p65
        $region14: #{_lambda_.12} parent=11 // pred_check_branch
          %150 = sbr.rel (%p148) target = $region16
        $region15: #{_lambda_.12} parent=11 // pred_region
          %s152 = ssub.s32 2368, 2368
          %153 = vsyncadd [#allocation6], %s152
          %s154 = sshll.u32 [#allocation5], 4
          %s155 = int_to_ptr.vmem [resolvable:$true] %s154
          %160 = dma.hbm_to_vmem [thread:$0]  %s1, 2368, %s155, [#allocation6], 64, 64, 4
        $region16: #{_lambda_.12} parent=11 // pred_fallthru
          _
        // Predicated region
        $region17: #{_lambda_.12} parent=11 // pred_check
          %p161 = pneg %p86
        $region18: #{_lambda_.12} parent=11 // pred_check_branch
          %163 = sbr.rel (%p161) target = $region20
        $region19: #{_lambda_.12} parent=11 // pred_region
          %s165 = ssub.s32 16, 16
          %166 = vsyncadd [#allocation6], %s165
          %s168 = sshll.u32 [#allocation7], 4
          %s169 = int_to_ptr.vmem [resolvable:$true] %s168
          %171 = dma.hbm_to_vmem [thread:$0]  %s2, 16, %s169, [#allocation6]
        $region20: #{_lambda_.12} parent=11 // pred_fallthru
          _
        // Predicated region
        $region21: #{_lambda_.12} parent=11 // pred_check
          %p172 = pneg %p107
        $region22: #{_lambda_.12} parent=11 // pred_check_branch
          %174 = sbr.rel (%p172) target = $region24
        $region23: #{_lambda_.12} parent=11 // pred_region
          %s176 = ssub.s32 16, 16
          %177 = vsyncadd [#allocation9], %s176
          %s179 = sshll.u32 [#allocation8], 4
          %s180 = int_to_ptr.vmem [resolvable:$true] %s179
          %182 = dma.hbm_to_vmem [thread:$0]  %s3, 16, %s180, [#allocation9]
        $region24: #{_lambda_.12} parent=11 // pred_fallthru
          _
      $region12: #{_lambda_.12} parent=5 // pred_fallthru
        _
      %p183 = scmp.lt.s32.totalorder %s18, 2
      // Predicated region
      $region25: #{_lambda_.12} parent=5 // pred_check
        %p184 = pneg %p183
      $region26: #{_lambda_.12} parent=5 // pred_check_branch
        %186 = sbr.rel (%p184) target = $region28
      $region27: #{_lambda_.12} parent=5 // pred_region
        // Predicated region
        $region29: #{_lambda_.12} parent=27 // pred_check
          %p187 = pneg %p38
        $region30: #{_lambda_.12} parent=27 // pred_check_branch
          %189 = sbr.rel (%p187) target = $region32
        $region31: #{_lambda_.12} parent=27 // pred_region
          %s190 = sand.u32 %s28, 1
          %s191 = scalar_lea.sflag [#allocation3], %s190
          %s192 = sand.u32 %s28, 1
          %s193 = smul.addr %s192, 384
          %s194 = scalar_lea.vmem [#allocation2], %s193
          %s196 = ssub.s32 6144, 6144
          %197 = vsyncadd %s191, %s196
          %s198 = smul.addr %s18, 96
          %s199 = smul.addr %s198, 64
          %s200 = scalar_lea.hbm %s0, %s199
          %s201 = sshll.u32 %s194, 4
          %s202 = int_to_ptr.vmem [resolvable:$true] %s201
          %207 = dma.hbm_to_vmem [thread:$0]  %s200, 6144, %s202, %s191, 192, 192, 12
        $region32: #{_lambda_.12} parent=27 // pred_fallthru
          _
      $region28: #{_lambda_.12} parent=5 // pred_fallthru
        _
      %p208 = scmp.le.s32.totalorder 1, %s18
      %p209 = scmp.lt.s32.totalorder %s18, 3
      %p210 = pnand %p208, %p209
      %p211 = pneg %p210
      // Predicated region
      $region33: #{_lambda_.12} parent=5 // pred_check
        _
      $region34: #{_lambda_.12} parent=5 // pred_check_branch
        %213 = sbr.rel (%p210) target = $region36
      $region35: #{_lambda_.12} parent=5 // pred_region
        %s214 = ssub.s32 %s18, 1
        %s215 = sand.u32 %s31, 1
        %s216 = scalar_lea.sflag [#allocation3], %s215
        %s217 = sand.u32 %s31, 1
        %s218 = smul.addr %s217, 384
        %s219 = scalar_lea.vmem [#allocation2], %s218
        // Predicated region
        $region37: #{_lambda_.12} parent=35 // pred_check
          %p220 = pneg %p44
        $region38: #{_lambda_.12} parent=35 // pred_check_branch
          %222 = sbr.rel (%p220) target = $region40
        $region39: #{_lambda_.12} parent=35 // pred_region
          %223 = dma.done %s216, 6144
        $region40: #{_lambda_.12} parent=35 // pred_fallthru
          _
        // Predicated region
        $region41: #{_lambda_.12} parent=35 // pred_check
          %p224 = pneg %p65
        $region42: #{_lambda_.12} parent=35 // pred_check_branch
          %226 = sbr.rel (%p224) target = $region44
        $region43: #{_lambda_.12} parent=35 // pred_region
          %227 = dma.done [#allocation6], 2368
        $region44: #{_lambda_.12} parent=35 // pred_fallthru
          _
        // Predicated region
        $region45: #{_lambda_.12} parent=35 // pred_check
          %p228 = pneg %p86
        $region46: #{_lambda_.12} parent=35 // pred_check_branch
          %230 = sbr.rel (%p228) target = $region48
        $region47: #{_lambda_.12} parent=35 // pred_region
          %231 = dma.done [#allocation6], 16
        $region48: #{_lambda_.12} parent=35 // pred_fallthru
          _
        // Predicated region
        $region49: #{_lambda_.12} parent=35 // pred_check
          %p232 = pneg %p107
        $region50: #{_lambda_.12} parent=35 // pred_check_branch
          %234 = sbr.rel (%p232) target = $region52
        $region51: #{_lambda_.12} parent=35 // pred_region
          %235 = dma.done [#allocation9], 16
        $region52: #{_lambda_.12} parent=35 // pred_fallthru
          _
        %s236 = sand.u32 %s31, 1
        %s237 = scalar_lea.sflag [#allocation3], %s236
        %s238 = sand.u32 %s31, 1
        %s239 = smul.addr %s238, 384
        %s240 = scalar_lea.vmem [#allocation2], %s239
        %p241 = pneg %p44
        %p242 = pneg %p41
        %p243 = pneg %p65
        %p244 = pneg %p62
        %p245 = pneg %p86
        %p246 = pneg %p83
        %p247 = pneg %p107
        %p248 = pneg %p104
        %p249 = pneg %p133
        %p250 = pneg %p130
        %s251 = sand.u32 %s120, 1
        %s252 = scalar_lea.sflag [#allocation4], %s251
        %s253 = sand.u32 %s120, 1
        %s254 = smul.addr %s253, 128
        %s255 = scalar_lea.vmem [#allocation10], %s254
        %v257 = vld [vmem:[%s219] sm:$0xff]
        %v258 = vld [vmem:[%s219 + $0x8] sm:$0xf]
        %v259 = vld [vmem:[%s219 + $0xc] sm:$0xff]
        %v260 = vld [vmem:[%s219 + $0x14] sm:$0xf]
        %v261 = vld [vmem:[%s219 + $0x18] sm:$0xff]
        %v262 = vld [vmem:[%s219 + $0x20] sm:$0xf]
        %v263 = vld [vmem:[%s219 + $0x24] sm:$0xff]
        %v264 = vld [vmem:[%s219 + $0x2c] sm:$0xf]
        %v265 = vld [vmem:[%s219 + $0x30] sm:$0xff]
        %v266 = vld [vmem:[%s219 + $0x38] sm:$0xf]
        %v267 = vld [vmem:[%s219 + $0x3c] sm:$0xff]
        %v268 = vld [vmem:[%s219 + $0x44] sm:$0xf]
        %v269 = vld [vmem:[%s219 + $0x48] sm:$0xff]
        %v270 = vld [vmem:[%s219 + $0x50] sm:$0xf]
        %v271 = vld [vmem:[%s219 + $0x54] sm:$0xff]
        %v272 = vld [vmem:[%s219 + $0x5c] sm:$0xf]
        %v273 = vld [vmem:[%s219 + $0x60] sm:$0xff]
        %v274 = vld [vmem:[%s219 + $0x68] sm:$0xf]
        %v275 = vld [vmem:[%s219 + $0x6c] sm:$0xff]
        %v276 = vld [vmem:[%s219 + $0x74] sm:$0xf]
        %v277 = vld [vmem:[%s219 + $0x78] sm:$0xff]
        %v278 = vld [vmem:[%s219 + $0x80] sm:$0xf]
        %v279 = vld [vmem:[%s219 + $0x84] sm:$0xff]
        %v280 = vld [vmem:[%s219 + $0x8c] sm:$0xf]
        %v281 = vld [vmem:[%s219 + $0x90] sm:$0xff]
        %v282 = vld [vmem:[%s219 + $0x98] sm:$0xf]
        %v283 = vld [vmem:[%s219 + $0x9c] sm:$0xff]
        %v284 = vld [vmem:[%s219 + $0xa4] sm:$0xf]
        %v285 = vld [vmem:[%s219 + $0xa8] sm:$0xff]
        %v286 = vld [vmem:[%s219 + $0xb0] sm:$0xf]
        %v287 = vld [vmem:[%s219 + $0xb4] sm:$0xff]
        %v288 = vld [vmem:[%s219 + $0xbc] sm:$0xf]
        %v289 = vld [vmem:[%s219 + $0xc0] sm:$0xff]
        %v290 = vld [vmem:[%s219 + $0xc8] sm:$0xf]
        %v291 = vld [vmem:[%s219 + $0xcc] sm:$0xff]
        %v292 = vld [vmem:[%s219 + $0xd4] sm:$0xf]
        %v293 = vld [vmem:[%s219 + $0xd8] sm:$0xff]
        %v294 = vld [vmem:[%s219 + $0xe0] sm:$0xf]
        %v295 = vld [vmem:[%s219 + $0xe4] sm:$0xff]
        %v296 = vld [vmem:[%s219 + $0xec] sm:$0xf]
        %v297 = vld [vmem:[%s219 + $0xf0] sm:$0xff]
        %v298 = vld [vmem:[%s219 + $0xf8] sm:$0xf]
        %v299 = vld [vmem:[%s219 + $0xfc] sm:$0xff]
        %v300 = vld [vmem:[%s219 + $0x104] sm:$0xf]
        %v301 = vld [vmem:[%s219 + $0x108] sm:$0xff]
        %v302 = vld [vmem:[%s219 + $0x110] sm:$0xf]
        %v303 = vld [vmem:[%s219 + $0x114] sm:$0xff]
        %v304 = vld [vmem:[%s219 + $0x11c] sm:$0xf]
        %v305 = vld [vmem:[%s219 + $0x120] sm:$0xff]
        %v306 = vld [vmem:[%s219 + $0x128] sm:$0xf]
        %v307 = vld [vmem:[%s219 + $0x12c] sm:$0xff]
        %v308 = vld [vmem:[%s219 + $0x134] sm:$0xf]
        %v309 = vld [vmem:[%s219 + $0x138] sm:$0xff]
        %v310 = vld [vmem:[%s219 + $0x140] sm:$0xf]
        %v311 = vld [vmem:[%s219 + $0x144] sm:$0xff]
        %v312 = vld [vmem:[%s219 + $0x14c] sm:$0xf]
        %v313 = vld [vmem:[%s219 + $0x150] sm:$0xff]
        %v314 = vld [vmem:[%s219 + $0x158] sm:$0xf]
        %v315 = vld [vmem:[%s219 + $0x15c] sm:$0xff]
        %v316 = vld [vmem:[%s219 + $0x164] sm:$0xf]
        %v317 = vld [vmem:[%s219 + $0x168] sm:$0xff]
        %v318 = vld [vmem:[%s219 + $0x170] sm:$0xf]
        %v319 = vld [vmem:[%s219 + $0x174] sm:$0xff]
        %v320 = vld [vmem:[%s219 + $0x17c] sm:$0xf]
        %v321 = vld [vmem:[#allocation5] sm:$0xf]
        %v322 = vld [vmem:[#allocation5 + $0x4] sm:$0xf]
        %v323 = vld [vmem:[#allocation5 + $0x8] sm:$0xf]
        %v324 = vld [vmem:[#allocation5 + $0xc] sm:$0xf]
        %v325 = vld [vmem:[#allocation5 + $0x10] sm:$0xf]
        %v326 = vld [vmem:[#allocation5 + $0x14] sm:$0xf]
        %v327 = vld [vmem:[#allocation5 + $0x18] sm:$0xf]
        %v328 = vld [vmem:[#allocation5 + $0x1c] sm:$0xf]
        %v329 = vld [vmem:[#allocation5 + $0x20] sm:$0xf]
        %v330 = vld [vmem:[#allocation5 + $0x24] sm:$0xf]
        %v331 = vld [vmem:[#allocation5 + $0x28] sm:$0xf]
        %v332 = vld [vmem:[#allocation5 + $0x2c] sm:$0xf]
        %v333 = vld [vmem:[#allocation5 + $0x30] sm:$0xf]
        %v334 = vld [vmem:[#allocation5 + $0x34] sm:$0xf]
        %v335 = vld [vmem:[#allocation5 + $0x38] sm:$0xf]
        %v336 = vld [vmem:[#allocation5 + $0x3c] sm:$0xf]
        %v337 = vld [vmem:[#allocation5 + $0x40] sm:$0xf]
        %v338 = vld [vmem:[#allocation5 + $0x44] sm:$0xf]
        %v339 = vld [vmem:[#allocation5 + $0x48] sm:$0xf]
        %v340 = vld [vmem:[#allocation5 + $0x4c] sm:$0xf]
        %v341 = vld [vmem:[#allocation5 + $0x50] sm:$0xf]
        %v342 = vld [vmem:[#allocation5 + $0x54] sm:$0xf]
        %v343 = vld [vmem:[#allocation5 + $0x58] sm:$0xf]
        %v344 = vld [vmem:[#allocation5 + $0x5c] sm:$0xf]
        %v345 = vld [vmem:[#allocation5 + $0x60] sm:$0xf]
        %v346 = vld [vmem:[#allocation5 + $0x64] sm:$0xf]
        %v347 = vld [vmem:[#allocation5 + $0x68] sm:$0xf]
        %v348 = vld [vmem:[#allocation5 + $0x6c] sm:$0xf]
        %v349 = vld [vmem:[#allocation5 + $0x70] sm:$0xf]
        %v350 = vld [vmem:[#allocation5 + $0x74] sm:$0xf]
        %v351 = vld [vmem:[#allocation5 + $0x78] sm:$0xf]
        %v352 = vld [vmem:[#allocation5 + $0x7c] sm:$0xf]
        %v353 = vld [vmem:[#allocation5 + $0x80] sm:$0xf]
        %v354 = vld [vmem:[#allocation5 + $0x84] sm:$0xf]
        %v355 = vld [vmem:[#allocation5 + $0x88] sm:$0xf]
        %v356 = vld [vmem:[#allocation5 + $0x8c] sm:$0xf]
        %v357 = vld [vmem:[#allocation5 + $0x90] sm:$0x7]
        %v422 = vunpack.c.l.b16 %v257
        %v423 = vunpack.c.h.b16 %v257
        %v424 = vunpack.c.l.b16 %v258
        %v425 = vunpack.c.l.b16 %v259
        %v426 = vunpack.c.h.b16 %v259
        %v427 = vunpack.c.l.b16 %v260
        %v428 = vunpack.c.l.b16 %v261
        %v429 = vunpack.c.h.b16 %v261
        %v430 = vunpack.c.l.b16 %v262
        %v431 = vunpack.c.l.b16 %v263
        %v432 = vunpack.c.h.b16 %v263
        %v433 = vunpack.c.l.b16 %v264
        %v434 = vunpack.c.l.b16 %v265
        %v435 = vunpack.c.h.b16 %v265
        %v436 = vunpack.c.l.b16 %v266
        %v437 = vunpack.c.l.b16 %v267
        %v438 = vunpack.c.h.b16 %v267
        %v439 = vunpack.c.l.b16 %v268
        %v440 = vunpack.c.l.b16 %v269
        %v441 = vunpack.c.h.b16 %v269
        %v442 = vunpack.c.l.b16 %v270
        %v443 = vunpack.c.l.b16 %v271
        %v444 = vunpack.c.h.b16 %v271
        %v445 = vunpack.c.l.b16 %v272
        %v446 = vunpack.c.l.b16 %v273
        %v447 = vunpack.c.h.b16 %v273
        %v448 = vunpack.c.l.b16 %v274
        %v449 = vunpack.c.l.b16 %v275
        %v450 = vunpack.c.h.b16 %v275
        %v451 = vunpack.c.l.b16 %v276
        %v452 = vunpack.c.l.b16 %v277
        %v453 = vunpack.c.h.b16 %v277
        %v454 = vunpack.c.l.b16 %v278
        %v455 = vunpack.c.l.b16 %v279
        %v456 = vunpack.c.h.b16 %v279
        %v457 = vunpack.c.l.b16 %v280
        %v458 = vunpack.c.l.b16 %v281
        %v459 = vunpack.c.h.b16 %v281
        %v460 = vunpack.c.l.b16 %v282
        %v461 = vunpack.c.l.b16 %v283
        %v462 = vunpack.c.h.b16 %v283
        %v463 = vunpack.c.l.b16 %v284
        %v464 = vunpack.c.l.b16 %v285
        %v465 = vunpack.c.h.b16 %v285
        %v466 = vunpack.c.l.b16 %v286
        %v467 = vunpack.c.l.b16 %v287
        %v468 = vunpack.c.h.b16 %v287
        %v469 = vunpack.c.l.b16 %v288
        %v470 = vunpack.c.l.b16 %v289
        %v471 = vunpack.c.h.b16 %v289
        %v472 = vunpack.c.l.b16 %v290
        %v473 = vunpack.c.l.b16 %v291
        %v474 = vunpack.c.h.b16 %v291
        %v475 = vunpack.c.l.b16 %v292
        %v476 = vunpack.c.l.b16 %v293
        %v477 = vunpack.c.h.b16 %v293
        %v478 = vunpack.c.l.b16 %v294
        %v479 = vunpack.c.l.b16 %v295
        %v480 = vunpack.c.h.b16 %v295
        %v481 = vunpack.c.l.b16 %v296
        %v482 = vunpack.c.l.b16 %v297
        %v483 = vunpack.c.h.b16 %v297
        %v484 = vunpack.c.l.b16 %v298
        %v485 = vunpack.c.l.b16 %v299
        %v486 = vunpack.c.h.b16 %v299
        %v487 = vunpack.c.l.b16 %v300
        %v488 = vunpack.c.l.b16 %v301
        %v489 = vunpack.c.h.b16 %v301
        %v490 = vunpack.c.l.b16 %v302
        %v491 = vunpack.c.l.b16 %v303
        %v492 = vunpack.c.h.b16 %v303
        %v493 = vunpack.c.l.b16 %v304
        %v494 = vunpack.c.l.b16 %v305
        %v495 = vunpack.c.h.b16 %v305
        %v496 = vunpack.c.l.b16 %v306
        %v497 = vunpack.c.l.b16 %v307
        %v498 = vunpack.c.h.b16 %v307
        %v499 = vunpack.c.l.b16 %v308
        %v500 = vunpack.c.l.b16 %v309
        %v501 = vunpack.c.h.b16 %v309
        %v502 = vunpack.c.l.b16 %v310
        %v503 = vunpack.c.l.b16 %v311
        %v504 = vunpack.c.h.b16 %v311
        %v505 = vunpack.c.l.b16 %v312
        %v506 = vunpack.c.l.b16 %v313
        %v507 = vunpack.c.h.b16 %v313
        %v508 = vunpack.c.l.b16 %v314
        %v509 = vunpack.c.l.b16 %v315
        %v510 = vunpack.c.h.b16 %v315
        %v511 = vunpack.c.l.b16 %v316
        %v512 = vunpack.c.l.b16 %v317
        %v513 = vunpack.c.h.b16 %v317
        %v514 = vunpack.c.l.b16 %v318
        %v515 = vunpack.c.l.b16 %v319
        %v516 = vunpack.c.h.b16 %v319
        %v517 = vunpack.c.l.b16 %v320
        %v518 = vpack.c.b16 %v425, %v422
        %v519 = vpack.c.b16 %v426, %v423
        %v520 = vpack.c.b16 %v427, %v424
        %v521 = vpack.c.b16 %v431, %v428
        %v522 = vpack.c.b16 %v432, %v429
        %v523 = vpack.c.b16 %v433, %v430
        %v524 = vpack.c.b16 %v437, %v434
        %v525 = vpack.c.b16 %v438, %v435
        %v526 = vpack.c.b16 %v439, %v436
        %v527 = vpack.c.b16 %v443, %v440
        %v528 = vpack.c.b16 %v444, %v441
        %v529 = vpack.c.b16 %v445, %v442
        %v530 = vpack.c.b16 %v449, %v446
        %v531 = vpack.c.b16 %v450, %v447
        %v532 = vpack.c.b16 %v451, %v448
        %v533 = vpack.c.b16 %v455, %v452
        %v534 = vpack.c.b16 %v456, %v453
        %v535 = vpack.c.b16 %v457, %v454
        %v536 = vpack.c.b16 %v461, %v458
        %v537 = vpack.c.b16 %v462, %v459
        %v538 = vpack.c.b16 %v463, %v460
        %v539 = vpack.c.b16 %v467, %v464
        %v540 = vpack.c.b16 %v468, %v465
        %v541 = vpack.c.b16 %v469, %v466
        %v542 = vpack.c.b16 %v473, %v470
        %v543 = vpack.c.b16 %v474, %v471
        %v544 = vpack.c.b16 %v475, %v472
        %v545 = vpack.c.b16 %v479, %v476
        %v546 = vpack.c.b16 %v480, %v477
        %v547 = vpack.c.b16 %v481, %v478
        %v548 = vpack.c.b16 %v485, %v482
        %v549 = vpack.c.b16 %v486, %v483
        %v550 = vpack.c.b16 %v487, %v484
        %v551 = vpack.c.b16 %v491, %v488
        %v552 = vpack.c.b16 %v492, %v489
        %v553 = vpack.c.b16 %v493, %v490
        %v554 = vpack.c.b16 %v497, %v494
        %v555 = vpack.c.b16 %v498, %v495
        %v556 = vpack.c.b16 %v499, %v496
        %v557 = vpack.c.b16 %v503, %v500
        %v558 = vpack.c.b16 %v504, %v501
        %v559 = vpack.c.b16 %v505, %v502
        %v560 = vpack.c.b16 %v509, %v506
        %v561 = vpack.c.b16 %v510, %v507
        %v562 = vpack.c.b16 %v511, %v508
        %v563 = vpack.c.b16 %v515, %v512
        %v564 = vpack.c.b16 %v516, %v513
        %v565 = vpack.c.b16 %v517, %v514
        %v635 = vunpack.c.l.b16 %v321
        %v636 = vunpack.c.l.b16 %v322
        %v637 = vunpack.c.l.b16 %v323
        %v638 = vunpack.c.l.b16 %v324
        %v639 = vunpack.c.l.b16 %v325
        %v640 = vunpack.c.l.b16 %v326
        %v641 = vunpack.c.l.b16 %v327
        %v642 = vunpack.c.l.b16 %v328
        %v643 = vunpack.c.l.b16 %v329
        %v644 = vunpack.c.l.b16 %v330
        %v645 = vunpack.c.l.b16 %v331
        %v646 = vunpack.c.l.b16 %v332
        %v647 = vunpack.c.l.b16 %v333
        %v648 = vunpack.c.l.b16 %v334
        %v649 = vunpack.c.l.b16 %v335
        %v650 = vunpack.c.l.b16 %v336
        %v651 = vunpack.c.l.b16 %v337
        %v652 = vunpack.c.l.b16 %v338
        %v653 = vunpack.c.l.b16 %v339
        %v654 = vunpack.c.l.b16 %v340
        %v655 = vunpack.c.l.b16 %v341
        %v656 = vunpack.c.l.b16 %v342
        %v657 = vunpack.c.l.b16 %v343
        %v658 = vunpack.c.l.b16 %v344
        %v659 = vunpack.c.l.b16 %v345
        %v660 = vunpack.c.l.b16 %v346
        %v661 = vunpack.c.l.b16 %v347
        %v662 = vunpack.c.l.b16 %v348
        %v663 = vunpack.c.l.b16 %v349
        %v664 = vunpack.c.l.b16 %v350
        %v665 = vunpack.c.l.b16 %v351
        %v666 = vunpack.c.l.b16 %v352
        %v667 = vunpack.c.l.b16 %v353
        %v668 = vunpack.c.l.b16 %v354
        %v669 = vunpack.c.l.b16 %v355
        %v670 = vunpack.c.l.b16 %v356
        %v671 = vunpack.c.l.b16 %v357
        %v672 = vpack.c.b16 %v636, %v635
        %v673 = vpack.c.b16 %v638, %v637
        %v674 = vpack.c.b16 %v640, %v639
        %v675 = vpack.c.b16 %v642, %v641
        %v676 = vpack.c.b16 %v644, %v643
        %v677 = vpack.c.b16 %v646, %v645
        %v678 = vpack.c.b16 %v648, %v647
        %v679 = vpack.c.b16 %v650, %v649
        %v680 = vpack.c.b16 %v652, %v651
        %v681 = vpack.c.b16 %v654, %v653
        %v682 = vpack.c.b16 %v656, %v655
        %v683 = vpack.c.b16 %v658, %v657
        %v684 = vpack.c.b16 %v660, %v659
        %v685 = vpack.c.b16 %v662, %v661
        %v686 = vpack.c.b16 %v664, %v663
        %v687 = vpack.c.b16 %v666, %v665
        %v688 = vpack.c.b16 %v668, %v667
        %v689 = vpack.c.b16 %v670, %v669
        %v690 = vpack.c.b16 %v671, %v671
        %vm709 = vcmask 310272
        %v711 = vsel %vm709, %v520, 0
        %v714 = vsel %vm709, %v523, 0
        %v717 = vsel %vm709, %v526, 0
        %v720 = vsel %vm709, %v529, 0
        %v723 = vsel %vm709, %v532, 0
        %v726 = vsel %vm709, %v535, 0
        %v729 = vsel %vm709, %v538, 0
        %v732 = vsel %vm709, %v541, 0
        %v735 = vsel %vm709, %v544, 0
        %v738 = vsel %vm709, %v547, 0
        %v741 = vsel %vm709, %v550, 0
        %v744 = vsel %vm709, %v553, 0
        %v747 = vsel %vm709, %v556, 0
        %v750 = vsel %vm709, %v559, 0
        %v753 = vsel %vm709, %v562, 0
        %v756 = vsel %vm709, %v565, 0
        %vm758 = vcmask 1042432
        %v760 = vsel %vm758, %v690, 0
        %762 = vmatprep.subr.bf16.mxu0 0
        %763 = vmatpush1.bf16.msra.mxu0 %v672
        %764 = vmatprep.subr.bf16.mxu0 0
        %765 = vmatpush1.bf16.msra.mxu0 %v673
        %766 = vmatprep.subr.bf16.mxu0 0
        %767 = vmatpush1.bf16.msra.mxu0 %v674
        %768 = vmatprep.subr.bf16.mxu0 0
        %769 = vmatpush1.bf16.msra.mxu0 %v675
        %770 = vmatprep.subr.bf16.mxu0 0
        %771 = vmatpush1.bf16.msra.mxu0 %v676
        %772 = vmatprep.subr.bf16.mxu0 0
        %773 = vmatpush1.bf16.msra.mxu0 %v677
        %774 = vmatprep.subr.bf16.mxu0 0
        %775 = vmatpush1.bf16.msra.mxu0 %v678
        %776 = vmatprep.subr.bf16.mxu0 0
        %777 = vmatpush1.bf16.msra.mxu0 %v679
        %778 = vmatprep.subr.bf16.mxu0 0
        %779 = vmatpush1.bf16.msra.mxu0 %v680
        %780 = vmatprep.subr.bf16.mxu0 0
        %781 = vmatpush1.bf16.msra.mxu0 %v681
        %782 = vmatprep.subr.bf16.mxu0 0
        %783 = vmatpush1.bf16.msra.mxu0 %v682
        %784 = vmatprep.subr.bf16.mxu0 0
        %785 = vmatpush1.bf16.msra.mxu0 %v683
        %786 = vmatprep.subr.bf16.mxu0 0
        %787 = vmatpush1.bf16.msra.mxu0 %v684
        %788 = vmatprep.subr.bf16.mxu0 0
        %789 = vmatpush1.bf16.msra.mxu0 %v685
        %790 = vmatprep.subr.bf16.mxu0 0
        %791 = vmatpush1.bf16.msra.mxu0 %v686
        %792 = vmatprep.subr.bf16.mxu0 0
        %793 = vmatpush1.bf16.msra.mxu0 %v687
        %794 = vmatprep.mubr.bf16.mxu0 %v519
        %795 = vmatmul.mubr.bf16.gmra.mrb[0].mxu0 %v518
        %v796 = vpop.f32.mrb[0].mxu0
        %v797 = vadd.f32 0.0, %v796
        %v798 = vpop.f32.mrb[0].mxu0
        %v799 = vpop.f32.mrb[0].mxu0
        %v800 = vadd.f32 0.0, %v799
        %v801 = vpop.f32.mrb[0].mxu0
        %802 = vmatprep.mubr.bf16.mxu0 %v522
        %803 = vmatmul.mubr.bf16.gmra.mrb[0].mxu0 %v521
        %v804 = vpop.f32.mrb[0].mxu0
        %v805 = vadd.f32 0.0, %v804
        %v806 = vpop.f32.mrb[0].mxu0
        %v807 = vpop.f32.mrb[0].mxu0
        %v808 = vadd.f32 0.0, %v807
        %v809 = vpop.f32.mrb[0].mxu0
        %810 = vmatprep.mubr.bf16.mxu0 %v525
        %811 = vmatmul.mubr.bf16.gmra.mrb[0].mxu0 %v524
        %v812 = vpop.f32.mrb[0].mxu0
        %v813 = vadd.f32 0.0, %v812
        %v814 = vpop.f32.mrb[0].mxu0
        %v815 = vpop.f32.mrb[0].mxu0
        %v816 = vadd.f32 0.0, %v815
        %v817 = vpop.f32.mrb[0].mxu0
        %818 = vmatprep.mubr.bf16.mxu0 %v528
        %819 = vmatmul.mubr.bf16.gmra.mrb[0].mxu0 %v527
        %v820 = vpop.f32.mrb[0].mxu0
        %v821 = vadd.f32 0.0, %v820
        %v822 = vpop.f32.mrb[0].mxu0
        %v823 = vpop.f32.mrb[0].mxu0
        %v824 = vadd.f32 0.0, %v823
        %v825 = vpop.f32.mrb[0].mxu0
        %826 = vmatprep.mubr.bf16.mxu0 %v531
        %827 = vmatmul.mubr.bf16.gmra.mrb[0].mxu0 %v530
        %v828 = vpop.f32.mrb[0].mxu0
        %v829 = vadd.f32 0.0, %v828
        %v830 = vpop.f32.mrb[0].mxu0
        %v831 = vpop.f32.mrb[0].mxu0
        %v832 = vadd.f32 0.0, %v831
        %v833 = vpop.f32.mrb[0].mxu0
        %834 = vmatprep.mubr.bf16.mxu0 %v534
        %835 = vmatmul.mubr.bf16.gmra.mrb[0].mxu0 %v533
        %v836 = vpop.f32.mrb[0].mxu0
        %v837 = vadd.f32 0.0, %v836
        %v838 = vpop.f32.mrb[0].mxu0
        %v839 = vpop.f32.mrb[0].mxu0
        %v840 = vadd.f32 0.0, %v839
        %v841 = vpop.f32.mrb[0].mxu0
        %842 = vmatprep.mubr.bf16.mxu0 %v537
        %843 = vmatmul.mubr.bf16.gmra.mrb[0].mxu0 %v536
        %v844 = vpop.f32.mrb[0].mxu0
        %v845 = vadd.f32 0.0, %v844
        %v846 = vpop.f32.mrb[0].mxu0
        %v847 = vpop.f32.mrb[0].mxu0
        %v848 = vadd.f32 0.0, %v847
        %v849 = vpop.f32.mrb[0].mxu0
        %850 = vmatprep.mubr.bf16.mxu0 %v540
        %851 = vmatmul.mubr.bf16.gmra.mrb[0].mxu0 %v539
        %v852 = vpop.f32.mrb[0].mxu0
        %v853 = vadd.f32 0.0, %v852
        %v854 = vpop.f32.mrb[0].mxu0
        %v855 = vpop.f32.mrb[0].mxu0
        %v856 = vadd.f32 0.0, %v855
        %v857 = vpop.f32.mrb[0].mxu0
        %858 = vmatprep.mubr.bf16.mxu0 %v543
        %859 = vmatmul.mubr.bf16.gmra.mrb[0].mxu0 %v542
        %v860 = vpop.f32.mrb[0].mxu0
        %v861 = vadd.f32 0.0, %v860
        %v862 = vpop.f32.mrb[0].mxu0
        %v863 = vpop.f32.mrb[0].mxu0
        %v864 = vadd.f32 0.0, %v863
        %v865 = vpop.f32.mrb[0].mxu0
        %866 = vmatprep.mubr.bf16.mxu0 %v546
        %867 = vmatmul.mubr.bf16.gmra.mrb[0].mxu0 %v545
        %v868 = vpop.f32.mrb[0].mxu0
        %v869 = vadd.f32 0.0, %v868
        %v870 = vpop.f32.mrb[0].mxu0
        %v871 = vpop.f32.mrb[0].mxu0
        %v872 = vadd.f32 0.0, %v871
        %v873 = vpop.f32.mrb[0].mxu0
        %874 = vmatprep.mubr.bf16.mxu0 %v549
        %875 = vmatmul.mubr.bf16.gmra.mrb[0].mxu0 %v548
        %v876 = vpop.f32.mrb[0].mxu0
        %v877 = vadd.f32 0.0, %v876
        %v878 = vpop.f32.mrb[0].mxu0
        %v879 = vpop.f32.mrb[0].mxu0
        %v880 = vadd.f32 0.0, %v879
        %v881 = vpop.f32.mrb[0].mxu0
        %882 = vmatprep.mubr.bf16.mxu0 %v552
        %883 = vmatmul.mubr.bf16.gmra.mrb[0].mxu0 %v551
        %v884 = vpop.f32.mrb[0].mxu0
        %v885 = vadd.f32 0.0, %v884
        %v886 = vpop.f32.mrb[0].mxu0
        %v887 = vpop.f32.mrb[0].mxu0
        %v888 = vadd.f32 0.0, %v887
        %v889 = vpop.f32.mrb[0].mxu0
        %890 = vmatprep.mubr.bf16.mxu0 %v555
        %891 = vmatmul.mubr.bf16.gmra.mrb[0].mxu0 %v554
        %v892 = vpop.f32.mrb[0].mxu0
        %v893 = vadd.f32 0.0, %v892
        %v894 = vpop.f32.mrb[0].mxu0
        %v895 = vpop.f32.mrb[0].mxu0
        %v896 = vadd.f32 0.0, %v895
        %v897 = vpop.f32.mrb[0].mxu0
        %898 = vmatprep.mubr.bf16.mxu0 %v558
        %899 = vmatmul.mubr.bf16.gmra.mrb[0].mxu0 %v557
        %v900 = vpop.f32.mrb[0].mxu0
        %v901 = vadd.f32 0.0, %v900
        %v902 = vpop.f32.mrb[0].mxu0
        %v903 = vpop.f32.mrb[0].mxu0
        %v904 = vadd.f32 0.0, %v903
        %v905 = vpop.f32.mrb[0].mxu0
        %906 = vmatprep.mubr.bf16.mxu0 %v561
        %907 = vmatmul.mubr.bf16.gmra.mrb[0].mxu0 %v560
        %v908 = vpop.f32.mrb[0].mxu0
        %v909 = vadd.f32 0.0, %v908
        %v910 = vpop.f32.mrb[0].mxu0
        %v911 = vpop.f32.mrb[0].mxu0
        %v912 = vadd.f32 0.0, %v911
        %v913 = vpop.f32.mrb[0].mxu0
        %914 = vmatprep.mubr.bf16.mxu0 %v564
        %915 = vmatmul.mubr.bf16.gmra.mrb[0].mxu0 %v563
        %v916 = vpop.f32.mrb[0].mxu0
        %v917 = vadd.f32 0.0, %v916
        %v918 = vpop.f32.mrb[0].mxu0
        %v919 = vpop.f32.mrb[0].mxu0
        %v920 = vadd.f32 0.0, %v919
        %v921 = vpop.f32.mrb[0].mxu0
        %922 = vdwg.mxu0
        %923 = vmatprep.subr.bf16.mxu0 0
        %924 = vmatpush1.bf16.msra.mxu0 %v688
        %925 = vmatprep.subr.bf16.mxu0 0
        %926 = vmatpush1.bf16.msra.mxu0 %v689
        %927 = vmatprep.subr.bf16.mxu0 0
        %928 = vmatpush1.bf16.msra.mxu0 %v760
        %929 = vmatprep.subr.bf16.mxu0 0
        %930 = vmatpush1.bf16.msra.mxu0 0
        %931 = vmatprep.subr.bf16.mxu0 0
        %932 = vmatpush1.bf16.msra.mxu0 0
        %933 = vmatprep.subr.bf16.mxu0 0
        %934 = vmatpush1.bf16.msra.mxu0 0
        %935 = vmatprep.subr.bf16.mxu0 0
        %936 = vmatpush1.bf16.msra.mxu0 0
        %937 = vmatprep.subr.bf16.mxu0 0
        %938 = vmatpush1.bf16.msra.mxu0 0
        %939 = vmatprep.subr.bf16.mxu0 0
        %940 = vmatpush1.bf16.msra.mxu0 0
        %941 = vmatprep.subr.bf16.mxu0 0
        %942 = vmatpush1.bf16.msra.mxu0 0
        %943 = vmatprep.subr.bf16.mxu0 0
        %944 = vmatpush1.bf16.msra.mxu0 0
        %945 = vmatprep.subr.bf16.mxu0 0
        %946 = vmatpush1.bf16.msra.mxu0 0
        %947 = vmatprep.subr.bf16.mxu0 0
        %948 = vmatpush1.bf16.msra.mxu0 0
        %949 = vmatprep.subr.bf16.mxu0 0
        %950 = vmatpush1.bf16.msra.mxu0 0
        %951 = vmatprep.subr.bf16.mxu0 0
        %952 = vmatpush1.bf16.msra.mxu0 0
        %953 = vmatprep.subr.bf16.mxu0 0
        %954 = vmatpush1.bf16.msra.mxu0 0
        %955 = vmatprep.mubr.bf16.mxu0 0
        %956 = vmatmul.mubr.bf16.gmra.mrb[0].mxu0 %v711
        %v957 = vpop.f32.mrb[0].mxu0
        %v958 = vadd.f32 %v797, %v957
        %v959 = vpop.f32.mrb[0].mxu0
        %v960 = vpop.f32.mrb[0].mxu0
        %v961 = vadd.f32 %v800, %v960
        %v962 = vpop.f32.mrb[0].mxu0
        %963 = vmatprep.mubr.bf16.mxu0 0
        %964 = vmatmul.mubr.bf16.gmra.mrb[0].mxu0 %v714
        %v965 = vpop.f32.mrb[0].mxu0
        %v966 = vadd.f32 %v805, %v965
        %v967 = vpop.f32.mrb[0].mxu0
        %v968 = vpop.f32.mrb[0].mxu0
        %v969 = vadd.f32 %v808, %v968
        %v970 = vpop.f32.mrb[0].mxu0
        %971 = vmatprep.mubr.bf16.mxu0 0
        %972 = vmatmul.mubr.bf16.gmra.mrb[0].mxu0 %v717
        %v973 = vpop.f32.mrb[0].mxu0
        %v974 = vadd.f32 %v813, %v973
        %v975 = vpop.f32.mrb[0].mxu0
        %v976 = vpop.f32.mrb[0].mxu0
        %v977 = vadd.f32 %v816, %v976
        %v978 = vpop.f32.mrb[0].mxu0
        %979 = vmatprep.mubr.bf16.mxu0 0
        %980 = vmatmul.mubr.bf16.gmra.mrb[0].mxu0 %v720
        %v981 = vpop.f32.mrb[0].mxu0
        %v982 = vadd.f32 %v821, %v981
        %v983 = vpop.f32.mrb[0].mxu0
        %v984 = vpop.f32.mrb[0].mxu0
        %v985 = vadd.f32 %v824, %v984
        %v986 = vpop.f32.mrb[0].mxu0
        %987 = vmatprep.mubr.bf16.mxu0 0
        %988 = vmatmul.mubr.bf16.gmra.mrb[0].mxu0 %v723
        %v989 = vpop.f32.mrb[0].mxu0
        %v990 = vadd.f32 %v829, %v989
        %v991 = vpop.f32.mrb[0].mxu0
        %v992 = vpop.f32.mrb[0].mxu0
        %v993 = vadd.f32 %v832, %v992
        %v994 = vpop.f32.mrb[0].mxu0
        %995 = vmatprep.mubr.bf16.mxu0 0
        %996 = vmatmul.mubr.bf16.gmra.mrb[0].mxu0 %v726
        %v997 = vpop.f32.mrb[0].mxu0
        %v998 = vadd.f32 %v837, %v997
        %v999 = vpop.f32.mrb[0].mxu0
        %v1000 = vpop.f32.mrb[0].mxu0
        %v1001 = vadd.f32 %v840, %v1000
        %v1002 = vpop.f32.mrb[0].mxu0
        %1003 = vmatprep.mubr.bf16.mxu0 0
        %1004 = vmatmul.mubr.bf16.gmra.mrb[0].mxu0 %v729
        %v1005 = vpop.f32.mrb[0].mxu0
        %v1006 = vadd.f32 %v845, %v1005
        %v1007 = vpop.f32.mrb[0].mxu0
        %v1008 = vpop.f32.mrb[0].mxu0
        %v1009 = vadd.f32 %v848, %v1008
        %v1010 = vpop.f32.mrb[0].mxu0
        %1011 = vmatprep.mubr.bf16.mxu0 0
        %1012 = vmatmul.mubr.bf16.gmra.mrb[0].mxu0 %v732
        %v1013 = vpop.f32.mrb[0].mxu0
        %v1014 = vadd.f32 %v853, %v1013
        %v1015 = vpop.f32.mrb[0].mxu0
        %v1016 = vpop.f32.mrb[0].mxu0
        %v1017 = vadd.f32 %v856, %v1016
        %v1018 = vpop.f32.mrb[0].mxu0
        %1019 = vmatprep.mubr.bf16.mxu0 0
        %1020 = vmatmul.mubr.bf16.gmra.mrb[0].mxu0 %v735
        %v1021 = vpop.f32.mrb[0].mxu0
        %v1022 = vadd.f32 %v861, %v1021
        %v1023 = vpop.f32.mrb[0].mxu0
        %v1024 = vpop.f32.mrb[0].mxu0
        %v1025 = vadd.f32 %v864, %v1024
        %v1026 = vpop.f32.mrb[0].mxu0
        %1027 = vmatprep.mubr.bf16.mxu0 0
        %1028 = vmatmul.mubr.bf16.gmra.mrb[0].mxu0 %v738
        %v1029 = vpop.f32.mrb[0].mxu0
        %v1030 = vadd.f32 %v869, %v1029
        %v1031 = vpop.f32.mrb[0].mxu0
        %v1032 = vpop.f32.mrb[0].mxu0
        %v1033 = vadd.f32 %v872, %v1032
        %v1034 = vpop.f32.mrb[0].mxu0
        %1035 = vmatprep.mubr.bf16.mxu0 0
        %1036 = vmatmul.mubr.bf16.gmra.mrb[0].mxu0 %v741
        %v1037 = vpop.f32.mrb[0].mxu0
        %v1038 = vadd.f32 %v877, %v1037
        %v1039 = vpop.f32.mrb[0].mxu0
        %v1040 = vpop.f32.mrb[0].mxu0
        %v1041 = vadd.f32 %v880, %v1040
        %v1042 = vpop.f32.mrb[0].mxu0
        %1043 = vmatprep.mubr.bf16.mxu0 0
        %1044 = vmatmul.mubr.bf16.gmra.mrb[0].mxu0 %v744
        %v1045 = vpop.f32.mrb[0].mxu0
        %v1046 = vadd.f32 %v885, %v1045
        %v1047 = vpop.f32.mrb[0].mxu0
        %v1048 = vpop.f32.mrb[0].mxu0
        %v1049 = vadd.f32 %v888, %v1048
        %v1050 = vpop.f32.mrb[0].mxu0
        %1051 = vmatprep.mubr.bf16.mxu0 0
        %1052 = vmatmul.mubr.bf16.gmra.mrb[0].mxu0 %v747
        %v1053 = vpop.f32.mrb[0].mxu0
        %v1054 = vadd.f32 %v893, %v1053
        %v1055 = vpop.f32.mrb[0].mxu0
        %v1056 = vpop.f32.mrb[0].mxu0
        %v1057 = vadd.f32 %v896, %v1056
        %v1058 = vpop.f32.mrb[0].mxu0
        %1059 = vmatprep.mubr.bf16.mxu0 0
        %1060 = vmatmul.mubr.bf16.gmra.mrb[0].mxu0 %v750
        %v1061 = vpop.f32.mrb[0].mxu0
        %v1062 = vadd.f32 %v901, %v1061
        %v1063 = vpop.f32.mrb[0].mxu0
        %v1064 = vpop.f32.mrb[0].mxu0
        %v1065 = vadd.f32 %v904, %v1064
        %v1066 = vpop.f32.mrb[0].mxu0
        %1067 = vmatprep.mubr.bf16.mxu0 0
        %1068 = vmatmul.mubr.bf16.gmra.mrb[0].mxu0 %v753
        %v1069 = vpop.f32.mrb[0].mxu0
        %v1070 = vadd.f32 %v909, %v1069
        %v1071 = vpop.f32.mrb[0].mxu0
        %v1072 = vpop.f32.mrb[0].mxu0
        %v1073 = vadd.f32 %v912, %v1072
        %v1074 = vpop.f32.mrb[0].mxu0
        %1075 = vmatprep.mubr.bf16.mxu0 0
        %1076 = vmatmul.mubr.bf16.gmra.mrb[0].mxu0 %v756
        %v1077 = vpop.f32.mrb[0].mxu0
        %v1078 = vadd.f32 %v917, %v1077
        %v1079 = vpop.f32.mrb[0].mxu0
        %v1080 = vpop.f32.mrb[0].mxu0
        %v1081 = vadd.f32 %v920, %v1080
        %v1082 = vpop.f32.mrb[0].mxu0
        %1083 = vdwg.mxu0
        %vm1084 = vcmask 64512
        %v1085 = vsel %vm1084, %v958, 0.0
        %v1086 = vsel %vm1084, %v961, 0.0
        %v1087 = vadd.f32 %v1085, %v1086
        %v1088 = vsel %vm1084, %v966, 0.0
        %v1089 = vadd.f32 %v1087, %v1088
        %v1090 = vsel %vm1084, %v969, 0.0
        %v1091 = vadd.f32 %v1089, %v1090
        %v1092 = vsel %vm1084, %v974, 0.0
        %v1093 = vadd.f32 %v1091, %v1092
        %v1094 = vsel %vm1084, %v977, 0.0
        %v1095 = vadd.f32 %v1093, %v1094
        %v1096 = vsel %vm1084, %v982, 0.0
        %v1097 = vadd.f32 %v1095, %v1096
        %v1098 = vsel %vm1084, %v985, 0.0
        %v1099 = vadd.f32 %v1097, %v1098
        %v1100 = vsel %vm1084, %v990, 0.0
        %v1101 = vadd.f32 %v1099, %v1100
        %v1102 = vsel %vm1084, %v993, 0.0
        %v1103 = vadd.f32 %v1101, %v1102
        %v1104 = vsel %vm1084, %v998, 0.0
        %v1105 = vadd.f32 %v1103, %v1104
        %v1106 = vsel %vm1084, %v1001, 0.0
        %v1107 = vadd.f32 %v1105, %v1106
        %v1108 = vsel %vm1084, %v1006, 0.0
        %v1109 = vadd.f32 %v1107, %v1108
        %v1110 = vsel %vm1084, %v1009, 0.0
        %v1111 = vadd.f32 %v1109, %v1110
        %v1112 = vsel %vm1084, %v1014, 0.0
        %v1113 = vadd.f32 %v1111, %v1112
        %v1114 = vsel %vm1084, %v1017, 0.0
        %v1115 = vadd.f32 %v1113, %v1114
        %v1116 = vsel %vm1084, %v1022, 0.0
        %v1117 = vadd.f32 %v1115, %v1116
        %v1118 = vsel %vm1084, %v1025, 0.0
        %v1119 = vadd.f32 %v1117, %v1118
        %v1120 = vsel %vm1084, %v1030, 0.0
        %v1121 = vadd.f32 %v1119, %v1120
        %v1122 = vsel %vm1084, %v1033, 0.0
        %v1123 = vadd.f32 %v1121, %v1122
        %v1124 = vsel %vm1084, %v1038, 0.0
        %v1125 = vadd.f32 %v1123, %v1124
        %v1126 = vsel %vm1084, %v1041, 0.0
        %v1127 = vadd.f32 %v1125, %v1126
        %v1128 = vsel %vm1084, %v1046, 0.0
        %v1129 = vadd.f32 %v1127, %v1128
        %v1130 = vsel %vm1084, %v1049, 0.0
        %v1131 = vadd.f32 %v1129, %v1130
        %v1132 = vsel %vm1084, %v1054, 0.0
        %v1133 = vadd.f32 %v1131, %v1132
        %v1134 = vsel %vm1084, %v1057, 0.0
        %v1135 = vadd.f32 %v1133, %v1134
        %v1136 = vsel %vm1084, %v1062, 0.0
        %v1137 = vadd.f32 %v1135, %v1136
        %v1138 = vsel %vm1084, %v1065, 0.0
        %v1139 = vadd.f32 %v1137, %v1138
        %v1140 = vsel %vm1084, %v1070, 0.0
        %v1141 = vadd.f32 %v1139, %v1140
        %v1142 = vsel %vm1084, %v1073, 0.0
        %v1143 = vadd.f32 %v1141, %v1142
        %v1144 = vsel %vm1084, %v1078, 0.0
        %v1145 = vadd.f32 %v1143, %v1144
        %v1146 = vsel %vm1084, %v1081, 0.0
        %v1147 = vadd.f32 %v1145, %v1146
        %v1148 = vrot.slane %v1147, 4
        %v1149 = vadd.f32 %v1147, %v1148
        %v1150 = vrot.slane %v1149, 2
        %v1151 = vadd.f32 %v1149, %v1150
        %v1152 = vrot.slane %v1151, 1
        %v1153 = vadd.f32 %v1151, %v1152
        %v1154 = vmul.f32 %v1153, 0.00390625
        %v1155 = vsub.f32 %v958, %v1154
        %v1156 = vsub.f32 %v961, %v1154
        %v1157 = vsub.f32 %v966, %v1154
        %v1158 = vsub.f32 %v969, %v1154
        %v1159 = vsub.f32 %v974, %v1154
        %v1160 = vsub.f32 %v977, %v1154
        %v1161 = vsub.f32 %v982, %v1154
        %v1162 = vsub.f32 %v985, %v1154
        %v1163 = vsub.f32 %v990, %v1154
        %v1164 = vsub.f32 %v993, %v1154
        %v1165 = vsub.f32 %v998, %v1154
        %v1166 = vsub.f32 %v1001, %v1154
        %v1167 = vsub.f32 %v1006, %v1154
        %v1168 = vsub.f32 %v1009, %v1154
        %v1169 = vsub.f32 %v1014, %v1154
        %v1170 = vsub.f32 %v1017, %v1154
        %v1171 = vsub.f32 %v1022, %v1154
        %v1172 = vsub.f32 %v1025, %v1154
        %v1173 = vsub.f32 %v1030, %v1154
        %v1174 = vsub.f32 %v1033, %v1154
        %v1175 = vsub.f32 %v1038, %v1154
        %v1176 = vsub.f32 %v1041, %v1154
        %v1177 = vsub.f32 %v1046, %v1154
        %v1178 = vsub.f32 %v1049, %v1154
        %v1179 = vsub.f32 %v1054, %v1154
        %v1180 = vsub.f32 %v1057, %v1154
        %v1181 = vsub.f32 %v1062, %v1154
        %v1182 = vsub.f32 %v1065, %v1154
        %v1183 = vsub.f32 %v1070, %v1154
        %v1184 = vsub.f32 %v1073, %v1154
        %v1185 = vsub.f32 %v1078, %v1154
        %v1186 = vsub.f32 %v1081, %v1154
        %v1187 = vmul.f32 %v1155, %v1155
        %v1188 = vmul.f32 %v1156, %v1156
        %v1189 = vmul.f32 %v1157, %v1157
        %v1190 = vmul.f32 %v1158, %v1158
        %v1191 = vmul.f32 %v1159, %v1159
        %v1192 = vmul.f32 %v1160, %v1160
        %v1193 = vmul.f32 %v1161, %v1161
        %v1194 = vmul.f32 %v1162, %v1162
        %v1195 = vmul.f32 %v1163, %v1163
        %v1196 = vmul.f32 %v1164, %v1164
        %v1197 = vmul.f32 %v1165, %v1165
        %v1198 = vmul.f32 %v1166, %v1166
        %v1199 = vmul.f32 %v1167, %v1167
        %v1200 = vmul.f32 %v1168, %v1168
        %v1201 = vmul.f32 %v1169, %v1169
        %v1202 = vmul.f32 %v1170, %v1170
        %v1203 = vmul.f32 %v1171, %v1171
        %v1204 = vmul.f32 %v1172, %v1172
        %v1205 = vmul.f32 %v1173, %v1173
        %v1206 = vmul.f32 %v1174, %v1174
        %v1207 = vmul.f32 %v1175, %v1175
        %v1208 = vmul.f32 %v1176, %v1176
        %v1209 = vmul.f32 %v1177, %v1177
        %v1210 = vmul.f32 %v1178, %v1178
        %v1211 = vmul.f32 %v1179, %v1179
        %v1212 = vmul.f32 %v1180, %v1180
        %v1213 = vmul.f32 %v1181, %v1181
        %v1214 = vmul.f32 %v1182, %v1182
        %v1215 = vmul.f32 %v1183, %v1183
        %v1216 = vmul.f32 %v1184, %v1184
        %v1217 = vmul.f32 %v1185, %v1185
        %v1218 = vmul.f32 %v1186, %v1186
        %v1219 = vsel %vm1084, %v1187, 0.0
        %v1220 = vsel %vm1084, %v1188, 0.0
        %v1221 = vadd.f32 %v1219, %v1220
        %v1222 = vsel %vm1084, %v1189, 0.0
        %v1223 = vadd.f32 %v1221, %v1222
        %v1224 = vsel %vm1084, %v1190, 0.0
        %v1225 = vadd.f32 %v1223, %v1224
        %v1226 = vsel %vm1084, %v1191, 0.0
        %v1227 = vadd.f32 %v1225, %v1226
        %v1228 = vsel %vm1084, %v1192, 0.0
        %v1229 = vadd.f32 %v1227, %v1228
        %v1230 = vsel %vm1084, %v1193, 0.0
        %v1231 = vadd.f32 %v1229, %v1230
        %v1232 = vsel %vm1084, %v1194, 0.0
        %v1233 = vadd.f32 %v1231, %v1232
        %v1234 = vsel %vm1084, %v1195, 0.0
        %v1235 = vadd.f32 %v1233, %v1234
        %v1236 = vsel %vm1084, %v1196, 0.0
        %v1237 = vadd.f32 %v1235, %v1236
        %v1238 = vsel %vm1084, %v1197, 0.0
        %v1239 = vadd.f32 %v1237, %v1238
        %v1240 = vsel %vm1084, %v1198, 0.0
        %v1241 = vadd.f32 %v1239, %v1240
        %v1242 = vsel %vm1084, %v1199, 0.0
        %v1243 = vadd.f32 %v1241, %v1242
        %v1244 = vsel %vm1084, %v1200, 0.0
        %v1245 = vadd.f32 %v1243, %v1244
        %v1246 = vsel %vm1084, %v1201, 0.0
        %v1247 = vadd.f32 %v1245, %v1246
        %v1248 = vsel %vm1084, %v1202, 0.0
        %v1249 = vadd.f32 %v1247, %v1248
        %v1250 = vsel %vm1084, %v1203, 0.0
        %v1251 = vadd.f32 %v1249, %v1250
        %v1252 = vsel %vm1084, %v1204, 0.0
        %v1253 = vadd.f32 %v1251, %v1252
        %v1254 = vsel %vm1084, %v1205, 0.0
        %v1255 = vadd.f32 %v1253, %v1254
        %v1256 = vsel %vm1084, %v1206, 0.0
        %v1257 = vadd.f32 %v1255, %v1256
        %v1258 = vsel %vm1084, %v1207, 0.0
        %v1259 = vadd.f32 %v1257, %v1258
        %v1260 = vsel %vm1084, %v1208, 0.0
        %v1261 = vadd.f32 %v1259, %v1260
        %v1262 = vsel %vm1084, %v1209, 0.0
        %v1263 = vadd.f32 %v1261, %v1262
        %v1264 = vsel %vm1084, %v1210, 0.0
        %v1265 = vadd.f32 %v1263, %v1264
        %v1266 = vsel %vm1084, %v1211, 0.0
        %v1267 = vadd.f32 %v1265, %v1266
        %v1268 = vsel %vm1084, %v1212, 0.0
        %v1269 = vadd.f32 %v1267, %v1268
        %v1270 = vsel %vm1084, %v1213, 0.0
        %v1271 = vadd.f32 %v1269, %v1270
        %v1272 = vsel %vm1084, %v1214, 0.0
        %v1273 = vadd.f32 %v1271, %v1272
        %v1274 = vsel %vm1084, %v1215, 0.0
        %v1275 = vadd.f32 %v1273, %v1274
        %v1276 = vsel %vm1084, %v1216, 0.0
        %v1277 = vadd.f32 %v1275, %v1276
        %v1278 = vsel %vm1084, %v1217, 0.0
        %v1279 = vadd.f32 %v1277, %v1278
        %v1280 = vsel %vm1084, %v1218, 0.0
        %v1281 = vadd.f32 %v1279, %v1280
        %v1282 = vrot.slane %v1281, 4
        %v1283 = vadd.f32 %v1281, %v1282
        %v1284 = vrot.slane %v1283, 2
        %v1285 = vadd.f32 %v1283, %v1284
        %v1286 = vrot.slane %v1285, 1
        %v1287 = vadd.f32 %v1285, %v1286
        %v1288 = vmul.f32 %v1287, 0.00390625
        %v1289 = vadd.f32 %v1288, 1e-05
        %v1290 = vrsqrt.pop %v1289
        %v1291 = vmul.f32 %v1155, %v1290
        %v1292 = vmul.f32 %v1156, %v1290
        %v1293 = vmul.f32 %v1157, %v1290
        %v1294 = vmul.f32 %v1158, %v1290
        %v1295 = vmul.f32 %v1159, %v1290
        %v1296 = vmul.f32 %v1160, %v1290
        %v1297 = vmul.f32 %v1161, %v1290
        %v1298 = vmul.f32 %v1162, %v1290
        %v1299 = vmul.f32 %v1163, %v1290
        %v1300 = vmul.f32 %v1164, %v1290
        %v1301 = vmul.f32 %v1165, %v1290
        %v1302 = vmul.f32 %v1166, %v1290
        %v1303 = vmul.f32 %v1167, %v1290
        %v1304 = vmul.f32 %v1168, %v1290
        %v1305 = vmul.f32 %v1169, %v1290
        %v1306 = vmul.f32 %v1170, %v1290
        %v1307 = vmul.f32 %v1171, %v1290
        %v1308 = vmul.f32 %v1172, %v1290
        %v1309 = vmul.f32 %v1173, %v1290
        %v1310 = vmul.f32 %v1174, %v1290
        %v1311 = vmul.f32 %v1175, %v1290
        %v1312 = vmul.f32 %v1176, %v1290
        %v1313 = vmul.f32 %v1177, %v1290
        %v1314 = vmul.f32 %v1178, %v1290
        %v1315 = vmul.f32 %v1179, %v1290
        %v1316 = vmul.f32 %v1180, %v1290
        %v1317 = vmul.f32 %v1181, %v1290
        %v1318 = vmul.f32 %v1182, %v1290
        %v1319 = vmul.f32 %v1183, %v1290
        %v1320 = vmul.f32 %v1184, %v1290
        %v1321 = vmul.f32 %v1185, %v1290
        %v1322 = vmul.f32 %v1186, %v1290
        %v1323 = vld [vmem:[#allocation7] sm:$0x1]
        %v1325 = vlaneseq
        %v1326 = vshrl.u32 %v1325, 7
        %v1327 = vsub.s32 0, %v1326
        %v1328 = vrot.slane %v1323, %v1327
        %v1330 = vmul.f32 %v1291, %v1328
        %v1331 = vmul.f32 %v1292, %v1328
        %v1332 = vmul.f32 %v1293, %v1328
        %v1333 = vmul.f32 %v1294, %v1328
        %v1334 = vmul.f32 %v1295, %v1328
        %v1335 = vmul.f32 %v1296, %v1328
        %v1336 = vmul.f32 %v1297, %v1328
        %v1337 = vmul.f32 %v1298, %v1328
        %v1338 = vmul.f32 %v1299, %v1328
        %v1339 = vmul.f32 %v1300, %v1328
        %v1340 = vmul.f32 %v1301, %v1328
        %v1341 = vmul.f32 %v1302, %v1328
        %v1342 = vmul.f32 %v1303, %v1328
        %v1343 = vmul.f32 %v1304, %v1328
        %v1344 = vmul.f32 %v1305, %v1328
        %v1345 = vmul.f32 %v1306, %v1328
        %v1346 = vmul.f32 %v1307, %v1328
        %v1347 = vmul.f32 %v1308, %v1328
        %v1348 = vmul.f32 %v1309, %v1328
        %v1349 = vmul.f32 %v1310, %v1328
        %v1350 = vmul.f32 %v1311, %v1328
        %v1351 = vmul.f32 %v1312, %v1328
        %v1352 = vmul.f32 %v1313, %v1328
        %v1353 = vmul.f32 %v1314, %v1328
        %v1354 = vmul.f32 %v1315, %v1328
        %v1355 = vmul.f32 %v1316, %v1328
        %v1356 = vmul.f32 %v1317, %v1328
        %v1357 = vmul.f32 %v1318, %v1328
        %v1358 = vmul.f32 %v1319, %v1328
        %v1359 = vmul.f32 %v1320, %v1328
        %v1360 = vmul.f32 %v1321, %v1328
        %v1361 = vmul.f32 %v1322, %v1328
        %v1362 = vld [vmem:[#allocation8] sm:$0x1]
        %v1364 = vlaneseq
        %v1365 = vshrl.u32 %v1364, 7
        %v1366 = vsub.s32 0, %v1365
        %v1367 = vrot.slane %v1362, %v1366
        %v1369 = vadd.f32 %v1330, %v1367
        %v1370 = vadd.f32 %v1331, %v1367
        %v1371 = vadd.f32 %v1332, %v1367
        %v1372 = vadd.f32 %v1333, %v1367
        %v1373 = vadd.f32 %v1334, %v1367
        %v1374 = vadd.f32 %v1335, %v1367
        %v1375 = vadd.f32 %v1336, %v1367
        %v1376 = vadd.f32 %v1337, %v1367
        %v1377 = vadd.f32 %v1338, %v1367
        %v1378 = vadd.f32 %v1339, %v1367
        %v1379 = vadd.f32 %v1340, %v1367
        %v1380 = vadd.f32 %v1341, %v1367
        %v1381 = vadd.f32 %v1342, %v1367
        %v1382 = vadd.f32 %v1343, %v1367
        %v1383 = vadd.f32 %v1344, %v1367
        %v1384 = vadd.f32 %v1345, %v1367
        %v1385 = vadd.f32 %v1346, %v1367
        %v1386 = vadd.f32 %v1347, %v1367
        %v1387 = vadd.f32 %v1348, %v1367
        %v1388 = vadd.f32 %v1349, %v1367
        %v1389 = vadd.f32 %v1350, %v1367
        %v1390 = vadd.f32 %v1351, %v1367
        %v1391 = vadd.f32 %v1352, %v1367
        %v1392 = vadd.f32 %v1353, %v1367
        %v1393 = vadd.f32 %v1354, %v1367
        %v1394 = vadd.f32 %v1355, %v1367
        %v1395 = vadd.f32 %v1356, %v1367
        %v1396 = vadd.f32 %v1357, %v1367
        %v1397 = vadd.f32 %v1358, %v1367
        %v1398 = vadd.f32 %v1359, %v1367
        %v1399 = vadd.f32 %v1360, %v1367
        %v1400 = vadd.f32 %v1361, %v1367
        %v1401 = vmax.f32 %v1369, 0.0
        %v1402 = vmax.f32 %v1370, 0.0
        %v1403 = vmax.f32 %v1371, 0.0
        %v1404 = vmax.f32 %v1372, 0.0
        %v1405 = vmax.f32 %v1373, 0.0
        %v1406 = vmax.f32 %v1374, 0.0
        %v1407 = vmax.f32 %v1375, 0.0
        %v1408 = vmax.f32 %v1376, 0.0
        %v1409 = vmax.f32 %v1377, 0.0
        %v1410 = vmax.f32 %v1378, 0.0
        %v1411 = vmax.f32 %v1379, 0.0
        %v1412 = vmax.f32 %v1380, 0.0
        %v1413 = vmax.f32 %v1381, 0.0
        %v1414 = vmax.f32 %v1382, 0.0
        %v1415 = vmax.f32 %v1383, 0.0
        %v1416 = vmax.f32 %v1384, 0.0
        %v1417 = vmax.f32 %v1385, 0.0
        %v1418 = vmax.f32 %v1386, 0.0
        %v1419 = vmax.f32 %v1387, 0.0
        %v1420 = vmax.f32 %v1388, 0.0
        %v1421 = vmax.f32 %v1389, 0.0
        %v1422 = vmax.f32 %v1390, 0.0
        %v1423 = vmax.f32 %v1391, 0.0
        %v1424 = vmax.f32 %v1392, 0.0
        %v1425 = vmax.f32 %v1393, 0.0
        %v1426 = vmax.f32 %v1394, 0.0
        %v1427 = vmax.f32 %v1395, 0.0
        %v1428 = vmax.f32 %v1396, 0.0
        %v1429 = vmax.f32 %v1397, 0.0
        %v1430 = vmax.f32 %v1398, 0.0
        %v1431 = vmax.f32 %v1399, 0.0
        %v1432 = vmax.f32 %v1400, 0.0
        %v1433 = vpack.c.bf16 %v1402, %v1401
        %v1434 = vpack.c.bf16 %v1404, %v1403
        %v1435 = vpack.c.bf16 %v1406, %v1405
        %v1436 = vpack.c.bf16 %v1408, %v1407
        %v1437 = vpack.c.bf16 %v1410, %v1409
        %v1438 = vpack.c.bf16 %v1412, %v1411
        %v1439 = vpack.c.bf16 %v1414, %v1413
        %v1440 = vpack.c.bf16 %v1416, %v1415
        %v1441 = vpack.c.bf16 %v1418, %v1417
        %v1442 = vpack.c.bf16 %v1420, %v1419
        %v1443 = vpack.c.bf16 %v1422, %v1421
        %v1444 = vpack.c.bf16 %v1424, %v1423
        %v1445 = vpack.c.bf16 %v1426, %v1425
        %v1446 = vpack.c.bf16 %v1428, %v1427
        %v1447 = vpack.c.bf16 %v1430, %v1429
        %v1448 = vpack.c.bf16 %v1432, %v1431
        %v1465 = vunpack.c.l.b16 %v1433
        %v1466 = vunpack.c.h.b16 %v1433
        %v1467 = vunpack.c.l.b16 %v1434
        %v1468 = vunpack.c.h.b16 %v1434
        %v1469 = vunpack.c.l.b16 %v1435
        %v1470 = vunpack.c.h.b16 %v1435
        %v1471 = vunpack.c.l.b16 %v1436
        %v1472 = vunpack.c.h.b16 %v1436
        %v1473 = vunpack.c.l.b16 %v1437
        %v1474 = vunpack.c.h.b16 %v1437
        %v1475 = vunpack.c.l.b16 %v1438
        %v1476 = vunpack.c.h.b16 %v1438
        %v1477 = vunpack.c.l.b16 %v1439
        %v1478 = vunpack.c.h.b16 %v1439
        %v1479 = vunpack.c.l.b16 %v1440
        %v1480 = vunpack.c.h.b16 %v1440
        %v1481 = vunpack.c.l.b16 %v1441
        %v1482 = vunpack.c.h.b16 %v1441
        %v1483 = vunpack.c.l.b16 %v1442
        %v1484 = vunpack.c.h.b16 %v1442
        %v1485 = vunpack.c.l.b16 %v1443
        %v1486 = vunpack.c.h.b16 %v1443
        %v1487 = vunpack.c.l.b16 %v1444
        %v1488 = vunpack.c.h.b16 %v1444
        %v1489 = vunpack.c.l.b16 %v1445
        %v1490 = vunpack.c.h.b16 %v1445
        %v1491 = vunpack.c.l.b16 %v1446
        %v1492 = vunpack.c.h.b16 %v1446
        %v1493 = vunpack.c.l.b16 %v1447
        %v1494 = vunpack.c.h.b16 %v1447
        %v1495 = vunpack.c.l.b16 %v1448
        %v1496 = vunpack.c.h.b16 %v1448
        %v1497 = vpack.c.b16 %v1465, %v1465
        %v1498 = vpack.c.b16 %v1466, %v1466
        %v1499 = vpack.c.b16 %v1467, %v1467
        %v1500 = vpack.c.b16 %v1468, %v1468
        %v1501 = vpack.c.b16 %v1469, %v1469
        %v1502 = vpack.c.b16 %v1470, %v1470
        %v1503 = vpack.c.b16 %v1471, %v1471
        %v1504 = vpack.c.b16 %v1472, %v1472
        %v1505 = vpack.c.b16 %v1473, %v1473
        %v1506 = vpack.c.b16 %v1474, %v1474
        %v1507 = vpack.c.b16 %v1475, %v1475
        %v1508 = vpack.c.b16 %v1476, %v1476
        %v1509 = vpack.c.b16 %v1477, %v1477
        %v1510 = vpack.c.b16 %v1478, %v1478
        %v1511 = vpack.c.b16 %v1479, %v1479
        %v1512 = vpack.c.b16 %v1480, %v1480
        %v1513 = vpack.c.b16 %v1481, %v1481
        %v1514 = vpack.c.b16 %v1482, %v1482
        %v1515 = vpack.c.b16 %v1483, %v1483
        %v1516 = vpack.c.b16 %v1484, %v1484
        %v1517 = vpack.c.b16 %v1485, %v1485
        %v1518 = vpack.c.b16 %v1486, %v1486
        %v1519 = vpack.c.b16 %v1487, %v1487
        %v1520 = vpack.c.b16 %v1488, %v1488
        %v1521 = vpack.c.b16 %v1489, %v1489
        %v1522 = vpack.c.b16 %v1490, %v1490
        %v1523 = vpack.c.b16 %v1491, %v1491
        %v1524 = vpack.c.b16 %v1492, %v1492
        %v1525 = vpack.c.b16 %v1493, %v1493
        %v1526 = vpack.c.b16 %v1494, %v1494
        %v1527 = vpack.c.b16 %v1495, %v1495
        %v1528 = vpack.c.b16 %v1496, %v1496
        %vm1561 = vcmask 60416
        %1562 = vst.msk [vmem:[%s255] sm:$0xf] %vm1561, %v1497
        %1563 = vst.msk [vmem:[%s255 + $0x4] sm:$0xf] %vm1561, %v1498
        %1564 = vst.msk [vmem:[%s255 + $0x8] sm:$0xf] %vm1561, %v1499
        %1565 = vst.msk [vmem:[%s255 + $0xc] sm:$0xf] %vm1561, %v1500
        %1566 = vst.msk [vmem:[%s255 + $0x10] sm:$0xf] %vm1561, %v1501
        %1567 = vst.msk [vmem:[%s255 + $0x14] sm:$0xf] %vm1561, %v1502
        %1568 = vst.msk [vmem:[%s255 + $0x18] sm:$0xf] %vm1561, %v1503
        %1569 = vst.msk [vmem:[%s255 + $0x1c] sm:$0xf] %vm1561, %v1504
        %1570 = vst.msk [vmem:[%s255 + $0x20] sm:$0xf] %vm1561, %v1505
        %1571 = vst.msk [vmem:[%s255 + $0x24] sm:$0xf] %vm1561, %v1506
        %1572 = vst.msk [vmem:[%s255 + $0x28] sm:$0xf] %vm1561, %v1507
        %1573 = vst.msk [vmem:[%s255 + $0x2c] sm:$0xf] %vm1561, %v1508
        %1574 = vst.msk [vmem:[%s255 + $0x30] sm:$0xf] %vm1561, %v1509
        %1575 = vst.msk [vmem:[%s255 + $0x34] sm:$0xf] %vm1561, %v1510
        %1576 = vst.msk [vmem:[%s255 + $0x38] sm:$0xf] %vm1561, %v1511
        %1577 = vst.msk [vmem:[%s255 + $0x3c] sm:$0xf] %vm1561, %v1512
        %1578 = vst.msk [vmem:[%s255 + $0x40] sm:$0xf] %vm1561, %v1513
        %1579 = vst.msk [vmem:[%s255 + $0x44] sm:$0xf] %vm1561, %v1514
        %1580 = vst.msk [vmem:[%s255 + $0x48] sm:$0xf] %vm1561, %v1515
        %1581 = vst.msk [vmem:[%s255 + $0x4c] sm:$0xf] %vm1561, %v1516
        %1582 = vst.msk [vmem:[%s255 + $0x50] sm:$0xf] %vm1561, %v1517
        %1583 = vst.msk [vmem:[%s255 + $0x54] sm:$0xf] %vm1561, %v1518
        %1584 = vst.msk [vmem:[%s255 + $0x58] sm:$0xf] %vm1561, %v1519
        %1585 = vst.msk [vmem:[%s255 + $0x5c] sm:$0xf] %vm1561, %v1520
        %1586 = vst.msk [vmem:[%s255 + $0x60] sm:$0xf] %vm1561, %v1521
        %1587 = vst.msk [vmem:[%s255 + $0x64] sm:$0xf] %vm1561, %v1522
        %1588 = vst.msk [vmem:[%s255 + $0x68] sm:$0xf] %vm1561, %v1523
        %1589 = vst.msk [vmem:[%s255 + $0x6c] sm:$0xf] %vm1561, %v1524
        %1590 = vst.msk [vmem:[%s255 + $0x70] sm:$0xf] %vm1561, %v1525
        %1591 = vst.msk [vmem:[%s255 + $0x74] sm:$0xf] %vm1561, %v1526
        %1592 = vst.msk [vmem:[%s255 + $0x78] sm:$0xf] %vm1561, %v1527
        %1593 = vst.msk [vmem:[%s255 + $0x7c] sm:$0xf] %vm1561, %v1528
        %s1594 = sand.u32 %s120, 1
        %s1595 = scalar_lea.sflag [#allocation4], %s1594
        %s1596 = sand.u32 %s120, 1
        %s1597 = smul.addr %s1596, 128
        %s1598 = scalar_lea.vmem [#allocation10], %s1597
        // Predicated region
        $region53: #{_lambda_.12} parent=35 // pred_check
          %p1599 = pneg %p130
        $region54: #{_lambda_.12} parent=35 // pred_check_branch
          %1601 = sbr.rel (%p1599) target = $region56
        $region55: #{_lambda_.12} parent=35 // pred_region
          %s1603 = ssub.s32 2048, 2048
          %1604 = vsyncadd %s1595, %s1603
          %s1605 = smul.addr %s23, 32
          %s1606 = smul.addr %s1605, 64
          %s1607 = scalar_lea.hbm %s4, %s1606
          %s1608 = sshll.u32 %s1598, 4
          %s1609 = int_to_ptr.vmem [resolvable:$true] %s1608
          %1614 = dma.vmem_to_hbm [thread:$0]  %s1609, 2048, %s1607, %s1595, 64, 64, 4
        $region56: #{_lambda_.12} parent=35 // pred_fallthru
          _
      $region36: #{_lambda_.12} parent=5 // pred_fallthru
        _
      %p1615 = scmp.le.s32.totalorder 2, %s18
      // Predicated region
      $region57: #{_lambda_.12} parent=5 // pred_check
        %p1616 = pneg %p1615
      $region58: #{_lambda_.12} parent=5 // pred_check_branch
        %1618 = sbr.rel (%p1616) target = $region60
      $region59: #{_lambda_.12} parent=5 // pred_region
        %s1619 = ssub.s32 %s18, 2
        // Predicated region
        $region61: #{_lambda_.12} parent=59 // pred_check
          %p1620 = pneg %p136
        $region62: #{_lambda_.12} parent=59 // pred_check_branch
          %1622 = sbr.rel (%p1620) target = $region64
        $region63: #{_lambda_.12} parent=59 // pred_region
          %s1623 = sand.u32 %s121, 1
          %s1624 = scalar_lea.sflag [#allocation4], %s1623
          %s1625 = sand.u32 %s121, 1
          %s1626 = smul.addr %s1625, 128
          %s1627 = scalar_lea.vmem [#allocation10], %s1626
          %1628 = dma.done %s1624, 2048
        $region64: #{_lambda_.12} parent=59 // pred_fallthru
          _
      $region60: #{_lambda_.12} parent=5 // pred_fallthru
        _
    $region6: #{_lambda_.12} parent=1 // loop_footer
      %s22 = sadd.s32 1, %s18
    $region7: #{_lambda_.12} parent=1 // loop_footer_branch
      %17 = sbr.rel target = $region3
    $region8: #{_lambda_.12} parent=1 // loop_exit
      _
    %1629 = vsyncpa [#allocation3], 1
    %s1630 = scalar_lea.sflag [#allocation3], 1
    %1631 = vsyncpa %s1630, 1
    %1632 = vsyncpa [#allocation6], 1
    %1633 = vsyncpa [#allocation9], 1
    %1634 = vsyncpa [#allocation4], 1
    %s1635 = scalar_lea.sflag [#allocation4], 1
    %1636 = vsyncpa %s1635, 1

// kernel: _lambda_.13
$region0: #{_lambda_.13}
  #allocation0 [shape = 'u32[]', space=smem, size = 0x4, offset = 0x4, fixed_abs, tag = 'smem constant byte address 0x4 - core index']
  #allocation1 [shape = 'u32[144,128]{1,0:T(1,128)}', space=vmem, size = 0x12000, scoped, tag = 'internal scratch']
  %s0 = inlined_call_operand.hbm [shape: bf16[2,64,128], index: 0, kind: input, shape index: {}]
  %s1 = inlined_call_operand.hbm [shape: bf16[128,96], index: 1, kind: input, shape index: {}]
  %s2 = inlined_call_operand.hbm [shape: f32[1,96], index: 2, kind: input, shape index: {}]
  %s3 = inlined_call_operand.hbm [shape: bf16[2,64,12], index: 3, kind: output, shape index: {0}]
  %s4 = inlined_call_operand.hbm [shape: bf16[2,64,4], index: 4, kind: output, shape index: {1}]
  %5 = xla_tuple %s3, %s4
  %s6 = sld [smem:[#allocation0]]
  $region65: #{_lambda_.13} parent=0
    _
  %s8 = ssub.s32 1, %s6
  %s9 = scalar_select 0, %s8, %s6
  $region1: #{_lambda_.13} parent=0
    #allocation2 [shape = 'u8[32768]{0}', space=vmem, size = 0x8000, scoped, tag = 'input window, operand 0']
    #allocation3 [shape = 's32[2]{0}', space=sflag, size = 0x8, scoped, tag = 'scoped memory for _lambda_.13']
    #allocation4 [shape = 's32[2]{0}', space=sflag, size = 0x8, scoped, tag = 'scoped memory for _lambda_.13']
    #allocation5 [shape = 'u8[32768]{0}', space=vmem, size = 0x8000, scoped, tag = 'input window, operand 1, single buffered']
    #allocation6 [shape = 's32[1]{0}', space=sflag, size = 0x4, scoped, tag = 'scoped memory for _lambda_.13']
    #allocation7 [shape = 'u8[512]{0}', space=vmem, size = 0x400, scoped, tag = 'input window, operand 2, single buffered']
    #allocation8 [shape = 'u8[32768]{0}', space=vmem, size = 0x8000, scoped, tag = 'output window, operand 0']
    #allocation9 [shape = 'u8[32768]{0}', space=vmem, size = 0x8000, scoped, tag = 'output window, operand 1']
    #allocation10 [shape = 's32[2]{0}', space=sflag, size = 0x8, scoped, tag = 'scoped memory for _lambda_.13']
    %10 = vsyncpa [#allocation3], 0
    %s11 = scalar_lea.sflag [#allocation3], 1
    %12 = vsyncpa %s11, 0
    %13 = vsyncpa [#allocation6], 0
    %14 = vsyncpa [#allocation4], 0
    %s15 = scalar_lea.sflag [#allocation4], 1
    %16 = vsyncpa %s15, 0
    %17 = vsyncpa [#allocation10], 0
    %s18 = scalar_lea.sflag [#allocation10], 1
    %19 = vsyncpa %s18, 0
    loop: start=0, step=1, limit=4
    $region2: #{_lambda_.13} parent=1 // loop_pre_header
      _
    $region3: #{_lambda_.13} parent=1 // loop_header
      %s21 = sphi 0, %s25
      %p22 = scmp.ge.s32.totalorder %s21, 4
      %s31 = sphi 0, %s33
      %s34 = sphi 0, %s31
      %s35 = sphi 0, %s34
      %s51 = sphi 0, %s35
      %s55 = sphi 0, %s55
      %s57 = sphi 0, %s55
      %s58 = sphi 0, %s57
      %s72 = sphi 0, %s58
      %s76 = sphi 0, %s76
      %s78 = sphi 0, %s76
      %s79 = sphi 0, %s78
      %s93 = sphi 0, %s79
      %s99 = sphi 0, %s101
      %s102 = sphi 0, %s99
      %s103 = sphi 0, %s102
      %s119 = sphi 0, %s103
      %s125 = sphi 0, %s127
      %s128 = sphi 0, %s125
      %s129 = sphi 0, %s128
      %s145 = sphi 0, %s129
    $region4: #{_lambda_.13} parent=1 // loop_header_branch
      %24 = sbr.rel (%p22) target = $region8
    $region5: #{_lambda_.13} parent=1 // loop_body
      %s26 = ssub.s32 %s21, 1
      %s27 = ssub.s32 %s21, 2
      %s28 = sadd.s32 %s21, 1
      %s29 = ssub.s32 %s21, %s28
      %p30 = scmp.eq.s32.totalorder %s29, 0
      %s32 = sadd.s32 %s31, 1
      %s33 = scalar_select %p30, %s31, %s32
      %p36 = pneg %p30
      %p37 = scmp.eq.s32.totalorder %s21, 1
      %p38 = por %p36, %p37
      %p39 = scmp.ne.s32.totalorder %s31, %s34
      %p40 = scmp.eq.s32.totalorder %s21, 0
      %p41 = por %p39, %p40
      %p42 = scmp.ne.s32.totalorder %s31, %s34
      %p43 = scmp.eq.s32.totalorder %s26, 1
      %p44 = por %p42, %p43
      %p45 = scmp.ne.s32.totalorder %s34, %s35
      %p46 = scmp.eq.s32.totalorder %s26, 0
      %p47 = por %p45, %p46
      %p48 = scmp.ne.s32.totalorder %s34, %s35
      %p49 = scmp.eq.s32.totalorder %s27, 1
      %p50 = por %p48, %p49
      %p52 = scmp.ne.s32.totalorder %s35, %s51
      %p53 = scmp.eq.s32.totalorder %s27, 0
      %p54 = por %p52, %p53
      %s56 = sadd.s32 %s55, 1
      %p59 = scmp.eq.s32.totalorder %s21, 1
      %p60 = scmp.ne.s32.totalorder %s55, %s57
      %p61 = scmp.eq.s32.totalorder %s21, 0
      %p62 = por %p60, %p61
      %p63 = scmp.ne.s32.totalorder %s55, %s57
      %p64 = scmp.eq.s32.totalorder %s26, 1
      %p65 = por %p63, %p64
      %p66 = scmp.ne.s32.totalorder %s57, %s58
      %p67 = scmp.eq.s32.totalorder %s26, 0
      %p68 = por %p66, %p67
      %p69 = scmp.ne.s32.totalorder %s57, %s58
      %p70 = scmp.eq.s32.totalorder %s27, 1
      %p71 = por %p69, %p70
      %p73 = scmp.ne.s32.totalorder %s58, %s72
      %p74 = scmp.eq.s32.totalorder %s27, 0
      %p75 = por %p73, %p74
      %s77 = sadd.s32 %s76, 1
      %p80 = scmp.eq.s32.totalorder %s21, 1
      %p81 = scmp.ne.s32.totalorder %s76, %s78
      %p82 = scmp.eq.s32.totalorder %s21, 0
      %p83 = por %p81, %p82
      %p84 = scmp.ne.s32.totalorder %s76, %s78
      %p85 = scmp.eq.s32.totalorder %s26, 1
      %p86 = por %p84, %p85
      %p87 = scmp.ne.s32.totalorder %s78, %s79
      %p88 = scmp.eq.s32.totalorder %s26, 0
      %p89 = por %p87, %p88
      %p90 = scmp.ne.s32.totalorder %s78, %s79
      %p91 = scmp.eq.s32.totalorder %s27, 1
      %p92 = por %p90, %p91
      %p94 = scmp.ne.s32.totalorder %s79, %s93
      %p95 = scmp.eq.s32.totalorder %s27, 0
      %p96 = por %p94, %p95
      %s97 = ssub.s32 %s21, %s28
      %p98 = scmp.eq.s32.totalorder %s97, 0
      %s100 = sadd.s32 %s99, 1
      %s101 = scalar_select %p98, %s99, %s100
      %p104 = pneg %p98
      %p105 = scmp.eq.s32.totalorder %s21, 1
      %p106 = por %p104, %p105
      %p107 = scmp.ne.s32.totalorder %s99, %s102
      %p108 = scmp.eq.s32.totalorder %s21, 0
      %p109 = por %p107, %p108
      %p110 = scmp.ne.s32.totalorder %s99, %s102
      %p111 = scmp.eq.s32.totalorder %s26, 1
      %p112 = por %p110, %p111
      %p113 = scmp.ne.s32.totalorder %s102, %s103
      %p114 = scmp.eq.s32.totalorder %s26, 0
      %p115 = por %p113, %p114
      %p116 = scmp.ne.s32.totalorder %s102, %s103
      %p117 = scmp.eq.s32.totalorder %s27, 1
      %p118 = por %p116, %p117
      %p120 = scmp.ne.s32.totalorder %s103, %s119
      %p121 = scmp.eq.s32.totalorder %s27, 0
      %p122 = por %p120, %p121
      %s123 = ssub.s32 %s21, %s28
      %p124 = scmp.eq.s32.totalorder %s123, 0
      %s126 = sadd.s32 %s125, 1
      %s127 = scalar_select %p124, %s125, %s126
      %p130 = pneg %p124
      %p131 = scmp.eq.s32.totalorder %s21, 1
      %p132 = por %p130, %p131
      %p133 = scmp.ne.s32.totalorder %s125, %s128
      %p134 = scmp.eq.s32.totalorder %s21, 0
      %p135 = por %p133, %p134
      %p136 = scmp.ne.s32.totalorder %s125, %s128
      %p137 = scmp.eq.s32.totalorder %s26, 1
      %p138 = por %p136, %p137
      %p139 = scmp.ne.s32.totalorder %s128, %s129
      %p140 = scmp.eq.s32.totalorder %s26, 0
      %p141 = por %p139, %p140
      %p142 = scmp.ne.s32.totalorder %s128, %s129
      %p143 = scmp.eq.s32.totalorder %s27, 1
      %p144 = por %p142, %p143
      %p146 = scmp.ne.s32.totalorder %s129, %s145
      %p147 = scmp.eq.s32.totalorder %s27, 0
      %p148 = por %p146, %p147
      %p149 = scmp.le.s32.totalorder 1, %s21
      %p150 = scmp.lt.s32.totalorder %s21, 3
      %p151 = pnand %p149, %p150
      %p152 = pneg %p151
      // Predicated region
      $region9: #{_lambda_.13} parent=5 // pred_check
        _
      $region10: #{_lambda_.13} parent=5 // pred_check_branch
        %154 = sbr.rel (%p151) target = $region12
      $region11: #{_lambda_.13} parent=5 // pred_region
        %s155 = ssub.s32 %s21, 1
        // Predicated region
        $region13: #{_lambda_.13} parent=11 // pred_check
          %p156 = pneg %p68
        $region14: #{_lambda_.13} parent=11 // pred_check_branch
          %158 = sbr.rel (%p156) target = $region16
        $region15: #{_lambda_.13} parent=11 // pred_region
          %s160 = ssub.s32 1024, 1024
          %161 = vsyncadd [#allocation6], %s160
          %s162 = sshll.u32 [#allocation5], 4
          %s163 = int_to_ptr.vmem [resolvable:$true] %s162
          %168 = dma.hbm_to_vmem [thread:$0]  %s1, 1024, %s163, [#allocation6], 64, 64, 4
        $region16: #{_lambda_.13} parent=11 // pred_fallthru
          _
        // Predicated region
        $region17: #{_lambda_.13} parent=11 // pred_check
          %p169 = pneg %p89
        $region18: #{_lambda_.13} parent=11 // pred_check_branch
          %171 = sbr.rel (%p169) target = $region20
        $region19: #{_lambda_.13} parent=11 // pred_region
          %s173 = ssub.s32 16, 16
          %174 = vsyncadd [#allocation6], %s173
          %s176 = sshll.u32 [#allocation7], 4
          %s177 = int_to_ptr.vmem [resolvable:$true] %s176
          %179 = dma.hbm_to_vmem [thread:$0]  %s2, 16, %s177, [#allocation6]
        $region20: #{_lambda_.13} parent=11 // pred_fallthru
          _
      $region12: #{_lambda_.13} parent=5 // pred_fallthru
        _
      %p180 = scmp.lt.s32.totalorder %s21, 2
      // Predicated region
      $region21: #{_lambda_.13} parent=5 // pred_check
        %p181 = pneg %p180
      $region22: #{_lambda_.13} parent=5 // pred_check_branch
        %183 = sbr.rel (%p181) target = $region24
      $region23: #{_lambda_.13} parent=5 // pred_region
        // Predicated region
        $region25: #{_lambda_.13} parent=23 // pred_check
          %p184 = pneg %p41
        $region26: #{_lambda_.13} parent=23 // pred_check_branch
          %186 = sbr.rel (%p184) target = $region28
        $region27: #{_lambda_.13} parent=23 // pred_region
          %s187 = sand.u32 %s31, 1
          %s188 = scalar_lea.sflag [#allocation3], %s187
          %s189 = sand.u32 %s31, 1
          %s190 = smul.addr %s189, 32
          %s191 = scalar_lea.vmem [#allocation2], %s190
          %s193 = ssub.s32 512, 512
          %194 = vsyncadd %s188, %s193
          %s195 = smul.addr %s21, 8
          %s196 = smul.addr %s195, 64
          %s197 = scalar_lea.hbm %s0, %s196
          %s198 = sshll.u32 %s191, 4
          %s199 = int_to_ptr.vmem [resolvable:$true] %s198
          %204 = dma.hbm_to_vmem [thread:$0]  %s197, 512, %s199, %s188, 64, 64, 4
        $region28: #{_lambda_.13} parent=23 // pred_fallthru
          _
      $region24: #{_lambda_.13} parent=5 // pred_fallthru
        _
      %p205 = scmp.le.s32.totalorder 1, %s21
      %p206 = scmp.lt.s32.totalorder %s21, 3
      %p207 = pnand %p205, %p206
      %p208 = pneg %p207
      // Predicated region
      $region29: #{_lambda_.13} parent=5 // pred_check
        _
      $region30: #{_lambda_.13} parent=5 // pred_check_branch
        %210 = sbr.rel (%p207) target = $region32
      $region31: #{_lambda_.13} parent=5 // pred_region
        %s211 = ssub.s32 %s21, 1
        %s212 = sand.u32 %s34, 1
        %s213 = scalar_lea.sflag [#allocation3], %s212
        %s214 = sand.u32 %s34, 1
        %s215 = smul.addr %s214, 32
        %s216 = scalar_lea.vmem [#allocation2], %s215
        // Predicated region
        $region33: #{_lambda_.13} parent=31 // pred_check
          %p217 = pneg %p47
        $region34: #{_lambda_.13} parent=31 // pred_check_branch
          %219 = sbr.rel (%p217) target = $region36
        $region35: #{_lambda_.13} parent=31 // pred_region
          %220 = dma.done %s213, 512
        $region36: #{_lambda_.13} parent=31 // pred_fallthru
          _
        // Predicated region
        $region37: #{_lambda_.13} parent=31 // pred_check
          %p221 = pneg %p68
        $region38: #{_lambda_.13} parent=31 // pred_check_branch
          %223 = sbr.rel (%p221) target = $region40
        $region39: #{_lambda_.13} parent=31 // pred_region
          %224 = dma.done [#allocation6], 1024
        $region40: #{_lambda_.13} parent=31 // pred_fallthru
          _
        // Predicated region
        $region41: #{_lambda_.13} parent=31 // pred_check
          %p225 = pneg %p89
        $region42: #{_lambda_.13} parent=31 // pred_check_branch
          %227 = sbr.rel (%p225) target = $region44
        $region43: #{_lambda_.13} parent=31 // pred_region
          %228 = dma.done [#allocation6], 16
        $region44: #{_lambda_.13} parent=31 // pred_fallthru
          _
        %s229 = sand.u32 %s34, 1
        %s230 = scalar_lea.sflag [#allocation3], %s229
        %s231 = sand.u32 %s34, 1
        %s232 = smul.addr %s231, 32
        %s233 = scalar_lea.vmem [#allocation2], %s232
        %p234 = pneg %p47
        %p235 = pneg %p44
        %p236 = pneg %p68
        %p237 = pneg %p65
        %p238 = pneg %p89
        %p239 = pneg %p86
        %p240 = pneg %p115
        %p241 = pneg %p112
        %s242 = sand.u32 %s102, 1
        %s243 = scalar_lea.sflag [#allocation4], %s242
        %s244 = sand.u32 %s102, 1
        %s245 = smul.addr %s244, 32
        %s246 = scalar_lea.vmem [#allocation8], %s245
        %p247 = pneg %p141
        %p248 = pneg %p138
        %s249 = sand.u32 %s128, 1
        %s250 = scalar_lea.sflag [#allocation10], %s249
        %s251 = sand.u32 %s128, 1
        %s252 = smul.addr %s251, 32
        %s253 = scalar_lea.vmem [#allocation9], %s252
        %v255 = vld [vmem:[%s216] sm:$0xf]
        %v256 = vld [vmem:[%s216 + $0x4] sm:$0xf]
        %v257 = vld [vmem:[%s216 + $0x8] sm:$0xf]
        %v258 = vld [vmem:[%s216 + $0xc] sm:$0xf]
        %v259 = vld [vmem:[%s216 + $0x10] sm:$0xf]
        %v260 = vld [vmem:[%s216 + $0x14] sm:$0xf]
        %v261 = vld [vmem:[%s216 + $0x18] sm:$0xf]
        %v262 = vld [vmem:[%s216 + $0x1c] sm:$0xf]
        %v263 = vld [vmem:[#allocation5] sm:$0xf]
        %v264 = vld [vmem:[#allocation5 + $0x4] sm:$0xf]
        %v265 = vld [vmem:[#allocation5 + $0x8] sm:$0xf]
        %v266 = vld [vmem:[#allocation5 + $0xc] sm:$0xf]
        %v267 = vld [vmem:[#allocation5 + $0x10] sm:$0xf]
        %v268 = vld [vmem:[#allocation5 + $0x14] sm:$0xf]
        %v269 = vld [vmem:[#allocation5 + $0x18] sm:$0xf]
        %v270 = vld [vmem:[#allocation5 + $0x1c] sm:$0xf]
        %v271 = vld [vmem:[#allocation5 + $0x20] sm:$0xf]
        %v272 = vld [vmem:[#allocation5 + $0x24] sm:$0xf]
        %v273 = vld [vmem:[#allocation5 + $0x28] sm:$0xf]
        %v274 = vld [vmem:[#allocation5 + $0x2c] sm:$0xf]
        %v275 = vld [vmem:[#allocation5 + $0x30] sm:$0xf]
        %v276 = vld [vmem:[#allocation5 + $0x34] sm:$0xf]
        %v277 = vld [vmem:[#allocation5 + $0x38] sm:$0xf]
        %v278 = vld [vmem:[#allocation5 + $0x3c] sm:$0xf]
        %v279 = vld [vmem:[#allocation7] sm:$0x1]
        %v281 = vlaneseq
        %v282 = vshrl.u32 %v281, 7
        %v283 = vsub.s32 0, %v282
        %v284 = vrot.slane %v279, %v283
        %v294 = vunpack.c.l.b16 %v255
        %v295 = vunpack.c.l.b16 %v256
        %v296 = vunpack.c.l.b16 %v257
        %v297 = vunpack.c.l.b16 %v258
        %v298 = vunpack.c.l.b16 %v259
        %v299 = vunpack.c.l.b16 %v260
        %v300 = vunpack.c.l.b16 %v261
        %v301 = vunpack.c.l.b16 %v262
        %v302 = vpack.c.b16 %v295, %v294
        %v303 = vpack.c.b16 %v297, %v296
        %v304 = vpack.c.b16 %v299, %v298
        %v305 = vpack.c.b16 %v301, %v300
        %v326 = vunpack.c.l.b16 %v263
        %v327 = vunpack.c.l.b16 %v264
        %v328 = vunpack.c.l.b16 %v265
        %v329 = vunpack.c.l.b16 %v266
        %v330 = vunpack.c.l.b16 %v267
        %v331 = vunpack.c.l.b16 %v268
        %v332 = vunpack.c.l.b16 %v269
        %v333 = vunpack.c.l.b16 %v270
        %v334 = vunpack.c.l.b16 %v271
        %v335 = vunpack.c.l.b16 %v272
        %v336 = vunpack.c.l.b16 %v273
        %v337 = vunpack.c.l.b16 %v274
        %v338 = vunpack.c.l.b16 %v275
        %v339 = vunpack.c.l.b16 %v276
        %v340 = vunpack.c.l.b16 %v277
        %v341 = vunpack.c.l.b16 %v278
        %v342 = vpack.c.b16 %v327, %v326
        %v343 = vpack.c.b16 %v329, %v328
        %v344 = vpack.c.b16 %v331, %v330
        %v345 = vpack.c.b16 %v333, %v332
        %v346 = vpack.c.b16 %v335, %v334
        %v347 = vpack.c.b16 %v337, %v336
        %v348 = vpack.c.b16 %v339, %v338
        %v349 = vpack.c.b16 %v341, %v340
        %358 = vmatprep.subr.bf16.mxu0 0
        %359 = vmatpush1.bf16.msra.mxu0 %v342
        %360 = vmatprep.subr.bf16.mxu0 0
        %361 = vmatpush1.bf16.msra.mxu0 %v343
        %362 = vmatprep.subr.bf16.mxu0 0
        %363 = vmatpush1.bf16.msra.mxu0 %v344
        %364 = vmatprep.subr.bf16.mxu0 0
        %365 = vmatpush1.bf16.msra.mxu0 %v345
        %366 = vmatprep.subr.bf16.mxu0 0
        %367 = vmatpush1.bf16.msra.mxu0 %v346
        %368 = vmatprep.subr.bf16.mxu0 0
        %369 = vmatpush1.bf16.msra.mxu0 %v347
        %370 = vmatprep.subr.bf16.mxu0 0
        %371 = vmatpush1.bf16.msra.mxu0 %v348
        %372 = vmatprep.subr.bf16.mxu0 0
        %373 = vmatpush1.bf16.msra.mxu0 %v349
        %374 = vmatprep.subr.bf16.mxu0 0
        %375 = vmatpush1.bf16.msra.mxu0 0
        %376 = vmatprep.subr.bf16.mxu0 0
        %377 = vmatpush1.bf16.msra.mxu0 0
        %378 = vmatprep.subr.bf16.mxu0 0
        %379 = vmatpush1.bf16.msra.mxu0 0
        %380 = vmatprep.subr.bf16.mxu0 0
        %381 = vmatpush1.bf16.msra.mxu0 0
        %382 = vmatprep.subr.bf16.mxu0 0
        %383 = vmatpush1.bf16.msra.mxu0 0
        %384 = vmatprep.subr.bf16.mxu0 0
        %385 = vmatpush1.bf16.msra.mxu0 0
        %386 = vmatprep.subr.bf16.mxu0 0
        %387 = vmatpush1.bf16.msra.mxu0 0
        %388 = vmatprep.subr.bf16.mxu0 0
        %389 = vmatpush1.bf16.msra.mxu0 0
        %390 = vmatprep.mubr.bf16.mxu0 0
        %391 = vmatmul.mubr.bf16.gmra.mrb[0].mxu0 %v302
        %v392 = vpop.f32.mrb[0].mxu0
        %v393 = vadd.f32 %v284, %v392
        %v394 = vpop.f32.mrb[0].mxu0
        %v395 = vpop.f32.mrb[0].mxu0
        %v396 = vadd.f32 %v284, %v395
        %v397 = vpop.f32.mrb[0].mxu0
        %398 = vmatprep.mubr.bf16.mxu0 0
        %399 = vmatmul.mubr.bf16.gmra.mrb[0].mxu0 %v303
        %v400 = vpop.f32.mrb[0].mxu0
        %v401 = vadd.f32 %v284, %v400
        %v402 = vpop.f32.mrb[0].mxu0
        %v403 = vpop.f32.mrb[0].mxu0
        %v404 = vadd.f32 %v284, %v403
        %v405 = vpop.f32.mrb[0].mxu0
        %406 = vmatprep.mubr.bf16.mxu0 0
        %407 = vmatmul.mubr.bf16.gmra.mrb[0].mxu0 %v304
        %v408 = vpop.f32.mrb[0].mxu0
        %v409 = vadd.f32 %v284, %v408
        %v410 = vpop.f32.mrb[0].mxu0
        %v411 = vpop.f32.mrb[0].mxu0
        %v412 = vadd.f32 %v284, %v411
        %v413 = vpop.f32.mrb[0].mxu0
        %414 = vmatprep.mubr.bf16.mxu0 0
        %415 = vmatmul.mubr.bf16.gmra.mrb[0].mxu0 %v305
        %v416 = vpop.f32.mrb[0].mxu0
        %v417 = vadd.f32 %v284, %v416
        %v418 = vpop.f32.mrb[0].mxu0
        %v419 = vpop.f32.mrb[0].mxu0
        %v420 = vadd.f32 %v284, %v419
        %v421 = vpop.f32.mrb[0].mxu0
        %422 = vdwg.mxu0
        %v423 = vpack.c.bf16 %v396, %v393
        %v424 = vpack.c.bf16 %v404, %v401
        %v425 = vpack.c.bf16 %v412, %v409
        %v426 = vpack.c.bf16 %v420, %v417
        %v431 = vunpack.c.l.b16 %v423
        %v432 = vunpack.c.h.b16 %v423
        %v433 = vunpack.c.l.b16 %v424
        %v434 = vunpack.c.h.b16 %v424
        %v435 = vunpack.c.l.b16 %v425
        %v436 = vunpack.c.h.b16 %v425
        %v437 = vunpack.c.l.b16 %v426
        %v438 = vunpack.c.h.b16 %v426
        %v439 = vpack.c.b16 %v431, %v431
        %v440 = vpack.c.b16 %v432, %v432
        %v441 = vpack.c.b16 %v433, %v433
        %v442 = vpack.c.b16 %v434, %v434
        %v443 = vpack.c.b16 %v435, %v435
        %v444 = vpack.c.b16 %v436, %v436
        %v445 = vpack.c.b16 %v437, %v437
        %v446 = vpack.c.b16 %v438, %v438
        %vm455 = vcmask 93184
        %456 = vst.msk [vmem:[%s246] sm:$0xf] %vm455, %v439
        %457 = vst.msk [vmem:[%s246 + $0x4] sm:$0xf] %vm455, %v440
        %458 = vst.msk [vmem:[%s246 + $0x8] sm:$0xf] %vm455, %v441
        %459 = vst.msk [vmem:[%s246 + $0xc] sm:$0xf] %vm455, %v442
        %460 = vst.msk [vmem:[%s246 + $0x10] sm:$0xf] %vm455, %v443
        %461 = vst.msk [vmem:[%s246 + $0x14] sm:$0xf] %vm455, %v444
        %462 = vst.msk [vmem:[%s246 + $0x18] sm:$0xf] %vm455, %v445
        %463 = vst.msk [vmem:[%s246 + $0x1c] sm:$0xf] %vm455, %v446
        %464 = vrot.lane.b32.xlu0 %v423, 116
        %v465 = vpop.permute.xlu0 %464
        %466 = vrot.lane.b32.xlu0 %v424, 116
        %v467 = vpop.permute.xlu0 %466
        %468 = vrot.lane.b32.xlu0 %v425, 116
        %v469 = vpop.permute.xlu0 %468
        %470 = vrot.lane.b32.xlu0 %v426, 116
        %v471 = vpop.permute.xlu0 %470
        %472 = vrot.lane.b32.xlu0 %v423, 76
        %v473 = vpop.permute.xlu0 %472
        %474 = vrot.lane.b32.xlu0 %v424, 76
        %v475 = vpop.permute.xlu0 %474
        %476 = vrot.lane.b32.xlu0 %v425, 76
        %v477 = vpop.permute.xlu0 %476
        %478 = vrot.lane.b32.xlu0 %v426, 76
        %v479 = vpop.permute.xlu0 %478
        %vm480 = vcmask 326656
        %v482 = vsel %vm480, %v465, 0
        %v485 = vsel %vm480, %v467, 0
        %v488 = vsel %vm480, %v469, 0
        %v491 = vsel %vm480, %v471, 0
        %v494 = vsel %vm480, %v473, 0
        %v497 = vsel %vm480, %v475, 0
        %v500 = vsel %vm480, %v477, 0
        %v503 = vsel %vm480, %v479, 0
        %505 = vmatprep.subr.bf16.mxu0 0
        %506 = vmatpush1.bf16.xpose.msra.mxu0 %v494
        %507 = vmatprep.subr.bf16.mxu0 0
        %508 = vmatpush1.bf16.xpose.msra.mxu0 %v497
        %509 = vmatprep.subr.bf16.mxu0 0
        %510 = vmatpush1.bf16.xpose.msra.mxu0 %v500
        %511 = vmatprep.subr.bf16.mxu0 0
        %512 = vmatpush1.bf16.xpose.msra.mxu0 %v503
        %513 = vmatprep.subr.bf16.mxu0 0
        %514 = vmatpush1.bf16.xpose.msra.mxu0 0
        %515 = vmatprep.subr.bf16.mxu0 0
        %516 = vmatpush1.bf16.xpose.msra.mxu0 0
        %517 = vmatprep.subr.bf16.mxu0 0
        %518 = vmatpush1.bf16.xpose.msra.mxu0 0
        %519 = vmatprep.subr.bf16.mxu0 0
        %520 = vmatpush1.bf16.xpose.msra.mxu0 0
        %521 = vmatprep.subr.bf16.mxu0 0
        %522 = vmatpush1.bf16.xpose.msra.mxu0 0
        %523 = vmatprep.subr.bf16.mxu0 0
        %524 = vmatpush1.bf16.xpose.msra.mxu0 0
        %525 = vmatprep.subr.bf16.mxu0 0
        %526 = vmatpush1.bf16.xpose.msra.mxu0 0
        %527 = vmatprep.subr.bf16.mxu0 0
        %528 = vmatpush1.bf16.xpose.msra.mxu0 0
        %529 = vmatprep.subr.bf16.mxu0 0
        %530 = vmatpush1.bf16.xpose.msra.mxu0 0
        %531 = vmatprep.subr.bf16.mxu0 0
        %532 = vmatpush1.bf16.xpose.msra.mxu0 0
        %533 = vmatprep.subr.bf16.mxu0 0
        %534 = vmatpush1.bf16.xpose.msra.mxu0 0
        %535 = vmatprep.subr.bf16.mxu0 0
        %536 = vmatpush1.bf16.xpose.msra.mxu0 0
        %537 = vmatprep.mubr.bf16.mxu0 0
        %538 = vmatmul.mubr.bf16.gmra.mrb[0].mxu0 %v482
        %v539 = vpop.f32.mrb[0].mxu0
        %v540 = vadd.f32 0.0, %v539
        %v541 = vpop.f32.mrb[0].mxu0
        %v542 = vpop.f32.mrb[0].mxu0
        %v543 = vadd.f32 0.0, %v542
        %v544 = vpop.f32.mrb[0].mxu0
        %545 = vmatprep.mubr.bf16.mxu0 0
        %546 = vmatmul.mubr.bf16.gmra.mrb[0].mxu0 %v485
        %v547 = vpop.f32.mrb[0].mxu0
        %v548 = vadd.f32 0.0, %v547
        %v549 = vpop.f32.mrb[0].mxu0
        %v550 = vpop.f32.mrb[0].mxu0
        %v551 = vadd.f32 0.0, %v550
        %v552 = vpop.f32.mrb[0].mxu0
        %553 = vmatprep.mubr.bf16.mxu0 0
        %554 = vmatmul.mubr.bf16.gmra.mrb[0].mxu0 %v488
        %v555 = vpop.f32.mrb[0].mxu0
        %v556 = vadd.f32 0.0, %v555
        %v557 = vpop.f32.mrb[0].mxu0
        %v558 = vpop.f32.mrb[0].mxu0
        %v559 = vadd.f32 0.0, %v558
        %v560 = vpop.f32.mrb[0].mxu0
        %561 = vmatprep.mubr.bf16.mxu0 0
        %562 = vmatmul.mubr.bf16.gmra.mrb[0].mxu0 %v491
        %v563 = vpop.f32.mrb[0].mxu0
        %v564 = vadd.f32 0.0, %v563
        %v565 = vpop.f32.mrb[0].mxu0
        %v566 = vpop.f32.mrb[0].mxu0
        %v567 = vadd.f32 0.0, %v566
        %v568 = vpop.f32.mrb[0].mxu0
        %569 = vdwg.mxu0
        %vm570 = vcmask 523264
        %v571 = vsel %vm570, %v540, -inf
        %572 = vmax.xlane.f32.xlu0 %v571
        %v573 = vpop.xlane.xlu0 %572
        %v574 = vsel %vm570, %v543, -inf
        %575 = vmax.xlane.f32.xlu0 %v574
        %v576 = vpop.xlane.xlu0 %575
        %v577 = vsel %vm570, %v548, -inf
        %578 = vmax.xlane.f32.xlu0 %v577
        %v579 = vpop.xlane.xlu0 %578
        %v580 = vsel %vm570, %v551, -inf
        %581 = vmax.xlane.f32.xlu0 %v580
        %v582 = vpop.xlane.xlu0 %581
        %v583 = vsel %vm570, %v556, -inf
        %584 = vmax.xlane.f32.xlu0 %v583
        %v585 = vpop.xlane.xlu0 %584
        %v586 = vsel %vm570, %v559, -inf
        %587 = vmax.xlane.f32.xlu0 %v586
        %v588 = vpop.xlane.xlu0 %587
        %v589 = vsel %vm570, %v564, -inf
        %590 = vmax.xlane.f32.xlu0 %v589
        %v591 = vpop.xlane.xlu0 %590
        %v592 = vsel %vm570, %v567, -inf
        %593 = vmax.xlane.f32.xlu0 %v592
        %v594 = vpop.xlane.xlu0 %593
        %v595 = vsub.f32 %v540, %v573
        %v596 = vsub.f32 %v543, %v576
        %v597 = vsub.f32 %v548, %v579
        %v598 = vsub.f32 %v551, %v582
        %v599 = vsub.f32 %v556, %v585
        %v600 = vsub.f32 %v559, %v588
        %v601 = vsub.f32 %v564, %v591
        %v602 = vsub.f32 %v567, %v594
        %v603 = vmul.f32 %v595, 1.442695
        %v604 = vpow.pop %v603
        %v605 = vmul.f32 %v596, 1.442695
        %v606 = vpow.pop %v605
        %v607 = vmul.f32 %v597, 1.442695
        %v608 = vpow.pop %v607
        %v609 = vmul.f32 %v598, 1.442695
        %v610 = vpow.pop %v609
        %v611 = vmul.f32 %v599, 1.442695
        %v612 = vpow.pop %v611
        %v613 = vmul.f32 %v600, 1.442695
        %v614 = vpow.pop %v613
        %v615 = vmul.f32 %v601, 1.442695
        %v616 = vpow.pop %v615
        %v617 = vmul.f32 %v602, 1.442695
        %v618 = vpow.pop %v617
        %v619 = vsel %vm570, %v604, 0.0
        %620 = vadd.xlane.f32.xlu0 %v619
        %v621 = vpop.xlane.xlu0 %620
        %v622 = vsel %vm570, %v606, 0.0
        %623 = vadd.xlane.f32.xlu0 %v622
        %v624 = vpop.xlane.xlu0 %623
        %v625 = vsel %vm570, %v608, 0.0
        %626 = vadd.xlane.f32.xlu0 %v625
        %v627 = vpop.xlane.xlu0 %626
        %v628 = vsel %vm570, %v610, 0.0
        %629 = vadd.xlane.f32.xlu0 %v628
        %v630 = vpop.xlane.xlu0 %629
        %v631 = vsel %vm570, %v612, 0.0
        %632 = vadd.xlane.f32.xlu0 %v631
        %v633 = vpop.xlane.xlu0 %632
        %v634 = vsel %vm570, %v614, 0.0
        %635 = vadd.xlane.f32.xlu0 %v634
        %v636 = vpop.xlane.xlu0 %635
        %v637 = vsel %vm570, %v616, 0.0
        %638 = vadd.xlane.f32.xlu0 %v637
        %v639 = vpop.xlane.xlu0 %638
        %v640 = vsel %vm570, %v618, 0.0
        %641 = vadd.xlane.f32.xlu0 %v640
        %v642 = vpop.xlane.xlu0 %641
        %v643 = vrcp.pop %v621
        %v644 = vrcp.pop %v624
        %v645 = vrcp.pop %v627
        %v646 = vrcp.pop %v630
        %v647 = vrcp.pop %v633
        %v648 = vrcp.pop %v636
        %v649 = vrcp.pop %v639
        %v650 = vrcp.pop %v642
        %v651 = vmul.f32 %v604, %v643
        %v652 = vmul.f32 %v606, %v644
        %v653 = vmul.f32 %v608, %v645
        %v654 = vmul.f32 %v610, %v646
        %v655 = vmul.f32 %v612, %v647
        %v656 = vmul.f32 %v614, %v648
        %v657 = vmul.f32 %v616, %v649
        %v658 = vmul.f32 %v618, %v650
        %v659 = vpack.c.bf16 %v652, %v651
        %v660 = vpack.c.bf16 %v654, %v653
        %v661 = vpack.c.bf16 %v656, %v655
        %v662 = vpack.c.bf16 %v658, %v657
        %663 = vrot.lane.b32.xlu0 %v423, 36
        %v664 = vpop.permute.xlu0 %663
        %665 = vrot.lane.b32.xlu0 %v424, 36
        %v666 = vpop.permute.xlu0 %665
        %667 = vrot.lane.b32.xlu0 %v425, 36
        %v668 = vpop.permute.xlu0 %667
        %669 = vrot.lane.b32.xlu0 %v426, 36
        %v670 = vpop.permute.xlu0 %669
        %v676 = vsel %vm570, %v659, 0
        %v679 = vsel %vm570, %v660, 0
        %v682 = vsel %vm570, %v661, 0
        %v685 = vsel %vm570, %v662, 0
        %687 = vmatprep.subr.bf16.mxu0 0
        %688 = vmatpush1.bf16.msra.mxu0 %v664
        %689 = vmatprep.subr.bf16.mxu0 0
        %690 = vmatpush1.bf16.msra.mxu0 %v666
        %691 = vmatprep.subr.bf16.mxu0 0
        %692 = vmatpush1.bf16.msra.mxu0 %v668
        %693 = vmatprep.subr.bf16.mxu0 0
        %694 = vmatpush1.bf16.msra.mxu0 %v670
        %695 = vmatprep.subr.bf16.mxu0 0
        %696 = vmatpush1.bf16.msra.mxu0 0
        %697 = vmatprep.subr.bf16.mxu0 0
        %698 = vmatpush1.bf16.msra.mxu0 0
        %699 = vmatprep.subr.bf16.mxu0 0
        %700 = vmatpush1.bf16.msra.mxu0 0
        %701 = vmatprep.subr.bf16.mxu0 0
        %702 = vmatpush1.bf16.msra.mxu0 0
        %703 = vmatprep.subr.bf16.mxu0 0
        %704 = vmatpush1.bf16.msra.mxu0 0
        %705 = vmatprep.subr.bf16.mxu0 0
        %706 = vmatpush1.bf16.msra.mxu0 0
        %707 = vmatprep.subr.bf16.mxu0 0
        %708 = vmatpush1.bf16.msra.mxu0 0
        %709 = vmatprep.subr.bf16.mxu0 0
        %710 = vmatpush1.bf16.msra.mxu0 0
        %711 = vmatprep.subr.bf16.mxu0 0
        %712 = vmatpush1.bf16.msra.mxu0 0
        %713 = vmatprep.subr.bf16.mxu0 0
        %714 = vmatpush1.bf16.msra.mxu0 0
        %715 = vmatprep.subr.bf16.mxu0 0
        %716 = vmatpush1.bf16.msra.mxu0 0
        %717 = vmatprep.subr.bf16.mxu0 0
        %718 = vmatpush1.bf16.msra.mxu0 0
        %719 = vmatprep.mubr.bf16.mxu0 0
        %720 = vmatmul.mubr.bf16.gmra.mrb[0].mxu0 %v676
        %v721 = vpop.f32.mrb[0].mxu0
        %v722 = vadd.f32 0.0, %v721
        %v723 = vpop.f32.mrb[0].mxu0
        %v724 = vpop.f32.mrb[0].mxu0
        %v725 = vadd.f32 0.0, %v724
        %v726 = vpop.f32.mrb[0].mxu0
        %727 = vmatprep.mubr.bf16.mxu0 0
        %728 = vmatmul.mubr.bf16.gmra.mrb[0].mxu0 %v679
        %v729 = vpop.f32.mrb[0].mxu0
        %v730 = vadd.f32 0.0, %v729
        %v731 = vpop.f32.mrb[0].mxu0
        %v732 = vpop.f32.mrb[0].mxu0
        %v733 = vadd.f32 0.0, %v732
        %v734 = vpop.f32.mrb[0].mxu0
        %735 = vmatprep.mubr.bf16.mxu0 0
        %736 = vmatmul.mubr.bf16.gmra.mrb[0].mxu0 %v682
        %v737 = vpop.f32.mrb[0].mxu0
        %v738 = vadd.f32 0.0, %v737
        %v739 = vpop.f32.mrb[0].mxu0
        %v740 = vpop.f32.mrb[0].mxu0
        %v741 = vadd.f32 0.0, %v740
        %v742 = vpop.f32.mrb[0].mxu0
        %743 = vmatprep.mubr.bf16.mxu0 0
        %744 = vmatmul.mubr.bf16.gmra.mrb[0].mxu0 %v685
        %v745 = vpop.f32.mrb[0].mxu0
        %v746 = vadd.f32 0.0, %v745
        %v747 = vpop.f32.mrb[0].mxu0
        %v748 = vpop.f32.mrb[0].mxu0
        %v749 = vadd.f32 0.0, %v748
        %v750 = vpop.f32.mrb[0].mxu0
        %751 = vdwg.mxu0
        %v752 = vpack.c.bf16 %v725, %v722
        %v753 = vpack.c.bf16 %v733, %v730
        %v754 = vpack.c.bf16 %v741, %v738
        %v755 = vpack.c.bf16 %v749, %v746
        %v760 = vunpack.c.l.b16 %v752
        %v761 = vunpack.c.h.b16 %v752
        %v762 = vunpack.c.l.b16 %v753
        %v763 = vunpack.c.h.b16 %v753
        %v764 = vunpack.c.l.b16 %v754
        %v765 = vunpack.c.h.b16 %v754
        %v766 = vunpack.c.l.b16 %v755
        %v767 = vunpack.c.h.b16 %v755
        %v768 = vpack.c.b16 %v760, %v760
        %v769 = vpack.c.b16 %v761, %v761
        %v770 = vpack.c.b16 %v762, %v762
        %v771 = vpack.c.b16 %v763, %v763
        %v772 = vpack.c.b16 %v764, %v764
        %v773 = vpack.c.b16 %v765, %v765
        %v774 = vpack.c.b16 %v766, %v766
        %v775 = vpack.c.b16 %v767, %v767
        %vm784 = vcmask 27648
        %785 = vst.msk [vmem:[%s253] sm:$0xf] %vm784, %v768
        %786 = vst.msk [vmem:[%s253 + $0x4] sm:$0xf] %vm784, %v769
        %787 = vst.msk [vmem:[%s253 + $0x8] sm:$0xf] %vm784, %v770
        %788 = vst.msk [vmem:[%s253 + $0xc] sm:$0xf] %vm784, %v771
        %789 = vst.msk [vmem:[%s253 + $0x10] sm:$0xf] %vm784, %v772
        %790 = vst.msk [vmem:[%s253 + $0x14] sm:$0xf] %vm784, %v773
        %791 = vst.msk [vmem:[%s253 + $0x18] sm:$0xf] %vm784, %v774
        %792 = vst.msk [vmem:[%s253 + $0x1c] sm:$0xf] %vm784, %v775
        %s793 = sand.u32 %s102, 1
        %s794 = scalar_lea.sflag [#allocation4], %s793
        %s795 = sand.u32 %s102, 1
        %s796 = smul.addr %s795, 32
        %s797 = scalar_lea.vmem [#allocation8], %s796
        %s798 = sand.u32 %s128, 1
        %s799 = scalar_lea.sflag [#allocation10], %s798
        %s800 = sand.u32 %s128, 1
        %s801 = smul.addr %s800, 32
        %s802 = scalar_lea.vmem [#allocation9], %s801
        // Predicated region
        $region45: #{_lambda_.13} parent=31 // pred_check
          %p803 = pneg %p112
        $region46: #{_lambda_.13} parent=31 // pred_check_branch
          %805 = sbr.rel (%p803) target = $region48
        $region47: #{_lambda_.13} parent=31 // pred_region
          %s807 = ssub.s32 512, 512
          %808 = vsyncadd %s794, %s807
          %s809 = smul.addr %s26, 8
          %s810 = smul.addr %s809, 64
          %s811 = scalar_lea.hbm %s3, %s810
          %s812 = sshll.u32 %s797, 4
          %s813 = int_to_ptr.vmem [resolvable:$true] %s812
          %818 = dma.vmem_to_hbm [thread:$0]  %s813, 512, %s811, %s794, 64, 64, 4
        $region48: #{_lambda_.13} parent=31 // pred_fallthru
          _
        // Predicated region
        $region49: #{_lambda_.13} parent=31 // pred_check
          %p819 = pneg %p138
        $region50: #{_lambda_.13} parent=31 // pred_check_branch
          %821 = sbr.rel (%p819) target = $region52
        $region51: #{_lambda_.13} parent=31 // pred_region
          %s823 = ssub.s32 512, 512
          %824 = vsyncadd %s799, %s823
          %s825 = smul.addr %s26, 8
          %s826 = smul.addr %s825, 64
          %s827 = scalar_lea.hbm %s4, %s826
          %s828 = sshll.u32 %s802, 4
          %s829 = int_to_ptr.vmem [resolvable:$true] %s828
          %834 = dma.vmem_to_hbm [thread:$0]  %s829, 512, %s827, %s799, 64, 64, 4
        $region52: #{_lambda_.13} parent=31 // pred_fallthru
          _
      $region32: #{_lambda_.13} parent=5 // pred_fallthru
        _
      %p835 = scmp.le.s32.totalorder 2, %s21
      // Predicated region
      $region53: #{_lambda_.13} parent=5 // pred_check
        %p836 = pneg %p835
      $region54: #{_lambda_.13} parent=5 // pred_check_branch
        %838 = sbr.rel (%p836) target = $region56
      $region55: #{_lambda_.13} parent=5 // pred_region
        %s839 = ssub.s32 %s21, 2
        // Predicated region
        $region57: #{_lambda_.13} parent=55 // pred_check
          %p840 = pneg %p118
        $region58: #{_lambda_.13} parent=55 // pred_check_branch
          %842 = sbr.rel (%p840) target = $region60
        $region59: #{_lambda_.13} parent=55 // pred_region
          %s843 = sand.u32 %s103, 1
          %s844 = scalar_lea.sflag [#allocation4], %s843
          %s845 = sand.u32 %s103, 1
          %s846 = smul.addr %s845, 32
          %s847 = scalar_lea.vmem [#allocation8], %s846
          %848 = dma.done %s844, 512
        $region60: #{_lambda_.13} parent=55 // pred_fallthru
          _
        // Predicated region
        $region61: #{_lambda_.13} parent=55 // pred_check
          %p849 = pneg %p144
        $region62: #{_lambda_.13} parent=55 // pred_check_branch
          %851 = sbr.rel (%p849) target = $region64
        $region63: #{_lambda_.13} parent=55 // pred_region
          %s852 = sand.u32 %s129, 1
          %s853 = scalar_lea.sflag [#allocation10], %s852
          %s854 = sand.u32 %s129, 1
          %s855 = smul.addr %s854, 32
          %s856 = scalar_lea.vmem [#allocation9], %s855
          %857 = dma.done %s853, 512
        $region64: #{_lambda_.13} parent=55 // pred_fallthru
          _
      $region56: #{_lambda_.13} parent=5 // pred_fallthru
        _
    $region6: #{_lambda_.13} parent=1 // loop_footer
      %s25 = sadd.s32 1, %s21
    $region7: #{_lambda_.13} parent=1 // loop_footer_branch
      %20 = sbr.rel target = $region3
    $region8: #{_lambda_.13} parent=1 // loop_exit
      _
    %858 = vsyncpa [#allocation3], 1
    %s859 = scalar_lea.sflag [#allocation3], 1
    %860 = vsyncpa %s859, 1
    %861 = vsyncpa [#allocation6], 1
    %862 = vsyncpa [#allocation4], 1
    %s863 = scalar_lea.sflag [#allocation4], 1
    %864 = vsyncpa %s863, 1
    %865 = vsyncpa [#allocation10], 1
    %s866 = scalar_lea.sflag [#allocation10], 1
    %867 = vsyncpa %s866, 1

// kernel: _lambda_.14
$region0: #{_lambda_.14}
  #allocation0 [shape = 'u32[]', space=smem, size = 0x4, offset = 0x4, fixed_abs, tag = 'smem constant byte address 0x4 - core index']
  #allocation1 [shape = 'u32[144,128]{1,0:T(1,128)}', space=vmem, size = 0x12000, scoped, tag = 'internal scratch']
  %s0 = inlined_call_operand.hbm [shape: bf16[2,64,12], index: 0, kind: input, shape index: {}]
  %s1 = inlined_call_operand.hbm [shape: bf16[2,64,4], index: 1, kind: input, shape index: {}]
  %s2 = inlined_call_operand.hbm [shape: bf16[4,4], index: 2, kind: input, shape index: {}]
  %s3 = inlined_call_operand.hbm [shape: f32[1,4], index: 3, kind: input, shape index: {}]
  %s4 = inlined_call_operand.hbm [shape: f32[1,16], index: 4, kind: input, shape index: {}]
  %s5 = inlined_call_operand.hbm [shape: f32[1,16], index: 5, kind: input, shape index: {}]
  %s6 = inlined_call_operand.hbm [shape: bf16[2,64,16], index: 6, kind: output, shape index: {}]
  %s7 = sld [smem:[#allocation0]]
  $region81: #{_lambda_.14} parent=0
    _
  %s9 = ssub.s32 1, %s7
  %s10 = scalar_select 0, %s9, %s7
  $region1: #{_lambda_.14} parent=0
    #allocation2 [shape = 'u8[32768]{0}', space=vmem, size = 0x8000, scoped, tag = 'input window, operand 0']
    #allocation3 [shape = 's32[2]{0}', space=sflag, size = 0x8, scoped, tag = 'scoped memory for _lambda_.14']
    #allocation4 [shape = 's32[2]{0}', space=sflag, size = 0x8, scoped, tag = 'scoped memory for _lambda_.14']
    #allocation5 [shape = 'u8[32768]{0}', space=vmem, size = 0x8000, scoped, tag = 'input window, operand 1']
    #allocation6 [shape = 's32[2]{0}', space=sflag, size = 0x8, scoped, tag = 'scoped memory for _lambda_.14']
    #allocation7 [shape = 'u8[1024]{0}', space=vmem, size = 0x400, scoped, tag = 'input window, operand 2, single buffered']
    #allocation8 [shape = 'u8[512]{0}', space=vmem, size = 0x400, scoped, tag = 'input window, operand 3, single buffered']
    #allocation9 [shape = 's32[1]{0}', space=sflag, size = 0x4, scoped, tag = 'scoped memory for _lambda_.14']
    #allocation10 [shape = 'u8[512]{0}', space=vmem, size = 0x400, scoped, tag = 'input window, operand 4, single buffered']
    #allocation11 [shape = 'u8[512]{0}', space=vmem, size = 0x400, scoped, tag = 'input window, operand 5, single buffered']
    #allocation12 [shape = 's32[1]{0}', space=sflag, size = 0x4, scoped, tag = 'scoped memory for _lambda_.14']
    #allocation13 [shape = 'u8[32768]{0}', space=vmem, size = 0x8000, scoped, tag = 'output window, operand 0']
    %11 = vsyncpa [#allocation3], 0
    %s12 = scalar_lea.sflag [#allocation3], 1
    %13 = vsyncpa %s12, 0
    %14 = vsyncpa [#allocation6], 0
    %s15 = scalar_lea.sflag [#allocation6], 1
    %16 = vsyncpa %s15, 0
    %17 = vsyncpa [#allocation9], 0
    %18 = vsyncpa [#allocation12], 0
    %19 = vsyncpa [#allocation4], 0
    %s20 = scalar_lea.sflag [#allocation4], 1
    %21 = vsyncpa %s20, 0
    loop: start=0, step=1, limit=4
    $region2: #{_lambda_.14} parent=1 // loop_pre_header
      _
    $region3: #{_lambda_.14} parent=1 // loop_header
      %s23 = sphi 0, %s27
      %p24 = scmp.ge.s32.totalorder %s23, 4
      %s33 = sphi 0, %s35
      %s36 = sphi 0, %s33
      %s37 = sphi 0, %s36
      %s53 = sphi 0, %s37
      %s59 = sphi 0, %s61
      %s62 = sphi 0, %s59
      %s63 = sphi 0, %s62
      %s79 = sphi 0, %s63
      %s83 = sphi 0, %s83
      %s85 = sphi 0, %s83
      %s86 = sphi 0, %s85
      %s100 = sphi 0, %s86
      %s104 = sphi 0, %s104
      %s106 = sphi 0, %s104
      %s107 = sphi 0, %s106
      %s121 = sphi 0, %s107
      %s125 = sphi 0, %s125
      %s127 = sphi 0, %s125
      %s128 = sphi 0, %s127
      %s142 = sphi 0, %s128
      %s146 = sphi 0, %s146
      %s148 = sphi 0, %s146
      %s149 = sphi 0, %s148
      %s163 = sphi 0, %s149
      %s169 = sphi 0, %s171
      %s172 = sphi 0, %s169
      %s173 = sphi 0, %s172
      %s189 = sphi 0, %s173
    $region4: #{_lambda_.14} parent=1 // loop_header_branch
      %26 = sbr.rel (%p24) target = $region8
    $region5: #{_lambda_.14} parent=1 // loop_body
      %s28 = ssub.s32 %s23, 1
      %s29 = ssub.s32 %s23, 2
      %s30 = sadd.s32 %s23, 1
      %s31 = ssub.s32 %s23, %s30
      %p32 = scmp.eq.s32.totalorder %s31, 0
      %s34 = sadd.s32 %s33, 1
      %s35 = scalar_select %p32, %s33, %s34
      %p38 = pneg %p32
      %p39 = scmp.eq.s32.totalorder %s23, 1
      %p40 = por %p38, %p39
      %p41 = scmp.ne.s32.totalorder %s33, %s36
      %p42 = scmp.eq.s32.totalorder %s23, 0
      %p43 = por %p41, %p42
      %p44 = scmp.ne.s32.totalorder %s33, %s36
      %p45 = scmp.eq.s32.totalorder %s28, 1
      %p46 = por %p44, %p45
      %p47 = scmp.ne.s32.totalorder %s36, %s37
      %p48 = scmp.eq.s32.totalorder %s28, 0
      %p49 = por %p47, %p48
      %p50 = scmp.ne.s32.totalorder %s36, %s37
      %p51 = scmp.eq.s32.totalorder %s29, 1
      %p52 = por %p50, %p51
      %p54 = scmp.ne.s32.totalorder %s37, %s53
      %p55 = scmp.eq.s32.totalorder %s29, 0
      %p56 = por %p54, %p55
      %s57 = ssub.s32 %s23, %s30
      %p58 = scmp.eq.s32.totalorder %s57, 0
      %s60 = sadd.s32 %s59, 1
      %s61 = scalar_select %p58, %s59, %s60
      %p64 = pneg %p58
      %p65 = scmp.eq.s32.totalorder %s23, 1
      %p66 = por %p64, %p65
      %p67 = scmp.ne.s32.totalorder %s59, %s62
      %p68 = scmp.eq.s32.totalorder %s23, 0
      %p69 = por %p67, %p68
      %p70 = scmp.ne.s32.totalorder %s59, %s62
      %p71 = scmp.eq.s32.totalorder %s28, 1
      %p72 = por %p70, %p71
      %p73 = scmp.ne.s32.totalorder %s62, %s63
      %p74 = scmp.eq.s32.totalorder %s28, 0
      %p75 = por %p73, %p74
      %p76 = scmp.ne.s32.totalorder %s62, %s63
      %p77 = scmp.eq.s32.totalorder %s29, 1
      %p78 = por %p76, %p77
      %p80 = scmp.ne.s32.totalorder %s63, %s79
      %p81 = scmp.eq.s32.totalorder %s29, 0
      %p82 = por %p80, %p81
      %s84 = sadd.s32 %s83, 1
      %p87 = scmp.eq.s32.totalorder %s23, 1
      %p88 = scmp.ne.s32.totalorder %s83, %s85
      %p89 = scmp.eq.s32.totalorder %s23, 0
      %p90 = por %p88, %p89
      %p91 = scmp.ne.s32.totalorder %s83, %s85
      %p92 = scmp.eq.s32.totalorder %s28, 1
      %p93 = por %p91, %p92
      %p94 = scmp.ne.s32.totalorder %s85, %s86
      %p95 = scmp.eq.s32.totalorder %s28, 0
      %p96 = por %p94, %p95
      %p97 = scmp.ne.s32.totalorder %s85, %s86
      %p98 = scmp.eq.s32.totalorder %s29, 1
      %p99 = por %p97, %p98
      %p101 = scmp.ne.s32.totalorder %s86, %s100
      %p102 = scmp.eq.s32.totalorder %s29, 0
      %p103 = por %p101, %p102
      %s105 = sadd.s32 %s104, 1
      %p108 = scmp.eq.s32.totalorder %s23, 1
      %p109 = scmp.ne.s32.totalorder %s104, %s106
      %p110 = scmp.eq.s32.totalorder %s23, 0
      %p111 = por %p109, %p110
      %p112 = scmp.ne.s32.totalorder %s104, %s106
      %p113 = scmp.eq.s32.totalorder %s28, 1
      %p114 = por %p112, %p113
      %p115 = scmp.ne.s32.totalorder %s106, %s107
      %p116 = scmp.eq.s32.totalorder %s28, 0
      %p117 = por %p115, %p116
      %p118 = scmp.ne.s32.totalorder %s106, %s107
      %p119 = scmp.eq.s32.totalorder %s29, 1
      %p120 = por %p118, %p119
      %p122 = scmp.ne.s32.totalorder %s107, %s121
      %p123 = scmp.eq.s32.totalorder %s29, 0
      %p124 = por %p122, %p123
      %s126 = sadd.s32 %s125, 1
      %p129 = scmp.eq.s32.totalorder %s23, 1
      %p130 = scmp.ne.s32.totalorder %s125, %s127
      %p131 = scmp.eq.s32.totalorder %s23, 0
      %p132 = por %p130, %p131
      %p133 = scmp.ne.s32.totalorder %s125, %s127
      %p134 = scmp.eq.s32.totalorder %s28, 1
      %p135 = por %p133, %p134
      %p136 = scmp.ne.s32.totalorder %s127, %s128
      %p137 = scmp.eq.s32.totalorder %s28, 0
      %p138 = por %p136, %p137
      %p139 = scmp.ne.s32.totalorder %s127, %s128
      %p140 = scmp.eq.s32.totalorder %s29, 1
      %p141 = por %p139, %p140
      %p143 = scmp.ne.s32.totalorder %s128, %s142
      %p144 = scmp.eq.s32.totalorder %s29, 0
      %p145 = por %p143, %p144
      %s147 = sadd.s32 %s146, 1
      %p150 = scmp.eq.s32.totalorder %s23, 1
      %p151 = scmp.ne.s32.totalorder %s146, %s148
      %p152 = scmp.eq.s32.totalorder %s23, 0
      %p153 = por %p151, %p152
      %p154 = scmp.ne.s32.totalorder %s146, %s148
      %p155 = scmp.eq.s32.totalorder %s28, 1
      %p156 = por %p154, %p155
      %p157 = scmp.ne.s32.totalorder %s148, %s149
      %p158 = scmp.eq.s32.totalorder %s28, 0
      %p159 = por %p157, %p158
      %p160 = scmp.ne.s32.totalorder %s148, %s149
      %p161 = scmp.eq.s32.totalorder %s29, 1
      %p162 = por %p160, %p161
      %p164 = scmp.ne.s32.totalorder %s149, %s163
      %p165 = scmp.eq.s32.totalorder %s29, 0
      %p166 = por %p164, %p165
      %s167 = ssub.s32 %s23, %s30
      %p168 = scmp.eq.s32.totalorder %s167, 0
      %s170 = sadd.s32 %s169, 1
      %s171 = scalar_select %p168, %s169, %s170
      %p174 = pneg %p168
      %p175 = scmp.eq.s32.totalorder %s23, 1
      %p176 = por %p174, %p175
      %p177 = scmp.ne.s32.totalorder %s169, %s172
      %p178 = scmp.eq.s32.totalorder %s23, 0
      %p179 = por %p177, %p178
      %p180 = scmp.ne.s32.totalorder %s169, %s172
      %p181 = scmp.eq.s32.totalorder %s28, 1
      %p182 = por %p180, %p181
      %p183 = scmp.ne.s32.totalorder %s172, %s173
      %p184 = scmp.eq.s32.totalorder %s28, 0
      %p185 = por %p183, %p184
      %p186 = scmp.ne.s32.totalorder %s172, %s173
      %p187 = scmp.eq.s32.totalorder %s29, 1
      %p188 = por %p186, %p187
      %p190 = scmp.ne.s32.totalorder %s173, %s189
      %p191 = scmp.eq.s32.totalorder %s29, 0
      %p192 = por %p190, %p191
      %p193 = scmp.le.s32.totalorder 1, %s23
      %p194 = scmp.lt.s32.totalorder %s23, 3
      %p195 = pnand %p193, %p194
      %p196 = pneg %p195
      // Predicated region
      $region9: #{_lambda_.14} parent=5 // pred_check
        _
      $region10: #{_lambda_.14} parent=5 // pred_check_branch
        %198 = sbr.rel (%p195) target = $region12
      $region11: #{_lambda_.14} parent=5 // pred_region
        %s199 = ssub.s32 %s23, 1
        // Predicated region
        $region13: #{_lambda_.14} parent=11 // pred_check
          %p200 = pneg %p96
        $region14: #{_lambda_.14} parent=11 // pred_check_branch
          %202 = sbr.rel (%p200) target = $region16
        $region15: #{_lambda_.14} parent=11 // pred_region
          %s204 = ssub.s32 32, 32
          %205 = vsyncadd [#allocation6], %s204
          %s207 = sshll.u32 [#allocation7], 4
          %s208 = int_to_ptr.vmem [resolvable:$true] %s207
          %210 = dma.hbm_to_vmem [thread:$0]  %s2, 32, %s208, [#allocation6]
        $region16: #{_lambda_.14} parent=11 // pred_fallthru
          _
        // Predicated region
        $region17: #{_lambda_.14} parent=11 // pred_check
          %p211 = pneg %p117
        $region18: #{_lambda_.14} parent=11 // pred_check_branch
          %213 = sbr.rel (%p211) target = $region20
        $region19: #{_lambda_.14} parent=11 // pred_region
          %s215 = ssub.s32 16, 16
          %216 = vsyncadd [#allocation9], %s215
          %s218 = sshll.u32 [#allocation8], 4
          %s219 = int_to_ptr.vmem [resolvable:$true] %s218
          %221 = dma.hbm_to_vmem [thread:$0]  %s3, 16, %s219, [#allocation9]
        $region20: #{_lambda_.14} parent=11 // pred_fallthru
          _
        // Predicated region
        $region21: #{_lambda_.14} parent=11 // pred_check
          %p222 = pneg %p138
        $region22: #{_lambda_.14} parent=11 // pred_check_branch
          %224 = sbr.rel (%p222) target = $region24
        $region23: #{_lambda_.14} parent=11 // pred_region
          %s226 = ssub.s32 16, 16
          %227 = vsyncadd [#allocation9], %s226
          %s229 = sshll.u32 [#allocation10], 4
          %s230 = int_to_ptr.vmem [resolvable:$true] %s229
          %232 = dma.hbm_to_vmem [thread:$0]  %s4, 16, %s230, [#allocation9]
        $region24: #{_lambda_.14} parent=11 // pred_fallthru
          _
        // Predicated region
        $region25: #{_lambda_.14} parent=11 // pred_check
          %p233 = pneg %p159
        $region26: #{_lambda_.14} parent=11 // pred_check_branch
          %235 = sbr.rel (%p233) target = $region28
        $region27: #{_lambda_.14} parent=11 // pred_region
          %s237 = ssub.s32 16, 16
          %238 = vsyncadd [#allocation12], %s237
          %s240 = sshll.u32 [#allocation11], 4
          %s241 = int_to_ptr.vmem [resolvable:$true] %s240
          %243 = dma.hbm_to_vmem [thread:$0]  %s5, 16, %s241, [#allocation12]
        $region28: #{_lambda_.14} parent=11 // pred_fallthru
          _
      $region12: #{_lambda_.14} parent=5 // pred_fallthru
        _
      %p244 = scmp.lt.s32.totalorder %s23, 2
      // Predicated region
      $region29: #{_lambda_.14} parent=5 // pred_check
        %p245 = pneg %p244
      $region30: #{_lambda_.14} parent=5 // pred_check_branch
        %247 = sbr.rel (%p245) target = $region32
      $region31: #{_lambda_.14} parent=5 // pred_region
        // Predicated region
        $region33: #{_lambda_.14} parent=31 // pred_check
          %p248 = pneg %p43
        $region34: #{_lambda_.14} parent=31 // pred_check_branch
          %250 = sbr.rel (%p248) target = $region36
        $region35: #{_lambda_.14} parent=31 // pred_region
          %s251 = sand.u32 %s33, 1
          %s252 = scalar_lea.sflag [#allocation3], %s251
          %s253 = sand.u32 %s33, 1
          %s254 = smul.addr %s253, 32
          %s255 = scalar_lea.vmem [#allocation2], %s254
          %s257 = ssub.s32 512, 512
          %258 = vsyncadd %s252, %s257
          %s259 = smul.addr %s23, 8
          %s260 = smul.addr %s259, 64
          %s261 = scalar_lea.hbm %s0, %s260
          %s262 = sshll.u32 %s255, 4
          %s263 = int_to_ptr.vmem [resolvable:$true] %s262
          %268 = dma.hbm_to_vmem [thread:$0]  %s261, 512, %s263, %s252, 64, 64, 4
        $region36: #{_lambda_.14} parent=31 // pred_fallthru
          _
        // Predicated region
        $region37: #{_lambda_.14} parent=31 // pred_check
          %p269 = pneg %p69
        $region38: #{_lambda_.14} parent=31 // pred_check_branch
          %271 = sbr.rel (%p269) target = $region40
        $region39: #{_lambda_.14} parent=31 // pred_region
          %s272 = sand.u32 %s23, 1
          %s273 = scalar_lea.sflag [#allocation6], %s272
          %s274 = sand.u32 %s59, 1
          %s275 = smul.addr %s274, 32
          %s276 = scalar_lea.vmem [#allocation5], %s275
          %s278 = ssub.s32 512, 512
          %279 = vsyncadd %s273, %s278
          %s280 = smul.addr %s23, 8
          %s281 = smul.addr %s280, 64
          %s282 = scalar_lea.hbm %s1, %s281
          %s283 = sshll.u32 %s276, 4
          %s284 = int_to_ptr.vmem [resolvable:$true] %s283
          %289 = dma.hbm_to_vmem [thread:$0]  %s282, 512, %s284, %s273, 64, 64, 4
        $region40: #{_lambda_.14} parent=31 // pred_fallthru
          _
      $region32: #{_lambda_.14} parent=5 // pred_fallthru
        _
      %p290 = scmp.le.s32.totalorder 1, %s23
      %p291 = scmp.lt.s32.totalorder %s23, 3
      %p292 = pnand %p290, %p291
      %p293 = pneg %p292
      // Predicated region
      $region41: #{_lambda_.14} parent=5 // pred_check
        _
      $region42: #{_lambda_.14} parent=5 // pred_check_branch
        %295 = sbr.rel (%p292) target = $region44
      $region43: #{_lambda_.14} parent=5 // pred_region
        %s296 = ssub.s32 %s23, 1
        %s297 = sand.u32 %s36, 1
        %s298 = scalar_lea.sflag [#allocation3], %s297
        %s299 = sand.u32 %s36, 1
        %s300 = smul.addr %s299, 32
        %s301 = scalar_lea.vmem [#allocation2], %s300
        // Predicated region
        $region45: #{_lambda_.14} parent=43 // pred_check
          %p302 = pneg %p49
        $region46: #{_lambda_.14} parent=43 // pred_check_branch
          %304 = sbr.rel (%p302) target = $region48
        $region47: #{_lambda_.14} parent=43 // pred_region
          %305 = dma.done %s298, 512
        $region48: #{_lambda_.14} parent=43 // pred_fallthru
          _
        %s306 = sand.u32 %s28, 1
        %s307 = scalar_lea.sflag [#allocation6], %s306
        %s308 = sand.u32 %s62, 1
        %s309 = smul.addr %s308, 32
        %s310 = scalar_lea.vmem [#allocation5], %s309
        // Predicated region
        $region49: #{_lambda_.14} parent=43 // pred_check
          %p311 = pneg %p75
        $region50: #{_lambda_.14} parent=43 // pred_check_branch
          %313 = sbr.rel (%p311) target = $region52
        $region51: #{_lambda_.14} parent=43 // pred_region
          %314 = dma.done %s307, 512
        $region52: #{_lambda_.14} parent=43 // pred_fallthru
          _
        // Predicated region
        $region53: #{_lambda_.14} parent=43 // pred_check
          %p315 = pneg %p96
        $region54: #{_lambda_.14} parent=43 // pred_check_branch
          %317 = sbr.rel (%p315) target = $region56
        $region55: #{_lambda_.14} parent=43 // pred_region
          %318 = dma.done [#allocation6], 32
        $region56: #{_lambda_.14} parent=43 // pred_fallthru
          _
        // Predicated region
        $region57: #{_lambda_.14} parent=43 // pred_check
          %p319 = pneg %p117
        $region58: #{_lambda_.14} parent=43 // pred_check_branch
          %321 = sbr.rel (%p319) target = $region60
        $region59: #{_lambda_.14} parent=43 // pred_region
          %322 = dma.done [#allocation9], 16
        $region60: #{_lambda_.14} parent=43 // pred_fallthru
          _
        // Predicated region
        $region61: #{_lambda_.14} parent=43 // pred_check
          %p323 = pneg %p138
        $region62: #{_lambda_.14} parent=43 // pred_check_branch
          %325 = sbr.rel (%p323) target = $region64
        $region63: #{_lambda_.14} parent=43 // pred_region
          %326 = dma.done [#allocation9], 16
        $region64: #{_lambda_.14} parent=43 // pred_fallthru
          _
        // Predicated region
        $region65: #{_lambda_.14} parent=43 // pred_check
          %p327 = pneg %p159
        $region66: #{_lambda_.14} parent=43 // pred_check_branch
          %329 = sbr.rel (%p327) target = $region68
        $region67: #{_lambda_.14} parent=43 // pred_region
          %330 = dma.done [#allocation12], 16
        $region68: #{_lambda_.14} parent=43 // pred_fallthru
          _
        %s331 = sand.u32 %s36, 1
        %s332 = scalar_lea.sflag [#allocation3], %s331
        %s333 = sand.u32 %s36, 1
        %s334 = smul.addr %s333, 32
        %s335 = scalar_lea.vmem [#allocation2], %s334
        %p336 = pneg %p49
        %p337 = pneg %p46
        %s338 = sand.u32 %s28, 1
        %s339 = scalar_lea.sflag [#allocation6], %s338
        %s340 = sand.u32 %s62, 1
        %s341 = smul.addr %s340, 32
        %s342 = scalar_lea.vmem [#allocation5], %s341
        %p343 = pneg %p75
        %p344 = pneg %p72
        %p345 = pneg %p96
        %p346 = pneg %p93
        %p347 = pneg %p117
        %p348 = pneg %p114
        %p349 = pneg %p138
        %p350 = pneg %p135
        %p351 = pneg %p159
        %p352 = pneg %p156
        %p353 = pneg %p185
        %p354 = pneg %p182
        %s355 = sand.u32 %s172, 1
        %s356 = scalar_lea.sflag [#allocation4], %s355
        %s357 = sand.u32 %s172, 1
        %s358 = smul.addr %s357, 32
        %s359 = scalar_lea.vmem [#allocation13], %s358
        %v361 = vld [vmem:[#allocation10] sm:$0x1]
        %v362 = vld [vmem:[#allocation11] sm:$0x1]
        %v363 = vld [vmem:[%s310] sm:$0xf]
        %v364 = vld [vmem:[%s310 + $0x4] sm:$0xf]
        %v365 = vld [vmem:[%s310 + $0x8] sm:$0xf]
        %v366 = vld [vmem:[%s310 + $0xc] sm:$0xf]
        %v367 = vld [vmem:[%s310 + $0x10] sm:$0xf]
        %v368 = vld [vmem:[%s310 + $0x14] sm:$0xf]
        %v369 = vld [vmem:[%s310 + $0x18] sm:$0xf]
        %v370 = vld [vmem:[%s310 + $0x1c] sm:$0xf]
        %v371 = vld [vmem:[#allocation7] sm:$0x3]
        %v372 = vld [vmem:[#allocation8] sm:$0x1]
        %v374 = vlaneseq
        %v375 = vshrl.u32 %v374, 7
        %v376 = vsub.s32 0, %v375
        %v377 = vrot.slane %v372, %v376
        %v387 = vunpack.c.l.b16 %v363
        %v388 = vunpack.c.l.b16 %v364
        %v389 = vunpack.c.l.b16 %v365
        %v390 = vunpack.c.l.b16 %v366
        %v391 = vunpack.c.l.b16 %v367
        %v392 = vunpack.c.l.b16 %v368
        %v393 = vunpack.c.l.b16 %v369
        %v394 = vunpack.c.l.b16 %v370
        %v395 = vpack.c.b16 %v388, %v387
        %v396 = vpack.c.b16 %v390, %v389
        %v397 = vpack.c.b16 %v392, %v391
        %v398 = vpack.c.b16 %v394, %v393
        %vm399 = vcmask 31744
        %v401 = vsel %vm399, %v395, 0
        %v404 = vsel %vm399, %v396, 0
        %v407 = vsel %vm399, %v397, 0
        %v410 = vsel %vm399, %v398, 0
        %vm412 = vcmask 1041408
        %v414 = vsel %vm412, %v371, 0
        %416 = vmatprep.subr.bf16.mxu0 0
        %417 = vmatpush1.bf16.msra.mxu0 %v414
        %418 = vmatprep.subr.bf16.mxu0 0
        %419 = vmatpush1.bf16.msra.mxu0 0
        %420 = vmatprep.subr.bf16.mxu0 0
        %421 = vmatpush1.bf16.msra.mxu0 0
        %422 = vmatprep.subr.bf16.mxu0 0
        %423 = vmatpush1.bf16.msra.mxu0 0
        %424 = vmatprep.subr.bf16.mxu0 0
        %425 = vmatpush1.bf16.msra.mxu0 0
        %426 = vmatprep.subr.bf16.mxu0 0
        %427 = vmatpush1.bf16.msra.mxu0 0
        %428 = vmatprep.subr.bf16.mxu0 0
        %429 = vmatpush1.bf16.msra.mxu0 0
        %430 = vmatprep.subr.bf16.mxu0 0
        %431 = vmatpush1.bf16.msra.mxu0 0
        %432 = vmatprep.subr.bf16.mxu0 0
        %433 = vmatpush1.bf16.msra.mxu0 0
        %434 = vmatprep.subr.bf16.mxu0 0
        %435 = vmatpush1.bf16.msra.mxu0 0
        %436 = vmatprep.subr.bf16.mxu0 0
        %437 = vmatpush1.bf16.msra.mxu0 0
        %438 = vmatprep.subr.bf16.mxu0 0
        %439 = vmatpush1.bf16.msra.mxu0 0
        %440 = vmatprep.subr.bf16.mxu0 0
        %441 = vmatpush1.bf16.msra.mxu0 0
        %442 = vmatprep.subr.bf16.mxu0 0
        %443 = vmatpush1.bf16.msra.mxu0 0
        %444 = vmatprep.subr.bf16.mxu0 0
        %445 = vmatpush1.bf16.msra.mxu0 0
        %446 = vmatprep.subr.bf16.mxu0 0
        %447 = vmatpush1.bf16.msra.mxu0 0
        %448 = vmatprep.mubr.bf16.mxu0 0
        %449 = vmatmul.mubr.bf16.gmra.mrb[0].mxu0 %v401
        %v450 = vpop.f32.mrb[0].mxu0
        %v451 = vadd.f32 %v377, %v450
        %v452 = vpop.f32.mrb[0].mxu0
        %v453 = vpop.f32.mrb[0].mxu0
        %v454 = vadd.f32 %v377, %v453
        %v455 = vpop.f32.mrb[0].mxu0
        %456 = vmatprep.mubr.bf16.mxu0 0
        %457 = vmatmul.mubr.bf16.gmra.mrb[0].mxu0 %v404
        %v458 = vpop.f32.mrb[0].mxu0
        %v459 = vadd.f32 %v377, %v458
        %v460 = vpop.f32.mrb[0].mxu0
        %v461 = vpop.f32.mrb[0].mxu0
        %v462 = vadd.f32 %v377, %v461
        %v463 = vpop.f32.mrb[0].mxu0
        %464 = vmatprep.mubr.bf16.mxu0 0
        %465 = vmatmul.mubr.bf16.gmra.mrb[0].mxu0 %v407
        %v466 = vpop.f32.mrb[0].mxu0
        %v467 = vadd.f32 %v377, %v466
        %v468 = vpop.f32.mrb[0].mxu0
        %v469 = vpop.f32.mrb[0].mxu0
        %v470 = vadd.f32 %v377, %v469
        %v471 = vpop.f32.mrb[0].mxu0
        %472 = vmatprep.mubr.bf16.mxu0 0
        %473 = vmatmul.mubr.bf16.gmra.mrb[0].mxu0 %v410
        %v474 = vpop.f32.mrb[0].mxu0
        %v475 = vadd.f32 %v377, %v474
        %v476 = vpop.f32.mrb[0].mxu0
        %v477 = vpop.f32.mrb[0].mxu0
        %v478 = vadd.f32 %v377, %v477
        %v479 = vpop.f32.mrb[0].mxu0
        %480 = vdwg.mxu0
        %v481 = vld [vmem:[%s301] sm:$0xf]
        %v482 = vld [vmem:[%s301 + $0x4] sm:$0xf]
        %v483 = vld [vmem:[%s301 + $0x8] sm:$0xf]
        %v484 = vld [vmem:[%s301 + $0xc] sm:$0xf]
        %v485 = vld [vmem:[%s301 + $0x10] sm:$0xf]
        %v486 = vld [vmem:[%s301 + $0x14] sm:$0xf]
        %v487 = vld [vmem:[%s301 + $0x18] sm:$0xf]
        %v488 = vld [vmem:[%s301 + $0x1c] sm:$0xf]
        %v489 = vunpack.c.l.bf16 %v481
        %v490 = vunpack.c.l.bf16 %v482
        %v491 = vunpack.c.l.bf16 %v483
        %v492 = vunpack.c.l.bf16 %v484
        %v493 = vunpack.c.l.bf16 %v485
        %v494 = vunpack.c.l.bf16 %v486
        %v495 = vunpack.c.l.bf16 %v487
        %v496 = vunpack.c.l.bf16 %v488
        %vm497 = vcmask 97280
        %v498 = vsel %vm497, %v489, 0.0
        %v499 = vsel %vm497, %v490, 0.0
        %v500 = vadd.f32 %v498, %v499
        %v501 = vsel %vm497, %v491, 0.0
        %v502 = vadd.f32 %v500, %v501
        %v503 = vsel %vm497, %v492, 0.0
        %v504 = vadd.f32 %v502, %v503
        %v505 = vsel %vm497, %v493, 0.0
        %v506 = vadd.f32 %v504, %v505
        %v507 = vsel %vm497, %v494, 0.0
        %v508 = vadd.f32 %v506, %v507
        %v509 = vsel %vm497, %v495, 0.0
        %v510 = vadd.f32 %v508, %v509
        %v511 = vsel %vm497, %v496, 0.0
        %v512 = vadd.f32 %v510, %v511
        %v513 = vrot.slane %v512, 4
        %v514 = vadd.f32 %v512, %v513
        %v515 = vrot.slane %v514, 2
        %v516 = vadd.f32 %v514, %v515
        %v517 = vrot.slane %v516, 1
        %v518 = vadd.f32 %v516, %v517
        %v519 = vmul.f32 %v518, 0.015625
        %v520 = vsub.f32 %v489, %v519
        %v521 = vsub.f32 %v490, %v519
        %v522 = vsub.f32 %v491, %v519
        %v523 = vsub.f32 %v492, %v519
        %v524 = vsub.f32 %v493, %v519
        %v525 = vsub.f32 %v494, %v519
        %v526 = vsub.f32 %v495, %v519
        %v527 = vsub.f32 %v496, %v519
        %v528 = vmul.f32 %v520, %v520
        %v529 = vmul.f32 %v521, %v521
        %v530 = vmul.f32 %v522, %v522
        %v531 = vmul.f32 %v523, %v523
        %v532 = vmul.f32 %v524, %v524
        %v533 = vmul.f32 %v525, %v525
        %v534 = vmul.f32 %v526, %v526
        %v535 = vmul.f32 %v527, %v527
        %v536 = vsel %vm497, %v528, 0.0
        %v537 = vsel %vm497, %v529, 0.0
        %v538 = vadd.f32 %v536, %v537
        %v539 = vsel %vm497, %v530, 0.0
        %v540 = vadd.f32 %v538, %v539
        %v541 = vsel %vm497, %v531, 0.0
        %v542 = vadd.f32 %v540, %v541
        %v543 = vsel %vm497, %v532, 0.0
        %v544 = vadd.f32 %v542, %v543
        %v545 = vsel %vm497, %v533, 0.0
        %v546 = vadd.f32 %v544, %v545
        %v547 = vsel %vm497, %v534, 0.0
        %v548 = vadd.f32 %v546, %v547
        %v549 = vsel %vm497, %v535, 0.0
        %v550 = vadd.f32 %v548, %v549
        %v551 = vrot.slane %v550, 4
        %v552 = vadd.f32 %v550, %v551
        %v553 = vrot.slane %v552, 2
        %v554 = vadd.f32 %v552, %v553
        %v555 = vrot.slane %v554, 1
        %v556 = vadd.f32 %v554, %v555
        %v557 = vmul.f32 %v556, 0.015625
        %v558 = vadd.f32 %v557, 1e-05
        %v559 = vrsqrt.pop %v558
        %v560 = vmul.f32 %v520, %v559
        %v561 = vmul.f32 %v521, %v559
        %v562 = vmul.f32 %v522, %v559
        %v563 = vmul.f32 %v523, %v559
        %v564 = vmul.f32 %v524, %v559
        %v565 = vmul.f32 %v525, %v559
        %v566 = vmul.f32 %v526, %v559
        %v567 = vmul.f32 %v527, %v559
        %v569 = vlaneseq
        %v570 = vshrl.u32 %v569, 7
        %v571 = vsub.s32 0, %v570
        %v572 = vrot.slane %v361, %v571
        %v574 = vmul.f32 %v560, %v572
        %v575 = vmul.f32 %v561, %v572
        %v576 = vmul.f32 %v562, %v572
        %v577 = vmul.f32 %v563, %v572
        %v578 = vmul.f32 %v564, %v572
        %v579 = vmul.f32 %v565, %v572
        %v580 = vmul.f32 %v566, %v572
        %v581 = vmul.f32 %v567, %v572
        %v583 = vlaneseq
        %v584 = vshrl.u32 %v583, 7
        %v585 = vsub.s32 0, %v584
        %v586 = vrot.slane %v362, %v585
        %v588 = vadd.f32 %v574, %v586
        %v589 = vadd.f32 %v575, %v586
        %v590 = vadd.f32 %v576, %v586
        %v591 = vadd.f32 %v577, %v586
        %v592 = vadd.f32 %v578, %v586
        %v593 = vadd.f32 %v579, %v586
        %v594 = vadd.f32 %v580, %v586
        %v595 = vadd.f32 %v581, %v586
        %v596 = vmax.f32 %v588, 0.0
        %v597 = vmax.f32 %v589, 0.0
        %v598 = vmax.f32 %v590, 0.0
        %v599 = vmax.f32 %v591, 0.0
        %v600 = vmax.f32 %v592, 0.0
        %v601 = vmax.f32 %v593, 0.0
        %v602 = vmax.f32 %v594, 0.0
        %v603 = vmax.f32 %v595, 0.0
        %v604 = vpack.c.bf16 %v597, %v596
        %v605 = vpack.c.bf16 %v599, %v598
        %v606 = vpack.c.bf16 %v601, %v600
        %v607 = vpack.c.bf16 %v603, %v602
        %v612 = vunpack.c.l.b16 %v604
        %v613 = vunpack.c.h.b16 %v604
        %v614 = vunpack.c.l.b16 %v605
        %v615 = vunpack.c.h.b16 %v605
        %v616 = vunpack.c.l.b16 %v606
        %v617 = vunpack.c.h.b16 %v606
        %v618 = vunpack.c.l.b16 %v607
        %v619 = vunpack.c.h.b16 %v607
        %v620 = vpack.c.b16 %v612, %v612
        %v621 = vpack.c.b16 %v613, %v613
        %v622 = vpack.c.b16 %v614, %v614
        %v623 = vpack.c.b16 %v615, %v615
        %v624 = vpack.c.b16 %v616, %v616
        %v625 = vpack.c.b16 %v617, %v617
        %v626 = vpack.c.b16 %v618, %v618
        %v627 = vpack.c.b16 %v619, %v619
        %vm636 = vcmask 93184
        %637 = vst.msk [vmem:[%s359] sm:$0xf] %vm636, %v620
        %638 = vst.msk [vmem:[%s359 + $0x4] sm:$0xf] %vm636, %v621
        %639 = vst.msk [vmem:[%s359 + $0x8] sm:$0xf] %vm636, %v622
        %640 = vst.msk [vmem:[%s359 + $0xc] sm:$0xf] %vm636, %v623
        %641 = vst.msk [vmem:[%s359 + $0x10] sm:$0xf] %vm636, %v624
        %642 = vst.msk [vmem:[%s359 + $0x14] sm:$0xf] %vm636, %v625
        %643 = vst.msk [vmem:[%s359 + $0x18] sm:$0xf] %vm636, %v626
        %644 = vst.msk [vmem:[%s359 + $0x1c] sm:$0xf] %vm636, %v627
        %v645 = vsel %vm399, %v451, 0.0
        %v646 = vsel %vm399, %v454, 0.0
        %v647 = vadd.f32 %v645, %v646
        %v648 = vsel %vm399, %v459, 0.0
        %v649 = vadd.f32 %v647, %v648
        %v650 = vsel %vm399, %v462, 0.0
        %v651 = vadd.f32 %v649, %v650
        %v652 = vsel %vm399, %v467, 0.0
        %v653 = vadd.f32 %v651, %v652
        %v654 = vsel %vm399, %v470, 0.0
        %v655 = vadd.f32 %v653, %v654
        %v656 = vsel %vm399, %v475, 0.0
        %v657 = vadd.f32 %v655, %v656
        %v658 = vsel %vm399, %v478, 0.0
        %v659 = vadd.f32 %v657, %v658
        %v660 = vrot.slane %v659, 4
        %v661 = vadd.f32 %v659, %v660
        %v662 = vrot.slane %v661, 2
        %v663 = vadd.f32 %v661, %v662
        %v664 = vrot.slane %v663, 1
        %v665 = vadd.f32 %v663, %v664
        %v666 = vmul.f32 %v665, 0.015625
        %v667 = vsub.f32 %v451, %v666
        %v668 = vsub.f32 %v454, %v666
        %v669 = vsub.f32 %v459, %v666
        %v670 = vsub.f32 %v462, %v666
        %v671 = vsub.f32 %v467, %v666
        %v672 = vsub.f32 %v470, %v666
        %v673 = vsub.f32 %v475, %v666
        %v674 = vsub.f32 %v478, %v666
        %v675 = vmul.f32 %v667, %v667
        %v676 = vmul.f32 %v668, %v668
        %v677 = vmul.f32 %v669, %v669
        %v678 = vmul.f32 %v670, %v670
        %v679 = vmul.f32 %v671, %v671
        %v680 = vmul.f32 %v672, %v672
        %v681 = vmul.f32 %v673, %v673
        %v682 = vmul.f32 %v674, %v674
        %v683 = vsel %vm399, %v675, 0.0
        %v684 = vsel %vm399, %v676, 0.0
        %v685 = vadd.f32 %v683, %v684
        %v686 = vsel %vm399, %v677, 0.0
        %v687 = vadd.f32 %v685, %v686
        %v688 = vsel %vm399, %v678, 0.0
        %v689 = vadd.f32 %v687, %v688
        %v690 = vsel %vm399, %v679, 0.0
        %v691 = vadd.f32 %v689, %v690
        %v692 = vsel %vm399, %v680, 0.0
        %v693 = vadd.f32 %v691, %v692
        %v694 = vsel %vm399, %v681, 0.0
        %v695 = vadd.f32 %v693, %v694
        %v696 = vsel %vm399, %v682, 0.0
        %v697 = vadd.f32 %v695, %v696
        %v698 = vrot.slane %v697, 4
        %v699 = vadd.f32 %v697, %v698
        %v700 = vrot.slane %v699, 2
        %v701 = vadd.f32 %v699, %v700
        %v702 = vrot.slane %v701, 1
        %v703 = vadd.f32 %v701, %v702
        %v704 = vmul.f32 %v703, 0.015625
        %v705 = vadd.f32 %v704, 1e-05
        %v706 = vrsqrt.pop %v705
        %v707 = vmul.f32 %v667, %v706
        %v708 = vmul.f32 %v668, %v706
        %v709 = vmul.f32 %v669, %v706
        %v710 = vmul.f32 %v670, %v706
        %v711 = vmul.f32 %v671, %v706
        %v712 = vmul.f32 %v672, %v706
        %v713 = vmul.f32 %v673, %v706
        %v714 = vmul.f32 %v674, %v706
        %715 = vrot.lane.b32.xlu0 %v572, 116
        %v716 = vpop.permute.xlu0 %715
        %v718 = vmul.f32 %v707, %v716
        %v719 = vmul.f32 %v708, %v716
        %v720 = vmul.f32 %v709, %v716
        %v721 = vmul.f32 %v710, %v716
        %v722 = vmul.f32 %v711, %v716
        %v723 = vmul.f32 %v712, %v716
        %v724 = vmul.f32 %v713, %v716
        %v725 = vmul.f32 %v714, %v716
        %726 = vrot.lane.b32.xlu0 %v586, 116
        %v727 = vpop.permute.xlu0 %726
        %v729 = vadd.f32 %v718, %v727
        %v730 = vadd.f32 %v719, %v727
        %v731 = vadd.f32 %v720, %v727
        %v732 = vadd.f32 %v721, %v727
        %v733 = vadd.f32 %v722, %v727
        %v734 = vadd.f32 %v723, %v727
        %v735 = vadd.f32 %v724, %v727
        %v736 = vadd.f32 %v725, %v727
        %v737 = vmax.f32 %v729, 0.0
        %v738 = vmax.f32 %v730, 0.0
        %v739 = vmax.f32 %v731, 0.0
        %v740 = vmax.f32 %v732, 0.0
        %v741 = vmax.f32 %v733, 0.0
        %v742 = vmax.f32 %v734, 0.0
        %v743 = vmax.f32 %v735, 0.0
        %v744 = vmax.f32 %v736, 0.0
        %v745 = vpack.c.bf16 %v738, %v737
        %v746 = vpack.c.bf16 %v740, %v739
        %v747 = vpack.c.bf16 %v742, %v741
        %v748 = vpack.c.bf16 %v744, %v743
        %v753 = vunpack.c.l.b16 %v745
        %v754 = vunpack.c.h.b16 %v745
        %v755 = vunpack.c.l.b16 %v746
        %v756 = vunpack.c.h.b16 %v746
        %v757 = vunpack.c.l.b16 %v747
        %v758 = vunpack.c.h.b16 %v747
        %v759 = vunpack.c.l.b16 %v748
        %v760 = vunpack.c.h.b16 %v748
        %v761 = vpack.c.b16 %v753, %v753
        %v762 = vpack.c.b16 %v754, %v754
        %v763 = vpack.c.b16 %v755, %v755
        %v764 = vpack.c.b16 %v756, %v756
        %v765 = vpack.c.b16 %v757, %v757
        %v766 = vpack.c.b16 %v758, %v758
        %v767 = vpack.c.b16 %v759, %v759
        %v768 = vpack.c.b16 %v760, %v760
        %769 = vrot.lane.b32.xlu0 %v761, 12
        %v770 = vpop.permute.xlu0 %769
        %771 = vrot.lane.b32.xlu0 %v762, 12
        %v772 = vpop.permute.xlu0 %771
        %773 = vrot.lane.b32.xlu0 %v763, 12
        %v774 = vpop.permute.xlu0 %773
        %775 = vrot.lane.b32.xlu0 %v764, 12
        %v776 = vpop.permute.xlu0 %775
        %777 = vrot.lane.b32.xlu0 %v765, 12
        %v778 = vpop.permute.xlu0 %777
        %779 = vrot.lane.b32.xlu0 %v766, 12
        %v780 = vpop.permute.xlu0 %779
        %781 = vrot.lane.b32.xlu0 %v767, 12
        %v782 = vpop.permute.xlu0 %781
        %783 = vrot.lane.b32.xlu0 %v768, 12
        %v784 = vpop.permute.xlu0 %783
        %vm793 = vcmask 126048
        %794 = vst.msk [vmem:[%s359] sm:$0xf] %vm793, %v770
        %795 = vst.msk [vmem:[%s359 + $0x4] sm:$0xf] %vm793, %v772
        %796 = vst.msk [vmem:[%s359 + $0x8] sm:$0xf] %vm793, %v774
        %797 = vst.msk [vmem:[%s359 + $0xc] sm:$0xf] %vm793, %v776
        %798 = vst.msk [vmem:[%s359 + $0x10] sm:$0xf] %vm793, %v778
        %799 = vst.msk [vmem:[%s359 + $0x14] sm:$0xf] %vm793, %v780
        %800 = vst.msk [vmem:[%s359 + $0x18] sm:$0xf] %vm793, %v782
        %801 = vst.msk [vmem:[%s359 + $0x1c] sm:$0xf] %vm793, %v784
        %s802 = sand.u32 %s172, 1
        %s803 = scalar_lea.sflag [#allocation4], %s802
        %s804 = sand.u32 %s172, 1
        %s805 = smul.addr %s804, 32
        %s806 = scalar_lea.vmem [#allocation13], %s805
        // Predicated region
        $region69: #{_lambda_.14} parent=43 // pred_check
          %p807 = pneg %p182
        $region70: #{_lambda_.14} parent=43 // pred_check_branch
          %809 = sbr.rel (%p807) target = $region72
        $region71: #{_lambda_.14} parent=43 // pred_region
          %s811 = ssub.s32 512, 512
          %812 = vsyncadd %s803, %s811
          %s813 = smul.addr %s28, 8
          %s814 = smul.addr %s813, 64
          %s815 = scalar_lea.hbm %s6, %s814
          %s816 = sshll.u32 %s806, 4
          %s817 = int_to_ptr.vmem [resolvable:$true] %s816
          %822 = dma.vmem_to_hbm [thread:$0]  %s817, 512, %s815, %s803, 64, 64, 4
        $region72: #{_lambda_.14} parent=43 // pred_fallthru
          _
      $region44: #{_lambda_.14} parent=5 // pred_fallthru
        _
      %p823 = scmp.le.s32.totalorder 2, %s23
      // Predicated region
      $region73: #{_lambda_.14} parent=5 // pred_check
        %p824 = pneg %p823
      $region74: #{_lambda_.14} parent=5 // pred_check_branch
        %826 = sbr.rel (%p824) target = $region76
      $region75: #{_lambda_.14} parent=5 // pred_region
        %s827 = ssub.s32 %s23, 2
        // Predicated region
        $region77: #{_lambda_.14} parent=75 // pred_check
          %p828 = pneg %p188
        $region78: #{_lambda_.14} parent=75 // pred_check_branch
          %830 = sbr.rel (%p828) target = $region80
        $region79: #{_lambda_.14} parent=75 // pred_region
          %s831 = sand.u32 %s173, 1
          %s832 = scalar_lea.sflag [#allocation4], %s831
          %s833 = sand.u32 %s173, 1
          %s834 = smul.addr %s833, 32
          %s835 = scalar_lea.vmem [#allocation13], %s834
          %836 = dma.done %s832, 512
        $region80: #{_lambda_.14} parent=75 // pred_fallthru
          _
      $region76: #{_lambda_.14} parent=5 // pred_fallthru
        _
    $region6: #{_lambda_.14} parent=1 // loop_footer
      %s27 = sadd.s32 1, %s23
    $region7: #{_lambda_.14} parent=1 // loop_footer_branch
      %22 = sbr.rel target = $region3
    $region8: #{_lambda_.14} parent=1 // loop_exit
      _
    %837 = vsyncpa [#allocation3], 1
    %s838 = scalar_lea.sflag [#allocation3], 1
    %839 = vsyncpa %s838, 1
    %840 = vsyncpa [#allocation6], 1
    %s841 = scalar_lea.sflag [#allocation6], 1
    %842 = vsyncpa %s841, 1
    %843 = vsyncpa [#allocation9], 1
    %844 = vsyncpa [#allocation12], 1
    %845 = vsyncpa [#allocation4], 1
    %s846 = scalar_lea.sflag [#allocation4], 1
    %847 = vsyncpa %s846, 1

// kernel: _lambda_.15
$region0: #{_lambda_.15}
  #allocation0 [shape = 'u32[]', space=smem, size = 0x4, offset = 0x4, fixed_abs, tag = 'smem constant byte address 0x4 - core index']
  #allocation1 [shape = 'u32[144,128]{1,0:T(1,128)}', space=vmem, size = 0x12000, scoped, tag = 'internal scratch']
  %s0 = inlined_call_operand.hbm [shape: bf16[2,16,256], index: 0, kind: input, shape index: {}]
  %s1 = inlined_call_operand.hbm [shape: bf16[256,112], index: 1, kind: input, shape index: {}]
  %s2 = inlined_call_operand.hbm [shape: f32[1,112], index: 2, kind: input, shape index: {}]
  %s3 = inlined_call_operand.hbm [shape: bf16[2,16,28], index: 3, kind: output, shape index: {0}]
  %s4 = inlined_call_operand.hbm [shape: bf16[2,16,4], index: 4, kind: output, shape index: {1}]
  %5 = xla_tuple %s3, %s4
  %s6 = sld [smem:[#allocation0]]
  $region65: #{_lambda_.15} parent=0
    _
  %s8 = ssub.s32 1, %s6
  %s9 = scalar_select 0, %s8, %s6
  $region1: #{_lambda_.15} parent=0
    #allocation2 [shape = 'u8[16384]{0}', space=vmem, size = 0x4000, scoped, tag = 'input window, operand 0']
    #allocation3 [shape = 's32[2]{0}', space=sflag, size = 0x8, scoped, tag = 'scoped memory for _lambda_.15']
    #allocation4 [shape = 's32[2]{0}', space=sflag, size = 0x8, scoped, tag = 'scoped memory for _lambda_.15']
    #allocation5 [shape = 'u8[65536]{0}', space=vmem, size = 0x10000, scoped, tag = 'input window, operand 1, single buffered']
    #allocation6 [shape = 's32[1]{0}', space=sflag, size = 0x4, scoped, tag = 'scoped memory for _lambda_.15']
    #allocation7 [shape = 'u8[512]{0}', space=vmem, size = 0x400, scoped, tag = 'input window, operand 2, single buffered']
    #allocation8 [shape = 'u8[8192]{0}', space=vmem, size = 0x2000, scoped, tag = 'output window, operand 0']
    #allocation9 [shape = 'u8[8192]{0}', space=vmem, size = 0x2000, scoped, tag = 'output window, operand 1']
    #allocation10 [shape = 's32[2]{0}', space=sflag, size = 0x8, scoped, tag = 'scoped memory for _lambda_.15']
    %10 = vsyncpa [#allocation3], 0
    %s11 = scalar_lea.sflag [#allocation3], 1
    %12 = vsyncpa %s11, 0
    %13 = vsyncpa [#allocation6], 0
    %14 = vsyncpa [#allocation4], 0
    %s15 = scalar_lea.sflag [#allocation4], 1
    %16 = vsyncpa %s15, 0
    %17 = vsyncpa [#allocation10], 0
    %s18 = scalar_lea.sflag [#allocation10], 1
    %19 = vsyncpa %s18, 0
    loop: start=0, step=1, limit=4
    $region2: #{_lambda_.15} parent=1 // loop_pre_header
      _
    $region3: #{_lambda_.15} parent=1 // loop_header
      %s21 = sphi 0, %s25
      %p22 = scmp.ge.s32.totalorder %s21, 4
      %s31 = sphi 0, %s33
      %s34 = sphi 0, %s31
      %s35 = sphi 0, %s34
      %s51 = sphi 0, %s35
      %s55 = sphi 0, %s55
      %s57 = sphi 0, %s55
      %s58 = sphi 0, %s57
      %s72 = sphi 0, %s58
      %s76 = sphi 0, %s76
      %s78 = sphi 0, %s76
      %s79 = sphi 0, %s78
      %s93 = sphi 0, %s79
      %s99 = sphi 0, %s101
      %s102 = sphi 0, %s99
      %s103 = sphi 0, %s102
      %s119 = sphi 0, %s103
      %s125 = sphi 0, %s127
      %s128 = sphi 0, %s125
      %s129 = sphi 0, %s128
      %s145 = sphi 0, %s129
    $region4: #{_lambda_.15} parent=1 // loop_header_branch
      %24 = sbr.rel (%p22) target = $region8
    $region5: #{_lambda_.15} parent=1 // loop_body
      %s26 = ssub.s32 %s21, 1
      %s27 = ssub.s32 %s21, 2
      %s28 = sadd.s32 %s21, 1
      %s29 = ssub.s32 %s21, %s28
      %p30 = scmp.eq.s32.totalorder %s29, 0
      %s32 = sadd.s32 %s31, 1
      %s33 = scalar_select %p30, %s31, %s32
      %p36 = pneg %p30
      %p37 = scmp.eq.s32.totalorder %s21, 1
      %p38 = por %p36, %p37
      %p39 = scmp.ne.s32.totalorder %s31, %s34
      %p40 = scmp.eq.s32.totalorder %s21, 0
      %p41 = por %p39, %p40
      %p42 = scmp.ne.s32.totalorder %s31, %s34
      %p43 = scmp.eq.s32.totalorder %s26, 1
      %p44 = por %p42, %p43
      %p45 = scmp.ne.s32.totalorder %s34, %s35
      %p46 = scmp.eq.s32.totalorder %s26, 0
      %p47 = por %p45, %p46
      %p48 = scmp.ne.s32.totalorder %s34, %s35
      %p49 = scmp.eq.s32.totalorder %s27, 1
      %p50 = por %p48, %p49
      %p52 = scmp.ne.s32.totalorder %s35, %s51
      %p53 = scmp.eq.s32.totalorder %s27, 0
      %p54 = por %p52, %p53
      %s56 = sadd.s32 %s55, 1
      %p59 = scmp.eq.s32.totalorder %s21, 1
      %p60 = scmp.ne.s32.totalorder %s55, %s57
      %p61 = scmp.eq.s32.totalorder %s21, 0
      %p62 = por %p60, %p61
      %p63 = scmp.ne.s32.totalorder %s55, %s57
      %p64 = scmp.eq.s32.totalorder %s26, 1
      %p65 = por %p63, %p64
      %p66 = scmp.ne.s32.totalorder %s57, %s58
      %p67 = scmp.eq.s32.totalorder %s26, 0
      %p68 = por %p66, %p67
      %p69 = scmp.ne.s32.totalorder %s57, %s58
      %p70 = scmp.eq.s32.totalorder %s27, 1
      %p71 = por %p69, %p70
      %p73 = scmp.ne.s32.totalorder %s58, %s72
      %p74 = scmp.eq.s32.totalorder %s27, 0
      %p75 = por %p73, %p74
      %s77 = sadd.s32 %s76, 1
      %p80 = scmp.eq.s32.totalorder %s21, 1
      %p81 = scmp.ne.s32.totalorder %s76, %s78
      %p82 = scmp.eq.s32.totalorder %s21, 0
      %p83 = por %p81, %p82
      %p84 = scmp.ne.s32.totalorder %s76, %s78
      %p85 = scmp.eq.s32.totalorder %s26, 1
      %p86 = por %p84, %p85
      %p87 = scmp.ne.s32.totalorder %s78, %s79
      %p88 = scmp.eq.s32.totalorder %s26, 0
      %p89 = por %p87, %p88
      %p90 = scmp.ne.s32.totalorder %s78, %s79
      %p91 = scmp.eq.s32.totalorder %s27, 1
      %p92 = por %p90, %p91
      %p94 = scmp.ne.s32.totalorder %s79, %s93
      %p95 = scmp.eq.s32.totalorder %s27, 0
      %p96 = por %p94, %p95
      %s97 = ssub.s32 %s21, %s28
      %p98 = scmp.eq.s32.totalorder %s97, 0
      %s100 = sadd.s32 %s99, 1
      %s101 = scalar_select %p98, %s99, %s100
      %p104 = pneg %p98
      %p105 = scmp.eq.s32.totalorder %s21, 1
      %p106 = por %p104, %p105
      %p107 = scmp.ne.s32.totalorder %s99, %s102
      %p108 = scmp.eq.s32.totalorder %s21, 0
      %p109 = por %p107, %p108
      %p110 = scmp.ne.s32.totalorder %s99, %s102
      %p111 = scmp.eq.s32.totalorder %s26, 1
      %p112 = por %p110, %p111
      %p113 = scmp.ne.s32.totalorder %s102, %s103
      %p114 = scmp.eq.s32.totalorder %s26, 0
      %p115 = por %p113, %p114
      %p116 = scmp.ne.s32.totalorder %s102, %s103
      %p117 = scmp.eq.s32.totalorder %s27, 1
      %p118 = por %p116, %p117
      %p120 = scmp.ne.s32.totalorder %s103, %s119
      %p121 = scmp.eq.s32.totalorder %s27, 0
      %p122 = por %p120, %p121
      %s123 = ssub.s32 %s21, %s28
      %p124 = scmp.eq.s32.totalorder %s123, 0
      %s126 = sadd.s32 %s125, 1
      %s127 = scalar_select %p124, %s125, %s126
      %p130 = pneg %p124
      %p131 = scmp.eq.s32.totalorder %s21, 1
      %p132 = por %p130, %p131
      %p133 = scmp.ne.s32.totalorder %s125, %s128
      %p134 = scmp.eq.s32.totalorder %s21, 0
      %p135 = por %p133, %p134
      %p136 = scmp.ne.s32.totalorder %s125, %s128
      %p137 = scmp.eq.s32.totalorder %s26, 1
      %p138 = por %p136, %p137
      %p139 = scmp.ne.s32.totalorder %s128, %s129
      %p140 = scmp.eq.s32.totalorder %s26, 0
      %p141 = por %p139, %p140
      %p142 = scmp.ne.s32.totalorder %s128, %s129
      %p143 = scmp.eq.s32.totalorder %s27, 1
      %p144 = por %p142, %p143
      %p146 = scmp.ne.s32.totalorder %s129, %s145
      %p147 = scmp.eq.s32.totalorder %s27, 0
      %p148 = por %p146, %p147
      %p149 = scmp.le.s32.totalorder 1, %s21
      %p150 = scmp.lt.s32.totalorder %s21, 3
      %p151 = pnand %p149, %p150
      %p152 = pneg %p151
      // Predicated region
      $region9: #{_lambda_.15} parent=5 // pred_check
        _
      $region10: #{_lambda_.15} parent=5 // pred_check_branch
        %154 = sbr.rel (%p151) target = $region12
      $region11: #{_lambda_.15} parent=5 // pred_region
        %s155 = ssub.s32 %s21, 1
        // Predicated region
        $region13: #{_lambda_.15} parent=11 // pred_check
          %p156 = pneg %p68
        $region14: #{_lambda_.15} parent=11 // pred_check_branch
          %158 = sbr.rel (%p156) target = $region16
        $region15: #{_lambda_.15} parent=11 // pred_region
          %s160 = ssub.s32 2048, 2048
          %161 = vsyncadd [#allocation6], %s160
          %s162 = sshll.u32 [#allocation5], 4
          %s163 = int_to_ptr.vmem [resolvable:$true] %s162
          %168 = dma.hbm_to_vmem [thread:$0]  %s1, 2048, %s163, [#allocation6], 64, 64, 4
        $region16: #{_lambda_.15} parent=11 // pred_fallthru
          _
        // Predicated region
        $region17: #{_lambda_.15} parent=11 // pred_check
          %p169 = pneg %p89
        $region18: #{_lambda_.15} parent=11 // pred_check_branch
          %171 = sbr.rel (%p169) target = $region20
        $region19: #{_lambda_.15} parent=11 // pred_region
          %s173 = ssub.s32 16, 16
          %174 = vsyncadd [#allocation6], %s173
          %s176 = sshll.u32 [#allocation7], 4
          %s177 = int_to_ptr.vmem [resolvable:$true] %s176
          %179 = dma.hbm_to_vmem [thread:$0]  %s2, 16, %s177, [#allocation6]
        $region20: #{_lambda_.15} parent=11 // pred_fallthru
          _
      $region12: #{_lambda_.15} parent=5 // pred_fallthru
        _
      %p180 = scmp.lt.s32.totalorder %s21, 2
      // Predicated region
      $region21: #{_lambda_.15} parent=5 // pred_check
        %p181 = pneg %p180
      $region22: #{_lambda_.15} parent=5 // pred_check_branch
        %183 = sbr.rel (%p181) target = $region24
      $region23: #{_lambda_.15} parent=5 // pred_region
        // Predicated region
        $region25: #{_lambda_.15} parent=23 // pred_check
          %p184 = pneg %p41
        $region26: #{_lambda_.15} parent=23 // pred_check_branch
          %186 = sbr.rel (%p184) target = $region28
        $region27: #{_lambda_.15} parent=23 // pred_region
          %s187 = sand.u32 %s31, 1
          %s188 = scalar_lea.sflag [#allocation3], %s187
          %s189 = sand.u32 %s31, 1
          %s190 = smul.addr %s189, 16
          %s191 = scalar_lea.vmem [#allocation2], %s190
          %s193 = ssub.s32 256, 256
          %194 = vsyncadd %s188, %s193
          %s195 = smul.addr %s21, 4
          %s196 = smul.addr %s195, 64
          %s197 = scalar_lea.hbm %s0, %s196
          %s198 = sshll.u32 %s191, 4
          %s199 = int_to_ptr.vmem [resolvable:$true] %s198
          %204 = dma.hbm_to_vmem [thread:$0]  %s197, 256, %s199, %s188, 128, 128, 8
        $region28: #{_lambda_.15} parent=23 // pred_fallthru
          _
      $region24: #{_lambda_.15} parent=5 // pred_fallthru
        _
      %p205 = scmp.le.s32.totalorder 1, %s21
      %p206 = scmp.lt.s32.totalorder %s21, 3
      %p207 = pnand %p205, %p206
      %p208 = pneg %p207
      // Predicated region
      $region29: #{_lambda_.15} parent=5 // pred_check
        _
      $region30: #{_lambda_.15} parent=5 // pred_check_branch
        %210 = sbr.rel (%p207) target = $region32
      $region31: #{_lambda_.15} parent=5 // pred_region
        %s211 = ssub.s32 %s21, 1
        %s212 = sand.u32 %s34, 1
        %s213 = scalar_lea.sflag [#allocation3], %s212
        %s214 = sand.u32 %s34, 1
        %s215 = smul.addr %s214, 16
        %s216 = scalar_lea.vmem [#allocation2], %s215
        // Predicated region
        $region33: #{_lambda_.15} parent=31 // pred_check
          %p217 = pneg %p47
        $region34: #{_lambda_.15} parent=31 // pred_check_branch
          %219 = sbr.rel (%p217) target = $region36
        $region35: #{_lambda_.15} parent=31 // pred_region
          %220 = dma.done %s213, 256
        $region36: #{_lambda_.15} parent=31 // pred_fallthru
          _
        // Predicated region
        $region37: #{_lambda_.15} parent=31 // pred_check
          %p221 = pneg %p68
        $region38: #{_lambda_.15} parent=31 // pred_check_branch
          %223 = sbr.rel (%p221) target = $region40
        $region39: #{_lambda_.15} parent=31 // pred_region
          %224 = dma.done [#allocation6], 2048
        $region40: #{_lambda_.15} parent=31 // pred_fallthru
          _
        // Predicated region
        $region41: #{_lambda_.15} parent=31 // pred_check
          %p225 = pneg %p89
        $region42: #{_lambda_.15} parent=31 // pred_check_branch
          %227 = sbr.rel (%p225) target = $region44
        $region43: #{_lambda_.15} parent=31 // pred_region
          %228 = dma.done [#allocation6], 16
        $region44: #{_lambda_.15} parent=31 // pred_fallthru
          _
        %s229 = sand.u32 %s34, 1
        %s230 = scalar_lea.sflag [#allocation3], %s229
        %s231 = sand.u32 %s34, 1
        %s232 = smul.addr %s231, 16
        %s233 = scalar_lea.vmem [#allocation2], %s232
        %p234 = pneg %p47
        %p235 = pneg %p44
        %p236 = pneg %p68
        %p237 = pneg %p65
        %p238 = pneg %p89
        %p239 = pneg %p86
        %p240 = pneg %p115
        %p241 = pneg %p112
        %s242 = sand.u32 %s102, 1
        %s243 = scalar_lea.sflag [#allocation4], %s242
        %s244 = sand.u32 %s102, 1
        %s245 = smul.addr %s244, 8
        %s246 = scalar_lea.vmem [#allocation8], %s245
        %p247 = pneg %p141
        %p248 = pneg %p138
        %s249 = sand.u32 %s128, 1
        %s250 = scalar_lea.sflag [#allocation10], %s249
        %s251 = sand.u32 %s128, 1
        %s252 = smul.addr %s251, 8
        %s253 = scalar_lea.vmem [#allocation9], %s252
        %v255 = vld [vmem:[%s216] sm:$0xff]
        %v256 = vld [vmem:[%s216 + $0x8] sm:$0xff]
        %v257 = vld [vmem:[#allocation5] sm:$0xf]
        %v258 = vld [vmem:[#allocation5 + $0x4] sm:$0xf]
        %v259 = vld [vmem:[#allocation5 + $0x8] sm:$0xf]
        %v260 = vld [vmem:[#allocation5 + $0xc] sm:$0xf]
        %v261 = vld [vmem:[#allocation5 + $0x10] sm:$0xf]
        %v262 = vld [vmem:[#allocation5 + $0x14] sm:$0xf]
        %v263 = vld [vmem:[#allocation5 + $0x18] sm:$0xf]
        %v264 = vld [vmem:[#allocation5 + $0x1c] sm:$0xf]
        %v265 = vld [vmem:[#allocation5 + $0x20] sm:$0xf]
        %v266 = vld [vmem:[#allocation5 + $0x24] sm:$0xf]
        %v267 = vld [vmem:[#allocation5 + $0x28] sm:$0xf]
        %v268 = vld [vmem:[#allocation5 + $0x2c] sm:$0xf]
        %v269 = vld [vmem:[#allocation5 + $0x30] sm:$0xf]
        %v270 = vld [vmem:[#allocation5 + $0x34] sm:$0xf]
        %v271 = vld [vmem:[#allocation5 + $0x38] sm:$0xf]
        %v272 = vld [vmem:[#allocation5 + $0x3c] sm:$0xf]
        %v273 = vld [vmem:[#allocation5 + $0x40] sm:$0xf]
        %v274 = vld [vmem:[#allocation5 + $0x44] sm:$0xf]
        %v275 = vld [vmem:[#allocation5 + $0x48] sm:$0xf]
        %v276 = vld [vmem:[#allocation5 + $0x4c] sm:$0xf]
        %v277 = vld [vmem:[#allocation5 + $0x50] sm:$0xf]
        %v278 = vld [vmem:[#allocation5 + $0x54] sm:$0xf]
        %v279 = vld [vmem:[#allocation5 + $0x58] sm:$0xf]
        %v280 = vld [vmem:[#allocation5 + $0x5c] sm:$0xf]
        %v281 = vld [vmem:[#allocation5 + $0x60] sm:$0xf]
        %v282 = vld [vmem:[#allocation5 + $0x64] sm:$0xf]
        %v283 = vld [vmem:[#allocation5 + $0x68] sm:$0xf]
        %v284 = vld [vmem:[#allocation5 + $0x6c] sm:$0xf]
        %v285 = vld [vmem:[#allocation5 + $0x70] sm:$0xf]
        %v286 = vld [vmem:[#allocation5 + $0x74] sm:$0xf]
        %v287 = vld [vmem:[#allocation5 + $0x78] sm:$0xf]
        %v288 = vld [vmem:[#allocation5 + $0x7c] sm:$0xf]
        %v289 = vld [vmem:[#allocation7] sm:$0x1]
        %v291 = vlaneseq
        %v292 = vshrl.u32 %v291, 7
        %v293 = vsub.s32 0, %v292
        %v294 = vrot.slane %v289, %v293
        %v298 = vunpack.c.l.b16 %v255
        %v299 = vunpack.c.h.b16 %v255
        %v300 = vunpack.c.l.b16 %v256
        %v301 = vunpack.c.h.b16 %v256
        %v302 = vpack.c.b16 %v300, %v298
        %v303 = vpack.c.b16 %v301, %v299
        %v338 = vunpack.c.l.b16 %v257
        %v339 = vunpack.c.l.b16 %v258
        %v340 = vunpack.c.l.b16 %v259
        %v341 = vunpack.c.l.b16 %v260
        %v342 = vunpack.c.l.b16 %v261
        %v343 = vunpack.c.l.b16 %v262
        %v344 = vunpack.c.l.b16 %v263
        %v345 = vunpack.c.l.b16 %v264
        %v346 = vunpack.c.l.b16 %v265
        %v347 = vunpack.c.l.b16 %v266
        %v348 = vunpack.c.l.b16 %v267
        %v349 = vunpack.c.l.b16 %v268
        %v350 = vunpack.c.l.b16 %v269
        %v351 = vunpack.c.l.b16 %v270
        %v352 = vunpack.c.l.b16 %v271
        %v353 = vunpack.c.l.b16 %v272
        %v354 = vunpack.c.l.b16 %v273
        %v355 = vunpack.c.l.b16 %v274
        %v356 = vunpack.c.l.b16 %v275
        %v357 = vunpack.c.l.b16 %v276
        %v358 = vunpack.c.l.b16 %v277
        %v359 = vunpack.c.l.b16 %v278
        %v360 = vunpack.c.l.b16 %v279
        %v361 = vunpack.c.l.b16 %v280
        %v362 = vunpack.c.l.b16 %v281
        %v363 = vunpack.c.l.b16 %v282
        %v364 = vunpack.c.l.b16 %v283
        %v365 = vunpack.c.l.b16 %v284
        %v366 = vunpack.c.l.b16 %v285
        %v367 = vunpack.c.l.b16 %v286
        %v368 = vunpack.c.l.b16 %v287
        %v369 = vunpack.c.l.b16 %v288
        %v370 = vpack.c.b16 %v339, %v338
        %v371 = vpack.c.b16 %v341, %v340
        %v372 = vpack.c.b16 %v343, %v342
        %v373 = vpack.c.b16 %v345, %v344
        %v374 = vpack.c.b16 %v347, %v346
        %v375 = vpack.c.b16 %v349, %v348
        %v376 = vpack.c.b16 %v351, %v350
        %v377 = vpack.c.b16 %v353, %v352
        %v378 = vpack.c.b16 %v355, %v354
        %v379 = vpack.c.b16 %v357, %v356
        %v380 = vpack.c.b16 %v359, %v358
        %v381 = vpack.c.b16 %v361, %v360
        %v382 = vpack.c.b16 %v363, %v362
        %v383 = vpack.c.b16 %v365, %v364
        %v384 = vpack.c.b16 %v367, %v366
        %v385 = vpack.c.b16 %v369, %v368
        %402 = vmatprep.subr.bf16.mxu0 0
        %403 = vmatpush1.bf16.msra.mxu0 %v370
        %404 = vmatprep.subr.bf16.mxu0 0
        %405 = vmatpush1.bf16.msra.mxu0 %v371
        %406 = vmatprep.subr.bf16.mxu0 0
        %407 = vmatpush1.bf16.msra.mxu0 %v372
        %408 = vmatprep.subr.bf16.mxu0 0
        %409 = vmatpush1.bf16.msra.mxu0 %v373
        %410 = vmatprep.subr.bf16.mxu0 0
        %411 = vmatpush1.bf16.msra.mxu0 %v374
        %412 = vmatprep.subr.bf16.mxu0 0
        %413 = vmatpush1.bf16.msra.mxu0 %v375
        %414 = vmatprep.subr.bf16.mxu0 0
        %415 = vmatpush1.bf16.msra.mxu0 %v376
        %416 = vmatprep.subr.bf16.mxu0 0
        %417 = vmatpush1.bf16.msra.mxu0 %v377
        %418 = vmatprep.subr.bf16.mxu0 0
        %419 = vmatpush1.bf16.msra.mxu0 %v378
        %420 = vmatprep.subr.bf16.mxu0 0
        %421 = vmatpush1.bf16.msra.mxu0 %v379
        %422 = vmatprep.subr.bf16.mxu0 0
        %423 = vmatpush1.bf16.msra.mxu0 %v380
        %424 = vmatprep.subr.bf16.mxu0 0
        %425 = vmatpush1.bf16.msra.mxu0 %v381
        %426 = vmatprep.subr.bf16.mxu0 0
        %427 = vmatpush1.bf16.msra.mxu0 %v382
        %428 = vmatprep.subr.bf16.mxu0 0
        %429 = vmatpush1.bf16.msra.mxu0 %v383
        %430 = vmatprep.subr.bf16.mxu0 0
        %431 = vmatpush1.bf16.msra.mxu0 %v384
        %432 = vmatprep.subr.bf16.mxu0 0
        %433 = vmatpush1.bf16.msra.mxu0 %v385
        %434 = vmatprep.mubr.bf16.mxu0 %v303
        %435 = vmatmul.mubr.bf16.gmra.mrb[0].mxu0 %v302
        %v436 = vpop.f32.mrb[0].mxu0
        %v437 = vadd.f32 %v294, %v436
        %v438 = vpop.f32.mrb[0].mxu0
        %v439 = vpop.f32.mrb[0].mxu0
        %v440 = vadd.f32 %v294, %v439
        %v441 = vpop.f32.mrb[0].mxu0
        %442 = vdwg.mxu0
        %v443 = vpack.c.bf16 %v440, %v437
        %v445 = vunpack.c.l.b16 %v443
        %v446 = vunpack.c.h.b16 %v443
        %v447 = vpack.c.b16 %v445, %v445
        %v448 = vpack.c.b16 %v446, %v446
        %vm451 = vcmask 224256
        %452 = vst.msk [vmem:[%s246] sm:$0xf] %vm451, %v447
        %453 = vst.msk [vmem:[%s246 + $0x4] sm:$0xf] %vm451, %v448
        %454 = vrot.lane.b32.xlu0 %v443, 100
        %v455 = vpop.permute.xlu0 %454
        %456 = vrot.lane.b32.xlu0 %v443, 60
        %v457 = vpop.permute.xlu0 %456
        %vm458 = vcmask 326656
        %v460 = vsel %vm458, %v455, 0
        %v463 = vsel %vm458, %v457, 0
        %465 = vmatprep.subr.bf16.mxu0 0
        %466 = vmatpush1.bf16.xpose.msra.mxu0 %v463
        %467 = vmatprep.subr.bf16.mxu0 0
        %468 = vmatpush1.bf16.xpose.msra.mxu0 0
        %469 = vmatprep.subr.bf16.mxu0 0
        %470 = vmatpush1.bf16.xpose.msra.mxu0 0
        %471 = vmatprep.subr.bf16.mxu0 0
        %472 = vmatpush1.bf16.xpose.msra.mxu0 0
        %473 = vmatprep.subr.bf16.mxu0 0
        %474 = vmatpush1.bf16.xpose.msra.mxu0 0
        %475 = vmatprep.subr.bf16.mxu0 0
        %476 = vmatpush1.bf16.xpose.msra.mxu0 0
        %477 = vmatprep.subr.bf16.mxu0 0
        %478 = vmatpush1.bf16.xpose.msra.mxu0 0
        %479 = vmatprep.subr.bf16.mxu0 0
        %480 = vmatpush1.bf16.xpose.msra.mxu0 0
        %481 = vmatprep.subr.bf16.mxu0 0
        %482 = vmatpush1.bf16.xpose.msra.mxu0 0
        %483 = vmatprep.subr.bf16.mxu0 0
        %484 = vmatpush1.bf16.xpose.msra.mxu0 0
        %485 = vmatprep.subr.bf16.mxu0 0
        %486 = vmatpush1.bf16.xpose.msra.mxu0 0
        %487 = vmatprep.subr.bf16.mxu0 0
        %488 = vmatpush1.bf16.xpose.msra.mxu0 0
        %489 = vmatprep.subr.bf16.mxu0 0
        %490 = vmatpush1.bf16.xpose.msra.mxu0 0
        %491 = vmatprep.subr.bf16.mxu0 0
        %492 = vmatpush1.bf16.xpose.msra.mxu0 0
        %493 = vmatprep.subr.bf16.mxu0 0
        %494 = vmatpush1.bf16.xpose.msra.mxu0 0
        %495 = vmatprep.subr.bf16.mxu0 0
        %496 = vmatpush1.bf16.xpose.msra.mxu0 0
        %497 = vmatprep.mubr.bf16.mxu0 0
        %498 = vmatmul.mubr.bf16.gmra.mrb[0].mxu0 %v460
        %v499 = vpop.f32.mrb[0].mxu0
        %v500 = vadd.f32 0.0, %v499
        %v501 = vpop.f32.mrb[0].mxu0
        %v502 = vpop.f32.mrb[0].mxu0
        %v503 = vadd.f32 0.0, %v502
        %v504 = vpop.f32.mrb[0].mxu0
        %505 = vdwg.mxu0
        %vm506 = vcmask 130048
        %v507 = vsel %vm506, %v500, -inf
        %508 = vmax.xlane.f32.xlu0 %v507
        %v509 = vpop.xlane.xlu0 %508
        %v510 = vsel %vm506, %v503, -inf
        %511 = vmax.xlane.f32.xlu0 %v510
        %v512 = vpop.xlane.xlu0 %511
        %v513 = vsub.f32 %v500, %v509
        %v514 = vsub.f32 %v503, %v512
        %v515 = vmul.f32 %v513, 1.442695
        %v516 = vpow.pop %v515
        %v517 = vmul.f32 %v514, 1.442695
        %v518 = vpow.pop %v517
        %v519 = vsel %vm506, %v516, 0.0
        %520 = vadd.xlane.f32.xlu0 %v519
        %v521 = vpop.xlane.xlu0 %520
        %v522 = vsel %vm506, %v518, 0.0
        %523 = vadd.xlane.f32.xlu0 %v522
        %v524 = vpop.xlane.xlu0 %523
        %v525 = vrcp.pop %v521
        %v526 = vrcp.pop %v524
        %v527 = vmul.f32 %v516, %v525
        %v528 = vmul.f32 %v518, %v526
        %v529 = vpack.c.bf16 %v528, %v527
        %530 = vrot.lane.b32.xlu0 %v443, 20
        %v531 = vpop.permute.xlu0 %530
        %v534 = vsel %vm506, %v529, 0
        %536 = vmatprep.subr.bf16.mxu0 0
        %537 = vmatpush1.bf16.msra.mxu0 %v531
        %538 = vmatprep.subr.bf16.mxu0 0
        %539 = vmatpush1.bf16.msra.mxu0 0
        %540 = vmatprep.subr.bf16.mxu0 0
        %541 = vmatpush1.bf16.msra.mxu0 0
        %542 = vmatprep.subr.bf16.mxu0 0
        %543 = vmatpush1.bf16.msra.mxu0 0
        %544 = vmatprep.subr.bf16.mxu0 0
        %545 = vmatpush1.bf16.msra.mxu0 0
        %546 = vmatprep.subr.bf16.mxu0 0
        %547 = vmatpush1.bf16.msra.mxu0 0
        %548 = vmatprep.subr.bf16.mxu0 0
        %549 = vmatpush1.bf16.msra.mxu0 0
        %550 = vmatprep.subr.bf16.mxu0 0
        %551 = vmatpush1.bf16.msra.mxu0 0
        %552 = vmatprep.subr.bf16.mxu0 0
        %553 = vmatpush1.bf16.msra.mxu0 0
        %554 = vmatprep.subr.bf16.mxu0 0
        %555 = vmatpush1.bf16.msra.mxu0 0
        %556 = vmatprep.subr.bf16.mxu0 0
        %557 = vmatpush1.bf16.msra.mxu0 0
        %558 = vmatprep.subr.bf16.mxu0 0
        %559 = vmatpush1.bf16.msra.mxu0 0
        %560 = vmatprep.subr.bf16.mxu0 0
        %561 = vmatpush1.bf16.msra.mxu0 0
        %562 = vmatprep.subr.bf16.mxu0 0
        %563 = vmatpush1.bf16.msra.mxu0 0
        %564 = vmatprep.subr.bf16.mxu0 0
        %565 = vmatpush1.bf16.msra.mxu0 0
        %566 = vmatprep.subr.bf16.mxu0 0
        %567 = vmatpush1.bf16.msra.mxu0 0
        %568 = vmatprep.mubr.bf16.mxu0 0
        %569 = vmatmul.mubr.bf16.gmra.mrb[0].mxu0 %v534
        %v570 = vpop.f32.mrb[0].mxu0
        %v571 = vadd.f32 0.0, %v570
        %v572 = vpop.f32.mrb[0].mxu0
        %v573 = vpop.f32.mrb[0].mxu0
        %v574 = vadd.f32 0.0, %v573
        %v575 = vpop.f32.mrb[0].mxu0
        %576 = vdwg.mxu0
        %v577 = vpack.c.bf16 %v574, %v571
        %v579 = vunpack.c.l.b16 %v577
        %v580 = vunpack.c.h.b16 %v577
        %v581 = vpack.c.b16 %v579, %v579
        %v582 = vpack.c.b16 %v580, %v580
        %vm585 = vcmask 27648
        %586 = vst.msk [vmem:[%s253] sm:$0xf] %vm585, %v581
        %587 = vst.msk [vmem:[%s253 + $0x4] sm:$0xf] %vm585, %v582
        %s588 = sand.u32 %s102, 1
        %s589 = scalar_lea.sflag [#allocation4], %s588
        %s590 = sand.u32 %s102, 1
        %s591 = smul.addr %s590, 8
        %s592 = scalar_lea.vmem [#allocation8], %s591
        %s593 = sand.u32 %s128, 1
        %s594 = scalar_lea.sflag [#allocation10], %s593
        %s595 = sand.u32 %s128, 1
        %s596 = smul.addr %s595, 8
        %s597 = scalar_lea.vmem [#allocation9], %s596
        // Predicated region
        $region45: #{_lambda_.15} parent=31 // pred_check
          %p598 = pneg %p112
        $region46: #{_lambda_.15} parent=31 // pred_check_branch
          %600 = sbr.rel (%p598) target = $region48
        $region47: #{_lambda_.15} parent=31 // pred_region
          %s602 = ssub.s32 128, 128
          %603 = vsyncadd %s589, %s602
          %s604 = smul.addr %s26, 2
          %s605 = smul.addr %s604, 64
          %s606 = scalar_lea.hbm %s3, %s605
          %s607 = sshll.u32 %s592, 4
          %s608 = int_to_ptr.vmem [resolvable:$true] %s607
          %613 = dma.vmem_to_hbm [thread:$0]  %s608, 128, %s606, %s589, 64, 64, 4
        $region48: #{_lambda_.15} parent=31 // pred_fallthru
          _
        // Predicated region
        $region49: #{_lambda_.15} parent=31 // pred_check
          %p614 = pneg %p138
        $region50: #{_lambda_.15} parent=31 // pred_check_branch
          %616 = sbr.rel (%p614) target = $region52
        $region51: #{_lambda_.15} parent=31 // pred_region
          %s618 = ssub.s32 128, 128
          %619 = vsyncadd %s594, %s618
          %s620 = smul.addr %s26, 2
          %s621 = smul.addr %s620, 64
          %s622 = scalar_lea.hbm %s4, %s621
          %s623 = sshll.u32 %s597, 4
          %s624 = int_to_ptr.vmem [resolvable:$true] %s623
          %629 = dma.vmem_to_hbm [thread:$0]  %s624, 128, %s622, %s594, 64, 64, 4
        $region52: #{_lambda_.15} parent=31 // pred_fallthru
          _
      $region32: #{_lambda_.15} parent=5 // pred_fallthru
        _
      %p630 = scmp.le.s32.totalorder 2, %s21
      // Predicated region
      $region53: #{_lambda_.15} parent=5 // pred_check
        %p631 = pneg %p630
      $region54: #{_lambda_.15} parent=5 // pred_check_branch
        %633 = sbr.rel (%p631) target = $region56
      $region55: #{_lambda_.15} parent=5 // pred_region
        %s634 = ssub.s32 %s21, 2
        // Predicated region
        $region57: #{_lambda_.15} parent=55 // pred_check
          %p635 = pneg %p118
        $region58: #{_lambda_.15} parent=55 // pred_check_branch
          %637 = sbr.rel (%p635) target = $region60
        $region59: #{_lambda_.15} parent=55 // pred_region
          %s638 = sand.u32 %s103, 1
          %s639 = scalar_lea.sflag [#allocation4], %s638
          %s640 = sand.u32 %s103, 1
          %s641 = smul.addr %s640, 8
          %s642 = scalar_lea.vmem [#allocation8], %s641
          %643 = dma.done %s639, 128
        $region60: #{_lambda_.15} parent=55 // pred_fallthru
          _
        // Predicated region
        $region61: #{_lambda_.15} parent=55 // pred_check
          %p644 = pneg %p144
        $region62: #{_lambda_.15} parent=55 // pred_check_branch
          %646 = sbr.rel (%p644) target = $region64
        $region63: #{_lambda_.15} parent=55 // pred_region
          %s647 = sand.u32 %s129, 1
          %s648 = scalar_lea.sflag [#allocation10], %s647
          %s649 = sand.u32 %s129, 1
          %s650 = smul.addr %s649, 8
          %s651 = scalar_lea.vmem [#allocation9], %s650
          %652 = dma.done %s648, 128
        $region64: #{_lambda_.15} parent=55 // pred_fallthru
          _
      $region56: #{_lambda_.15} parent=5 // pred_fallthru
        _
    $region6: #{_lambda_.15} parent=1 // loop_footer
      %s25 = sadd.s32 1, %s21
    $region7: #{_lambda_.15} parent=1 // loop_footer_branch
      %20 = sbr.rel target = $region3
    $region8: #{_lambda_.15} parent=1 // loop_exit
      _
    %653 = vsyncpa [#allocation3], 1
    %s654 = scalar_lea.sflag [#allocation3], 1
    %655 = vsyncpa %s654, 1
    %656 = vsyncpa [#allocation6], 1
    %657 = vsyncpa [#allocation4], 1
    %s658 = scalar_lea.sflag [#allocation4], 1
    %659 = vsyncpa %s658, 1
    %660 = vsyncpa [#allocation10], 1
    %s661 = scalar_lea.sflag [#allocation10], 1
    %662 = vsyncpa %s661, 1

// kernel: _lambda_.16
$region0: #{_lambda_.16}
  #allocation0 [shape = 'u32[]', space=smem, size = 0x4, offset = 0x4, fixed_abs, tag = 'smem constant byte address 0x4 - core index']
  #allocation1 [shape = 'u32[144,128]{1,0:T(1,128)}', space=vmem, size = 0x12000, scoped, tag = 'internal scratch']
  %s0 = inlined_call_operand.hbm [shape: bf16[2,16,28], index: 0, kind: input, shape index: {}]
  %s1 = inlined_call_operand.hbm [shape: bf16[2,16,4], index: 1, kind: input, shape index: {}]
  %s2 = inlined_call_operand.hbm [shape: bf16[4,4], index: 2, kind: input, shape index: {}]
  %s3 = inlined_call_operand.hbm [shape: f32[1,4], index: 3, kind: input, shape index: {}]
  %s4 = inlined_call_operand.hbm [shape: f32[1,32], index: 4, kind: input, shape index: {}]
  %s5 = inlined_call_operand.hbm [shape: f32[1,32], index: 5, kind: input, shape index: {}]
  %s6 = inlined_call_operand.hbm [shape: bf16[2,16,32], index: 6, kind: output, shape index: {}]
  %s7 = sld [smem:[#allocation0]]
  $region81: #{_lambda_.16} parent=0
    _
  %s9 = ssub.s32 1, %s7
  %s10 = scalar_select 0, %s9, %s7
  $region1: #{_lambda_.16} parent=0
    #allocation2 [shape = 'u8[8192]{0}', space=vmem, size = 0x2000, scoped, tag = 'input window, operand 0']
    #allocation3 [shape = 's32[2]{0}', space=sflag, size = 0x8, scoped, tag = 'scoped memory for _lambda_.16']
    #allocation4 [shape = 's32[2]{0}', space=sflag, size = 0x8, scoped, tag = 'scoped memory for _lambda_.16']
    #allocation5 [shape = 'u8[8192]{0}', space=vmem, size = 0x2000, scoped, tag = 'input window, operand 1']
    #allocation6 [shape = 's32[2]{0}', space=sflag, size = 0x8, scoped, tag = 'scoped memory for _lambda_.16']
    #allocation7 [shape = 'u8[1024]{0}', space=vmem, size = 0x400, scoped, tag = 'input window, operand 2, single buffered']
    #allocation8 [shape = 'u8[512]{0}', space=vmem, size = 0x400, scoped, tag = 'input window, operand 3, single buffered']
    #allocation9 [shape = 's32[1]{0}', space=sflag, size = 0x4, scoped, tag = 'scoped memory for _lambda_.16']
    #allocation10 [shape = 'u8[512]{0}', space=vmem, size = 0x400, scoped, tag = 'input window, operand 4, single buffered']
    #allocation11 [shape = 'u8[512]{0}', space=vmem, size = 0x400, scoped, tag = 'input window, operand 5, single buffered']
    #allocation12 [shape = 's32[1]{0}', space=sflag, size = 0x4, scoped, tag = 'scoped memory for _lambda_.16']
    #allocation13 [shape = 'u8[8192]{0}', space=vmem, size = 0x2000, scoped, tag = 'output window, operand 0']
    %11 = vsyncpa [#allocation3], 0
    %s12 = scalar_lea.sflag [#allocation3], 1
    %13 = vsyncpa %s12, 0
    %14 = vsyncpa [#allocation6], 0
    %s15 = scalar_lea.sflag [#allocation6], 1
    %16 = vsyncpa %s15, 0
    %17 = vsyncpa [#allocation9], 0
    %18 = vsyncpa [#allocation12], 0
    %19 = vsyncpa [#allocation4], 0
    %s20 = scalar_lea.sflag [#allocation4], 1
    %21 = vsyncpa %s20, 0
    loop: start=0, step=1, limit=4
    $region2: #{_lambda_.16} parent=1 // loop_pre_header
      _
    $region3: #{_lambda_.16} parent=1 // loop_header
      %s23 = sphi 0, %s27
      %p24 = scmp.ge.s32.totalorder %s23, 4
      %s33 = sphi 0, %s35
      %s36 = sphi 0, %s33
      %s37 = sphi 0, %s36
      %s53 = sphi 0, %s37
      %s59 = sphi 0, %s61
      %s62 = sphi 0, %s59
      %s63 = sphi 0, %s62
      %s79 = sphi 0, %s63
      %s83 = sphi 0, %s83
      %s85 = sphi 0, %s83
      %s86 = sphi 0, %s85
      %s100 = sphi 0, %s86
      %s104 = sphi 0, %s104
      %s106 = sphi 0, %s104
      %s107 = sphi 0, %s106
      %s121 = sphi 0, %s107
      %s125 = sphi 0, %s125
      %s127 = sphi 0, %s125
      %s128 = sphi 0, %s127
      %s142 = sphi 0, %s128
      %s146 = sphi 0, %s146
      %s148 = sphi 0, %s146
      %s149 = sphi 0, %s148
      %s163 = sphi 0, %s149
      %s169 = sphi 0, %s171
      %s172 = sphi 0, %s169
      %s173 = sphi 0, %s172
      %s189 = sphi 0, %s173
    $region4: #{_lambda_.16} parent=1 // loop_header_branch
      %26 = sbr.rel (%p24) target = $region8
    $region5: #{_lambda_.16} parent=1 // loop_body
      %s28 = ssub.s32 %s23, 1
      %s29 = ssub.s32 %s23, 2
      %s30 = sadd.s32 %s23, 1
      %s31 = ssub.s32 %s23, %s30
      %p32 = scmp.eq.s32.totalorder %s31, 0
      %s34 = sadd.s32 %s33, 1
      %s35 = scalar_select %p32, %s33, %s34
      %p38 = pneg %p32
      %p39 = scmp.eq.s32.totalorder %s23, 1
      %p40 = por %p38, %p39
      %p41 = scmp.ne.s32.totalorder %s33, %s36
      %p42 = scmp.eq.s32.totalorder %s23, 0
      %p43 = por %p41, %p42
      %p44 = scmp.ne.s32.totalorder %s33, %s36
      %p45 = scmp.eq.s32.totalorder %s28, 1
      %p46 = por %p44, %p45
      %p47 = scmp.ne.s32.totalorder %s36, %s37
      %p48 = scmp.eq.s32.totalorder %s28, 0
      %p49 = por %p47, %p48
      %p50 = scmp.ne.s32.totalorder %s36, %s37
      %p51 = scmp.eq.s32.totalorder %s29, 1
      %p52 = por %p50, %p51
      %p54 = scmp.ne.s32.totalorder %s37, %s53
      %p55 = scmp.eq.s32.totalorder %s29, 0
      %p56 = por %p54, %p55
      %s57 = ssub.s32 %s23, %s30
      %p58 = scmp.eq.s32.totalorder %s57, 0
      %s60 = sadd.s32 %s59, 1
      %s61 = scalar_select %p58, %s59, %s60
      %p64 = pneg %p58
      %p65 = scmp.eq.s32.totalorder %s23, 1
      %p66 = por %p64, %p65
      %p67 = scmp.ne.s32.totalorder %s59, %s62
      %p68 = scmp.eq.s32.totalorder %s23, 0
      %p69 = por %p67, %p68
      %p70 = scmp.ne.s32.totalorder %s59, %s62
      %p71 = scmp.eq.s32.totalorder %s28, 1
      %p72 = por %p70, %p71
      %p73 = scmp.ne.s32.totalorder %s62, %s63
      %p74 = scmp.eq.s32.totalorder %s28, 0
      %p75 = por %p73, %p74
      %p76 = scmp.ne.s32.totalorder %s62, %s63
      %p77 = scmp.eq.s32.totalorder %s29, 1
      %p78 = por %p76, %p77
      %p80 = scmp.ne.s32.totalorder %s63, %s79
      %p81 = scmp.eq.s32.totalorder %s29, 0
      %p82 = por %p80, %p81
      %s84 = sadd.s32 %s83, 1
      %p87 = scmp.eq.s32.totalorder %s23, 1
      %p88 = scmp.ne.s32.totalorder %s83, %s85
      %p89 = scmp.eq.s32.totalorder %s23, 0
      %p90 = por %p88, %p89
      %p91 = scmp.ne.s32.totalorder %s83, %s85
      %p92 = scmp.eq.s32.totalorder %s28, 1
      %p93 = por %p91, %p92
      %p94 = scmp.ne.s32.totalorder %s85, %s86
      %p95 = scmp.eq.s32.totalorder %s28, 0
      %p96 = por %p94, %p95
      %p97 = scmp.ne.s32.totalorder %s85, %s86
      %p98 = scmp.eq.s32.totalorder %s29, 1
      %p99 = por %p97, %p98
      %p101 = scmp.ne.s32.totalorder %s86, %s100
      %p102 = scmp.eq.s32.totalorder %s29, 0
      %p103 = por %p101, %p102
      %s105 = sadd.s32 %s104, 1
      %p108 = scmp.eq.s32.totalorder %s23, 1
      %p109 = scmp.ne.s32.totalorder %s104, %s106
      %p110 = scmp.eq.s32.totalorder %s23, 0
      %p111 = por %p109, %p110
      %p112 = scmp.ne.s32.totalorder %s104, %s106
      %p113 = scmp.eq.s32.totalorder %s28, 1
      %p114 = por %p112, %p113
      %p115 = scmp.ne.s32.totalorder %s106, %s107
      %p116 = scmp.eq.s32.totalorder %s28, 0
      %p117 = por %p115, %p116
      %p118 = scmp.ne.s32.totalorder %s106, %s107
      %p119 = scmp.eq.s32.totalorder %s29, 1
      %p120 = por %p118, %p119
      %p122 = scmp.ne.s32.totalorder %s107, %s121
      %p123 = scmp.eq.s32.totalorder %s29, 0
      %p124 = por %p122, %p123
      %s126 = sadd.s32 %s125, 1
      %p129 = scmp.eq.s32.totalorder %s23, 1
      %p130 = scmp.ne.s32.totalorder %s125, %s127
      %p131 = scmp.eq.s32.totalorder %s23, 0
      %p132 = por %p130, %p131
      %p133 = scmp.ne.s32.totalorder %s125, %s127
      %p134 = scmp.eq.s32.totalorder %s28, 1
      %p135 = por %p133, %p134
      %p136 = scmp.ne.s32.totalorder %s127, %s128
      %p137 = scmp.eq.s32.totalorder %s28, 0
      %p138 = por %p136, %p137
      %p139 = scmp.ne.s32.totalorder %s127, %s128
      %p140 = scmp.eq.s32.totalorder %s29, 1
      %p141 = por %p139, %p140
      %p143 = scmp.ne.s32.totalorder %s128, %s142
      %p144 = scmp.eq.s32.totalorder %s29, 0
      %p145 = por %p143, %p144
      %s147 = sadd.s32 %s146, 1
      %p150 = scmp.eq.s32.totalorder %s23, 1
      %p151 = scmp.ne.s32.totalorder %s146, %s148
      %p152 = scmp.eq.s32.totalorder %s23, 0
      %p153 = por %p151, %p152
      %p154 = scmp.ne.s32.totalorder %s146, %s148
      %p155 = scmp.eq.s32.totalorder %s28, 1
      %p156 = por %p154, %p155
      %p157 = scmp.ne.s32.totalorder %s148, %s149
      %p158 = scmp.eq.s32.totalorder %s28, 0
      %p159 = por %p157, %p158
      %p160 = scmp.ne.s32.totalorder %s148, %s149
      %p161 = scmp.eq.s32.totalorder %s29, 1
      %p162 = por %p160, %p161
      %p164 = scmp.ne.s32.totalorder %s149, %s163
      %p165 = scmp.eq.s32.totalorder %s29, 0
      %p166 = por %p164, %p165
      %s167 = ssub.s32 %s23, %s30
      %p168 = scmp.eq.s32.totalorder %s167, 0
      %s170 = sadd.s32 %s169, 1
      %s171 = scalar_select %p168, %s169, %s170
      %p174 = pneg %p168
      %p175 = scmp.eq.s32.totalorder %s23, 1
      %p176 = por %p174, %p175
      %p177 = scmp.ne.s32.totalorder %s169, %s172
      %p178 = scmp.eq.s32.totalorder %s23, 0
      %p179 = por %p177, %p178
      %p180 = scmp.ne.s32.totalorder %s169, %s172
      %p181 = scmp.eq.s32.totalorder %s28, 1
      %p182 = por %p180, %p181
      %p183 = scmp.ne.s32.totalorder %s172, %s173
      %p184 = scmp.eq.s32.totalorder %s28, 0
      %p185 = por %p183, %p184
      %p186 = scmp.ne.s32.totalorder %s172, %s173
      %p187 = scmp.eq.s32.totalorder %s29, 1
      %p188 = por %p186, %p187
      %p190 = scmp.ne.s32.totalorder %s173, %s189
      %p191 = scmp.eq.s32.totalorder %s29, 0
      %p192 = por %p190, %p191
      %p193 = scmp.le.s32.totalorder 1, %s23
      %p194 = scmp.lt.s32.totalorder %s23, 3
      %p195 = pnand %p193, %p194
      %p196 = pneg %p195
      // Predicated region
      $region9: #{_lambda_.16} parent=5 // pred_check
        _
      $region10: #{_lambda_.16} parent=5 // pred_check_branch
        %198 = sbr.rel (%p195) target = $region12
      $region11: #{_lambda_.16} parent=5 // pred_region
        %s199 = ssub.s32 %s23, 1
        // Predicated region
        $region13: #{_lambda_.16} parent=11 // pred_check
          %p200 = pneg %p96
        $region14: #{_lambda_.16} parent=11 // pred_check_branch
          %202 = sbr.rel (%p200) target = $region16
        $region15: #{_lambda_.16} parent=11 // pred_region
          %s204 = ssub.s32 32, 32
          %205 = vsyncadd [#allocation6], %s204
          %s207 = sshll.u32 [#allocation7], 4
          %s208 = int_to_ptr.vmem [resolvable:$true] %s207
          %210 = dma.hbm_to_vmem [thread:$0]  %s2, 32, %s208, [#allocation6]
        $region16: #{_lambda_.16} parent=11 // pred_fallthru
          _
        // Predicated region
        $region17: #{_lambda_.16} parent=11 // pred_check
          %p211 = pneg %p117
        $region18: #{_lambda_.16} parent=11 // pred_check_branch
          %213 = sbr.rel (%p211) target = $region20
        $region19: #{_lambda_.16} parent=11 // pred_region
          %s215 = ssub.s32 16, 16
          %216 = vsyncadd [#allocation9], %s215
          %s218 = sshll.u32 [#allocation8], 4
          %s219 = int_to_ptr.vmem [resolvable:$true] %s218
          %221 = dma.hbm_to_vmem [thread:$0]  %s3, 16, %s219, [#allocation9]
        $region20: #{_lambda_.16} parent=11 // pred_fallthru
          _
        // Predicated region
        $region21: #{_lambda_.16} parent=11 // pred_check
          %p222 = pneg %p138
        $region22: #{_lambda_.16} parent=11 // pred_check_branch
          %224 = sbr.rel (%p222) target = $region24
        $region23: #{_lambda_.16} parent=11 // pred_region
          %s226 = ssub.s32 16, 16
          %227 = vsyncadd [#allocation9], %s226
          %s229 = sshll.u32 [#allocation10], 4
          %s230 = int_to_ptr.vmem [resolvable:$true] %s229
          %232 = dma.hbm_to_vmem [thread:$0]  %s4, 16, %s230, [#allocation9]
        $region24: #{_lambda_.16} parent=11 // pred_fallthru
          _
        // Predicated region
        $region25: #{_lambda_.16} parent=11 // pred_check
          %p233 = pneg %p159
        $region26: #{_lambda_.16} parent=11 // pred_check_branch
          %235 = sbr.rel (%p233) target = $region28
        $region27: #{_lambda_.16} parent=11 // pred_region
          %s237 = ssub.s32 16, 16
          %238 = vsyncadd [#allocation12], %s237
          %s240 = sshll.u32 [#allocation11], 4
          %s241 = int_to_ptr.vmem [resolvable:$true] %s240
          %243 = dma.hbm_to_vmem [thread:$0]  %s5, 16, %s241, [#allocation12]
        $region28: #{_lambda_.16} parent=11 // pred_fallthru
          _
      $region12: #{_lambda_.16} parent=5 // pred_fallthru
        _
      %p244 = scmp.lt.s32.totalorder %s23, 2
      // Predicated region
      $region29: #{_lambda_.16} parent=5 // pred_check
        %p245 = pneg %p244
      $region30: #{_lambda_.16} parent=5 // pred_check_branch
        %247 = sbr.rel (%p245) target = $region32
      $region31: #{_lambda_.16} parent=5 // pred_region
        // Predicated region
        $region33: #{_lambda_.16} parent=31 // pred_check
          %p248 = pneg %p43
        $region34: #{_lambda_.16} parent=31 // pred_check_branch
          %250 = sbr.rel (%p248) target = $region36
        $region35: #{_lambda_.16} parent=31 // pred_region
          %s251 = sand.u32 %s33, 1
          %s252 = scalar_lea.sflag [#allocation3], %s251
          %s253 = sand.u32 %s33, 1
          %s254 = smul.addr %s253, 8
          %s255 = scalar_lea.vmem [#allocation2], %s254
          %s257 = ssub.s32 128, 128
          %258 = vsyncadd %s252, %s257
          %s259 = smul.addr %s23, 2
          %s260 = smul.addr %s259, 64
          %s261 = scalar_lea.hbm %s0, %s260
          %s262 = sshll.u32 %s255, 4
          %s263 = int_to_ptr.vmem [resolvable:$true] %s262
          %268 = dma.hbm_to_vmem [thread:$0]  %s261, 128, %s263, %s252, 64, 64, 4
        $region36: #{_lambda_.16} parent=31 // pred_fallthru
          _
        // Predicated region
        $region37: #{_lambda_.16} parent=31 // pred_check
          %p269 = pneg %p69
        $region38: #{_lambda_.16} parent=31 // pred_check_branch
          %271 = sbr.rel (%p269) target = $region40
        $region39: #{_lambda_.16} parent=31 // pred_region
          %s272 = sand.u32 %s23, 1
          %s273 = scalar_lea.sflag [#allocation6], %s272
          %s274 = sand.u32 %s59, 1
          %s275 = smul.addr %s274, 8
          %s276 = scalar_lea.vmem [#allocation5], %s275
          %s278 = ssub.s32 128, 128
          %279 = vsyncadd %s273, %s278
          %s280 = smul.addr %s23, 2
          %s281 = smul.addr %s280, 64
          %s282 = scalar_lea.hbm %s1, %s281
          %s283 = sshll.u32 %s276, 4
          %s284 = int_to_ptr.vmem [resolvable:$true] %s283
          %289 = dma.hbm_to_vmem [thread:$0]  %s282, 128, %s284, %s273, 64, 64, 4
        $region40: #{_lambda_.16} parent=31 // pred_fallthru
          _
      $region32: #{_lambda_.16} parent=5 // pred_fallthru
        _
      %p290 = scmp.le.s32.totalorder 1, %s23
      %p291 = scmp.lt.s32.totalorder %s23, 3
      %p292 = pnand %p290, %p291
      %p293 = pneg %p292
      // Predicated region
      $region41: #{_lambda_.16} parent=5 // pred_check
        _
      $region42: #{_lambda_.16} parent=5 // pred_check_branch
        %295 = sbr.rel (%p292) target = $region44
      $region43: #{_lambda_.16} parent=5 // pred_region
        %s296 = ssub.s32 %s23, 1
        %s297 = sand.u32 %s36, 1
        %s298 = scalar_lea.sflag [#allocation3], %s297
        %s299 = sand.u32 %s36, 1
        %s300 = smul.addr %s299, 8
        %s301 = scalar_lea.vmem [#allocation2], %s300
        // Predicated region
        $region45: #{_lambda_.16} parent=43 // pred_check
          %p302 = pneg %p49
        $region46: #{_lambda_.16} parent=43 // pred_check_branch
          %304 = sbr.rel (%p302) target = $region48
        $region47: #{_lambda_.16} parent=43 // pred_region
          %305 = dma.done %s298, 128
        $region48: #{_lambda_.16} parent=43 // pred_fallthru
          _
        %s306 = sand.u32 %s28, 1
        %s307 = scalar_lea.sflag [#allocation6], %s306
        %s308 = sand.u32 %s62, 1
        %s309 = smul.addr %s308, 8
        %s310 = scalar_lea.vmem [#allocation5], %s309
        // Predicated region
        $region49: #{_lambda_.16} parent=43 // pred_check
          %p311 = pneg %p75
        $region50: #{_lambda_.16} parent=43 // pred_check_branch
          %313 = sbr.rel (%p311) target = $region52
        $region51: #{_lambda_.16} parent=43 // pred_region
          %314 = dma.done %s307, 128
        $region52: #{_lambda_.16} parent=43 // pred_fallthru
          _
        // Predicated region
        $region53: #{_lambda_.16} parent=43 // pred_check
          %p315 = pneg %p96
        $region54: #{_lambda_.16} parent=43 // pred_check_branch
          %317 = sbr.rel (%p315) target = $region56
        $region55: #{_lambda_.16} parent=43 // pred_region
          %318 = dma.done [#allocation6], 32
        $region56: #{_lambda_.16} parent=43 // pred_fallthru
          _
        // Predicated region
        $region57: #{_lambda_.16} parent=43 // pred_check
          %p319 = pneg %p117
        $region58: #{_lambda_.16} parent=43 // pred_check_branch
          %321 = sbr.rel (%p319) target = $region60
        $region59: #{_lambda_.16} parent=43 // pred_region
          %322 = dma.done [#allocation9], 16
        $region60: #{_lambda_.16} parent=43 // pred_fallthru
          _
        // Predicated region
        $region61: #{_lambda_.16} parent=43 // pred_check
          %p323 = pneg %p138
        $region62: #{_lambda_.16} parent=43 // pred_check_branch
          %325 = sbr.rel (%p323) target = $region64
        $region63: #{_lambda_.16} parent=43 // pred_region
          %326 = dma.done [#allocation9], 16
        $region64: #{_lambda_.16} parent=43 // pred_fallthru
          _
        // Predicated region
        $region65: #{_lambda_.16} parent=43 // pred_check
          %p327 = pneg %p159
        $region66: #{_lambda_.16} parent=43 // pred_check_branch
          %329 = sbr.rel (%p327) target = $region68
        $region67: #{_lambda_.16} parent=43 // pred_region
          %330 = dma.done [#allocation12], 16
        $region68: #{_lambda_.16} parent=43 // pred_fallthru
          _
        %s331 = sand.u32 %s36, 1
        %s332 = scalar_lea.sflag [#allocation3], %s331
        %s333 = sand.u32 %s36, 1
        %s334 = smul.addr %s333, 8
        %s335 = scalar_lea.vmem [#allocation2], %s334
        %p336 = pneg %p49
        %p337 = pneg %p46
        %s338 = sand.u32 %s28, 1
        %s339 = scalar_lea.sflag [#allocation6], %s338
        %s340 = sand.u32 %s62, 1
        %s341 = smul.addr %s340, 8
        %s342 = scalar_lea.vmem [#allocation5], %s341
        %p343 = pneg %p75
        %p344 = pneg %p72
        %p345 = pneg %p96
        %p346 = pneg %p93
        %p347 = pneg %p117
        %p348 = pneg %p114
        %p349 = pneg %p138
        %p350 = pneg %p135
        %p351 = pneg %p159
        %p352 = pneg %p156
        %p353 = pneg %p185
        %p354 = pneg %p182
        %s355 = sand.u32 %s172, 1
        %s356 = scalar_lea.sflag [#allocation4], %s355
        %s357 = sand.u32 %s172, 1
        %s358 = smul.addr %s357, 8
        %s359 = scalar_lea.vmem [#allocation13], %s358
        %v361 = vld [vmem:[#allocation10] sm:$0x1]
        %v362 = vld [vmem:[#allocation11] sm:$0x1]
        %v363 = vld [vmem:[%s310] sm:$0xf]
        %v364 = vld [vmem:[%s310 + $0x4] sm:$0xf]
        %v365 = vld [vmem:[#allocation7] sm:$0x3]
        %v366 = vld [vmem:[#allocation8] sm:$0x1]
        %v368 = vlaneseq
        %v369 = vshrl.u32 %v368, 7
        %v370 = vsub.s32 0, %v369
        %v371 = vrot.slane %v366, %v370
        %v375 = vunpack.c.l.b16 %v363
        %v376 = vunpack.c.l.b16 %v364
        %v377 = vpack.c.b16 %v376, %v375
        %vm378 = vcmask 31744
        %v380 = vsel %vm378, %v377, 0
        %vm382 = vcmask 1041408
        %v384 = vsel %vm382, %v365, 0
        %386 = vmatprep.subr.bf16.mxu0 0
        %387 = vmatpush1.bf16.msra.mxu0 %v384
        %388 = vmatprep.subr.bf16.mxu0 0
        %389 = vmatpush1.bf16.msra.mxu0 0
        %390 = vmatprep.subr.bf16.mxu0 0
        %391 = vmatpush1.bf16.msra.mxu0 0
        %392 = vmatprep.subr.bf16.mxu0 0
        %393 = vmatpush1.bf16.msra.mxu0 0
        %394 = vmatprep.subr.bf16.mxu0 0
        %395 = vmatpush1.bf16.msra.mxu0 0
        %396 = vmatprep.subr.bf16.mxu0 0
        %397 = vmatpush1.bf16.msra.mxu0 0
        %398 = vmatprep.subr.bf16.mxu0 0
        %399 = vmatpush1.bf16.msra.mxu0 0
        %400 = vmatprep.subr.bf16.mxu0 0
        %401 = vmatpush1.bf16.msra.mxu0 0
        %402 = vmatprep.subr.bf16.mxu0 0
        %403 = vmatpush1.bf16.msra.mxu0 0
        %404 = vmatprep.subr.bf16.mxu0 0
        %405 = vmatpush1.bf16.msra.mxu0 0
        %406 = vmatprep.subr.bf16.mxu0 0
        %407 = vmatpush1.bf16.msra.mxu0 0
        %408 = vmatprep.subr.bf16.mxu0 0
        %409 = vmatpush1.bf16.msra.mxu0 0
        %410 = vmatprep.subr.bf16.mxu0 0
        %411 = vmatpush1.bf16.msra.mxu0 0
        %412 = vmatprep.subr.bf16.mxu0 0
        %413 = vmatpush1.bf16.msra.mxu0 0
        %414 = vmatprep.subr.bf16.mxu0 0
        %415 = vmatpush1.bf16.msra.mxu0 0
        %416 = vmatprep.subr.bf16.mxu0 0
        %417 = vmatpush1.bf16.msra.mxu0 0
        %418 = vmatprep.mubr.bf16.mxu0 0
        %419 = vmatmul.mubr.bf16.gmra.mrb[0].mxu0 %v380
        %v420 = vpop.f32.mrb[0].mxu0
        %v421 = vadd.f32 %v371, %v420
        %v422 = vpop.f32.mrb[0].mxu0
        %v423 = vpop.f32.mrb[0].mxu0
        %v424 = vadd.f32 %v371, %v423
        %v425 = vpop.f32.mrb[0].mxu0
        %426 = vdwg.mxu0
        %v427 = vld [vmem:[%s301] sm:$0xf]
        %v428 = vld [vmem:[%s301 + $0x4] sm:$0xf]
        %v429 = vunpack.c.l.bf16 %v427
        %v430 = vunpack.c.l.bf16 %v428
        %vm431 = vcmask 228352
        %v432 = vsel %vm431, %v429, 0.0
        %v433 = vsel %vm431, %v430, 0.0
        %v434 = vadd.f32 %v432, %v433
        %v435 = vrot.slane %v434, 4
        %v436 = vadd.f32 %v434, %v435
        %v437 = vrot.slane %v436, 2
        %v438 = vadd.f32 %v436, %v437
        %v439 = vrot.slane %v438, 1
        %v440 = vadd.f32 %v438, %v439
        %v441 = vmul.f32 %v440, 0.0625
        %v442 = vsub.f32 %v429, %v441
        %v443 = vsub.f32 %v430, %v441
        %v444 = vmul.f32 %v442, %v442
        %v445 = vmul.f32 %v443, %v443
        %v446 = vsel %vm431, %v444, 0.0
        %v447 = vsel %vm431, %v445, 0.0
        %v448 = vadd.f32 %v446, %v447
        %v449 = vrot.slane %v448, 4
        %v450 = vadd.f32 %v448, %v449
        %v451 = vrot.slane %v450, 2
        %v452 = vadd.f32 %v450, %v451
        %v453 = vrot.slane %v452, 1
        %v454 = vadd.f32 %v452, %v453
        %v455 = vmul.f32 %v454, 0.0625
        %v456 = vadd.f32 %v455, 1e-05
        %v457 = vrsqrt.pop %v456
        %v458 = vmul.f32 %v442, %v457
        %v459 = vmul.f32 %v443, %v457
        %v461 = vlaneseq
        %v462 = vshrl.u32 %v461, 7
        %v463 = vsub.s32 0, %v462
        %v464 = vrot.slane %v361, %v463
        %v466 = vmul.f32 %v458, %v464
        %v467 = vmul.f32 %v459, %v464
        %v469 = vlaneseq
        %v470 = vshrl.u32 %v469, 7
        %v471 = vsub.s32 0, %v470
        %v472 = vrot.slane %v362, %v471
        %v474 = vadd.f32 %v466, %v472
        %v475 = vadd.f32 %v467, %v472
        %v476 = vmax.f32 %v474, 0.0
        %v477 = vmax.f32 %v475, 0.0
        %v478 = vpack.c.bf16 %v477, %v476
        %v480 = vunpack.c.l.b16 %v478
        %v481 = vunpack.c.h.b16 %v478
        %v482 = vpack.c.b16 %v480, %v480
        %v483 = vpack.c.b16 %v481, %v481
        %vm486 = vcmask 224256
        %487 = vst.msk [vmem:[%s359] sm:$0xf] %vm486, %v482
        %488 = vst.msk [vmem:[%s359 + $0x4] sm:$0xf] %vm486, %v483
        %v489 = vsel %vm378, %v421, 0.0
        %v490 = vsel %vm378, %v424, 0.0
        %v491 = vadd.f32 %v489, %v490
        %v492 = vrot.slane %v491, 4
        %v493 = vadd.f32 %v491, %v492
        %v494 = vrot.slane %v493, 2
        %v495 = vadd.f32 %v493, %v494
        %v496 = vrot.slane %v495, 1
        %v497 = vadd.f32 %v495, %v496
        %v498 = vmul.f32 %v497, 0.0625
        %v499 = vsub.f32 %v421, %v498
        %v500 = vsub.f32 %v424, %v498
        %v501 = vmul.f32 %v499, %v499
        %v502 = vmul.f32 %v500, %v500
        %v503 = vsel %vm378, %v501, 0.0
        %v504 = vsel %vm378, %v502, 0.0
        %v505 = vadd.f32 %v503, %v504
        %v506 = vrot.slane %v505, 4
        %v507 = vadd.f32 %v505, %v506
        %v508 = vrot.slane %v507, 2
        %v509 = vadd.f32 %v507, %v508
        %v510 = vrot.slane %v509, 1
        %v511 = vadd.f32 %v509, %v510
        %v512 = vmul.f32 %v511, 0.0625
        %v513 = vadd.f32 %v512, 1e-05
        %v514 = vrsqrt.pop %v513
        %v515 = vmul.f32 %v499, %v514
        %v516 = vmul.f32 %v500, %v514
        %517 = vrot.lane.b32.xlu0 %v464, 100
        %v518 = vpop.permute.xlu0 %517
        %v520 = vmul.f32 %v515, %v518
        %v521 = vmul.f32 %v516, %v518
        %522 = vrot.lane.b32.xlu0 %v472, 100
        %v523 = vpop.permute.xlu0 %522
        %v525 = vadd.f32 %v520, %v523
        %v526 = vadd.f32 %v521, %v523
        %v527 = vmax.f32 %v525, 0.0
        %v528 = vmax.f32 %v526, 0.0
        %v529 = vpack.c.bf16 %v528, %v527
        %v531 = vunpack.c.l.b16 %v529
        %v532 = vunpack.c.h.b16 %v529
        %v533 = vpack.c.b16 %v531, %v531
        %v534 = vpack.c.b16 %v532, %v532
        %535 = vrot.lane.b32.xlu0 %v533, 28
        %v536 = vpop.permute.xlu0 %535
        %537 = vrot.lane.b32.xlu0 %v534, 28
        %v538 = vpop.permute.xlu0 %537
        %vm541 = vcmask 257248
        %542 = vst.msk [vmem:[%s359] sm:$0xf] %vm541, %v536
        %543 = vst.msk [vmem:[%s359 + $0x4] sm:$0xf] %vm541, %v538
        %s544 = sand.u32 %s172, 1
        %s545 = scalar_lea.sflag [#allocation4], %s544
        %s546 = sand.u32 %s172, 1
        %s547 = smul.addr %s546, 8
        %s548 = scalar_lea.vmem [#allocation13], %s547
        // Predicated region
        $region69: #{_lambda_.16} parent=43 // pred_check
          %p549 = pneg %p182
        $region70: #{_lambda_.16} parent=43 // pred_check_branch
          %551 = sbr.rel (%p549) target = $region72
        $region71: #{_lambda_.16} parent=43 // pred_region
          %s553 = ssub.s32 128, 128
          %554 = vsyncadd %s545, %s553
          %s555 = smul.addr %s28, 2
          %s556 = smul.addr %s555, 64
          %s557 = scalar_lea.hbm %s6, %s556
          %s558 = sshll.u32 %s548, 4
          %s559 = int_to_ptr.vmem [resolvable:$true] %s558
          %564 = dma.vmem_to_hbm [thread:$0]  %s559, 128, %s557, %s545, 64, 64, 4
        $region72: #{_lambda_.16} parent=43 // pred_fallthru
          _
      $region44: #{_lambda_.16} parent=5 // pred_fallthru
        _
      %p565 = scmp.le.s32.totalorder 2, %s23
      // Predicated region
      $region73: #{_lambda_.16} parent=5 // pred_check
        %p566 = pneg %p565
      $region74: #{_lambda_.16} parent=5 // pred_check_branch
        %568 = sbr.rel (%p566) target = $region76
      $region75: #{_lambda_.16} parent=5 // pred_region
        %s569 = ssub.s32 %s23, 2
        // Predicated region
        $region77: #{_lambda_.16} parent=75 // pred_check
          %p570 = pneg %p188
        $region78: #{_lambda_.16} parent=75 // pred_check_branch
          %572 = sbr.rel (%p570) target = $region80
        $region79: #{_lambda_.16} parent=75 // pred_region
          %s573 = sand.u32 %s173, 1
          %s574 = scalar_lea.sflag [#allocation4], %s573
          %s575 = sand.u32 %s173, 1
          %s576 = smul.addr %s575, 8
          %s577 = scalar_lea.vmem [#allocation13], %s576
          %578 = dma.done %s574, 128
        $region80: #{_lambda_.16} parent=75 // pred_fallthru
          _
      $region76: #{_lambda_.16} parent=5 // pred_fallthru
        _
    $region6: #{_lambda_.16} parent=1 // loop_footer
      %s27 = sadd.s32 1, %s23
    $region7: #{_lambda_.16} parent=1 // loop_footer_branch
      %22 = sbr.rel target = $region3
    $region8: #{_lambda_.16} parent=1 // loop_exit
      _
    %579 = vsyncpa [#allocation3], 1
    %s580 = scalar_lea.sflag [#allocation3], 1
    %581 = vsyncpa %s580, 1
    %582 = vsyncpa [#allocation6], 1
    %s583 = scalar_lea.sflag [#allocation6], 1
    %584 = vsyncpa %s583, 1
    %585 = vsyncpa [#allocation9], 1
    %586 = vsyncpa [#allocation12], 1
    %587 = vsyncpa [#allocation4], 1
    %s588 = scalar_lea.sflag [#allocation4], 1
    %589 = vsyncpa %s588, 1

// kernel: _lambda_.18
$region0: #{_lambda_.18}
  #allocation0 [shape = 'u32[]', space=smem, size = 0x4, offset = 0x4, fixed_abs, tag = 'smem constant byte address 0x4 - core index']
  #allocation1 [shape = 'u32[144,128]{1,0:T(1,128)}', space=vmem, size = 0x12000, scoped, tag = 'internal scratch']
  %s0 = inlined_call_operand.hbm [shape: bf16[2,16,288], index: 0, kind: input, shape index: {}]
  %s1 = inlined_call_operand.hbm [shape: bf16[288,32], index: 1, kind: input, shape index: {}]
  %s2 = inlined_call_operand.hbm [shape: f32[1,32], index: 2, kind: input, shape index: {}]
  %s3 = inlined_call_operand.hbm [shape: f32[1,32], index: 3, kind: input, shape index: {}]
  %s4 = inlined_call_operand.hbm [shape: bf16[2,16,32], index: 4, kind: input, shape index: {}]
  %s5 = inlined_call_operand.hbm [shape: bf16[2,16,32], index: 5, kind: output, shape index: {}]
  %s6 = sld [smem:[#allocation0]]
  $region73: #{_lambda_.18} parent=0
    _
  %s8 = ssub.s32 1, %s6
  %s9 = scalar_select 0, %s8, %s6
  $region1: #{_lambda_.18} parent=0
    #allocation2 [shape = 'u8[24576]{0}', space=vmem, size = 0x6000, scoped, tag = 'input window, operand 0']
    #allocation3 [shape = 's32[2]{0}', space=sflag, size = 0x8, scoped, tag = 'scoped memory for _lambda_.18']
    #allocation4 [shape = 's32[2]{0}', space=sflag, size = 0x8, scoped, tag = 'scoped memory for _lambda_.18']
    #allocation5 [shape = 'u8[73728]{0}', space=vmem, size = 0x12000, scoped, tag = 'input window, operand 1, single buffered']
    #allocation6 [shape = 's32[1]{0}', space=sflag, size = 0x4, scoped, tag = 'scoped memory for _lambda_.18']
    #allocation7 [shape = 'u8[512]{0}', space=vmem, size = 0x400, scoped, tag = 'input window, operand 2, single buffered']
    #allocation8 [shape = 'u8[512]{0}', space=vmem, size = 0x400, scoped, tag = 'input window, operand 3, single buffered']
    #allocation9 [shape = 's32[1]{0}', space=sflag, size = 0x4, scoped, tag = 'scoped memory for _lambda_.18']
    #allocation10 [shape = 'u8[8192]{0}', space=vmem, size = 0x2000, scoped, tag = 'input window, operand 4']
    #allocation11 [shape = 'u8[8192]{0}', space=vmem, size = 0x2000, scoped, tag = 'output window, operand 0']
    %10 = vsyncpa [#allocation3], 0
    %s11 = scalar_lea.sflag [#allocation3], 1
    %12 = vsyncpa %s11, 0
    %13 = vsyncpa [#allocation6], 0
    %14 = vsyncpa [#allocation9], 0
    %15 = vsyncpa [#allocation4], 0
    %s16 = scalar_lea.sflag [#allocation4], 1
    %17 = vsyncpa %s16, 0
    loop: start=0, step=1, limit=4
    $region2: #{_lambda_.18} parent=1 // loop_pre_header
      _
    $region3: #{_lambda_.18} parent=1 // loop_header
      %s19 = sphi 0, %s23
      %p20 = scmp.ge.s32.totalorder %s19, 4
      %s29 = sphi 0, %s31
      %s32 = sphi 0, %s29
      %s33 = sphi 0, %s32
      %s49 = sphi 0, %s33
      %s53 = sphi 0, %s53
      %s55 = sphi 0, %s53
      %s56 = sphi 0, %s55
      %s70 = sphi 0, %s56
      %s74 = sphi 0, %s74
      %s76 = sphi 0, %s74
      %s77 = sphi 0, %s76
      %s91 = sphi 0, %s77
      %s95 = sphi 0, %s95
      %s97 = sphi 0, %s95
      %s98 = sphi 0, %s97
      %s112 = sphi 0, %s98
      %s118 = sphi 0, %s120
      %s121 = sphi 0, %s118
      %s122 = sphi 0, %s121
      %s138 = sphi 0, %s122
      %s144 = sphi 0, %s146
      %s147 = sphi 0, %s144
      %s148 = sphi 0, %s147
      %s164 = sphi 0, %s148
    $region4: #{_lambda_.18} parent=1 // loop_header_branch
      %22 = sbr.rel (%p20) target = $region8
    $region5: #{_lambda_.18} parent=1 // loop_body
      %s24 = ssub.s32 %s19, 1
      %s25 = ssub.s32 %s19, 2
      %s26 = sadd.s32 %s19, 1
      %s27 = ssub.s32 %s19, %s26
      %p28 = scmp.eq.s32.totalorder %s27, 0
      %s30 = sadd.s32 %s29, 1
      %s31 = scalar_select %p28, %s29, %s30
      %p34 = pneg %p28
      %p35 = scmp.eq.s32.totalorder %s19, 1
      %p36 = por %p34, %p35
      %p37 = scmp.ne.s32.totalorder %s29, %s32
      %p38 = scmp.eq.s32.totalorder %s19, 0
      %p39 = por %p37, %p38
      %p40 = scmp.ne.s32.totalorder %s29, %s32
      %p41 = scmp.eq.s32.totalorder %s24, 1
      %p42 = por %p40, %p41
      %p43 = scmp.ne.s32.totalorder %s32, %s33
      %p44 = scmp.eq.s32.totalorder %s24, 0
      %p45 = por %p43, %p44
      %p46 = scmp.ne.s32.totalorder %s32, %s33
      %p47 = scmp.eq.s32.totalorder %s25, 1
      %p48 = por %p46, %p47
      %p50 = scmp.ne.s32.totalorder %s33, %s49
      %p51 = scmp.eq.s32.totalorder %s25, 0
      %p52 = por %p50, %p51
      %s54 = sadd.s32 %s53, 1
      %p57 = scmp.eq.s32.totalorder %s19, 1
      %p58 = scmp.ne.s32.totalorder %s53, %s55
      %p59 = scmp.eq.s32.totalorder %s19, 0
      %p60 = por %p58, %p59
      %p61 = scmp.ne.s32.totalorder %s53, %s55
      %p62 = scmp.eq.s32.totalorder %s24, 1
      %p63 = por %p61, %p62
      %p64 = scmp.ne.s32.totalorder %s55, %s56
      %p65 = scmp.eq.s32.totalorder %s24, 0
      %p66 = por %p64, %p65
      %p67 = scmp.ne.s32.totalorder %s55, %s56
      %p68 = scmp.eq.s32.totalorder %s25, 1
      %p69 = por %p67, %p68
      %p71 = scmp.ne.s32.totalorder %s56, %s70
      %p72 = scmp.eq.s32.totalorder %s25, 0
      %p73 = por %p71, %p72
      %s75 = sadd.s32 %s74, 1
      %p78 = scmp.eq.s32.totalorder %s19, 1
      %p79 = scmp.ne.s32.totalorder %s74, %s76
      %p80 = scmp.eq.s32.totalorder %s19, 0
      %p81 = por %p79, %p80
      %p82 = scmp.ne.s32.totalorder %s74, %s76
      %p83 = scmp.eq.s32.totalorder %s24, 1
      %p84 = por %p82, %p83
      %p85 = scmp.ne.s32.totalorder %s76, %s77
      %p86 = scmp.eq.s32.totalorder %s24, 0
      %p87 = por %p85, %p86
      %p88 = scmp.ne.s32.totalorder %s76, %s77
      %p89 = scmp.eq.s32.totalorder %s25, 1
      %p90 = por %p88, %p89
      %p92 = scmp.ne.s32.totalorder %s77, %s91
      %p93 = scmp.eq.s32.totalorder %s25, 0
      %p94 = por %p92, %p93
      %s96 = sadd.s32 %s95, 1
      %p99 = scmp.eq.s32.totalorder %s19, 1
      %p100 = scmp.ne.s32.totalorder %s95, %s97
      %p101 = scmp.eq.s32.totalorder %s19, 0
      %p102 = por %p100, %p101
      %p103 = scmp.ne.s32.totalorder %s95, %s97
      %p104 = scmp.eq.s32.totalorder %s24, 1
      %p105 = por %p103, %p104
      %p106 = scmp.ne.s32.totalorder %s97, %s98
      %p107 = scmp.eq.s32.totalorder %s24, 0
      %p108 = por %p106, %p107
      %p109 = scmp.ne.s32.totalorder %s97, %s98
      %p110 = scmp.eq.s32.totalorder %s25, 1
      %p111 = por %p109, %p110
      %p113 = scmp.ne.s32.totalorder %s98, %s112
      %p114 = scmp.eq.s32.totalorder %s25, 0
      %p115 = por %p113, %p114
      %s116 = ssub.s32 %s19, %s26
      %p117 = scmp.eq.s32.totalorder %s116, 0
      %s119 = sadd.s32 %s118, 1
      %s120 = scalar_select %p117, %s118, %s119
      %p123 = pneg %p117
      %p124 = scmp.eq.s32.totalorder %s19, 1
      %p125 = por %p123, %p124
      %p126 = scmp.ne.s32.totalorder %s118, %s121
      %p127 = scmp.eq.s32.totalorder %s19, 0
      %p128 = por %p126, %p127
      %p129 = scmp.ne.s32.totalorder %s118, %s121
      %p130 = scmp.eq.s32.totalorder %s24, 1
      %p131 = por %p129, %p130
      %p132 = scmp.ne.s32.totalorder %s121, %s122
      %p133 = scmp.eq.s32.totalorder %s24, 0
      %p134 = por %p132, %p133
      %p135 = scmp.ne.s32.totalorder %s121, %s122
      %p136 = scmp.eq.s32.totalorder %s25, 1
      %p137 = por %p135, %p136
      %p139 = scmp.ne.s32.totalorder %s122, %s138
      %p140 = scmp.eq.s32.totalorder %s25, 0
      %p141 = por %p139, %p140
      %s142 = ssub.s32 %s19, %s26
      %p143 = scmp.eq.s32.totalorder %s142, 0
      %s145 = sadd.s32 %s144, 1
      %s146 = scalar_select %p143, %s144, %s145
      %p149 = pneg %p143
      %p150 = scmp.eq.s32.totalorder %s19, 1
      %p151 = por %p149, %p150
      %p152 = scmp.ne.s32.totalorder %s144, %s147
      %p153 = scmp.eq.s32.totalorder %s19, 0
      %p154 = por %p152, %p153
      %p155 = scmp.ne.s32.totalorder %s144, %s147
      %p156 = scmp.eq.s32.totalorder %s24, 1
      %p157 = por %p155, %p156
      %p158 = scmp.ne.s32.totalorder %s147, %s148
      %p159 = scmp.eq.s32.totalorder %s24, 0
      %p160 = por %p158, %p159
      %p161 = scmp.ne.s32.totalorder %s147, %s148
      %p162 = scmp.eq.s32.totalorder %s25, 1
      %p163 = por %p161, %p162
      %p165 = scmp.ne.s32.totalorder %s148, %s164
      %p166 = scmp.eq.s32.totalorder %s25, 0
      %p167 = por %p165, %p166
      %p168 = scmp.le.s32.totalorder 1, %s19
      %p169 = scmp.lt.s32.totalorder %s19, 3
      %p170 = pnand %p168, %p169
      %p171 = pneg %p170
      // Predicated region
      $region9: #{_lambda_.18} parent=5 // pred_check
        _
      $region10: #{_lambda_.18} parent=5 // pred_check_branch
        %173 = sbr.rel (%p170) target = $region12
      $region11: #{_lambda_.18} parent=5 // pred_region
        %s174 = ssub.s32 %s19, 1
        // Predicated region
        $region13: #{_lambda_.18} parent=11 // pred_check
          %p175 = pneg %p66
        $region14: #{_lambda_.18} parent=11 // pred_check_branch
          %177 = sbr.rel (%p175) target = $region16
        $region15: #{_lambda_.18} parent=11 // pred_region
          %s179 = ssub.s32 2304, 2304
          %180 = vsyncadd [#allocation6], %s179
          %s181 = sshll.u32 [#allocation5], 4
          %s182 = int_to_ptr.vmem [resolvable:$true] %s181
          %187 = dma.hbm_to_vmem [thread:$0]  %s1, 2304, %s182, [#allocation6], 64, 64, 4
        $region16: #{_lambda_.18} parent=11 // pred_fallthru
          _
        // Predicated region
        $region17: #{_lambda_.18} parent=11 // pred_check
          %p188 = pneg %p87
        $region18: #{_lambda_.18} parent=11 // pred_check_branch
          %190 = sbr.rel (%p188) target = $region20
        $region19: #{_lambda_.18} parent=11 // pred_region
          %s192 = ssub.s32 16, 16
          %193 = vsyncadd [#allocation6], %s192
          %s195 = sshll.u32 [#allocation7], 4
          %s196 = int_to_ptr.vmem [resolvable:$true] %s195
          %198 = dma.hbm_to_vmem [thread:$0]  %s2, 16, %s196, [#allocation6]
        $region20: #{_lambda_.18} parent=11 // pred_fallthru
          _
        // Predicated region
        $region21: #{_lambda_.18} parent=11 // pred_check
          %p199 = pneg %p108
        $region22: #{_lambda_.18} parent=11 // pred_check_branch
          %201 = sbr.rel (%p199) target = $region24
        $region23: #{_lambda_.18} parent=11 // pred_region
          %s203 = ssub.s32 16, 16
          %204 = vsyncadd [#allocation9], %s203
          %s206 = sshll.u32 [#allocation8], 4
          %s207 = int_to_ptr.vmem [resolvable:$true] %s206
          %209 = dma.hbm_to_vmem [thread:$0]  %s3, 16, %s207, [#allocation9]
        $region24: #{_lambda_.18} parent=11 // pred_fallthru
          _
      $region12: #{_lambda_.18} parent=5 // pred_fallthru
        _
      %p210 = scmp.lt.s32.totalorder %s19, 2
      // Predicated region
      $region25: #{_lambda_.18} parent=5 // pred_check
        %p211 = pneg %p210
      $region26: #{_lambda_.18} parent=5 // pred_check_branch
        %213 = sbr.rel (%p211) target = $region28
      $region27: #{_lambda_.18} parent=5 // pred_region
        // Predicated region
        $region29: #{_lambda_.18} parent=27 // pred_check
          %p214 = pneg %p39
        $region30: #{_lambda_.18} parent=27 // pred_check_branch
          %216 = sbr.rel (%p214) target = $region32
        $region31: #{_lambda_.18} parent=27 // pred_region
          %s217 = sand.u32 %s19, 1
          %s218 = scalar_lea.sflag [#allocation3], %s217
          %s219 = sand.u32 %s29, 1
          %s220 = smul.addr %s219, 24
          %s221 = scalar_lea.vmem [#allocation2], %s220
          %s223 = ssub.s32 384, 384
          %224 = vsyncadd %s218, %s223
          %s225 = smul.addr %s19, 6
          %s226 = smul.addr %s225, 64
          %s227 = scalar_lea.hbm %s0, %s226
          %s228 = sshll.u32 %s221, 4
          %s229 = int_to_ptr.vmem [resolvable:$true] %s228
          %234 = dma.hbm_to_vmem [thread:$0]  %s227, 384, %s229, %s218, 192, 192, 12
        $region32: #{_lambda_.18} parent=27 // pred_fallthru
          _
        // Predicated region
        $region33: #{_lambda_.18} parent=27 // pred_check
          %p235 = pneg %p128
        $region34: #{_lambda_.18} parent=27 // pred_check_branch
          %237 = sbr.rel (%p235) target = $region36
        $region35: #{_lambda_.18} parent=27 // pred_region
          %s238 = sand.u32 %s19, 1
          %s239 = scalar_lea.sflag [#allocation3], %s238
          %s240 = sand.u32 %s118, 1
          %s241 = smul.addr %s240, 8
          %s242 = scalar_lea.vmem [#allocation10], %s241
          %s244 = ssub.s32 128, 128
          %245 = vsyncadd %s239, %s244
          %s246 = smul.addr %s19, 2
          %s247 = smul.addr %s246, 64
          %s248 = scalar_lea.hbm %s4, %s247
          %s249 = sshll.u32 %s242, 4
          %s250 = int_to_ptr.vmem [resolvable:$true] %s249
          %255 = dma.hbm_to_vmem [thread:$0]  %s248, 128, %s250, %s239, 64, 64, 4
        $region36: #{_lambda_.18} parent=27 // pred_fallthru
          _
      $region28: #{_lambda_.18} parent=5 // pred_fallthru
        _
      %p256 = scmp.le.s32.totalorder 1, %s19
      %p257 = scmp.lt.s32.totalorder %s19, 3
      %p258 = pnand %p256, %p257
      %p259 = pneg %p258
      // Predicated region
      $region37: #{_lambda_.18} parent=5 // pred_check
        _
      $region38: #{_lambda_.18} parent=5 // pred_check_branch
        %261 = sbr.rel (%p258) target = $region40
      $region39: #{_lambda_.18} parent=5 // pred_region
        %s262 = ssub.s32 %s19, 1
        %s263 = sand.u32 %s24, 1
        %s264 = scalar_lea.sflag [#allocation3], %s263
        %s265 = sand.u32 %s32, 1
        %s266 = smul.addr %s265, 24
        %s267 = scalar_lea.vmem [#allocation2], %s266
        // Predicated region
        $region41: #{_lambda_.18} parent=39 // pred_check
          %p268 = pneg %p45
        $region42: #{_lambda_.18} parent=39 // pred_check_branch
          %270 = sbr.rel (%p268) target = $region44
        $region43: #{_lambda_.18} parent=39 // pred_region
          %271 = dma.done %s264, 384
        $region44: #{_lambda_.18} parent=39 // pred_fallthru
          _
        // Predicated region
        $region45: #{_lambda_.18} parent=39 // pred_check
          %p272 = pneg %p66
        $region46: #{_lambda_.18} parent=39 // pred_check_branch
          %274 = sbr.rel (%p272) target = $region48
        $region47: #{_lambda_.18} parent=39 // pred_region
          %275 = dma.done [#allocation6], 2304
        $region48: #{_lambda_.18} parent=39 // pred_fallthru
          _
        // Predicated region
        $region49: #{_lambda_.18} parent=39 // pred_check
          %p276 = pneg %p87
        $region50: #{_lambda_.18} parent=39 // pred_check_branch
          %278 = sbr.rel (%p276) target = $region52
        $region51: #{_lambda_.18} parent=39 // pred_region
          %279 = dma.done [#allocation6], 16
        $region52: #{_lambda_.18} parent=39 // pred_fallthru
          _
        // Predicated region
        $region53: #{_lambda_.18} parent=39 // pred_check
          %p280 = pneg %p108
        $region54: #{_lambda_.18} parent=39 // pred_check_branch
          %282 = sbr.rel (%p280) target = $region56
        $region55: #{_lambda_.18} parent=39 // pred_region
          %283 = dma.done [#allocation9], 16
        $region56: #{_lambda_.18} parent=39 // pred_fallthru
          _
        %s284 = sand.u32 %s24, 1
        %s285 = scalar_lea.sflag [#allocation3], %s284
        %s286 = sand.u32 %s121, 1
        %s287 = smul.addr %s286, 8
        %s288 = scalar_lea.vmem [#allocation10], %s287
        // Predicated region
        $region57: #{_lambda_.18} parent=39 // pred_check
          %p289 = pneg %p134
        $region58: #{_lambda_.18} parent=39 // pred_check_branch
          %291 = sbr.rel (%p289) target = $region60
        $region59: #{_lambda_.18} parent=39 // pred_region
          %292 = dma.done %s285, 128
        $region60: #{_lambda_.18} parent=39 // pred_fallthru
          _
        %s293 = sand.u32 %s24, 1
        %s294 = scalar_lea.sflag [#allocation3], %s293
        %s295 = sand.u32 %s32, 1
        %s296 = smul.addr %s295, 24
        %s297 = scalar_lea.vmem [#allocation2], %s296
        %p298 = pneg %p45
        %p299 = pneg %p42
        %p300 = pneg %p66
        %p301 = pneg %p63
        %p302 = pneg %p87
        %p303 = pneg %p84
        %p304 = pneg %p108
        %p305 = pneg %p105
        %s306 = sand.u32 %s24, 1
        %s307 = scalar_lea.sflag [#allocation3], %s306
        %s308 = sand.u32 %s121, 1
        %s309 = smul.addr %s308, 8
        %s310 = scalar_lea.vmem [#allocation10], %s309
        %p311 = pneg %p134
        %p312 = pneg %p131
        %p313 = pneg %p160
        %p314 = pneg %p157
        %s315 = sand.u32 %s147, 1
        %s316 = scalar_lea.sflag [#allocation4], %s315
        %s317 = sand.u32 %s147, 1
        %s318 = smul.addr %s317, 8
        %s319 = scalar_lea.vmem [#allocation11], %s318
        %v321 = vld [vmem:[%s267] sm:$0xff]
        %v322 = vld [vmem:[%s267 + $0x8] sm:$0xf]
        %v323 = vld [vmem:[%s267 + $0xc] sm:$0xff]
        %v324 = vld [vmem:[%s267 + $0x14] sm:$0xf]
        %v325 = vld [vmem:[#allocation5] sm:$0xf]
        %v326 = vld [vmem:[#allocation5 + $0x4] sm:$0xf]
        %v327 = vld [vmem:[#allocation5 + $0x8] sm:$0xf]
        %v328 = vld [vmem:[#allocation5 + $0xc] sm:$0xf]
        %v329 = vld [vmem:[#allocation5 + $0x10] sm:$0xf]
        %v330 = vld [vmem:[#allocation5 + $0x14] sm:$0xf]
        %v331 = vld [vmem:[#allocation5 + $0x18] sm:$0xf]
        %v332 = vld [vmem:[#allocation5 + $0x1c] sm:$0xf]
        %v333 = vld [vmem:[#allocation5 + $0x20] sm:$0xf]
        %v334 = vld [vmem:[#allocation5 + $0x24] sm:$0xf]
        %v335 = vld [vmem:[#allocation5 + $0x28] sm:$0xf]
        %v336 = vld [vmem:[#allocation5 + $0x2c] sm:$0xf]
        %v337 = vld [vmem:[#allocation5 + $0x30] sm:$0xf]
        %v338 = vld [vmem:[#allocation5 + $0x34] sm:$0xf]
        %v339 = vld [vmem:[#allocation5 + $0x38] sm:$0xf]
        %v340 = vld [vmem:[#allocation5 + $0x3c] sm:$0xf]
        %v341 = vld [vmem:[#allocation5 + $0x40] sm:$0xf]
        %v342 = vld [vmem:[#allocation5 + $0x44] sm:$0xf]
        %v343 = vld [vmem:[#allocation5 + $0x48] sm:$0xf]
        %v344 = vld [vmem:[#allocation5 + $0x4c] sm:$0xf]
        %v345 = vld [vmem:[#allocation5 + $0x50] sm:$0xf]
        %v346 = vld [vmem:[#allocation5 + $0x54] sm:$0xf]
        %v347 = vld [vmem:[#allocation5 + $0x58] sm:$0xf]
        %v348 = vld [vmem:[#allocation5 + $0x5c] sm:$0xf]
        %v349 = vld [vmem:[#allocation5 + $0x60] sm:$0xf]
        %v350 = vld [vmem:[#allocation5 + $0x64] sm:$0xf]
        %v351 = vld [vmem:[#allocation5 + $0x68] sm:$0xf]
        %v352 = vld [vmem:[#allocation5 + $0x6c] sm:$0xf]
        %v353 = vld [vmem:[#allocation5 + $0x70] sm:$0xf]
        %v354 = vld [vmem:[#allocation5 + $0x74] sm:$0xf]
        %v355 = vld [vmem:[#allocation5 + $0x78] sm:$0xf]
        %v356 = vld [vmem:[#allocation5 + $0x7c] sm:$0xf]
        %v357 = vld [vmem:[#allocation5 + $0x80] sm:$0xf]
        %v358 = vld [vmem:[#allocation5 + $0x84] sm:$0xf]
        %v359 = vld [vmem:[#allocation5 + $0x88] sm:$0xf]
        %v360 = vld [vmem:[#allocation5 + $0x8c] sm:$0xf]
        %v365 = vunpack.c.l.b16 %v321
        %v366 = vunpack.c.h.b16 %v321
        %v367 = vunpack.c.l.b16 %v322
        %v368 = vunpack.c.l.b16 %v323
        %v369 = vunpack.c.h.b16 %v323
        %v370 = vunpack.c.l.b16 %v324
        %v371 = vpack.c.b16 %v368, %v365
        %v372 = vpack.c.b16 %v369, %v366
        %v373 = vpack.c.b16 %v370, %v367
        %v412 = vunpack.c.l.b16 %v325
        %v413 = vunpack.c.l.b16 %v326
        %v414 = vunpack.c.l.b16 %v327
        %v415 = vunpack.c.l.b16 %v328
        %v416 = vunpack.c.l.b16 %v329
        %v417 = vunpack.c.l.b16 %v330
        %v418 = vunpack.c.l.b16 %v331
        %v419 = vunpack.c.l.b16 %v332
        %v420 = vunpack.c.l.b16 %v333
        %v421 = vunpack.c.l.b16 %v334
        %v422 = vunpack.c.l.b16 %v335
        %v423 = vunpack.c.l.b16 %v336
        %v424 = vunpack.c.l.b16 %v337
        %v425 = vunpack.c.l.b16 %v338
        %v426 = vunpack.c.l.b16 %v339
        %v427 = vunpack.c.l.b16 %v340
        %v428 = vunpack.c.l.b16 %v341
        %v429 = vunpack.c.l.b16 %v342
        %v430 = vunpack.c.l.b16 %v343
        %v431 = vunpack.c.l.b16 %v344
        %v432 = vunpack.c.l.b16 %v345
        %v433 = vunpack.c.l.b16 %v346
        %v434 = vunpack.c.l.b16 %v347
        %v435 = vunpack.c.l.b16 %v348
        %v436 = vunpack.c.l.b16 %v349
        %v437 = vunpack.c.l.b16 %v350
        %v438 = vunpack.c.l.b16 %v351
        %v439 = vunpack.c.l.b16 %v352
        %v440 = vunpack.c.l.b16 %v353
        %v441 = vunpack.c.l.b16 %v354
        %v442 = vunpack.c.l.b16 %v355
        %v443 = vunpack.c.l.b16 %v356
        %v444 = vunpack.c.l.b16 %v357
        %v445 = vunpack.c.l.b16 %v358
        %v446 = vunpack.c.l.b16 %v359
        %v447 = vunpack.c.l.b16 %v360
        %v448 = vpack.c.b16 %v413, %v412
        %v449 = vpack.c.b16 %v415, %v414
        %v450 = vpack.c.b16 %v417, %v416
        %v451 = vpack.c.b16 %v419, %v418
        %v452 = vpack.c.b16 %v421, %v420
        %v453 = vpack.c.b16 %v423, %v422
        %v454 = vpack.c.b16 %v425, %v424
        %v455 = vpack.c.b16 %v427, %v426
        %v456 = vpack.c.b16 %v429, %v428
        %v457 = vpack.c.b16 %v431, %v430
        %v458 = vpack.c.b16 %v433, %v432
        %v459 = vpack.c.b16 %v435, %v434
        %v460 = vpack.c.b16 %v437, %v436
        %v461 = vpack.c.b16 %v439, %v438
        %v462 = vpack.c.b16 %v441, %v440
        %v463 = vpack.c.b16 %v443, %v442
        %v464 = vpack.c.b16 %v445, %v444
        %v465 = vpack.c.b16 %v447, %v446
        %vm484 = vcmask 261120
        %v486 = vsel %vm484, %v373, 0
        %488 = vmatprep.subr.bf16.mxu0 0
        %489 = vmatpush1.bf16.msra.mxu0 %v448
        %490 = vmatprep.subr.bf16.mxu0 0
        %491 = vmatpush1.bf16.msra.mxu0 %v449
        %492 = vmatprep.subr.bf16.mxu0 0
        %493 = vmatpush1.bf16.msra.mxu0 %v450
        %494 = vmatprep.subr.bf16.mxu0 0
        %495 = vmatpush1.bf16.msra.mxu0 %v451
        %496 = vmatprep.subr.bf16.mxu0 0
        %497 = vmatpush1.bf16.msra.mxu0 %v452
        %498 = vmatprep.subr.bf16.mxu0 0
        %499 = vmatpush1.bf16.msra.mxu0 %v453
        %500 = vmatprep.subr.bf16.mxu0 0
        %501 = vmatpush1.bf16.msra.mxu0 %v454
        %502 = vmatprep.subr.bf16.mxu0 0
        %503 = vmatpush1.bf16.msra.mxu0 %v455
        %504 = vmatprep.subr.bf16.mxu0 0
        %505 = vmatpush1.bf16.msra.mxu0 %v456
        %506 = vmatprep.subr.bf16.mxu0 0
        %507 = vmatpush1.bf16.msra.mxu0 %v457
        %508 = vmatprep.subr.bf16.mxu0 0
        %509 = vmatpush1.bf16.msra.mxu0 %v458
        %510 = vmatprep.subr.bf16.mxu0 0
        %511 = vmatpush1.bf16.msra.mxu0 %v459
        %512 = vmatprep.subr.bf16.mxu0 0
        %513 = vmatpush1.bf16.msra.mxu0 %v460
        %514 = vmatprep.subr.bf16.mxu0 0
        %515 = vmatpush1.bf16.msra.mxu0 %v461
        %516 = vmatprep.subr.bf16.mxu0 0
        %517 = vmatpush1.bf16.msra.mxu0 %v462
        %518 = vmatprep.subr.bf16.mxu0 0
        %519 = vmatpush1.bf16.msra.mxu0 %v463
        %520 = vmatprep.mubr.bf16.mxu0 %v372
        %521 = vmatmul.mubr.bf16.gmra.mrb[0].mxu0 %v371
        %v522 = vpop.f32.mrb[0].mxu0
        %v523 = vadd.f32 0.0, %v522
        %v524 = vpop.f32.mrb[0].mxu0
        %v525 = vpop.f32.mrb[0].mxu0
        %v526 = vadd.f32 0.0, %v525
        %v527 = vpop.f32.mrb[0].mxu0
        %528 = vdwg.mxu0
        %529 = vmatprep.subr.bf16.mxu0 0
        %530 = vmatpush1.bf16.msra.mxu0 %v464
        %531 = vmatprep.subr.bf16.mxu0 0
        %532 = vmatpush1.bf16.msra.mxu0 %v465
        %533 = vmatprep.subr.bf16.mxu0 0
        %534 = vmatpush1.bf16.msra.mxu0 0
        %535 = vmatprep.subr.bf16.mxu0 0
        %536 = vmatpush1.bf16.msra.mxu0 0
        %537 = vmatprep.subr.bf16.mxu0 0
        %538 = vmatpush1.bf16.msra.mxu0 0
        %539 = vmatprep.subr.bf16.mxu0 0
        %540 = vmatpush1.bf16.msra.mxu0 0
        %541 = vmatprep.subr.bf16.mxu0 0
        %542 = vmatpush1.bf16.msra.mxu0 0
        %543 = vmatprep.subr.bf16.mxu0 0
        %544 = vmatpush1.bf16.msra.mxu0 0
        %545 = vmatprep.subr.bf16.mxu0 0
        %546 = vmatpush1.bf16.msra.mxu0 0
        %547 = vmatprep.subr.bf16.mxu0 0
        %548 = vmatpush1.bf16.msra.mxu0 0
        %549 = vmatprep.subr.bf16.mxu0 0
        %550 = vmatpush1.bf16.msra.mxu0 0
        %551 = vmatprep.subr.bf16.mxu0 0
        %552 = vmatpush1.bf16.msra.mxu0 0
        %553 = vmatprep.subr.bf16.mxu0 0
        %554 = vmatpush1.bf16.msra.mxu0 0
        %555 = vmatprep.subr.bf16.mxu0 0
        %556 = vmatpush1.bf16.msra.mxu0 0
        %557 = vmatprep.subr.bf16.mxu0 0
        %558 = vmatpush1.bf16.msra.mxu0 0
        %559 = vmatprep.subr.bf16.mxu0 0
        %560 = vmatpush1.bf16.msra.mxu0 0
        %561 = vmatprep.mubr.bf16.mxu0 0
        %562 = vmatmul.mubr.bf16.gmra.mrb[0].mxu0 %v486
        %v563 = vpop.f32.mrb[0].mxu0
        %v564 = vadd.f32 %v523, %v563
        %v565 = vpop.f32.mrb[0].mxu0
        %v566 = vpop.f32.mrb[0].mxu0
        %v567 = vadd.f32 %v526, %v566
        %v568 = vpop.f32.mrb[0].mxu0
        %569 = vdwg.mxu0
        %v570 = vsel %vm484, %v564, 0.0
        %v571 = vsel %vm484, %v567, 0.0
        %v572 = vadd.f32 %v570, %v571
        %v573 = vrot.slane %v572, 4
        %v574 = vadd.f32 %v572, %v573
        %v575 = vrot.slane %v574, 2
        %v576 = vadd.f32 %v574, %v575
        %v577 = vrot.slane %v576, 1
        %v578 = vadd.f32 %v576, %v577
        %v579 = vmul.f32 %v578, 0.0625
        %v580 = vsub.f32 %v564, %v579
        %v581 = vsub.f32 %v567, %v579
        %v582 = vmul.f32 %v580, %v580
        %v583 = vmul.f32 %v581, %v581
        %v584 = vsel %vm484, %v582, 0.0
        %v585 = vsel %vm484, %v583, 0.0
        %v586 = vadd.f32 %v584, %v585
        %v587 = vrot.slane %v586, 4
        %v588 = vadd.f32 %v586, %v587
        %v589 = vrot.slane %v588, 2
        %v590 = vadd.f32 %v588, %v589
        %v591 = vrot.slane %v590, 1
        %v592 = vadd.f32 %v590, %v591
        %v593 = vmul.f32 %v592, 0.0625
        %v594 = vadd.f32 %v593, 1e-05
        %v595 = vrsqrt.pop %v594
        %v596 = vmul.f32 %v580, %v595
        %v597 = vmul.f32 %v581, %v595
        %v598 = vld [vmem:[#allocation7] sm:$0x1]
        %v600 = vlaneseq
        %v601 = vshrl.u32 %v600, 7
        %v602 = vsub.s32 0, %v601
        %v603 = vrot.slane %v598, %v602
        %v605 = vmul.f32 %v596, %v603
        %v606 = vmul.f32 %v597, %v603
        %v607 = vld [vmem:[#allocation8] sm:$0x1]
        %v609 = vlaneseq
        %v610 = vshrl.u32 %v609, 7
        %v611 = vsub.s32 0, %v610
        %v612 = vrot.slane %v607, %v611
        %v614 = vadd.f32 %v605, %v612
        %v615 = vadd.f32 %v606, %v612
        %v616 = vld [vmem:[%s288] sm:$0xf]
        %v617 = vld [vmem:[%s288 + $0x4] sm:$0xf]
        %v618 = vunpack.c.l.bf16 %v616
        %v619 = vunpack.c.l.bf16 %v617
        %v620 = vadd.f32 %v614, %v618
        %v621 = vadd.f32 %v615, %v619
        %v622 = vpack.c.bf16 %v621, %v620
        %v624 = vunpack.c.l.b16 %v622
        %v625 = vunpack.c.h.b16 %v622
        %v626 = vpack.c.b16 %v624, %v624
        %v627 = vpack.c.b16 %v625, %v625
        %vm630 = vcmask 257024
        %631 = vst.msk [vmem:[%s319] sm:$0xf] %vm630, %v626
        %632 = vst.msk [vmem:[%s319 + $0x4] sm:$0xf] %vm630, %v627
        %s633 = sand.u32 %s147, 1
        %s634 = scalar_lea.sflag [#allocation4], %s633
        %s635 = sand.u32 %s147, 1
        %s636 = smul.addr %s635, 8
        %s637 = scalar_lea.vmem [#allocation11], %s636
        // Predicated region
        $region61: #{_lambda_.18} parent=39 // pred_check
          %p638 = pneg %p157
        $region62: #{_lambda_.18} parent=39 // pred_check_branch
          %640 = sbr.rel (%p638) target = $region64
        $region63: #{_lambda_.18} parent=39 // pred_region
          %s642 = ssub.s32 128, 128
          %643 = vsyncadd %s634, %s642
          %s644 = smul.addr %s24, 2
          %s645 = smul.addr %s644, 64
          %s646 = scalar_lea.hbm %s5, %s645
          %s647 = sshll.u32 %s637, 4
          %s648 = int_to_ptr.vmem [resolvable:$true] %s647
          %653 = dma.vmem_to_hbm [thread:$0]  %s648, 128, %s646, %s634, 64, 64, 4
        $region64: #{_lambda_.18} parent=39 // pred_fallthru
          _
      $region40: #{_lambda_.18} parent=5 // pred_fallthru
        _
      %p654 = scmp.le.s32.totalorder 2, %s19
      // Predicated region
      $region65: #{_lambda_.18} parent=5 // pred_check
        %p655 = pneg %p654
      $region66: #{_lambda_.18} parent=5 // pred_check_branch
        %657 = sbr.rel (%p655) target = $region68
      $region67: #{_lambda_.18} parent=5 // pred_region
        %s658 = ssub.s32 %s19, 2
        // Predicated region
        $region69: #{_lambda_.18} parent=67 // pred_check
          %p659 = pneg %p163
        $region70: #{_lambda_.18} parent=67 // pred_check_branch
          %661 = sbr.rel (%p659) target = $region72
        $region71: #{_lambda_.18} parent=67 // pred_region
          %s662 = sand.u32 %s148, 1
          %s663 = scalar_lea.sflag [#allocation4], %s662
          %s664 = sand.u32 %s148, 1
          %s665 = smul.addr %s664, 8
          %s666 = scalar_lea.vmem [#allocation11], %s665
          %667 = dma.done %s663, 128
        $region72: #{_lambda_.18} parent=67 // pred_fallthru
          _
      $region68: #{_lambda_.18} parent=5 // pred_fallthru
        _
    $region6: #{_lambda_.18} parent=1 // loop_footer
      %s23 = sadd.s32 1, %s19
    $region7: #{_lambda_.18} parent=1 // loop_footer_branch
      %18 = sbr.rel target = $region3
    $region8: #{_lambda_.18} parent=1 // loop_exit
      _
    %668 = vsyncpa [#allocation3], 1
    %s669 = scalar_lea.sflag [#allocation3], 1
    %670 = vsyncpa %s669, 1
    %671 = vsyncpa [#allocation6], 1
    %672 = vsyncpa [#allocation9], 1
    %673 = vsyncpa [#allocation4], 1
    %s674 = scalar_lea.sflag [#allocation4], 1
    %675 = vsyncpa %s674, 1

// kernel: _lambda_.17
$region0: #{_lambda_.17}
  #allocation0 [shape = 'u32[]', space=smem, size = 0x4, offset = 0x4, fixed_abs, tag = 'smem constant byte address 0x4 - core index']
  #allocation1 [shape = 'u32[144,128]{1,0:T(1,128)}', space=vmem, size = 0x12000, scoped, tag = 'internal scratch']
  %s0 = inlined_call_operand.hbm [shape: bf16[2,16,288], index: 0, kind: input, shape index: {}]
  %s1 = inlined_call_operand.hbm [shape: bf16[288,32], index: 1, kind: input, shape index: {}]
  %s2 = inlined_call_operand.hbm [shape: f32[1,32], index: 2, kind: input, shape index: {}]
  %s3 = inlined_call_operand.hbm [shape: f32[1,32], index: 3, kind: input, shape index: {}]
  %s4 = inlined_call_operand.hbm [shape: bf16[2,16,32], index: 4, kind: output, shape index: {}]
  %s5 = sld [smem:[#allocation0]]
  $region65: #{_lambda_.17} parent=0
    _
  %s7 = ssub.s32 1, %s5
  %s8 = scalar_select 0, %s7, %s5
  $region1: #{_lambda_.17} parent=0
    #allocation2 [shape = 'u8[24576]{0}', space=vmem, size = 0x6000, scoped, tag = 'input window, operand 0']
    #allocation3 [shape = 's32[2]{0}', space=sflag, size = 0x8, scoped, tag = 'scoped memory for _lambda_.17']
    #allocation4 [shape = 's32[2]{0}', space=sflag, size = 0x8, scoped, tag = 'scoped memory for _lambda_.17']
    #allocation5 [shape = 'u8[73728]{0}', space=vmem, size = 0x12000, scoped, tag = 'input window, operand 1, single buffered']
    #allocation6 [shape = 's32[1]{0}', space=sflag, size = 0x4, scoped, tag = 'scoped memory for _lambda_.17']
    #allocation7 [shape = 'u8[512]{0}', space=vmem, size = 0x400, scoped, tag = 'input window, operand 2, single buffered']
    #allocation8 [shape = 'u8[512]{0}', space=vmem, size = 0x400, scoped, tag = 'input window, operand 3, single buffered']
    #allocation9 [shape = 's32[1]{0}', space=sflag, size = 0x4, scoped, tag = 'scoped memory for _lambda_.17']
    #allocation10 [shape = 'u8[8192]{0}', space=vmem, size = 0x2000, scoped, tag = 'output window, operand 0']
    %9 = vsyncpa [#allocation3], 0
    %s10 = scalar_lea.sflag [#allocation3], 1
    %11 = vsyncpa %s10, 0
    %12 = vsyncpa [#allocation6], 0
    %13 = vsyncpa [#allocation9], 0
    %14 = vsyncpa [#allocation4], 0
    %s15 = scalar_lea.sflag [#allocation4], 1
    %16 = vsyncpa %s15, 0
    loop: start=0, step=1, limit=4
    $region2: #{_lambda_.17} parent=1 // loop_pre_header
      _
    $region3: #{_lambda_.17} parent=1 // loop_header
      %s18 = sphi 0, %s22
      %p19 = scmp.ge.s32.totalorder %s18, 4
      %s28 = sphi 0, %s30
      %s31 = sphi 0, %s28
      %s32 = sphi 0, %s31
      %s48 = sphi 0, %s32
      %s52 = sphi 0, %s52
      %s54 = sphi 0, %s52
      %s55 = sphi 0, %s54
      %s69 = sphi 0, %s55
      %s73 = sphi 0, %s73
      %s75 = sphi 0, %s73
      %s76 = sphi 0, %s75
      %s90 = sphi 0, %s76
      %s94 = sphi 0, %s94
      %s96 = sphi 0, %s94
      %s97 = sphi 0, %s96
      %s111 = sphi 0, %s97
      %s117 = sphi 0, %s119
      %s120 = sphi 0, %s117
      %s121 = sphi 0, %s120
      %s137 = sphi 0, %s121
    $region4: #{_lambda_.17} parent=1 // loop_header_branch
      %21 = sbr.rel (%p19) target = $region8
    $region5: #{_lambda_.17} parent=1 // loop_body
      %s23 = ssub.s32 %s18, 1
      %s24 = ssub.s32 %s18, 2
      %s25 = sadd.s32 %s18, 1
      %s26 = ssub.s32 %s18, %s25
      %p27 = scmp.eq.s32.totalorder %s26, 0
      %s29 = sadd.s32 %s28, 1
      %s30 = scalar_select %p27, %s28, %s29
      %p33 = pneg %p27
      %p34 = scmp.eq.s32.totalorder %s18, 1
      %p35 = por %p33, %p34
      %p36 = scmp.ne.s32.totalorder %s28, %s31
      %p37 = scmp.eq.s32.totalorder %s18, 0
      %p38 = por %p36, %p37
      %p39 = scmp.ne.s32.totalorder %s28, %s31
      %p40 = scmp.eq.s32.totalorder %s23, 1
      %p41 = por %p39, %p40
      %p42 = scmp.ne.s32.totalorder %s31, %s32
      %p43 = scmp.eq.s32.totalorder %s23, 0
      %p44 = por %p42, %p43
      %p45 = scmp.ne.s32.totalorder %s31, %s32
      %p46 = scmp.eq.s32.totalorder %s24, 1
      %p47 = por %p45, %p46
      %p49 = scmp.ne.s32.totalorder %s32, %s48
      %p50 = scmp.eq.s32.totalorder %s24, 0
      %p51 = por %p49, %p50
      %s53 = sadd.s32 %s52, 1
      %p56 = scmp.eq.s32.totalorder %s18, 1
      %p57 = scmp.ne.s32.totalorder %s52, %s54
      %p58 = scmp.eq.s32.totalorder %s18, 0
      %p59 = por %p57, %p58
      %p60 = scmp.ne.s32.totalorder %s52, %s54
      %p61 = scmp.eq.s32.totalorder %s23, 1
      %p62 = por %p60, %p61
      %p63 = scmp.ne.s32.totalorder %s54, %s55
      %p64 = scmp.eq.s32.totalorder %s23, 0
      %p65 = por %p63, %p64
      %p66 = scmp.ne.s32.totalorder %s54, %s55
      %p67 = scmp.eq.s32.totalorder %s24, 1
      %p68 = por %p66, %p67
      %p70 = scmp.ne.s32.totalorder %s55, %s69
      %p71 = scmp.eq.s32.totalorder %s24, 0
      %p72 = por %p70, %p71
      %s74 = sadd.s32 %s73, 1
      %p77 = scmp.eq.s32.totalorder %s18, 1
      %p78 = scmp.ne.s32.totalorder %s73, %s75
      %p79 = scmp.eq.s32.totalorder %s18, 0
      %p80 = por %p78, %p79
      %p81 = scmp.ne.s32.totalorder %s73, %s75
      %p82 = scmp.eq.s32.totalorder %s23, 1
      %p83 = por %p81, %p82
      %p84 = scmp.ne.s32.totalorder %s75, %s76
      %p85 = scmp.eq.s32.totalorder %s23, 0
      %p86 = por %p84, %p85
      %p87 = scmp.ne.s32.totalorder %s75, %s76
      %p88 = scmp.eq.s32.totalorder %s24, 1
      %p89 = por %p87, %p88
      %p91 = scmp.ne.s32.totalorder %s76, %s90
      %p92 = scmp.eq.s32.totalorder %s24, 0
      %p93 = por %p91, %p92
      %s95 = sadd.s32 %s94, 1
      %p98 = scmp.eq.s32.totalorder %s18, 1
      %p99 = scmp.ne.s32.totalorder %s94, %s96
      %p100 = scmp.eq.s32.totalorder %s18, 0
      %p101 = por %p99, %p100
      %p102 = scmp.ne.s32.totalorder %s94, %s96
      %p103 = scmp.eq.s32.totalorder %s23, 1
      %p104 = por %p102, %p103
      %p105 = scmp.ne.s32.totalorder %s96, %s97
      %p106 = scmp.eq.s32.totalorder %s23, 0
      %p107 = por %p105, %p106
      %p108 = scmp.ne.s32.totalorder %s96, %s97
      %p109 = scmp.eq.s32.totalorder %s24, 1
      %p110 = por %p108, %p109
      %p112 = scmp.ne.s32.totalorder %s97, %s111
      %p113 = scmp.eq.s32.totalorder %s24, 0
      %p114 = por %p112, %p113
      %s115 = ssub.s32 %s18, %s25
      %p116 = scmp.eq.s32.totalorder %s115, 0
      %s118 = sadd.s32 %s117, 1
      %s119 = scalar_select %p116, %s117, %s118
      %p122 = pneg %p116
      %p123 = scmp.eq.s32.totalorder %s18, 1
      %p124 = por %p122, %p123
      %p125 = scmp.ne.s32.totalorder %s117, %s120
      %p126 = scmp.eq.s32.totalorder %s18, 0
      %p127 = por %p125, %p126
      %p128 = scmp.ne.s32.totalorder %s117, %s120
      %p129 = scmp.eq.s32.totalorder %s23, 1
      %p130 = por %p128, %p129
      %p131 = scmp.ne.s32.totalorder %s120, %s121
      %p132 = scmp.eq.s32.totalorder %s23, 0
      %p133 = por %p131, %p132
      %p134 = scmp.ne.s32.totalorder %s120, %s121
      %p135 = scmp.eq.s32.totalorder %s24, 1
      %p136 = por %p134, %p135
      %p138 = scmp.ne.s32.totalorder %s121, %s137
      %p139 = scmp.eq.s32.totalorder %s24, 0
      %p140 = por %p138, %p139
      %p141 = scmp.le.s32.totalorder 1, %s18
      %p142 = scmp.lt.s32.totalorder %s18, 3
      %p143 = pnand %p141, %p142
      %p144 = pneg %p143
      // Predicated region
      $region9: #{_lambda_.17} parent=5 // pred_check
        _
      $region10: #{_lambda_.17} parent=5 // pred_check_branch
        %146 = sbr.rel (%p143) target = $region12
      $region11: #{_lambda_.17} parent=5 // pred_region
        %s147 = ssub.s32 %s18, 1
        // Predicated region
        $region13: #{_lambda_.17} parent=11 // pred_check
          %p148 = pneg %p65
        $region14: #{_lambda_.17} parent=11 // pred_check_branch
          %150 = sbr.rel (%p148) target = $region16
        $region15: #{_lambda_.17} parent=11 // pred_region
          %s152 = ssub.s32 2304, 2304
          %153 = vsyncadd [#allocation6], %s152
          %s154 = sshll.u32 [#allocation5], 4
          %s155 = int_to_ptr.vmem [resolvable:$true] %s154
          %160 = dma.hbm_to_vmem [thread:$0]  %s1, 2304, %s155, [#allocation6], 64, 64, 4
        $region16: #{_lambda_.17} parent=11 // pred_fallthru
          _
        // Predicated region
        $region17: #{_lambda_.17} parent=11 // pred_check
          %p161 = pneg %p86
        $region18: #{_lambda_.17} parent=11 // pred_check_branch
          %163 = sbr.rel (%p161) target = $region20
        $region19: #{_lambda_.17} parent=11 // pred_region
          %s165 = ssub.s32 16, 16
          %166 = vsyncadd [#allocation6], %s165
          %s168 = sshll.u32 [#allocation7], 4
          %s169 = int_to_ptr.vmem [resolvable:$true] %s168
          %171 = dma.hbm_to_vmem [thread:$0]  %s2, 16, %s169, [#allocation6]
        $region20: #{_lambda_.17} parent=11 // pred_fallthru
          _
        // Predicated region
        $region21: #{_lambda_.17} parent=11 // pred_check
          %p172 = pneg %p107
        $region22: #{_lambda_.17} parent=11 // pred_check_branch
          %174 = sbr.rel (%p172) target = $region24
        $region23: #{_lambda_.17} parent=11 // pred_region
          %s176 = ssub.s32 16, 16
          %177 = vsyncadd [#allocation9], %s176
          %s179 = sshll.u32 [#allocation8], 4
          %s180 = int_to_ptr.vmem [resolvable:$true] %s179
          %182 = dma.hbm_to_vmem [thread:$0]  %s3, 16, %s180, [#allocation9]
        $region24: #{_lambda_.17} parent=11 // pred_fallthru
          _
      $region12: #{_lambda_.17} parent=5 // pred_fallthru
        _
      %p183 = scmp.lt.s32.totalorder %s18, 2
      // Predicated region
      $region25: #{_lambda_.17} parent=5 // pred_check
        %p184 = pneg %p183
      $region26: #{_lambda_.17} parent=5 // pred_check_branch
        %186 = sbr.rel (%p184) target = $region28
      $region27: #{_lambda_.17} parent=5 // pred_region
        // Predicated region
        $region29: #{_lambda_.17} parent=27 // pred_check
          %p187 = pneg %p38
        $region30: #{_lambda_.17} parent=27 // pred_check_branch
          %189 = sbr.rel (%p187) target = $region32
        $region31: #{_lambda_.17} parent=27 // pred_region
          %s190 = sand.u32 %s28, 1
          %s191 = scalar_lea.sflag [#allocation3], %s190
          %s192 = sand.u32 %s28, 1
          %s193 = smul.addr %s192, 24
          %s194 = scalar_lea.vmem [#allocation2], %s193
          %s196 = ssub.s32 384, 384
          %197 = vsyncadd %s191, %s196
          %s198 = smul.addr %s18, 6
          %s199 = smul.addr %s198, 64
          %s200 = scalar_lea.hbm %s0, %s199
          %s201 = sshll.u32 %s194, 4
          %s202 = int_to_ptr.vmem [resolvable:$true] %s201
          %207 = dma.hbm_to_vmem [thread:$0]  %s200, 384, %s202, %s191, 192, 192, 12
        $region32: #{_lambda_.17} parent=27 // pred_fallthru
          _
      $region28: #{_lambda_.17} parent=5 // pred_fallthru
        _
      %p208 = scmp.le.s32.totalorder 1, %s18
      %p209 = scmp.lt.s32.totalorder %s18, 3
      %p210 = pnand %p208, %p209
      %p211 = pneg %p210
      // Predicated region
      $region33: #{_lambda_.17} parent=5 // pred_check
        _
      $region34: #{_lambda_.17} parent=5 // pred_check_branch
        %213 = sbr.rel (%p210) target = $region36
      $region35: #{_lambda_.17} parent=5 // pred_region
        %s214 = ssub.s32 %s18, 1
        %s215 = sand.u32 %s31, 1
        %s216 = scalar_lea.sflag [#allocation3], %s215
        %s217 = sand.u32 %s31, 1
        %s218 = smul.addr %s217, 24
        %s219 = scalar_lea.vmem [#allocation2], %s218
        // Predicated region
        $region37: #{_lambda_.17} parent=35 // pred_check
          %p220 = pneg %p44
        $region38: #{_lambda_.17} parent=35 // pred_check_branch
          %222 = sbr.rel (%p220) target = $region40
        $region39: #{_lambda_.17} parent=35 // pred_region
          %223 = dma.done %s216, 384
        $region40: #{_lambda_.17} parent=35 // pred_fallthru
          _
        // Predicated region
        $region41: #{_lambda_.17} parent=35 // pred_check
          %p224 = pneg %p65
        $region42: #{_lambda_.17} parent=35 // pred_check_branch
          %226 = sbr.rel (%p224) target = $region44
        $region43: #{_lambda_.17} parent=35 // pred_region
          %227 = dma.done [#allocation6], 2304
        $region44: #{_lambda_.17} parent=35 // pred_fallthru
          _
        // Predicated region
        $region45: #{_lambda_.17} parent=35 // pred_check
          %p228 = pneg %p86
        $region46: #{_lambda_.17} parent=35 // pred_check_branch
          %230 = sbr.rel (%p228) target = $region48
        $region47: #{_lambda_.17} parent=35 // pred_region
          %231 = dma.done [#allocation6], 16
        $region48: #{_lambda_.17} parent=35 // pred_fallthru
          _
        // Predicated region
        $region49: #{_lambda_.17} parent=35 // pred_check
          %p232 = pneg %p107
        $region50: #{_lambda_.17} parent=35 // pred_check_branch
          %234 = sbr.rel (%p232) target = $region52
        $region51: #{_lambda_.17} parent=35 // pred_region
          %235 = dma.done [#allocation9], 16
        $region52: #{_lambda_.17} parent=35 // pred_fallthru
          _
        %s236 = sand.u32 %s31, 1
        %s237 = scalar_lea.sflag [#allocation3], %s236
        %s238 = sand.u32 %s31, 1
        %s239 = smul.addr %s238, 24
        %s240 = scalar_lea.vmem [#allocation2], %s239
        %p241 = pneg %p44
        %p242 = pneg %p41
        %p243 = pneg %p65
        %p244 = pneg %p62
        %p245 = pneg %p86
        %p246 = pneg %p83
        %p247 = pneg %p107
        %p248 = pneg %p104
        %p249 = pneg %p133
        %p250 = pneg %p130
        %s251 = sand.u32 %s120, 1
        %s252 = scalar_lea.sflag [#allocation4], %s251
        %s253 = sand.u32 %s120, 1
        %s254 = smul.addr %s253, 8
        %s255 = scalar_lea.vmem [#allocation10], %s254
        %v257 = vld [vmem:[%s219] sm:$0xff]
        %v258 = vld [vmem:[%s219 + $0x8] sm:$0xf]
        %v259 = vld [vmem:[%s219 + $0xc] sm:$0xff]
        %v260 = vld [vmem:[%s219 + $0x14] sm:$0xf]
        %v261 = vld [vmem:[#allocation5] sm:$0xf]
        %v262 = vld [vmem:[#allocation5 + $0x4] sm:$0xf]
        %v263 = vld [vmem:[#allocation5 + $0x8] sm:$0xf]
        %v264 = vld [vmem:[#allocation5 + $0xc] sm:$0xf]
        %v265 = vld [vmem:[#allocation5 + $0x10] sm:$0xf]
        %v266 = vld [vmem:[#allocation5 + $0x14] sm:$0xf]
        %v267 = vld [vmem:[#allocation5 + $0x18] sm:$0xf]
        %v268 = vld [vmem:[#allocation5 + $0x1c] sm:$0xf]
        %v269 = vld [vmem:[#allocation5 + $0x20] sm:$0xf]
        %v270 = vld [vmem:[#allocation5 + $0x24] sm:$0xf]
        %v271 = vld [vmem:[#allocation5 + $0x28] sm:$0xf]
        %v272 = vld [vmem:[#allocation5 + $0x2c] sm:$0xf]
        %v273 = vld [vmem:[#allocation5 + $0x30] sm:$0xf]
        %v274 = vld [vmem:[#allocation5 + $0x34] sm:$0xf]
        %v275 = vld [vmem:[#allocation5 + $0x38] sm:$0xf]
        %v276 = vld [vmem:[#allocation5 + $0x3c] sm:$0xf]
        %v277 = vld [vmem:[#allocation5 + $0x40] sm:$0xf]
        %v278 = vld [vmem:[#allocation5 + $0x44] sm:$0xf]
        %v279 = vld [vmem:[#allocation5 + $0x48] sm:$0xf]
        %v280 = vld [vmem:[#allocation5 + $0x4c] sm:$0xf]
        %v281 = vld [vmem:[#allocation5 + $0x50] sm:$0xf]
        %v282 = vld [vmem:[#allocation5 + $0x54] sm:$0xf]
        %v283 = vld [vmem:[#allocation5 + $0x58] sm:$0xf]
        %v284 = vld [vmem:[#allocation5 + $0x5c] sm:$0xf]
        %v285 = vld [vmem:[#allocation5 + $0x60] sm:$0xf]
        %v286 = vld [vmem:[#allocation5 + $0x64] sm:$0xf]
        %v287 = vld [vmem:[#allocation5 + $0x68] sm:$0xf]
        %v288 = vld [vmem:[#allocation5 + $0x6c] sm:$0xf]
        %v289 = vld [vmem:[#allocation5 + $0x70] sm:$0xf]
        %v290 = vld [vmem:[#allocation5 + $0x74] sm:$0xf]
        %v291 = vld [vmem:[#allocation5 + $0x78] sm:$0xf]
        %v292 = vld [vmem:[#allocation5 + $0x7c] sm:$0xf]
        %v293 = vld [vmem:[#allocation5 + $0x80] sm:$0xf]
        %v294 = vld [vmem:[#allocation5 + $0x84] sm:$0xf]
        %v295 = vld [vmem:[#allocation5 + $0x88] sm:$0xf]
        %v296 = vld [vmem:[#allocation5 + $0x8c] sm:$0xf]
        %v301 = vunpack.c.l.b16 %v257
        %v302 = vunpack.c.h.b16 %v257
        %v303 = vunpack.c.l.b16 %v258
        %v304 = vunpack.c.l.b16 %v259
        %v305 = vunpack.c.h.b16 %v259
        %v306 = vunpack.c.l.b16 %v260
        %v307 = vpack.c.b16 %v304, %v301
        %v308 = vpack.c.b16 %v305, %v302
        %v309 = vpack.c.b16 %v306, %v303
        %v348 = vunpack.c.l.b16 %v261
        %v349 = vunpack.c.l.b16 %v262
        %v350 = vunpack.c.l.b16 %v263
        %v351 = vunpack.c.l.b16 %v264
        %v352 = vunpack.c.l.b16 %v265
        %v353 = vunpack.c.l.b16 %v266
        %v354 = vunpack.c.l.b16 %v267
        %v355 = vunpack.c.l.b16 %v268
        %v356 = vunpack.c.l.b16 %v269
        %v357 = vunpack.c.l.b16 %v270
        %v358 = vunpack.c.l.b16 %v271
        %v359 = vunpack.c.l.b16 %v272
        %v360 = vunpack.c.l.b16 %v273
        %v361 = vunpack.c.l.b16 %v274
        %v362 = vunpack.c.l.b16 %v275
        %v363 = vunpack.c.l.b16 %v276
        %v364 = vunpack.c.l.b16 %v277
        %v365 = vunpack.c.l.b16 %v278
        %v366 = vunpack.c.l.b16 %v279
        %v367 = vunpack.c.l.b16 %v280
        %v368 = vunpack.c.l.b16 %v281
        %v369 = vunpack.c.l.b16 %v282
        %v370 = vunpack.c.l.b16 %v283
        %v371 = vunpack.c.l.b16 %v284
        %v372 = vunpack.c.l.b16 %v285
        %v373 = vunpack.c.l.b16 %v286
        %v374 = vunpack.c.l.b16 %v287
        %v375 = vunpack.c.l.b16 %v288
        %v376 = vunpack.c.l.b16 %v289
        %v377 = vunpack.c.l.b16 %v290
        %v378 = vunpack.c.l.b16 %v291
        %v379 = vunpack.c.l.b16 %v292
        %v380 = vunpack.c.l.b16 %v293
        %v381 = vunpack.c.l.b16 %v294
        %v382 = vunpack.c.l.b16 %v295
        %v383 = vunpack.c.l.b16 %v296
        %v384 = vpack.c.b16 %v349, %v348
        %v385 = vpack.c.b16 %v351, %v350
        %v386 = vpack.c.b16 %v353, %v352
        %v387 = vpack.c.b16 %v355, %v354
        %v388 = vpack.c.b16 %v357, %v356
        %v389 = vpack.c.b16 %v359, %v358
        %v390 = vpack.c.b16 %v361, %v360
        %v391 = vpack.c.b16 %v363, %v362
        %v392 = vpack.c.b16 %v365, %v364
        %v393 = vpack.c.b16 %v367, %v366
        %v394 = vpack.c.b16 %v369, %v368
        %v395 = vpack.c.b16 %v371, %v370
        %v396 = vpack.c.b16 %v373, %v372
        %v397 = vpack.c.b16 %v375, %v374
        %v398 = vpack.c.b16 %v377, %v376
        %v399 = vpack.c.b16 %v379, %v378
        %v400 = vpack.c.b16 %v381, %v380
        %v401 = vpack.c.b16 %v383, %v382
        %vm420 = vcmask 261120
        %v422 = vsel %vm420, %v309, 0
        %424 = vmatprep.subr.bf16.mxu0 0
        %425 = vmatpush1.bf16.msra.mxu0 %v384
        %426 = vmatprep.subr.bf16.mxu0 0
        %427 = vmatpush1.bf16.msra.mxu0 %v385
        %428 = vmatprep.subr.bf16.mxu0 0
        %429 = vmatpush1.bf16.msra.mxu0 %v386
        %430 = vmatprep.subr.bf16.mxu0 0
        %431 = vmatpush1.bf16.msra.mxu0 %v387
        %432 = vmatprep.subr.bf16.mxu0 0
        %433 = vmatpush1.bf16.msra.mxu0 %v388
        %434 = vmatprep.subr.bf16.mxu0 0
        %435 = vmatpush1.bf16.msra.mxu0 %v389
        %436 = vmatprep.subr.bf16.mxu0 0
        %437 = vmatpush1.bf16.msra.mxu0 %v390
        %438 = vmatprep.subr.bf16.mxu0 0
        %439 = vmatpush1.bf16.msra.mxu0 %v391
        %440 = vmatprep.subr.bf16.mxu0 0
        %441 = vmatpush1.bf16.msra.mxu0 %v392
        %442 = vmatprep.subr.bf16.mxu0 0
        %443 = vmatpush1.bf16.msra.mxu0 %v393
        %444 = vmatprep.subr.bf16.mxu0 0
        %445 = vmatpush1.bf16.msra.mxu0 %v394
        %446 = vmatprep.subr.bf16.mxu0 0
        %447 = vmatpush1.bf16.msra.mxu0 %v395
        %448 = vmatprep.subr.bf16.mxu0 0
        %449 = vmatpush1.bf16.msra.mxu0 %v396
        %450 = vmatprep.subr.bf16.mxu0 0
        %451 = vmatpush1.bf16.msra.mxu0 %v397
        %452 = vmatprep.subr.bf16.mxu0 0
        %453 = vmatpush1.bf16.msra.mxu0 %v398
        %454 = vmatprep.subr.bf16.mxu0 0
        %455 = vmatpush1.bf16.msra.mxu0 %v399
        %456 = vmatprep.mubr.bf16.mxu0 %v308
        %457 = vmatmul.mubr.bf16.gmra.mrb[0].mxu0 %v307
        %v458 = vpop.f32.mrb[0].mxu0
        %v459 = vadd.f32 0.0, %v458
        %v460 = vpop.f32.mrb[0].mxu0
        %v461 = vpop.f32.mrb[0].mxu0
        %v462 = vadd.f32 0.0, %v461
        %v463 = vpop.f32.mrb[0].mxu0
        %464 = vdwg.mxu0
        %465 = vmatprep.subr.bf16.mxu0 0
        %466 = vmatpush1.bf16.msra.mxu0 %v400
        %467 = vmatprep.subr.bf16.mxu0 0
        %468 = vmatpush1.bf16.msra.mxu0 %v401
        %469 = vmatprep.subr.bf16.mxu0 0
        %470 = vmatpush1.bf16.msra.mxu0 0
        %471 = vmatprep.subr.bf16.mxu0 0
        %472 = vmatpush1.bf16.msra.mxu0 0
        %473 = vmatprep.subr.bf16.mxu0 0
        %474 = vmatpush1.bf16.msra.mxu0 0
        %475 = vmatprep.subr.bf16.mxu0 0
        %476 = vmatpush1.bf16.msra.mxu0 0
        %477 = vmatprep.subr.bf16.mxu0 0
        %478 = vmatpush1.bf16.msra.mxu0 0
        %479 = vmatprep.subr.bf16.mxu0 0
        %480 = vmatpush1.bf16.msra.mxu0 0
        %481 = vmatprep.subr.bf16.mxu0 0
        %482 = vmatpush1.bf16.msra.mxu0 0
        %483 = vmatprep.subr.bf16.mxu0 0
        %484 = vmatpush1.bf16.msra.mxu0 0
        %485 = vmatprep.subr.bf16.mxu0 0
        %486 = vmatpush1.bf16.msra.mxu0 0
        %487 = vmatprep.subr.bf16.mxu0 0
        %488 = vmatpush1.bf16.msra.mxu0 0
        %489 = vmatprep.subr.bf16.mxu0 0
        %490 = vmatpush1.bf16.msra.mxu0 0
        %491 = vmatprep.subr.bf16.mxu0 0
        %492 = vmatpush1.bf16.msra.mxu0 0
        %493 = vmatprep.subr.bf16.mxu0 0
        %494 = vmatpush1.bf16.msra.mxu0 0
        %495 = vmatprep.subr.bf16.mxu0 0
        %496 = vmatpush1.bf16.msra.mxu0 0
        %497 = vmatprep.mubr.bf16.mxu0 0
        %498 = vmatmul.mubr.bf16.gmra.mrb[0].mxu0 %v422
        %v499 = vpop.f32.mrb[0].mxu0
        %v500 = vadd.f32 %v459, %v499
        %v501 = vpop.f32.mrb[0].mxu0
        %v502 = vpop.f32.mrb[0].mxu0
        %v503 = vadd.f32 %v462, %v502
        %v504 = vpop.f32.mrb[0].mxu0
        %505 = vdwg.mxu0
        %v506 = vsel %vm420, %v500, 0.0
        %v507 = vsel %vm420, %v503, 0.0
        %v508 = vadd.f32 %v506, %v507
        %v509 = vrot.slane %v508, 4
        %v510 = vadd.f32 %v508, %v509
        %v511 = vrot.slane %v510, 2
        %v512 = vadd.f32 %v510, %v511
        %v513 = vrot.slane %v512, 1
        %v514 = vadd.f32 %v512, %v513
        %v515 = vmul.f32 %v514, 0.0625
        %v516 = vsub.f32 %v500, %v515
        %v517 = vsub.f32 %v503, %v515
        %v518 = vmul.f32 %v516, %v516
        %v519 = vmul.f32 %v517, %v517
        %v520 = vsel %vm420, %v518, 0.0
        %v521 = vsel %vm420, %v519, 0.0
        %v522 = vadd.f32 %v520, %v521
        %v523 = vrot.slane %v522, 4
        %v524 = vadd.f32 %v522, %v523
        %v525 = vrot.slane %v524, 2
        %v526 = vadd.f32 %v524, %v525
        %v527 = vrot.slane %v526, 1
        %v528 = vadd.f32 %v526, %v527
        %v529 = vmul.f32 %v528, 0.0625
        %v530 = vadd.f32 %v529, 1e-05
        %v531 = vrsqrt.pop %v530
        %v532 = vmul.f32 %v516, %v531
        %v533 = vmul.f32 %v517, %v531
        %v534 = vld [vmem:[#allocation7] sm:$0x1]
        %v536 = vlaneseq
        %v537 = vshrl.u32 %v536, 7
        %v538 = vsub.s32 0, %v537
        %v539 = vrot.slane %v534, %v538
        %v541 = vmul.f32 %v532, %v539
        %v542 = vmul.f32 %v533, %v539
        %v543 = vld [vmem:[#allocation8] sm:$0x1]
        %v545 = vlaneseq
        %v546 = vshrl.u32 %v545, 7
        %v547 = vsub.s32 0, %v546
        %v548 = vrot.slane %v543, %v547
        %v550 = vadd.f32 %v541, %v548
        %v551 = vadd.f32 %v542, %v548
        %v552 = vmax.f32 %v550, 0.0
        %v553 = vmax.f32 %v551, 0.0
        %v554 = vpack.c.bf16 %v553, %v552
        %v556 = vunpack.c.l.b16 %v554
        %v557 = vunpack.c.h.b16 %v554
        %v558 = vpack.c.b16 %v556, %v556
        %v559 = vpack.c.b16 %v557, %v557
        %vm562 = vcmask 257024
        %563 = vst.msk [vmem:[%s255] sm:$0xf] %vm562, %v558
        %564 = vst.msk [vmem:[%s255 + $0x4] sm:$0xf] %vm562, %v559
        %s565 = sand.u32 %s120, 1
        %s566 = scalar_lea.sflag [#allocation4], %s565
        %s567 = sand.u32 %s120, 1
        %s568 = smul.addr %s567, 8
        %s569 = scalar_lea.vmem [#allocation10], %s568
        // Predicated region
        $region53: #{_lambda_.17} parent=35 // pred_check
          %p570 = pneg %p130
        $region54: #{_lambda_.17} parent=35 // pred_check_branch
          %572 = sbr.rel (%p570) target = $region56
        $region55: #{_lambda_.17} parent=35 // pred_region
          %s574 = ssub.s32 128, 128
          %575 = vsyncadd %s566, %s574
          %s576 = smul.addr %s23, 2
          %s577 = smul.addr %s576, 64
          %s578 = scalar_lea.hbm %s4, %s577
          %s579 = sshll.u32 %s569, 4
          %s580 = int_to_ptr.vmem [resolvable:$true] %s579
          %585 = dma.vmem_to_hbm [thread:$0]  %s580, 128, %s578, %s566, 64, 64, 4
        $region56: #{_lambda_.17} parent=35 // pred_fallthru
          _
      $region36: #{_lambda_.17} parent=5 // pred_fallthru
        _
      %p586 = scmp.le.s32.totalorder 2, %s18
      // Predicated region
      $region57: #{_lambda_.17} parent=5 // pred_check
        %p587 = pneg %p586
      $region58: #{_lambda_.17} parent=5 // pred_check_branch
        %589 = sbr.rel (%p587) target = $region60
      $region59: #{_lambda_.17} parent=5 // pred_region
        %s590 = ssub.s32 %s18, 2
        // Predicated region
        $region61: #{_lambda_.17} parent=59 // pred_check
          %p591 = pneg %p136
        $region62: #{_lambda_.17} parent=59 // pred_check_branch
          %593 = sbr.rel (%p591) target = $region64
        $region63: #{_lambda_.17} parent=59 // pred_region
          %s594 = sand.u32 %s121, 1
          %s595 = scalar_lea.sflag [#allocation4], %s594
          %s596 = sand.u32 %s121, 1
          %s597 = smul.addr %s596, 8
          %s598 = scalar_lea.vmem [#allocation10], %s597
          %599 = dma.done %s595, 128
        $region64: #{_lambda_.17} parent=59 // pred_fallthru
          _
      $region60: #{_lambda_.17} parent=5 // pred_fallthru
        _
    $region6: #{_lambda_.17} parent=1 // loop_footer
      %s22 = sadd.s32 1, %s18
    $region7: #{_lambda_.17} parent=1 // loop_footer_branch
      %17 = sbr.rel target = $region3
    $region8: #{_lambda_.17} parent=1 // loop_exit
      _
    %600 = vsyncpa [#allocation3], 1
    %s601 = scalar_lea.sflag [#allocation3], 1
    %602 = vsyncpa %s601, 1
    %603 = vsyncpa [#allocation6], 1
    %604 = vsyncpa [#allocation9], 1
    %605 = vsyncpa [#allocation4], 1
    %s606 = scalar_lea.sflag [#allocation4], 1
    %607 = vsyncpa %s606, 1

// kernel: _lambda_.21
$region0: #{_lambda_.21}
  #allocation0 [shape = 'u32[]', space=smem, size = 0x4, offset = 0x4, fixed_abs, tag = 'smem constant byte address 0x4 - core index']
  #allocation1 [shape = 'u32[144,128]{1,0:T(1,128)}', space=vmem, size = 0x12000, scoped, tag = 'internal scratch']
  %s0 = inlined_call_operand.hbm [shape: bf16[2,16,288], index: 0, kind: input, shape index: {}]
  %s1 = inlined_call_operand.hbm [shape: bf16[288,64], index: 1, kind: input, shape index: {}]
  %s2 = inlined_call_operand.hbm [shape: f32[1,16], index: 2, kind: input, shape index: {}]
  %s3 = inlined_call_operand.hbm [shape: f32[1,16], index: 3, kind: input, shape index: {}]
  %s4 = inlined_call_operand.hbm [shape: bf16[2,16,64], index: 4, kind: output, shape index: {}]
  %s5 = sld [smem:[#allocation0]]
  $region65: #{_lambda_.21} parent=0
    _
  %s7 = ssub.s32 1, %s5
  %s8 = scalar_select 0, %s7, %s5
  $region1: #{_lambda_.21} parent=0
    #allocation2 [shape = 'u8[24576]{0}', space=vmem, size = 0x6000, scoped, tag = 'input window, operand 0']
    #allocation3 [shape = 's32[2]{0}', space=sflag, size = 0x8, scoped, tag = 'scoped memory for _lambda_.21']
    #allocation4 [shape = 's32[2]{0}', space=sflag, size = 0x8, scoped, tag = 'scoped memory for _lambda_.21']
    #allocation5 [shape = 'u8[73728]{0}', space=vmem, size = 0x12000, scoped, tag = 'input window, operand 1, single buffered']
    #allocation6 [shape = 's32[1]{0}', space=sflag, size = 0x4, scoped, tag = 'scoped memory for _lambda_.21']
    #allocation7 [shape = 'u8[512]{0}', space=vmem, size = 0x400, scoped, tag = 'input window, operand 2, single buffered']
    #allocation8 [shape = 'u8[512]{0}', space=vmem, size = 0x400, scoped, tag = 'input window, operand 3, single buffered']
    #allocation9 [shape = 's32[1]{0}', space=sflag, size = 0x4, scoped, tag = 'scoped memory for _lambda_.21']
    #allocation10 [shape = 'u8[8192]{0}', space=vmem, size = 0x2000, scoped, tag = 'output window, operand 0']
    %9 = vsyncpa [#allocation3], 0
    %s10 = scalar_lea.sflag [#allocation3], 1
    %11 = vsyncpa %s10, 0
    %12 = vsyncpa [#allocation6], 0
    %13 = vsyncpa [#allocation9], 0
    %14 = vsyncpa [#allocation4], 0
    %s15 = scalar_lea.sflag [#allocation4], 1
    %16 = vsyncpa %s15, 0
    loop: start=0, step=1, limit=4
    $region2: #{_lambda_.21} parent=1 // loop_pre_header
      _
    $region3: #{_lambda_.21} parent=1 // loop_header
      %s18 = sphi 0, %s22
      %p19 = scmp.ge.s32.totalorder %s18, 4
      %s28 = sphi 0, %s30
      %s31 = sphi 0, %s28
      %s32 = sphi 0, %s31
      %s48 = sphi 0, %s32
      %s52 = sphi 0, %s52
      %s54 = sphi 0, %s52
      %s55 = sphi 0, %s54
      %s69 = sphi 0, %s55
      %s73 = sphi 0, %s73
      %s75 = sphi 0, %s73
      %s76 = sphi 0, %s75
      %s90 = sphi 0, %s76
      %s94 = sphi 0, %s94
      %s96 = sphi 0, %s94
      %s97 = sphi 0, %s96
      %s111 = sphi 0, %s97
      %s117 = sphi 0, %s119
      %s120 = sphi 0, %s117
      %s121 = sphi 0, %s120
      %s137 = sphi 0, %s121
    $region4: #{_lambda_.21} parent=1 // loop_header_branch
      %21 = sbr.rel (%p19) target = $region8
    $region5: #{_lambda_.21} parent=1 // loop_body
      %s23 = ssub.s32 %s18, 1
      %s24 = ssub.s32 %s18, 2
      %s25 = sadd.s32 %s18, 1
      %s26 = ssub.s32 %s18, %s25
      %p27 = scmp.eq.s32.totalorder %s26, 0
      %s29 = sadd.s32 %s28, 1
      %s30 = scalar_select %p27, %s28, %s29
      %p33 = pneg %p27
      %p34 = scmp.eq.s32.totalorder %s18, 1
      %p35 = por %p33, %p34
      %p36 = scmp.ne.s32.totalorder %s28, %s31
      %p37 = scmp.eq.s32.totalorder %s18, 0
      %p38 = por %p36, %p37
      %p39 = scmp.ne.s32.totalorder %s28, %s31
      %p40 = scmp.eq.s32.totalorder %s23, 1
      %p41 = por %p39, %p40
      %p42 = scmp.ne.s32.totalorder %s31, %s32
      %p43 = scmp.eq.s32.totalorder %s23, 0
      %p44 = por %p42, %p43
      %p45 = scmp.ne.s32.totalorder %s31, %s32
      %p46 = scmp.eq.s32.totalorder %s24, 1
      %p47 = por %p45, %p46
      %p49 = scmp.ne.s32.totalorder %s32, %s48
      %p50 = scmp.eq.s32.totalorder %s24, 0
      %p51 = por %p49, %p50
      %s53 = sadd.s32 %s52, 1
      %p56 = scmp.eq.s32.totalorder %s18, 1
      %p57 = scmp.ne.s32.totalorder %s52, %s54
      %p58 = scmp.eq.s32.totalorder %s18, 0
      %p59 = por %p57, %p58
      %p60 = scmp.ne.s32.totalorder %s52, %s54
      %p61 = scmp.eq.s32.totalorder %s23, 1
      %p62 = por %p60, %p61
      %p63 = scmp.ne.s32.totalorder %s54, %s55
      %p64 = scmp.eq.s32.totalorder %s23, 0
      %p65 = por %p63, %p64
      %p66 = scmp.ne.s32.totalorder %s54, %s55
      %p67 = scmp.eq.s32.totalorder %s24, 1
      %p68 = por %p66, %p67
      %p70 = scmp.ne.s32.totalorder %s55, %s69
      %p71 = scmp.eq.s32.totalorder %s24, 0
      %p72 = por %p70, %p71
      %s74 = sadd.s32 %s73, 1
      %p77 = scmp.eq.s32.totalorder %s18, 1
      %p78 = scmp.ne.s32.totalorder %s73, %s75
      %p79 = scmp.eq.s32.totalorder %s18, 0
      %p80 = por %p78, %p79
      %p81 = scmp.ne.s32.totalorder %s73, %s75
      %p82 = scmp.eq.s32.totalorder %s23, 1
      %p83 = por %p81, %p82
      %p84 = scmp.ne.s32.totalorder %s75, %s76
      %p85 = scmp.eq.s32.totalorder %s23, 0
      %p86 = por %p84, %p85
      %p87 = scmp.ne.s32.totalorder %s75, %s76
      %p88 = scmp.eq.s32.totalorder %s24, 1
      %p89 = por %p87, %p88
      %p91 = scmp.ne.s32.totalorder %s76, %s90
      %p92 = scmp.eq.s32.totalorder %s24, 0
      %p93 = por %p91, %p92
      %s95 = sadd.s32 %s94, 1
      %p98 = scmp.eq.s32.totalorder %s18, 1
      %p99 = scmp.ne.s32.totalorder %s94, %s96
      %p100 = scmp.eq.s32.totalorder %s18, 0
      %p101 = por %p99, %p100
      %p102 = scmp.ne.s32.totalorder %s94, %s96
      %p103 = scmp.eq.s32.totalorder %s23, 1
      %p104 = por %p102, %p103
      %p105 = scmp.ne.s32.totalorder %s96, %s97
      %p106 = scmp.eq.s32.totalorder %s23, 0
      %p107 = por %p105, %p106
      %p108 = scmp.ne.s32.totalorder %s96, %s97
      %p109 = scmp.eq.s32.totalorder %s24, 1
      %p110 = por %p108, %p109
      %p112 = scmp.ne.s32.totalorder %s97, %s111
      %p113 = scmp.eq.s32.totalorder %s24, 0
      %p114 = por %p112, %p113
      %s115 = ssub.s32 %s18, %s25
      %p116 = scmp.eq.s32.totalorder %s115, 0
      %s118 = sadd.s32 %s117, 1
      %s119 = scalar_select %p116, %s117, %s118
      %p122 = pneg %p116
      %p123 = scmp.eq.s32.totalorder %s18, 1
      %p124 = por %p122, %p123
      %p125 = scmp.ne.s32.totalorder %s117, %s120
      %p126 = scmp.eq.s32.totalorder %s18, 0
      %p127 = por %p125, %p126
      %p128 = scmp.ne.s32.totalorder %s117, %s120
      %p129 = scmp.eq.s32.totalorder %s23, 1
      %p130 = por %p128, %p129
      %p131 = scmp.ne.s32.totalorder %s120, %s121
      %p132 = scmp.eq.s32.totalorder %s23, 0
      %p133 = por %p131, %p132
      %p134 = scmp.ne.s32.totalorder %s120, %s121
      %p135 = scmp.eq.s32.totalorder %s24, 1
      %p136 = por %p134, %p135
      %p138 = scmp.ne.s32.totalorder %s121, %s137
      %p139 = scmp.eq.s32.totalorder %s24, 0
      %p140 = por %p138, %p139
      %p141 = scmp.le.s32.totalorder 1, %s18
      %p142 = scmp.lt.s32.totalorder %s18, 3
      %p143 = pnand %p141, %p142
      %p144 = pneg %p143
      // Predicated region
      $region9: #{_lambda_.21} parent=5 // pred_check
        _
      $region10: #{_lambda_.21} parent=5 // pred_check_branch
        %146 = sbr.rel (%p143) target = $region12
      $region11: #{_lambda_.21} parent=5 // pred_region
        %s147 = ssub.s32 %s18, 1
        // Predicated region
        $region13: #{_lambda_.21} parent=11 // pred_check
          %p148 = pneg %p65
        $region14: #{_lambda_.21} parent=11 // pred_check_branch
          %150 = sbr.rel (%p148) target = $region16
        $region15: #{_lambda_.21} parent=11 // pred_region
          %s152 = ssub.s32 2304, 2304
          %153 = vsyncadd [#allocation6], %s152
          %s154 = sshll.u32 [#allocation5], 4
          %s155 = int_to_ptr.vmem [resolvable:$true] %s154
          %160 = dma.hbm_to_vmem [thread:$0]  %s1, 2304, %s155, [#allocation6], 64, 64, 4
        $region16: #{_lambda_.21} parent=11 // pred_fallthru
          _
        // Predicated region
        $region17: #{_lambda_.21} parent=11 // pred_check
          %p161 = pneg %p86
        $region18: #{_lambda_.21} parent=11 // pred_check_branch
          %163 = sbr.rel (%p161) target = $region20
        $region19: #{_lambda_.21} parent=11 // pred_region
          %s165 = ssub.s32 16, 16
          %166 = vsyncadd [#allocation6], %s165
          %s168 = sshll.u32 [#allocation7], 4
          %s169 = int_to_ptr.vmem [resolvable:$true] %s168
          %171 = dma.hbm_to_vmem [thread:$0]  %s2, 16, %s169, [#allocation6]
        $region20: #{_lambda_.21} parent=11 // pred_fallthru
          _
        // Predicated region
        $region21: #{_lambda_.21} parent=11 // pred_check
          %p172 = pneg %p107
        $region22: #{_lambda_.21} parent=11 // pred_check_branch
          %174 = sbr.rel (%p172) target = $region24
        $region23: #{_lambda_.21} parent=11 // pred_region
          %s176 = ssub.s32 16, 16
          %177 = vsyncadd [#allocation9], %s176
          %s179 = sshll.u32 [#allocation8], 4
          %s180 = int_to_ptr.vmem [resolvable:$true] %s179
          %182 = dma.hbm_to_vmem [thread:$0]  %s3, 16, %s180, [#allocation9]
        $region24: #{_lambda_.21} parent=11 // pred_fallthru
          _
      $region12: #{_lambda_.21} parent=5 // pred_fallthru
        _
      %p183 = scmp.lt.s32.totalorder %s18, 2
      // Predicated region
      $region25: #{_lambda_.21} parent=5 // pred_check
        %p184 = pneg %p183
      $region26: #{_lambda_.21} parent=5 // pred_check_branch
        %186 = sbr.rel (%p184) target = $region28
      $region27: #{_lambda_.21} parent=5 // pred_region
        // Predicated region
        $region29: #{_lambda_.21} parent=27 // pred_check
          %p187 = pneg %p38
        $region30: #{_lambda_.21} parent=27 // pred_check_branch
          %189 = sbr.rel (%p187) target = $region32
        $region31: #{_lambda_.21} parent=27 // pred_region
          %s190 = sand.u32 %s28, 1
          %s191 = scalar_lea.sflag [#allocation3], %s190
          %s192 = sand.u32 %s28, 1
          %s193 = smul.addr %s192, 24
          %s194 = scalar_lea.vmem [#allocation2], %s193
          %s196 = ssub.s32 384, 384
          %197 = vsyncadd %s191, %s196
          %s198 = smul.addr %s18, 6
          %s199 = smul.addr %s198, 64
          %s200 = scalar_lea.hbm %s0, %s199
          %s201 = sshll.u32 %s194, 4
          %s202 = int_to_ptr.vmem [resolvable:$true] %s201
          %207 = dma.hbm_to_vmem [thread:$0]  %s200, 384, %s202, %s191, 192, 192, 12
        $region32: #{_lambda_.21} parent=27 // pred_fallthru
          _
      $region28: #{_lambda_.21} parent=5 // pred_fallthru
        _
      %p208 = scmp.le.s32.totalorder 1, %s18
      %p209 = scmp.lt.s32.totalorder %s18, 3
      %p210 = pnand %p208, %p209
      %p211 = pneg %p210
      // Predicated region
      $region33: #{_lambda_.21} parent=5 // pred_check
        _
      $region34: #{_lambda_.21} parent=5 // pred_check_branch
        %213 = sbr.rel (%p210) target = $region36
      $region35: #{_lambda_.21} parent=5 // pred_region
        %s214 = ssub.s32 %s18, 1
        %s215 = sand.u32 %s31, 1
        %s216 = scalar_lea.sflag [#allocation3], %s215
        %s217 = sand.u32 %s31, 1
        %s218 = smul.addr %s217, 24
        %s219 = scalar_lea.vmem [#allocation2], %s218
        // Predicated region
        $region37: #{_lambda_.21} parent=35 // pred_check
          %p220 = pneg %p44
        $region38: #{_lambda_.21} parent=35 // pred_check_branch
          %222 = sbr.rel (%p220) target = $region40
        $region39: #{_lambda_.21} parent=35 // pred_region
          %223 = dma.done %s216, 384
        $region40: #{_lambda_.21} parent=35 // pred_fallthru
          _
        // Predicated region
        $region41: #{_lambda_.21} parent=35 // pred_check
          %p224 = pneg %p65
        $region42: #{_lambda_.21} parent=35 // pred_check_branch
          %226 = sbr.rel (%p224) target = $region44
        $region43: #{_lambda_.21} parent=35 // pred_region
          %227 = dma.done [#allocation6], 2304
        $region44: #{_lambda_.21} parent=35 // pred_fallthru
          _
        // Predicated region
        $region45: #{_lambda_.21} parent=35 // pred_check
          %p228 = pneg %p86
        $region46: #{_lambda_.21} parent=35 // pred_check_branch
          %230 = sbr.rel (%p228) target = $region48
        $region47: #{_lambda_.21} parent=35 // pred_region
          %231 = dma.done [#allocation6], 16
        $region48: #{_lambda_.21} parent=35 // pred_fallthru
          _
        // Predicated region
        $region49: #{_lambda_.21} parent=35 // pred_check
          %p232 = pneg %p107
        $region50: #{_lambda_.21} parent=35 // pred_check_branch
          %234 = sbr.rel (%p232) target = $region52
        $region51: #{_lambda_.21} parent=35 // pred_region
          %235 = dma.done [#allocation9], 16
        $region52: #{_lambda_.21} parent=35 // pred_fallthru
          _
        %s236 = sand.u32 %s31, 1
        %s237 = scalar_lea.sflag [#allocation3], %s236
        %s238 = sand.u32 %s31, 1
        %s239 = smul.addr %s238, 24
        %s240 = scalar_lea.vmem [#allocation2], %s239
        %p241 = pneg %p44
        %p242 = pneg %p41
        %p243 = pneg %p65
        %p244 = pneg %p62
        %p245 = pneg %p86
        %p246 = pneg %p83
        %p247 = pneg %p107
        %p248 = pneg %p104
        %p249 = pneg %p133
        %p250 = pneg %p130
        %s251 = sand.u32 %s120, 1
        %s252 = scalar_lea.sflag [#allocation4], %s251
        %s253 = sand.u32 %s120, 1
        %s254 = smul.addr %s253, 8
        %s255 = scalar_lea.vmem [#allocation10], %s254
        %v257 = vld [vmem:[%s219] sm:$0xff]
        %v258 = vld [vmem:[%s219 + $0x8] sm:$0xf]
        %v259 = vld [vmem:[%s219 + $0xc] sm:$0xff]
        %v260 = vld [vmem:[%s219 + $0x14] sm:$0xf]
        %v261 = vld [vmem:[#allocation5] sm:$0xf]
        %v262 = vld [vmem:[#allocation5 + $0x4] sm:$0xf]
        %v263 = vld [vmem:[#allocation5 + $0x8] sm:$0xf]
        %v264 = vld [vmem:[#allocation5 + $0xc] sm:$0xf]
        %v265 = vld [vmem:[#allocation5 + $0x10] sm:$0xf]
        %v266 = vld [vmem:[#allocation5 + $0x14] sm:$0xf]
        %v267 = vld [vmem:[#allocation5 + $0x18] sm:$0xf]
        %v268 = vld [vmem:[#allocation5 + $0x1c] sm:$0xf]
        %v269 = vld [vmem:[#allocation5 + $0x20] sm:$0xf]
        %v270 = vld [vmem:[#allocation5 + $0x24] sm:$0xf]
        %v271 = vld [vmem:[#allocation5 + $0x28] sm:$0xf]
        %v272 = vld [vmem:[#allocation5 + $0x2c] sm:$0xf]
        %v273 = vld [vmem:[#allocation5 + $0x30] sm:$0xf]
        %v274 = vld [vmem:[#allocation5 + $0x34] sm:$0xf]
        %v275 = vld [vmem:[#allocation5 + $0x38] sm:$0xf]
        %v276 = vld [vmem:[#allocation5 + $0x3c] sm:$0xf]
        %v277 = vld [vmem:[#allocation5 + $0x40] sm:$0xf]
        %v278 = vld [vmem:[#allocation5 + $0x44] sm:$0xf]
        %v279 = vld [vmem:[#allocation5 + $0x48] sm:$0xf]
        %v280 = vld [vmem:[#allocation5 + $0x4c] sm:$0xf]
        %v281 = vld [vmem:[#allocation5 + $0x50] sm:$0xf]
        %v282 = vld [vmem:[#allocation5 + $0x54] sm:$0xf]
        %v283 = vld [vmem:[#allocation5 + $0x58] sm:$0xf]
        %v284 = vld [vmem:[#allocation5 + $0x5c] sm:$0xf]
        %v285 = vld [vmem:[#allocation5 + $0x60] sm:$0xf]
        %v286 = vld [vmem:[#allocation5 + $0x64] sm:$0xf]
        %v287 = vld [vmem:[#allocation5 + $0x68] sm:$0xf]
        %v288 = vld [vmem:[#allocation5 + $0x6c] sm:$0xf]
        %v289 = vld [vmem:[#allocation5 + $0x70] sm:$0xf]
        %v290 = vld [vmem:[#allocation5 + $0x74] sm:$0xf]
        %v291 = vld [vmem:[#allocation5 + $0x78] sm:$0xf]
        %v292 = vld [vmem:[#allocation5 + $0x7c] sm:$0xf]
        %v293 = vld [vmem:[#allocation5 + $0x80] sm:$0xf]
        %v294 = vld [vmem:[#allocation5 + $0x84] sm:$0xf]
        %v295 = vld [vmem:[#allocation5 + $0x88] sm:$0xf]
        %v296 = vld [vmem:[#allocation5 + $0x8c] sm:$0xf]
        %v301 = vunpack.c.l.b16 %v257
        %v302 = vunpack.c.h.b16 %v257
        %v303 = vunpack.c.l.b16 %v258
        %v304 = vunpack.c.l.b16 %v259
        %v305 = vunpack.c.h.b16 %v259
        %v306 = vunpack.c.l.b16 %v260
        %v307 = vpack.c.b16 %v304, %v301
        %v308 = vpack.c.b16 %v305, %v302
        %v309 = vpack.c.b16 %v306, %v303
        %v348 = vunpack.c.l.b16 %v261
        %v349 = vunpack.c.l.b16 %v262
        %v350 = vunpack.c.l.b16 %v263
        %v351 = vunpack.c.l.b16 %v264
        %v352 = vunpack.c.l.b16 %v265
        %v353 = vunpack.c.l.b16 %v266
        %v354 = vunpack.c.l.b16 %v267
        %v355 = vunpack.c.l.b16 %v268
        %v356 = vunpack.c.l.b16 %v269
        %v357 = vunpack.c.l.b16 %v270
        %v358 = vunpack.c.l.b16 %v271
        %v359 = vunpack.c.l.b16 %v272
        %v360 = vunpack.c.l.b16 %v273
        %v361 = vunpack.c.l.b16 %v274
        %v362 = vunpack.c.l.b16 %v275
        %v363 = vunpack.c.l.b16 %v276
        %v364 = vunpack.c.l.b16 %v277
        %v365 = vunpack.c.l.b16 %v278
        %v366 = vunpack.c.l.b16 %v279
        %v367 = vunpack.c.l.b16 %v280
        %v368 = vunpack.c.l.b16 %v281
        %v369 = vunpack.c.l.b16 %v282
        %v370 = vunpack.c.l.b16 %v283
        %v371 = vunpack.c.l.b16 %v284
        %v372 = vunpack.c.l.b16 %v285
        %v373 = vunpack.c.l.b16 %v286
        %v374 = vunpack.c.l.b16 %v287
        %v375 = vunpack.c.l.b16 %v288
        %v376 = vunpack.c.l.b16 %v289
        %v377 = vunpack.c.l.b16 %v290
        %v378 = vunpack.c.l.b16 %v291
        %v379 = vunpack.c.l.b16 %v292
        %v380 = vunpack.c.l.b16 %v293
        %v381 = vunpack.c.l.b16 %v294
        %v382 = vunpack.c.l.b16 %v295
        %v383 = vunpack.c.l.b16 %v296
        %v384 = vpack.c.b16 %v349, %v348
        %v385 = vpack.c.b16 %v351, %v350
        %v386 = vpack.c.b16 %v353, %v352
        %v387 = vpack.c.b16 %v355, %v354
        %v388 = vpack.c.b16 %v357, %v356
        %v389 = vpack.c.b16 %v359, %v358
        %v390 = vpack.c.b16 %v361, %v360
        %v391 = vpack.c.b16 %v363, %v362
        %v392 = vpack.c.b16 %v365, %v364
        %v393 = vpack.c.b16 %v367, %v366
        %v394 = vpack.c.b16 %v369, %v368
        %v395 = vpack.c.b16 %v371, %v370
        %v396 = vpack.c.b16 %v373, %v372
        %v397 = vpack.c.b16 %v375, %v374
        %v398 = vpack.c.b16 %v377, %v376
        %v399 = vpack.c.b16 %v379, %v378
        %v400 = vpack.c.b16 %v381, %v380
        %v401 = vpack.c.b16 %v383, %v382
        %vm420 = vcmask 261120
        %v422 = vsel %vm420, %v309, 0
        %424 = vmatprep.subr.bf16.mxu0 0
        %425 = vmatpush1.bf16.msra.mxu0 %v384
        %426 = vmatprep.subr.bf16.mxu0 0
        %427 = vmatpush1.bf16.msra.mxu0 %v385
        %428 = vmatprep.subr.bf16.mxu0 0
        %429 = vmatpush1.bf16.msra.mxu0 %v386
        %430 = vmatprep.subr.bf16.mxu0 0
        %431 = vmatpush1.bf16.msra.mxu0 %v387
        %432 = vmatprep.subr.bf16.mxu0 0
        %433 = vmatpush1.bf16.msra.mxu0 %v388
        %434 = vmatprep.subr.bf16.mxu0 0
        %435 = vmatpush1.bf16.msra.mxu0 %v389
        %436 = vmatprep.subr.bf16.mxu0 0
        %437 = vmatpush1.bf16.msra.mxu0 %v390
        %438 = vmatprep.subr.bf16.mxu0 0
        %439 = vmatpush1.bf16.msra.mxu0 %v391
        %440 = vmatprep.subr.bf16.mxu0 0
        %441 = vmatpush1.bf16.msra.mxu0 %v392
        %442 = vmatprep.subr.bf16.mxu0 0
        %443 = vmatpush1.bf16.msra.mxu0 %v393
        %444 = vmatprep.subr.bf16.mxu0 0
        %445 = vmatpush1.bf16.msra.mxu0 %v394
        %446 = vmatprep.subr.bf16.mxu0 0
        %447 = vmatpush1.bf16.msra.mxu0 %v395
        %448 = vmatprep.subr.bf16.mxu0 0
        %449 = vmatpush1.bf16.msra.mxu0 %v396
        %450 = vmatprep.subr.bf16.mxu0 0
        %451 = vmatpush1.bf16.msra.mxu0 %v397
        %452 = vmatprep.subr.bf16.mxu0 0
        %453 = vmatpush1.bf16.msra.mxu0 %v398
        %454 = vmatprep.subr.bf16.mxu0 0
        %455 = vmatpush1.bf16.msra.mxu0 %v399
        %456 = vmatprep.mubr.bf16.mxu0 %v308
        %457 = vmatmul.mubr.bf16.gmra.mrb[0].mxu0 %v307
        %v458 = vpop.f32.mrb[0].mxu0
        %v459 = vadd.f32 0.0, %v458
        %v460 = vpop.f32.mrb[0].mxu0
        %v461 = vpop.f32.mrb[0].mxu0
        %v462 = vadd.f32 0.0, %v461
        %v463 = vpop.f32.mrb[0].mxu0
        %464 = vdwg.mxu0
        %465 = vmatprep.subr.bf16.mxu0 0
        %466 = vmatpush1.bf16.msra.mxu0 %v400
        %467 = vmatprep.subr.bf16.mxu0 0
        %468 = vmatpush1.bf16.msra.mxu0 %v401
        %469 = vmatprep.subr.bf16.mxu0 0
        %470 = vmatpush1.bf16.msra.mxu0 0
        %471 = vmatprep.subr.bf16.mxu0 0
        %472 = vmatpush1.bf16.msra.mxu0 0
        %473 = vmatprep.subr.bf16.mxu0 0
        %474 = vmatpush1.bf16.msra.mxu0 0
        %475 = vmatprep.subr.bf16.mxu0 0
        %476 = vmatpush1.bf16.msra.mxu0 0
        %477 = vmatprep.subr.bf16.mxu0 0
        %478 = vmatpush1.bf16.msra.mxu0 0
        %479 = vmatprep.subr.bf16.mxu0 0
        %480 = vmatpush1.bf16.msra.mxu0 0
        %481 = vmatprep.subr.bf16.mxu0 0
        %482 = vmatpush1.bf16.msra.mxu0 0
        %483 = vmatprep.subr.bf16.mxu0 0
        %484 = vmatpush1.bf16.msra.mxu0 0
        %485 = vmatprep.subr.bf16.mxu0 0
        %486 = vmatpush1.bf16.msra.mxu0 0
        %487 = vmatprep.subr.bf16.mxu0 0
        %488 = vmatpush1.bf16.msra.mxu0 0
        %489 = vmatprep.subr.bf16.mxu0 0
        %490 = vmatpush1.bf16.msra.mxu0 0
        %491 = vmatprep.subr.bf16.mxu0 0
        %492 = vmatpush1.bf16.msra.mxu0 0
        %493 = vmatprep.subr.bf16.mxu0 0
        %494 = vmatpush1.bf16.msra.mxu0 0
        %495 = vmatprep.subr.bf16.mxu0 0
        %496 = vmatpush1.bf16.msra.mxu0 0
        %497 = vmatprep.mubr.bf16.mxu0 0
        %498 = vmatmul.mubr.bf16.gmra.mrb[0].mxu0 %v422
        %v499 = vpop.f32.mrb[0].mxu0
        %v500 = vadd.f32 %v459, %v499
        %v501 = vpop.f32.mrb[0].mxu0
        %v502 = vpop.f32.mrb[0].mxu0
        %v503 = vadd.f32 %v462, %v502
        %v504 = vpop.f32.mrb[0].mxu0
        %505 = vdwg.mxu0
        %vm506 = vcmask 523264
        %v507 = vsel %vm506, %v500, 0.0
        %v508 = vsel %vm506, %v503, 0.0
        %v509 = vadd.f32 %v507, %v508
        %v510 = vrot.slane %v509, 4
        %v511 = vadd.f32 %v509, %v510
        %v512 = vrot.slane %v511, 2
        %v513 = vadd.f32 %v511, %v512
        %v514 = vrot.slane %v513, 1
        %v515 = vadd.f32 %v513, %v514
        %517 = vrot.lane.b32.xlu0 %v515, 112
        %v518 = vpop.permute.xlu0 %517
        %v520 = vadd.f32 %v515, %v518
        %521 = vrot.lane.b32.xlu0 %v515, 96
        %v522 = vpop.permute.xlu0 %521
        %v524 = vadd.f32 %v520, %v522
        %525 = vrot.lane.b32.xlu0 %v515, 80
        %v526 = vpop.permute.xlu0 %525
        %v528 = vadd.f32 %v524, %v526
        %v529 = vmul.f32 %v528, 0.015625
        %v530 = vlaneseq
        %v531 = vshrl.u32 %v530, 7
        %v532 = vsub.s32 0, %v531
        %v533 = vrot.slane %v529, %v532
        %v534 = vsub.f32 %v500, %v533
        %v535 = vsub.f32 %v503, %v533
        %v536 = vmul.f32 %v534, %v534
        %v537 = vmul.f32 %v535, %v535
        %vm538 = vcmask 130048
        %v539 = vsel %vm538, %v536, 0.0
        %v540 = vsel %vm538, %v537, 0.0
        %v541 = vadd.f32 %v539, %v540
        %v542 = vrot.slane %v541, 4
        %v543 = vadd.f32 %v541, %v542
        %v544 = vrot.slane %v543, 2
        %v545 = vadd.f32 %v543, %v544
        %v546 = vrot.slane %v545, 1
        %v547 = vadd.f32 %v545, %v546
        %v548 = vadd.f32 %v547, 0.0
        %550 = vrot.lane.b32.xlu0 %v533, 16
        %v551 = vpop.permute.xlu0 %550
        %v553 = vsub.f32 %v500, %v551
        %v554 = vsub.f32 %v503, %v551
        %v555 = vmul.f32 %v553, %v553
        %v556 = vmul.f32 %v554, %v554
        %vm557 = vcmask 261248
        %v558 = vsel %vm557, %v555, 0.0
        %v559 = vsel %vm557, %v556, 0.0
        %v560 = vadd.f32 %v558, %v559
        %v561 = vrot.slane %v560, 4
        %v562 = vadd.f32 %v560, %v561
        %v563 = vrot.slane %v562, 2
        %v564 = vadd.f32 %v562, %v563
        %v565 = vrot.slane %v564, 1
        %v566 = vadd.f32 %v564, %v565
        %568 = vrot.lane.b32.xlu0 %v566, 112
        %v569 = vpop.permute.xlu0 %568
        %v571 = vadd.f32 %v548, %v569
        %572 = vrot.lane.b32.xlu0 %v533, 32
        %v573 = vpop.permute.xlu0 %572
        %v575 = vsub.f32 %v500, %v573
        %v576 = vsub.f32 %v503, %v573
        %v577 = vmul.f32 %v575, %v575
        %v578 = vmul.f32 %v576, %v576
        %vm579 = vcmask 392448
        %v580 = vsel %vm579, %v577, 0.0
        %v581 = vsel %vm579, %v578, 0.0
        %v582 = vadd.f32 %v580, %v581
        %v583 = vrot.slane %v582, 4
        %v584 = vadd.f32 %v582, %v583
        %v585 = vrot.slane %v584, 2
        %v586 = vadd.f32 %v584, %v585
        %v587 = vrot.slane %v586, 1
        %v588 = vadd.f32 %v586, %v587
        %590 = vrot.lane.b32.xlu0 %v588, 96
        %v591 = vpop.permute.xlu0 %590
        %v593 = vadd.f32 %v571, %v591
        %594 = vrot.lane.b32.xlu0 %v533, 48
        %v595 = vpop.permute.xlu0 %594
        %v597 = vsub.f32 %v500, %v595
        %v598 = vsub.f32 %v503, %v595
        %v599 = vmul.f32 %v597, %v597
        %v600 = vmul.f32 %v598, %v598
        %vm601 = vcmask 523648
        %v602 = vsel %vm601, %v599, 0.0
        %v603 = vsel %vm601, %v600, 0.0
        %v604 = vadd.f32 %v602, %v603
        %v605 = vrot.slane %v604, 4
        %v606 = vadd.f32 %v604, %v605
        %v607 = vrot.slane %v606, 2
        %v608 = vadd.f32 %v606, %v607
        %v609 = vrot.slane %v608, 1
        %v610 = vadd.f32 %v608, %v609
        %612 = vrot.lane.b32.xlu0 %v610, 80
        %v613 = vpop.permute.xlu0 %612
        %v615 = vadd.f32 %v593, %v613
        %v616 = vmul.f32 %v615, 0.015625
        %v617 = vadd.f32 %v616, 1e-05
        %v618 = vrsqrt.pop %v617
        %v619 = vld [vmem:[#allocation7] sm:$0x1]
        %v620 = vmul.f32 %v618, %v619
        %v621 = vld [vmem:[#allocation8] sm:$0x1]
        %v622 = vmul.f32 %v529, %v620
        %v623 = vsub.f32 %v621, %v622
        %v624 = vlaneseq
        %v625 = vshrl.u32 %v624, 7
        %v626 = vsub.s32 0, %v625
        %v627 = vrot.slane %v620, %v626
        %v628 = vmul.f32 %v500, %v627
        %v629 = vmul.f32 %v503, %v627
        %v631 = vlaneseq
        %v632 = vshrl.u32 %v631, 7
        %v633 = vsub.s32 0, %v632
        %v634 = vrot.slane %v623, %v633
        %v636 = vadd.f32 %v628, %v634
        %v637 = vadd.f32 %v629, %v634
        %v638 = vmax.f32 %v636, 0.0
        %v639 = vmax.f32 %v637, 0.0
        %v640 = vpack.c.bf16 %v639, %v638
        %v642 = vunpack.c.l.b16 %v640
        %v643 = vunpack.c.h.b16 %v640
        %v644 = vpack.c.b16 %v642, %v642
        %v645 = vpack.c.b16 %v643, %v643
        %vm648 = vcmask 125952
        %649 = vst.msk [vmem:[%s255] sm:$0xf] %vm648, %v644
        %650 = vst.msk [vmem:[%s255 + $0x4] sm:$0xf] %vm648, %v645
        %652 = vrot.lane.b32.xlu0 %v627, 16
        %v653 = vpop.permute.xlu0 %652
        %v655 = vmul.f32 %v500, %v653
        %v656 = vmul.f32 %v503, %v653
        %657 = vrot.lane.b32.xlu0 %v634, 16
        %v658 = vpop.permute.xlu0 %657
        %v660 = vadd.f32 %v655, %v658
        %v661 = vadd.f32 %v656, %v658
        %v662 = vmax.f32 %v660, 0.0
        %v663 = vmax.f32 %v661, 0.0
        %v664 = vpack.c.bf16 %v663, %v662
        %v666 = vunpack.c.l.b16 %v664
        %v667 = vunpack.c.h.b16 %v664
        %v668 = vpack.c.b16 %v666, %v666
        %v669 = vpack.c.b16 %v667, %v667
        %vm672 = vcmask 257152
        %673 = vst.msk [vmem:[%s255] sm:$0xf] %vm672, %v668
        %674 = vst.msk [vmem:[%s255 + $0x4] sm:$0xf] %vm672, %v669
        %675 = vrot.lane.b32.xlu0 %v627, 32
        %v676 = vpop.permute.xlu0 %675
        %v678 = vmul.f32 %v500, %v676
        %v679 = vmul.f32 %v503, %v676
        %680 = vrot.lane.b32.xlu0 %v634, 32
        %v681 = vpop.permute.xlu0 %680
        %v683 = vadd.f32 %v678, %v681
        %v684 = vadd.f32 %v679, %v681
        %v685 = vmax.f32 %v683, 0.0
        %v686 = vmax.f32 %v684, 0.0
        %v687 = vpack.c.bf16 %v686, %v685
        %v689 = vunpack.c.l.b16 %v687
        %v690 = vunpack.c.h.b16 %v687
        %v691 = vpack.c.b16 %v689, %v689
        %v692 = vpack.c.b16 %v690, %v690
        %vm695 = vcmask 388352
        %696 = vst.msk [vmem:[%s255] sm:$0xf] %vm695, %v691
        %697 = vst.msk [vmem:[%s255 + $0x4] sm:$0xf] %vm695, %v692
        %698 = vrot.lane.b32.xlu0 %v627, 48
        %v699 = vpop.permute.xlu0 %698
        %v701 = vmul.f32 %v500, %v699
        %v702 = vmul.f32 %v503, %v699
        %703 = vrot.lane.b32.xlu0 %v634, 48
        %v704 = vpop.permute.xlu0 %703
        %v706 = vadd.f32 %v701, %v704
        %v707 = vadd.f32 %v702, %v704
        %v708 = vmax.f32 %v706, 0.0
        %v709 = vmax.f32 %v707, 0.0
        %v710 = vpack.c.bf16 %v709, %v708
        %v712 = vunpack.c.l.b16 %v710
        %v713 = vunpack.c.h.b16 %v710
        %v714 = vpack.c.b16 %v712, %v712
        %v715 = vpack.c.b16 %v713, %v713
        %vm718 = vcmask 519552
        %719 = vst.msk [vmem:[%s255] sm:$0xf] %vm718, %v714
        %720 = vst.msk [vmem:[%s255 + $0x4] sm:$0xf] %vm718, %v715
        %s721 = sand.u32 %s120, 1
        %s722 = scalar_lea.sflag [#allocation4], %s721
        %s723 = sand.u32 %s120, 1
        %s724 = smul.addr %s723, 8
        %s725 = scalar_lea.vmem [#allocation10], %s724
        // Predicated region
        $region53: #{_lambda_.21} parent=35 // pred_check
          %p726 = pneg %p130
        $region54: #{_lambda_.21} parent=35 // pred_check_branch
          %728 = sbr.rel (%p726) target = $region56
        $region55: #{_lambda_.21} parent=35 // pred_region
          %s730 = ssub.s32 128, 128
          %731 = vsyncadd %s722, %s730
          %s732 = smul.addr %s23, 2
          %s733 = smul.addr %s732, 64
          %s734 = scalar_lea.hbm %s4, %s733
          %s735 = sshll.u32 %s725, 4
          %s736 = int_to_ptr.vmem [resolvable:$true] %s735
          %741 = dma.vmem_to_hbm [thread:$0]  %s736, 128, %s734, %s722, 64, 64, 4
        $region56: #{_lambda_.21} parent=35 // pred_fallthru
          _
      $region36: #{_lambda_.21} parent=5 // pred_fallthru
        _
      %p742 = scmp.le.s32.totalorder 2, %s18
      // Predicated region
      $region57: #{_lambda_.21} parent=5 // pred_check
        %p743 = pneg %p742
      $region58: #{_lambda_.21} parent=5 // pred_check_branch
        %745 = sbr.rel (%p743) target = $region60
      $region59: #{_lambda_.21} parent=5 // pred_region
        %s746 = ssub.s32 %s18, 2
        // Predicated region
        $region61: #{_lambda_.21} parent=59 // pred_check
          %p747 = pneg %p136
        $region62: #{_lambda_.21} parent=59 // pred_check_branch
          %749 = sbr.rel (%p747) target = $region64
        $region63: #{_lambda_.21} parent=59 // pred_region
          %s750 = sand.u32 %s121, 1
          %s751 = scalar_lea.sflag [#allocation4], %s750
          %s752 = sand.u32 %s121, 1
          %s753 = smul.addr %s752, 8
          %s754 = scalar_lea.vmem [#allocation10], %s753
          %755 = dma.done %s751, 128
        $region64: #{_lambda_.21} parent=59 // pred_fallthru
          _
      $region60: #{_lambda_.21} parent=5 // pred_fallthru
        _
    $region6: #{_lambda_.21} parent=1 // loop_footer
      %s22 = sadd.s32 1, %s18
    $region7: #{_lambda_.21} parent=1 // loop_footer_branch
      %17 = sbr.rel target = $region3
    $region8: #{_lambda_.21} parent=1 // loop_exit
      _
    %756 = vsyncpa [#allocation3], 1
    %s757 = scalar_lea.sflag [#allocation3], 1
    %758 = vsyncpa %s757, 1
    %759 = vsyncpa [#allocation6], 1
    %760 = vsyncpa [#allocation9], 1
    %761 = vsyncpa [#allocation4], 1
    %s762 = scalar_lea.sflag [#allocation4], 1
    %763 = vsyncpa %s762, 1

// kernel: _lambda_.22
$region0: #{_lambda_.22}
  #allocation0 [shape = 'u32[]', space=smem, size = 0x4, offset = 0x4, fixed_abs, tag = 'smem constant byte address 0x4 - core index']
  #allocation1 [shape = 'u32[144,128]{1,0:T(1,128)}', space=vmem, size = 0x12000, scoped, tag = 'internal scratch']
  %s0 = inlined_call_operand.hbm [shape: bf16[2,64,144], index: 0, kind: input, shape index: {}]
  %s1 = inlined_call_operand.hbm [shape: bf16[144,32], index: 1, kind: input, shape index: {}]
  %s2 = inlined_call_operand.hbm [shape: f32[1,8], index: 2, kind: input, shape index: {}]
  %s3 = inlined_call_operand.hbm [shape: f32[1,8], index: 3, kind: input, shape index: {}]
  %s4 = inlined_call_operand.hbm [shape: bf16[2,64,32], index: 4, kind: output, shape index: {}]
  %s5 = sld [smem:[#allocation0]]
  $region65: #{_lambda_.22} parent=0
    _
  %s7 = ssub.s32 1, %s5
  %s8 = scalar_select 0, %s7, %s5
  $region1: #{_lambda_.22} parent=0
    #allocation2 [shape = 'u8[65536]{0}', space=vmem, size = 0x10000, scoped, tag = 'input window, operand 0']
    #allocation3 [shape = 's32[2]{0}', space=sflag, size = 0x8, scoped, tag = 'scoped memory for _lambda_.22']
    #allocation4 [shape = 's32[2]{0}', space=sflag, size = 0x8, scoped, tag = 'scoped memory for _lambda_.22']
    #allocation5 [shape = 'u8[36864]{0}', space=vmem, size = 0x9000, scoped, tag = 'input window, operand 1, single buffered']
    #allocation6 [shape = 's32[1]{0}', space=sflag, size = 0x4, scoped, tag = 'scoped memory for _lambda_.22']
    #allocation7 [shape = 'u8[512]{0}', space=vmem, size = 0x400, scoped, tag = 'input window, operand 2, single buffered']
    #allocation8 [shape = 'u8[512]{0}', space=vmem, size = 0x400, scoped, tag = 'input window, operand 3, single buffered']
    #allocation9 [shape = 's32[1]{0}', space=sflag, size = 0x4, scoped, tag = 'scoped memory for _lambda_.22']
    #allocation10 [shape = 'u8[32768]{0}', space=vmem, size = 0x8000, scoped, tag = 'output window, operand 0']
    %9 = vsyncpa [#allocation3], 0
    %s10 = scalar_lea.sflag [#allocation3], 1
    %11 = vsyncpa %s10, 0
    %12 = vsyncpa [#allocation6], 0
    %13 = vsyncpa [#allocation9], 0
    %14 = vsyncpa [#allocation4], 0
    %s15 = scalar_lea.sflag [#allocation4], 1
    %16 = vsyncpa %s15, 0
    loop: start=0, step=1, limit=4
    $region2: #{_lambda_.22} parent=1 // loop_pre_header
      _
    $region3: #{_lambda_.22} parent=1 // loop_header
      %s18 = sphi 0, %s22
      %p19 = scmp.ge.s32.totalorder %s18, 4
      %s28 = sphi 0, %s30
      %s31 = sphi 0, %s28
      %s32 = sphi 0, %s31
      %s48 = sphi 0, %s32
      %s52 = sphi 0, %s52
      %s54 = sphi 0, %s52
      %s55 = sphi 0, %s54
      %s69 = sphi 0, %s55
      %s73 = sphi 0, %s73
      %s75 = sphi 0, %s73
      %s76 = sphi 0, %s75
      %s90 = sphi 0, %s76
      %s94 = sphi 0, %s94
      %s96 = sphi 0, %s94
      %s97 = sphi 0, %s96
      %s111 = sphi 0, %s97
      %s117 = sphi 0, %s119
      %s120 = sphi 0, %s117
      %s121 = sphi 0, %s120
      %s137 = sphi 0, %s121
    $region4: #{_lambda_.22} parent=1 // loop_header_branch
      %21 = sbr.rel (%p19) target = $region8
    $region5: #{_lambda_.22} parent=1 // loop_body
      %s23 = ssub.s32 %s18, 1
      %s24 = ssub.s32 %s18, 2
      %s25 = sadd.s32 %s18, 1
      %s26 = ssub.s32 %s18, %s25
      %p27 = scmp.eq.s32.totalorder %s26, 0
      %s29 = sadd.s32 %s28, 1
      %s30 = scalar_select %p27, %s28, %s29
      %p33 = pneg %p27
      %p34 = scmp.eq.s32.totalorder %s18, 1
      %p35 = por %p33, %p34
      %p36 = scmp.ne.s32.totalorder %s28, %s31
      %p37 = scmp.eq.s32.totalorder %s18, 0
      %p38 = por %p36, %p37
      %p39 = scmp.ne.s32.totalorder %s28, %s31
      %p40 = scmp.eq.s32.totalorder %s23, 1
      %p41 = por %p39, %p40
      %p42 = scmp.ne.s32.totalorder %s31, %s32
      %p43 = scmp.eq.s32.totalorder %s23, 0
      %p44 = por %p42, %p43
      %p45 = scmp.ne.s32.totalorder %s31, %s32
      %p46 = scmp.eq.s32.totalorder %s24, 1
      %p47 = por %p45, %p46
      %p49 = scmp.ne.s32.totalorder %s32, %s48
      %p50 = scmp.eq.s32.totalorder %s24, 0
      %p51 = por %p49, %p50
      %s53 = sadd.s32 %s52, 1
      %p56 = scmp.eq.s32.totalorder %s18, 1
      %p57 = scmp.ne.s32.totalorder %s52, %s54
      %p58 = scmp.eq.s32.totalorder %s18, 0
      %p59 = por %p57, %p58
      %p60 = scmp.ne.s32.totalorder %s52, %s54
      %p61 = scmp.eq.s32.totalorder %s23, 1
      %p62 = por %p60, %p61
      %p63 = scmp.ne.s32.totalorder %s54, %s55
      %p64 = scmp.eq.s32.totalorder %s23, 0
      %p65 = por %p63, %p64
      %p66 = scmp.ne.s32.totalorder %s54, %s55
      %p67 = scmp.eq.s32.totalorder %s24, 1
      %p68 = por %p66, %p67
      %p70 = scmp.ne.s32.totalorder %s55, %s69
      %p71 = scmp.eq.s32.totalorder %s24, 0
      %p72 = por %p70, %p71
      %s74 = sadd.s32 %s73, 1
      %p77 = scmp.eq.s32.totalorder %s18, 1
      %p78 = scmp.ne.s32.totalorder %s73, %s75
      %p79 = scmp.eq.s32.totalorder %s18, 0
      %p80 = por %p78, %p79
      %p81 = scmp.ne.s32.totalorder %s73, %s75
      %p82 = scmp.eq.s32.totalorder %s23, 1
      %p83 = por %p81, %p82
      %p84 = scmp.ne.s32.totalorder %s75, %s76
      %p85 = scmp.eq.s32.totalorder %s23, 0
      %p86 = por %p84, %p85
      %p87 = scmp.ne.s32.totalorder %s75, %s76
      %p88 = scmp.eq.s32.totalorder %s24, 1
      %p89 = por %p87, %p88
      %p91 = scmp.ne.s32.totalorder %s76, %s90
      %p92 = scmp.eq.s32.totalorder %s24, 0
      %p93 = por %p91, %p92
      %s95 = sadd.s32 %s94, 1
      %p98 = scmp.eq.s32.totalorder %s18, 1
      %p99 = scmp.ne.s32.totalorder %s94, %s96
      %p100 = scmp.eq.s32.totalorder %s18, 0
      %p101 = por %p99, %p100
      %p102 = scmp.ne.s32.totalorder %s94, %s96
      %p103 = scmp.eq.s32.totalorder %s23, 1
      %p104 = por %p102, %p103
      %p105 = scmp.ne.s32.totalorder %s96, %s97
      %p106 = scmp.eq.s32.totalorder %s23, 0
      %p107 = por %p105, %p106
      %p108 = scmp.ne.s32.totalorder %s96, %s97
      %p109 = scmp.eq.s32.totalorder %s24, 1
      %p110 = por %p108, %p109
      %p112 = scmp.ne.s32.totalorder %s97, %s111
      %p113 = scmp.eq.s32.totalorder %s24, 0
      %p114 = por %p112, %p113
      %s115 = ssub.s32 %s18, %s25
      %p116 = scmp.eq.s32.totalorder %s115, 0
      %s118 = sadd.s32 %s117, 1
      %s119 = scalar_select %p116, %s117, %s118
      %p122 = pneg %p116
      %p123 = scmp.eq.s32.totalorder %s18, 1
      %p124 = por %p122, %p123
      %p125 = scmp.ne.s32.totalorder %s117, %s120
      %p126 = scmp.eq.s32.totalorder %s18, 0
      %p127 = por %p125, %p126
      %p128 = scmp.ne.s32.totalorder %s117, %s120
      %p129 = scmp.eq.s32.totalorder %s23, 1
      %p130 = por %p128, %p129
      %p131 = scmp.ne.s32.totalorder %s120, %s121
      %p132 = scmp.eq.s32.totalorder %s23, 0
      %p133 = por %p131, %p132
      %p134 = scmp.ne.s32.totalorder %s120, %s121
      %p135 = scmp.eq.s32.totalorder %s24, 1
      %p136 = por %p134, %p135
      %p138 = scmp.ne.s32.totalorder %s121, %s137
      %p139 = scmp.eq.s32.totalorder %s24, 0
      %p140 = por %p138, %p139
      %p141 = scmp.le.s32.totalorder 1, %s18
      %p142 = scmp.lt.s32.totalorder %s18, 3
      %p143 = pnand %p141, %p142
      %p144 = pneg %p143
      // Predicated region
      $region9: #{_lambda_.22} parent=5 // pred_check
        _
      $region10: #{_lambda_.22} parent=5 // pred_check_branch
        %146 = sbr.rel (%p143) target = $region12
      $region11: #{_lambda_.22} parent=5 // pred_region
        %s147 = ssub.s32 %s18, 1
        // Predicated region
        $region13: #{_lambda_.22} parent=11 // pred_check
          %p148 = pneg %p65
        $region14: #{_lambda_.22} parent=11 // pred_check_branch
          %150 = sbr.rel (%p148) target = $region16
        $region15: #{_lambda_.22} parent=11 // pred_region
          %s152 = ssub.s32 1152, 1152
          %153 = vsyncadd [#allocation6], %s152
          %s154 = sshll.u32 [#allocation5], 4
          %s155 = int_to_ptr.vmem [resolvable:$true] %s154
          %160 = dma.hbm_to_vmem [thread:$0]  %s1, 1152, %s155, [#allocation6], 64, 64, 4
        $region16: #{_lambda_.22} parent=11 // pred_fallthru
          _
        // Predicated region
        $region17: #{_lambda_.22} parent=11 // pred_check
          %p161 = pneg %p86
        $region18: #{_lambda_.22} parent=11 // pred_check_branch
          %163 = sbr.rel (%p161) target = $region20
        $region19: #{_lambda_.22} parent=11 // pred_region
          %s165 = ssub.s32 16, 16
          %166 = vsyncadd [#allocation6], %s165
          %s168 = sshll.u32 [#allocation7], 4
          %s169 = int_to_ptr.vmem [resolvable:$true] %s168
          %171 = dma.hbm_to_vmem [thread:$0]  %s2, 16, %s169, [#allocation6]
        $region20: #{_lambda_.22} parent=11 // pred_fallthru
          _
        // Predicated region
        $region21: #{_lambda_.22} parent=11 // pred_check
          %p172 = pneg %p107
        $region22: #{_lambda_.22} parent=11 // pred_check_branch
          %174 = sbr.rel (%p172) target = $region24
        $region23: #{_lambda_.22} parent=11 // pred_region
          %s176 = ssub.s32 16, 16
          %177 = vsyncadd [#allocation9], %s176
          %s179 = sshll.u32 [#allocation8], 4
          %s180 = int_to_ptr.vmem [resolvable:$true] %s179
          %182 = dma.hbm_to_vmem [thread:$0]  %s3, 16, %s180, [#allocation9]
        $region24: #{_lambda_.22} parent=11 // pred_fallthru
          _
      $region12: #{_lambda_.22} parent=5 // pred_fallthru
        _
      %p183 = scmp.lt.s32.totalorder %s18, 2
      // Predicated region
      $region25: #{_lambda_.22} parent=5 // pred_check
        %p184 = pneg %p183
      $region26: #{_lambda_.22} parent=5 // pred_check_branch
        %186 = sbr.rel (%p184) target = $region28
      $region27: #{_lambda_.22} parent=5 // pred_region
        // Predicated region
        $region29: #{_lambda_.22} parent=27 // pred_check
          %p187 = pneg %p38
        $region30: #{_lambda_.22} parent=27 // pred_check_branch
          %189 = sbr.rel (%p187) target = $region32
        $region31: #{_lambda_.22} parent=27 // pred_region
          %s190 = sand.u32 %s28, 1
          %s191 = scalar_lea.sflag [#allocation3], %s190
          %s192 = sand.u32 %s28, 1
          %s193 = smul.addr %s192, 64
          %s194 = scalar_lea.vmem [#allocation2], %s193
          %s196 = ssub.s32 1024, 1024
          %197 = vsyncadd %s191, %s196
          %s198 = smul.addr %s18, 16
          %s199 = smul.addr %s198, 64
          %s200 = scalar_lea.hbm %s0, %s199
          %s201 = sshll.u32 %s194, 4
          %s202 = int_to_ptr.vmem [resolvable:$true] %s201
          %207 = dma.hbm_to_vmem [thread:$0]  %s200, 1024, %s202, %s191, 128, 128, 8
        $region32: #{_lambda_.22} parent=27 // pred_fallthru
          _
      $region28: #{_lambda_.22} parent=5 // pred_fallthru
        _
      %p208 = scmp.le.s32.totalorder 1, %s18
      %p209 = scmp.lt.s32.totalorder %s18, 3
      %p210 = pnand %p208, %p209
      %p211 = pneg %p210
      // Predicated region
      $region33: #{_lambda_.22} parent=5 // pred_check
        _
      $region34: #{_lambda_.22} parent=5 // pred_check_branch
        %213 = sbr.rel (%p210) target = $region36
      $region35: #{_lambda_.22} parent=5 // pred_region
        %s214 = ssub.s32 %s18, 1
        %s215 = sand.u32 %s31, 1
        %s216 = scalar_lea.sflag [#allocation3], %s215
        %s217 = sand.u32 %s31, 1
        %s218 = smul.addr %s217, 64
        %s219 = scalar_lea.vmem [#allocation2], %s218
        // Predicated region
        $region37: #{_lambda_.22} parent=35 // pred_check
          %p220 = pneg %p44
        $region38: #{_lambda_.22} parent=35 // pred_check_branch
          %222 = sbr.rel (%p220) target = $region40
        $region39: #{_lambda_.22} parent=35 // pred_region
          %223 = dma.done %s216, 1024
        $region40: #{_lambda_.22} parent=35 // pred_fallthru
          _
        // Predicated region
        $region41: #{_lambda_.22} parent=35 // pred_check
          %p224 = pneg %p65
        $region42: #{_lambda_.22} parent=35 // pred_check_branch
          %226 = sbr.rel (%p224) target = $region44
        $region43: #{_lambda_.22} parent=35 // pred_region
          %227 = dma.done [#allocation6], 1152
        $region44: #{_lambda_.22} parent=35 // pred_fallthru
          _
        // Predicated region
        $region45: #{_lambda_.22} parent=35 // pred_check
          %p228 = pneg %p86
        $region46: #{_lambda_.22} parent=35 // pred_check_branch
          %230 = sbr.rel (%p228) target = $region48
        $region47: #{_lambda_.22} parent=35 // pred_region
          %231 = dma.done [#allocation6], 16
        $region48: #{_lambda_.22} parent=35 // pred_fallthru
          _
        // Predicated region
        $region49: #{_lambda_.22} parent=35 // pred_check
          %p232 = pneg %p107
        $region50: #{_lambda_.22} parent=35 // pred_check_branch
          %234 = sbr.rel (%p232) target = $region52
        $region51: #{_lambda_.22} parent=35 // pred_region
          %235 = dma.done [#allocation9], 16
        $region52: #{_lambda_.22} parent=35 // pred_fallthru
          _
        %s236 = sand.u32 %s31, 1
        %s237 = scalar_lea.sflag [#allocation3], %s236
        %s238 = sand.u32 %s31, 1
        %s239 = smul.addr %s238, 64
        %s240 = scalar_lea.vmem [#allocation2], %s239
        %p241 = pneg %p44
        %p242 = pneg %p41
        %p243 = pneg %p65
        %p244 = pneg %p62
        %p245 = pneg %p86
        %p246 = pneg %p83
        %p247 = pneg %p107
        %p248 = pneg %p104
        %p249 = pneg %p133
        %p250 = pneg %p130
        %s251 = sand.u32 %s120, 1
        %s252 = scalar_lea.sflag [#allocation4], %s251
        %s253 = sand.u32 %s120, 1
        %s254 = smul.addr %s253, 32
        %s255 = scalar_lea.vmem [#allocation10], %s254
        %v257 = vld [vmem:[%s219] sm:$0xff]
        %v258 = vld [vmem:[%s219 + $0x8] sm:$0xff]
        %v259 = vld [vmem:[%s219 + $0x10] sm:$0xff]
        %v260 = vld [vmem:[%s219 + $0x18] sm:$0xff]
        %v261 = vld [vmem:[%s219 + $0x20] sm:$0xff]
        %v262 = vld [vmem:[%s219 + $0x28] sm:$0xff]
        %v263 = vld [vmem:[%s219 + $0x30] sm:$0xff]
        %v264 = vld [vmem:[%s219 + $0x38] sm:$0xff]
        %v265 = vld [vmem:[#allocation5] sm:$0xf]
        %v266 = vld [vmem:[#allocation5 + $0x4] sm:$0xf]
        %v267 = vld [vmem:[#allocation5 + $0x8] sm:$0xf]
        %v268 = vld [vmem:[#allocation5 + $0xc] sm:$0xf]
        %v269 = vld [vmem:[#allocation5 + $0x10] sm:$0xf]
        %v270 = vld [vmem:[#allocation5 + $0x14] sm:$0xf]
        %v271 = vld [vmem:[#allocation5 + $0x18] sm:$0xf]
        %v272 = vld [vmem:[#allocation5 + $0x1c] sm:$0xf]
        %v273 = vld [vmem:[#allocation5 + $0x20] sm:$0xf]
        %v274 = vld [vmem:[#allocation5 + $0x24] sm:$0xf]
        %v275 = vld [vmem:[#allocation5 + $0x28] sm:$0xf]
        %v276 = vld [vmem:[#allocation5 + $0x2c] sm:$0xf]
        %v277 = vld [vmem:[#allocation5 + $0x30] sm:$0xf]
        %v278 = vld [vmem:[#allocation5 + $0x34] sm:$0xf]
        %v279 = vld [vmem:[#allocation5 + $0x38] sm:$0xf]
        %v280 = vld [vmem:[#allocation5 + $0x3c] sm:$0xf]
        %v281 = vld [vmem:[#allocation5 + $0x40] sm:$0xf]
        %v282 = vld [vmem:[#allocation5 + $0x44] sm:$0xf]
        %v291 = vunpack.c.l.b16 %v257
        %v292 = vunpack.c.h.b16 %v257
        %v293 = vunpack.c.l.b16 %v258
        %v294 = vunpack.c.h.b16 %v258
        %v295 = vunpack.c.l.b16 %v259
        %v296 = vunpack.c.h.b16 %v259
        %v297 = vunpack.c.l.b16 %v260
        %v298 = vunpack.c.h.b16 %v260
        %v299 = vunpack.c.l.b16 %v261
        %v300 = vunpack.c.h.b16 %v261
        %v301 = vunpack.c.l.b16 %v262
        %v302 = vunpack.c.h.b16 %v262
        %v303 = vunpack.c.l.b16 %v263
        %v304 = vunpack.c.h.b16 %v263
        %v305 = vunpack.c.l.b16 %v264
        %v306 = vunpack.c.h.b16 %v264
        %v307 = vpack.c.b16 %v293, %v291
        %v308 = vpack.c.b16 %v294, %v292
        %v309 = vpack.c.b16 %v297, %v295
        %v310 = vpack.c.b16 %v298, %v296
        %v311 = vpack.c.b16 %v301, %v299
        %v312 = vpack.c.b16 %v302, %v300
        %v313 = vpack.c.b16 %v305, %v303
        %v314 = vpack.c.b16 %v306, %v304
        %v337 = vunpack.c.l.b16 %v265
        %v338 = vunpack.c.l.b16 %v266
        %v339 = vunpack.c.l.b16 %v267
        %v340 = vunpack.c.l.b16 %v268
        %v341 = vunpack.c.l.b16 %v269
        %v342 = vunpack.c.l.b16 %v270
        %v343 = vunpack.c.l.b16 %v271
        %v344 = vunpack.c.l.b16 %v272
        %v345 = vunpack.c.l.b16 %v273
        %v346 = vunpack.c.l.b16 %v274
        %v347 = vunpack.c.l.b16 %v275
        %v348 = vunpack.c.l.b16 %v276
        %v349 = vunpack.c.l.b16 %v277
        %v350 = vunpack.c.l.b16 %v278
        %v351 = vunpack.c.l.b16 %v279
        %v352 = vunpack.c.l.b16 %v280
        %v353 = vunpack.c.l.b16 %v281
        %v354 = vunpack.c.l.b16 %v282
        %v355 = vpack.c.b16 %v338, %v337
        %v356 = vpack.c.b16 %v340, %v339
        %v357 = vpack.c.b16 %v342, %v341
        %v358 = vpack.c.b16 %v344, %v343
        %v359 = vpack.c.b16 %v346, %v345
        %v360 = vpack.c.b16 %v348, %v347
        %v361 = vpack.c.b16 %v350, %v349
        %v362 = vpack.c.b16 %v352, %v351
        %v363 = vpack.c.b16 %v354, %v353
        %vm373 = vcmask 130048
        %v375 = vsel %vm373, %v308, 0
        %v378 = vsel %vm373, %v310, 0
        %v381 = vsel %vm373, %v312, 0
        %v384 = vsel %vm373, %v314, 0
        %386 = vmatprep.subr.bf16.mxu0 0
        %387 = vmatpush1.bf16.msra.mxu0 %v355
        %388 = vmatprep.subr.bf16.mxu0 0
        %389 = vmatpush1.bf16.msra.mxu0 %v356
        %390 = vmatprep.subr.bf16.mxu0 0
        %391 = vmatpush1.bf16.msra.mxu0 %v357
        %392 = vmatprep.subr.bf16.mxu0 0
        %393 = vmatpush1.bf16.msra.mxu0 %v358
        %394 = vmatprep.subr.bf16.mxu0 0
        %395 = vmatpush1.bf16.msra.mxu0 %v359
        %396 = vmatprep.subr.bf16.mxu0 0
        %397 = vmatpush1.bf16.msra.mxu0 %v360
        %398 = vmatprep.subr.bf16.mxu0 0
        %399 = vmatpush1.bf16.msra.mxu0 %v361
        %400 = vmatprep.subr.bf16.mxu0 0
        %401 = vmatpush1.bf16.msra.mxu0 %v362
        %402 = vmatprep.subr.bf16.mxu0 0
        %403 = vmatpush1.bf16.msra.mxu0 %v363
        %404 = vmatprep.subr.bf16.mxu0 0
        %405 = vmatpush1.bf16.msra.mxu0 0
        %406 = vmatprep.subr.bf16.mxu0 0
        %407 = vmatpush1.bf16.msra.mxu0 0
        %408 = vmatprep.subr.bf16.mxu0 0
        %409 = vmatpush1.bf16.msra.mxu0 0
        %410 = vmatprep.subr.bf16.mxu0 0
        %411 = vmatpush1.bf16.msra.mxu0 0
        %412 = vmatprep.subr.bf16.mxu0 0
        %413 = vmatpush1.bf16.msra.mxu0 0
        %414 = vmatprep.subr.bf16.mxu0 0
        %415 = vmatpush1.bf16.msra.mxu0 0
        %416 = vmatprep.subr.bf16.mxu0 0
        %417 = vmatpush1.bf16.msra.mxu0 0
        %418 = vmatprep.mubr.bf16.mxu0 %v375
        %419 = vmatmul.mubr.bf16.gmra.mrb[0].mxu0 %v307
        %v420 = vpop.f32.mrb[0].mxu0
        %v421 = vadd.f32 0.0, %v420
        %v422 = vpop.f32.mrb[0].mxu0
        %v423 = vpop.f32.mrb[0].mxu0
        %v424 = vadd.f32 0.0, %v423
        %v425 = vpop.f32.mrb[0].mxu0
        %426 = vmatprep.mubr.bf16.mxu0 %v378
        %427 = vmatmul.mubr.bf16.gmra.mrb[0].mxu0 %v309
        %v428 = vpop.f32.mrb[0].mxu0
        %v429 = vadd.f32 0.0, %v428
        %v430 = vpop.f32.mrb[0].mxu0
        %v431 = vpop.f32.mrb[0].mxu0
        %v432 = vadd.f32 0.0, %v431
        %v433 = vpop.f32.mrb[0].mxu0
        %434 = vmatprep.mubr.bf16.mxu0 %v381
        %435 = vmatmul.mubr.bf16.gmra.mrb[0].mxu0 %v311
        %v436 = vpop.f32.mrb[0].mxu0
        %v437 = vadd.f32 0.0, %v436
        %v438 = vpop.f32.mrb[0].mxu0
        %v439 = vpop.f32.mrb[0].mxu0
        %v440 = vadd.f32 0.0, %v439
        %v441 = vpop.f32.mrb[0].mxu0
        %442 = vmatprep.mubr.bf16.mxu0 %v384
        %443 = vmatmul.mubr.bf16.gmra.mrb[0].mxu0 %v313
        %v444 = vpop.f32.mrb[0].mxu0
        %v445 = vadd.f32 0.0, %v444
        %v446 = vpop.f32.mrb[0].mxu0
        %v447 = vpop.f32.mrb[0].mxu0
        %v448 = vadd.f32 0.0, %v447
        %v449 = vpop.f32.mrb[0].mxu0
        %450 = vdwg.mxu0
        %vm451 = vcmask 261120
        %v452 = vsel %vm451, %v421, 0.0
        %v453 = vsel %vm451, %v424, 0.0
        %v454 = vadd.f32 %v452, %v453
        %v455 = vsel %vm451, %v429, 0.0
        %v456 = vadd.f32 %v454, %v455
        %v457 = vsel %vm451, %v432, 0.0
        %v458 = vadd.f32 %v456, %v457
        %v459 = vsel %vm451, %v437, 0.0
        %v460 = vadd.f32 %v458, %v459
        %v461 = vsel %vm451, %v440, 0.0
        %v462 = vadd.f32 %v460, %v461
        %v463 = vsel %vm451, %v445, 0.0
        %v464 = vadd.f32 %v462, %v463
        %v465 = vsel %vm451, %v448, 0.0
        %v466 = vadd.f32 %v464, %v465
        %v467 = vrot.slane %v466, 4
        %v468 = vadd.f32 %v466, %v467
        %v469 = vrot.slane %v468, 2
        %v470 = vadd.f32 %v468, %v469
        %v471 = vrot.slane %v470, 1
        %v472 = vadd.f32 %v470, %v471
        %474 = vrot.lane.b32.xlu0 %v472, 120
        %v475 = vpop.permute.xlu0 %474
        %v477 = vadd.f32 %v472, %v475
        %478 = vrot.lane.b32.xlu0 %v472, 112
        %v479 = vpop.permute.xlu0 %478
        %v481 = vadd.f32 %v477, %v479
        %482 = vrot.lane.b32.xlu0 %v472, 104
        %v483 = vpop.permute.xlu0 %482
        %v485 = vadd.f32 %v481, %v483
        %v486 = vmul.f32 %v485, 0.00390625
        %v487 = vlaneseq
        %v488 = vshrl.u32 %v487, 7
        %v489 = vsub.s32 0, %v488
        %v490 = vrot.slane %v486, %v489
        %v491 = vsub.f32 %v421, %v490
        %v492 = vsub.f32 %v424, %v490
        %v493 = vsub.f32 %v429, %v490
        %v494 = vsub.f32 %v432, %v490
        %v495 = vsub.f32 %v437, %v490
        %v496 = vsub.f32 %v440, %v490
        %v497 = vsub.f32 %v445, %v490
        %v498 = vsub.f32 %v448, %v490
        %v499 = vmul.f32 %v491, %v491
        %v500 = vmul.f32 %v492, %v492
        %v501 = vmul.f32 %v493, %v493
        %v502 = vmul.f32 %v494, %v494
        %v503 = vmul.f32 %v495, %v495
        %v504 = vmul.f32 %v496, %v496
        %v505 = vmul.f32 %v497, %v497
        %v506 = vmul.f32 %v498, %v498
        %vm507 = vcmask 64512
        %v508 = vsel %vm507, %v499, 0.0
        %v509 = vsel %vm507, %v500, 0.0
        %v510 = vadd.f32 %v508, %v509
        %v511 = vsel %vm507, %v501, 0.0
        %v512 = vadd.f32 %v510, %v511
        %v513 = vsel %vm507, %v502, 0.0
        %v514 = vadd.f32 %v512, %v513
        %v515 = vsel %vm507, %v503, 0.0
        %v516 = vadd.f32 %v514, %v515
        %v517 = vsel %vm507, %v504, 0.0
        %v518 = vadd.f32 %v516, %v517
        %v519 = vsel %vm507, %v505, 0.0
        %v520 = vadd.f32 %v518, %v519
        %v521 = vsel %vm507, %v506, 0.0
        %v522 = vadd.f32 %v520, %v521
        %v523 = vrot.slane %v522, 4
        %v524 = vadd.f32 %v522, %v523
        %v525 = vrot.slane %v524, 2
        %v526 = vadd.f32 %v524, %v525
        %v527 = vrot.slane %v526, 1
        %v528 = vadd.f32 %v526, %v527
        %v529 = vadd.f32 %v528, 0.0
        %531 = vrot.lane.b32.xlu0 %v490, 8
        %v532 = vpop.permute.xlu0 %531
        %v534 = vsub.f32 %v421, %v532
        %v535 = vsub.f32 %v424, %v532
        %v536 = vsub.f32 %v429, %v532
        %v537 = vsub.f32 %v432, %v532
        %v538 = vsub.f32 %v437, %v532
        %v539 = vsub.f32 %v440, %v532
        %v540 = vsub.f32 %v445, %v532
        %v541 = vsub.f32 %v448, %v532
        %v542 = vmul.f32 %v534, %v534
        %v543 = vmul.f32 %v535, %v535
        %v544 = vmul.f32 %v536, %v536
        %v545 = vmul.f32 %v537, %v537
        %v546 = vmul.f32 %v538, %v538
        %v547 = vmul.f32 %v539, %v539
        %v548 = vmul.f32 %v540, %v540
        %v549 = vmul.f32 %v541, %v541
        %vm550 = vcmask 130112
        %v551 = vsel %vm550, %v542, 0.0
        %v552 = vsel %vm550, %v543, 0.0
        %v553 = vadd.f32 %v551, %v552
        %v554 = vsel %vm550, %v544, 0.0
        %v555 = vadd.f32 %v553, %v554
        %v556 = vsel %vm550, %v545, 0.0
        %v557 = vadd.f32 %v555, %v556
        %v558 = vsel %vm550, %v546, 0.0
        %v559 = vadd.f32 %v557, %v558
        %v560 = vsel %vm550, %v547, 0.0
        %v561 = vadd.f32 %v559, %v560
        %v562 = vsel %vm550, %v548, 0.0
        %v563 = vadd.f32 %v561, %v562
        %v564 = vsel %vm550, %v549, 0.0
        %v565 = vadd.f32 %v563, %v564
        %v566 = vrot.slane %v565, 4
        %v567 = vadd.f32 %v565, %v566
        %v568 = vrot.slane %v567, 2
        %v569 = vadd.f32 %v567, %v568
        %v570 = vrot.slane %v569, 1
        %v571 = vadd.f32 %v569, %v570
        %573 = vrot.lane.b32.xlu0 %v571, 120
        %v574 = vpop.permute.xlu0 %573
        %v576 = vadd.f32 %v529, %v574
        %577 = vrot.lane.b32.xlu0 %v490, 16
        %v578 = vpop.permute.xlu0 %577
        %v580 = vsub.f32 %v421, %v578
        %v581 = vsub.f32 %v424, %v578
        %v582 = vsub.f32 %v429, %v578
        %v583 = vsub.f32 %v432, %v578
        %v584 = vsub.f32 %v437, %v578
        %v585 = vsub.f32 %v440, %v578
        %v586 = vsub.f32 %v445, %v578
        %v587 = vsub.f32 %v448, %v578
        %v588 = vmul.f32 %v580, %v580
        %v589 = vmul.f32 %v581, %v581
        %v590 = vmul.f32 %v582, %v582
        %v591 = vmul.f32 %v583, %v583
        %v592 = vmul.f32 %v584, %v584
        %v593 = vmul.f32 %v585, %v585
        %v594 = vmul.f32 %v586, %v586
        %v595 = vmul.f32 %v587, %v587
        %vm596 = vcmask 195712
        %v597 = vsel %vm596, %v588, 0.0
        %v598 = vsel %vm596, %v589, 0.0
        %v599 = vadd.f32 %v597, %v598
        %v600 = vsel %vm596, %v590, 0.0
        %v601 = vadd.f32 %v599, %v600
        %v602 = vsel %vm596, %v591, 0.0
        %v603 = vadd.f32 %v601, %v602
        %v604 = vsel %vm596, %v592, 0.0
        %v605 = vadd.f32 %v603, %v604
        %v606 = vsel %vm596, %v593, 0.0
        %v607 = vadd.f32 %v605, %v606
        %v608 = vsel %vm596, %v594, 0.0
        %v609 = vadd.f32 %v607, %v608
        %v610 = vsel %vm596, %v595, 0.0
        %v611 = vadd.f32 %v609, %v610
        %v612 = vrot.slane %v611, 4
        %v613 = vadd.f32 %v611, %v612
        %v614 = vrot.slane %v613, 2
        %v615 = vadd.f32 %v613, %v614
        %v616 = vrot.slane %v615, 1
        %v617 = vadd.f32 %v615, %v616
        %619 = vrot.lane.b32.xlu0 %v617, 112
        %v620 = vpop.permute.xlu0 %619
        %v622 = vadd.f32 %v576, %v620
        %623 = vrot.lane.b32.xlu0 %v490, 24
        %v624 = vpop.permute.xlu0 %623
        %v626 = vsub.f32 %v421, %v624
        %v627 = vsub.f32 %v424, %v624
        %v628 = vsub.f32 %v429, %v624
        %v629 = vsub.f32 %v432, %v624
        %v630 = vsub.f32 %v437, %v624
        %v631 = vsub.f32 %v440, %v624
        %v632 = vsub.f32 %v445, %v624
        %v633 = vsub.f32 %v448, %v624
        %v634 = vmul.f32 %v626, %v626
        %v635 = vmul.f32 %v627, %v627
        %v636 = vmul.f32 %v628, %v628
        %v637 = vmul.f32 %v629, %v629
        %v638 = vmul.f32 %v630, %v630
        %v639 = vmul.f32 %v631, %v631
        %v640 = vmul.f32 %v632, %v632
        %v641 = vmul.f32 %v633, %v633
        %vm642 = vcmask 261312
        %v643 = vsel %vm642, %v634, 0.0
        %v644 = vsel %vm642, %v635, 0.0
        %v645 = vadd.f32 %v643, %v644
        %v646 = vsel %vm642, %v636, 0.0
        %v647 = vadd.f32 %v645, %v646
        %v648 = vsel %vm642, %v637, 0.0
        %v649 = vadd.f32 %v647, %v648
        %v650 = vsel %vm642, %v638, 0.0
        %v651 = vadd.f32 %v649, %v650
        %v652 = vsel %vm642, %v639, 0.0
        %v653 = vadd.f32 %v651, %v652
        %v654 = vsel %vm642, %v640, 0.0
        %v655 = vadd.f32 %v653, %v654
        %v656 = vsel %vm642, %v641, 0.0
        %v657 = vadd.f32 %v655, %v656
        %v658 = vrot.slane %v657, 4
        %v659 = vadd.f32 %v657, %v658
        %v660 = vrot.slane %v659, 2
        %v661 = vadd.f32 %v659, %v660
        %v662 = vrot.slane %v661, 1
        %v663 = vadd.f32 %v661, %v662
        %665 = vrot.lane.b32.xlu0 %v663, 104
        %v666 = vpop.permute.xlu0 %665
        %v668 = vadd.f32 %v622, %v666
        %v669 = vmul.f32 %v668, 0.00390625
        %v670 = vadd.f32 %v669, 1e-05
        %v671 = vrsqrt.pop %v670
        %v672 = vld [vmem:[#allocation7] sm:$0x1]
        %v673 = vmul.f32 %v671, %v672
        %v674 = vld [vmem:[#allocation8] sm:$0x1]
        %v675 = vmul.f32 %v486, %v673
        %v676 = vsub.f32 %v674, %v675
        %v677 = vlaneseq
        %v678 = vshrl.u32 %v677, 7
        %v679 = vsub.s32 0, %v678
        %v680 = vrot.slane %v673, %v679
        %v681 = vmul.f32 %v421, %v680
        %v682 = vmul.f32 %v424, %v680
        %v683 = vmul.f32 %v429, %v680
        %v684 = vmul.f32 %v432, %v680
        %v685 = vmul.f32 %v437, %v680
        %v686 = vmul.f32 %v440, %v680
        %v687 = vmul.f32 %v445, %v680
        %v688 = vmul.f32 %v448, %v680
        %v690 = vlaneseq
        %v691 = vshrl.u32 %v690, 7
        %v692 = vsub.s32 0, %v691
        %v693 = vrot.slane %v676, %v692
        %v695 = vadd.f32 %v681, %v693
        %v696 = vadd.f32 %v682, %v693
        %v697 = vadd.f32 %v683, %v693
        %v698 = vadd.f32 %v684, %v693
        %v699 = vadd.f32 %v685, %v693
        %v700 = vadd.f32 %v686, %v693
        %v701 = vadd.f32 %v687, %v693
        %v702 = vadd.f32 %v688, %v693
        %v703 = vmax.f32 %v695, 0.0
        %v704 = vmax.f32 %v696, 0.0
        %v705 = vmax.f32 %v697, 0.0
        %v706 = vmax.f32 %v698, 0.0
        %v707 = vmax.f32 %v699, 0.0
        %v708 = vmax.f32 %v700, 0.0
        %v709 = vmax.f32 %v701, 0.0
        %v710 = vmax.f32 %v702, 0.0
        %v711 = vpack.c.bf16 %v704, %v703
        %v712 = vpack.c.bf16 %v706, %v705
        %v713 = vpack.c.bf16 %v708, %v707
        %v714 = vpack.c.bf16 %v710, %v709
        %v719 = vunpack.c.l.b16 %v711
        %v720 = vunpack.c.h.b16 %v711
        %v721 = vunpack.c.l.b16 %v712
        %v722 = vunpack.c.h.b16 %v712
        %v723 = vunpack.c.l.b16 %v713
        %v724 = vunpack.c.h.b16 %v713
        %v725 = vunpack.c.l.b16 %v714
        %v726 = vunpack.c.h.b16 %v714
        %v727 = vpack.c.b16 %v719, %v719
        %v728 = vpack.c.b16 %v720, %v720
        %v729 = vpack.c.b16 %v721, %v721
        %v730 = vpack.c.b16 %v722, %v722
        %v731 = vpack.c.b16 %v723, %v723
        %v732 = vpack.c.b16 %v724, %v724
        %v733 = vpack.c.b16 %v725, %v725
        %v734 = vpack.c.b16 %v726, %v726
        %vm743 = vcmask 60416
        %744 = vst.msk [vmem:[%s255] sm:$0xf] %vm743, %v727
        %745 = vst.msk [vmem:[%s255 + $0x4] sm:$0xf] %vm743, %v728
        %746 = vst.msk [vmem:[%s255 + $0x8] sm:$0xf] %vm743, %v729
        %747 = vst.msk [vmem:[%s255 + $0xc] sm:$0xf] %vm743, %v730
        %748 = vst.msk [vmem:[%s255 + $0x10] sm:$0xf] %vm743, %v731
        %749 = vst.msk [vmem:[%s255 + $0x14] sm:$0xf] %vm743, %v732
        %750 = vst.msk [vmem:[%s255 + $0x18] sm:$0xf] %vm743, %v733
        %751 = vst.msk [vmem:[%s255 + $0x1c] sm:$0xf] %vm743, %v734
        %753 = vrot.lane.b32.xlu0 %v680, 8
        %v754 = vpop.permute.xlu0 %753
        %v756 = vmul.f32 %v421, %v754
        %v757 = vmul.f32 %v424, %v754
        %v758 = vmul.f32 %v429, %v754
        %v759 = vmul.f32 %v432, %v754
        %v760 = vmul.f32 %v437, %v754
        %v761 = vmul.f32 %v440, %v754
        %v762 = vmul.f32 %v445, %v754
        %v763 = vmul.f32 %v448, %v754
        %764 = vrot.lane.b32.xlu0 %v693, 8
        %v765 = vpop.permute.xlu0 %764
        %v767 = vadd.f32 %v756, %v765
        %v768 = vadd.f32 %v757, %v765
        %v769 = vadd.f32 %v758, %v765
        %v770 = vadd.f32 %v759, %v765
        %v771 = vadd.f32 %v760, %v765
        %v772 = vadd.f32 %v761, %v765
        %v773 = vadd.f32 %v762, %v765
        %v774 = vadd.f32 %v763, %v765
        %v775 = vmax.f32 %v767, 0.0
        %v776 = vmax.f32 %v768, 0.0
        %v777 = vmax.f32 %v769, 0.0
        %v778 = vmax.f32 %v770, 0.0
        %v779 = vmax.f32 %v771, 0.0
        %v780 = vmax.f32 %v772, 0.0
        %v781 = vmax.f32 %v773, 0.0
        %v782 = vmax.f32 %v774, 0.0
        %v783 = vpack.c.bf16 %v776, %v775
        %v784 = vpack.c.bf16 %v778, %v777
        %v785 = vpack.c.bf16 %v780, %v779
        %v786 = vpack.c.bf16 %v782, %v781
        %v791 = vunpack.c.l.b16 %v783
        %v792 = vunpack.c.h.b16 %v783
        %v793 = vunpack.c.l.b16 %v784
        %v794 = vunpack.c.h.b16 %v784
        %v795 = vunpack.c.l.b16 %v785
        %v796 = vunpack.c.h.b16 %v785
        %v797 = vunpack.c.l.b16 %v786
        %v798 = vunpack.c.h.b16 %v786
        %v799 = vpack.c.b16 %v791, %v791
        %v800 = vpack.c.b16 %v792, %v792
        %v801 = vpack.c.b16 %v793, %v793
        %v802 = vpack.c.b16 %v794, %v794
        %v803 = vpack.c.b16 %v795, %v795
        %v804 = vpack.c.b16 %v796, %v796
        %v805 = vpack.c.b16 %v797, %v797
        %v806 = vpack.c.b16 %v798, %v798
        %vm815 = vcmask 126016
        %816 = vst.msk [vmem:[%s255] sm:$0xf] %vm815, %v799
        %817 = vst.msk [vmem:[%s255 + $0x4] sm:$0xf] %vm815, %v800
        %818 = vst.msk [vmem:[%s255 + $0x8] sm:$0xf] %vm815, %v801
        %819 = vst.msk [vmem:[%s255 + $0xc] sm:$0xf] %vm815, %v802
        %820 = vst.msk [vmem:[%s255 + $0x10] sm:$0xf] %vm815, %v803
        %821 = vst.msk [vmem:[%s255 + $0x14] sm:$0xf] %vm815, %v804
        %822 = vst.msk [vmem:[%s255 + $0x18] sm:$0xf] %vm815, %v805
        %823 = vst.msk [vmem:[%s255 + $0x1c] sm:$0xf] %vm815, %v806
        %824 = vrot.lane.b32.xlu0 %v680, 16
        %v825 = vpop.permute.xlu0 %824
        %v827 = vmul.f32 %v421, %v825
        %v828 = vmul.f32 %v424, %v825
        %v829 = vmul.f32 %v429, %v825
        %v830 = vmul.f32 %v432, %v825
        %v831 = vmul.f32 %v437, %v825
        %v832 = vmul.f32 %v440, %v825
        %v833 = vmul.f32 %v445, %v825
        %v834 = vmul.f32 %v448, %v825
        %835 = vrot.lane.b32.xlu0 %v693, 16
        %v836 = vpop.permute.xlu0 %835
        %v838 = vadd.f32 %v827, %v836
        %v839 = vadd.f32 %v828, %v836
        %v840 = vadd.f32 %v829, %v836
        %v841 = vadd.f32 %v830, %v836
        %v842 = vadd.f32 %v831, %v836
        %v843 = vadd.f32 %v832, %v836
        %v844 = vadd.f32 %v833, %v836
        %v845 = vadd.f32 %v834, %v836
        %v846 = vmax.f32 %v838, 0.0
        %v847 = vmax.f32 %v839, 0.0
        %v848 = vmax.f32 %v840, 0.0
        %v849 = vmax.f32 %v841, 0.0
        %v850 = vmax.f32 %v842, 0.0
        %v851 = vmax.f32 %v843, 0.0
        %v852 = vmax.f32 %v844, 0.0
        %v853 = vmax.f32 %v845, 0.0
        %v854 = vpack.c.bf16 %v847, %v846
        %v855 = vpack.c.bf16 %v849, %v848
        %v856 = vpack.c.bf16 %v851, %v850
        %v857 = vpack.c.bf16 %v853, %v852
        %v862 = vunpack.c.l.b16 %v854
        %v863 = vunpack.c.h.b16 %v854
        %v864 = vunpack.c.l.b16 %v855
        %v865 = vunpack.c.h.b16 %v855
        %v866 = vunpack.c.l.b16 %v856
        %v867 = vunpack.c.h.b16 %v856
        %v868 = vunpack.c.l.b16 %v857
        %v869 = vunpack.c.h.b16 %v857
        %v870 = vpack.c.b16 %v862, %v862
        %v871 = vpack.c.b16 %v863, %v863
        %v872 = vpack.c.b16 %v864, %v864
        %v873 = vpack.c.b16 %v865, %v865
        %v874 = vpack.c.b16 %v866, %v866
        %v875 = vpack.c.b16 %v867, %v867
        %v876 = vpack.c.b16 %v868, %v868
        %v877 = vpack.c.b16 %v869, %v869
        %vm886 = vcmask 191616
        %887 = vst.msk [vmem:[%s255] sm:$0xf] %vm886, %v870
        %888 = vst.msk [vmem:[%s255 + $0x4] sm:$0xf] %vm886, %v871
        %889 = vst.msk [vmem:[%s255 + $0x8] sm:$0xf] %vm886, %v872
        %890 = vst.msk [vmem:[%s255 + $0xc] sm:$0xf] %vm886, %v873
        %891 = vst.msk [vmem:[%s255 + $0x10] sm:$0xf] %vm886, %v874
        %892 = vst.msk [vmem:[%s255 + $0x14] sm:$0xf] %vm886, %v875
        %893 = vst.msk [vmem:[%s255 + $0x18] sm:$0xf] %vm886, %v876
        %894 = vst.msk [vmem:[%s255 + $0x1c] sm:$0xf] %vm886, %v877
        %895 = vrot.lane.b32.xlu0 %v680, 24
        %v896 = vpop.permute.xlu0 %895
        %v898 = vmul.f32 %v421, %v896
        %v899 = vmul.f32 %v424, %v896
        %v900 = vmul.f32 %v429, %v896
        %v901 = vmul.f32 %v432, %v896
        %v902 = vmul.f32 %v437, %v896
        %v903 = vmul.f32 %v440, %v896
        %v904 = vmul.f32 %v445, %v896
        %v905 = vmul.f32 %v448, %v896
        %906 = vrot.lane.b32.xlu0 %v693, 24
        %v907 = vpop.permute.xlu0 %906
        %v909 = vadd.f32 %v898, %v907
        %v910 = vadd.f32 %v899, %v907
        %v911 = vadd.f32 %v900, %v907
        %v912 = vadd.f32 %v901, %v907
        %v913 = vadd.f32 %v902, %v907
        %v914 = vadd.f32 %v903, %v907
        %v915 = vadd.f32 %v904, %v907
        %v916 = vadd.f32 %v905, %v907
        %v917 = vmax.f32 %v909, 0.0
        %v918 = vmax.f32 %v910, 0.0
        %v919 = vmax.f32 %v911, 0.0
        %v920 = vmax.f32 %v912, 0.0
        %v921 = vmax.f32 %v913, 0.0
        %v922 = vmax.f32 %v914, 0.0
        %v923 = vmax.f32 %v915, 0.0
        %v924 = vmax.f32 %v916, 0.0
        %v925 = vpack.c.bf16 %v918, %v917
        %v926 = vpack.c.bf16 %v920, %v919
        %v927 = vpack.c.bf16 %v922, %v921
        %v928 = vpack.c.bf16 %v924, %v923
        %v933 = vunpack.c.l.b16 %v925
        %v934 = vunpack.c.h.b16 %v925
        %v935 = vunpack.c.l.b16 %v926
        %v936 = vunpack.c.h.b16 %v926
        %v937 = vunpack.c.l.b16 %v927
        %v938 = vunpack.c.h.b16 %v927
        %v939 = vunpack.c.l.b16 %v928
        %v940 = vunpack.c.h.b16 %v928
        %v941 = vpack.c.b16 %v933, %v933
        %v942 = vpack.c.b16 %v934, %v934
        %v943 = vpack.c.b16 %v935, %v935
        %v944 = vpack.c.b16 %v936, %v936
        %v945 = vpack.c.b16 %v937, %v937
        %v946 = vpack.c.b16 %v938, %v938
        %v947 = vpack.c.b16 %v939, %v939
        %v948 = vpack.c.b16 %v940, %v940
        %vm957 = vcmask 257216
        %958 = vst.msk [vmem:[%s255] sm:$0xf] %vm957, %v941
        %959 = vst.msk [vmem:[%s255 + $0x4] sm:$0xf] %vm957, %v942
        %960 = vst.msk [vmem:[%s255 + $0x8] sm:$0xf] %vm957, %v943
        %961 = vst.msk [vmem:[%s255 + $0xc] sm:$0xf] %vm957, %v944
        %962 = vst.msk [vmem:[%s255 + $0x10] sm:$0xf] %vm957, %v945
        %963 = vst.msk [vmem:[%s255 + $0x14] sm:$0xf] %vm957, %v946
        %964 = vst.msk [vmem:[%s255 + $0x18] sm:$0xf] %vm957, %v947
        %965 = vst.msk [vmem:[%s255 + $0x1c] sm:$0xf] %vm957, %v948
        %s966 = sand.u32 %s120, 1
        %s967 = scalar_lea.sflag [#allocation4], %s966
        %s968 = sand.u32 %s120, 1
        %s969 = smul.addr %s968, 32
        %s970 = scalar_lea.vmem [#allocation10], %s969
        // Predicated region
        $region53: #{_lambda_.22} parent=35 // pred_check
          %p971 = pneg %p130
        $region54: #{_lambda_.22} parent=35 // pred_check_branch
          %973 = sbr.rel (%p971) target = $region56
        $region55: #{_lambda_.22} parent=35 // pred_region
          %s975 = ssub.s32 512, 512
          %976 = vsyncadd %s967, %s975
          %s977 = smul.addr %s23, 8
          %s978 = smul.addr %s977, 64
          %s979 = scalar_lea.hbm %s4, %s978
          %s980 = sshll.u32 %s970, 4
          %s981 = int_to_ptr.vmem [resolvable:$true] %s980
          %986 = dma.vmem_to_hbm [thread:$0]  %s981, 512, %s979, %s967, 64, 64, 4
        $region56: #{_lambda_.22} parent=35 // pred_fallthru
          _
      $region36: #{_lambda_.22} parent=5 // pred_fallthru
        _
      %p987 = scmp.le.s32.totalorder 2, %s18
      // Predicated region
      $region57: #{_lambda_.22} parent=5 // pred_check
        %p988 = pneg %p987
      $region58: #{_lambda_.22} parent=5 // pred_check_branch
        %990 = sbr.rel (%p988) target = $region60
      $region59: #{_lambda_.22} parent=5 // pred_region
        %s991 = ssub.s32 %s18, 2
        // Predicated region
        $region61: #{_lambda_.22} parent=59 // pred_check
          %p992 = pneg %p136
        $region62: #{_lambda_.22} parent=59 // pred_check_branch
          %994 = sbr.rel (%p992) target = $region64
        $region63: #{_lambda_.22} parent=59 // pred_region
          %s995 = sand.u32 %s121, 1
          %s996 = scalar_lea.sflag [#allocation4], %s995
          %s997 = sand.u32 %s121, 1
          %s998 = smul.addr %s997, 32
          %s999 = scalar_lea.vmem [#allocation10], %s998
          %1000 = dma.done %s996, 512
        $region64: #{_lambda_.22} parent=59 // pred_fallthru
          _
      $region60: #{_lambda_.22} parent=5 // pred_fallthru
        _
    $region6: #{_lambda_.22} parent=1 // loop_footer
      %s22 = sadd.s32 1, %s18
    $region7: #{_lambda_.22} parent=1 // loop_footer_branch
      %17 = sbr.rel target = $region3
    $region8: #{_lambda_.22} parent=1 // loop_exit
      _
    %1001 = vsyncpa [#allocation3], 1
    %s1002 = scalar_lea.sflag [#allocation3], 1
    %1003 = vsyncpa %s1002, 1
    %1004 = vsyncpa [#allocation6], 1
    %1005 = vsyncpa [#allocation9], 1
    %1006 = vsyncpa [#allocation4], 1
    %s1007 = scalar_lea.sflag [#allocation4], 1
    %1008 = vsyncpa %s1007, 1

// kernel: _lambda_.23
$region0: #{_lambda_.23}
  #allocation0 [shape = 'u32[]', space=smem, size = 0x4, offset = 0x4, fixed_abs, tag = 'smem constant byte address 0x4 - core index']
  #allocation1 [shape = 'u32[144,128]{1,0:T(1,128)}', space=vmem, size = 0x12000, scoped, tag = 'internal scratch']
  %s0 = inlined_call_operand.hbm [shape: bf16[2,256,392], index: 0, kind: input, shape index: {}]
  %s1 = inlined_call_operand.hbm [shape: bf16[392,3], index: 1, kind: input, shape index: {}]
  %s2 = inlined_call_operand.hbm [shape: f32[2,256,3], index: 2, kind: output, shape index: {}]
  %s3 = sld [smem:[#allocation0]]
  $region49: #{_lambda_.23} parent=0
    _
  %s5 = ssub.s32 1, %s3
  %s6 = scalar_select 0, %s5, %s3
  $region1: #{_lambda_.23} parent=0
    #allocation2 [shape = 'u8[524288]{0}', space=vmem, size = 0x80000, scoped, tag = 'input window, operand 0']
    #allocation3 [shape = 's32[2]{0}', space=sflag, size = 0x8, scoped, tag = 'scoped memory for _lambda_.23']
    #allocation4 [shape = 's32[2]{0}', space=sflag, size = 0x8, scoped, tag = 'scoped memory for _lambda_.23']
    #allocation5 [shape = 'u8[100352]{0}', space=vmem, size = 0x18800, scoped, tag = 'input window, operand 1, single buffered']
    #allocation6 [shape = 's32[1]{0}', space=sflag, size = 0x4, scoped, tag = 'scoped memory for _lambda_.23']
    #allocation7 [shape = 'u8[262144]{0}', space=vmem, size = 0x40000, scoped, tag = 'output window, operand 0']
    %7 = vsyncpa [#allocation3], 0
    %s8 = scalar_lea.sflag [#allocation3], 1
    %9 = vsyncpa %s8, 0
    %10 = vsyncpa [#allocation6], 0
    %11 = vsyncpa [#allocation4], 0
    %s12 = scalar_lea.sflag [#allocation4], 1
    %13 = vsyncpa %s12, 0
    loop: start=0, step=1, limit=4
    $region2: #{_lambda_.23} parent=1 // loop_pre_header
      _
    $region3: #{_lambda_.23} parent=1 // loop_header
      %s15 = sphi 0, %s19
      %p16 = scmp.ge.s32.totalorder %s15, 4
      %s25 = sphi 0, %s27
      %s28 = sphi 0, %s25
      %s29 = sphi 0, %s28
      %s45 = sphi 0, %s29
      %s49 = sphi 0, %s49
      %s51 = sphi 0, %s49
      %s52 = sphi 0, %s51
      %s66 = sphi 0, %s52
      %s72 = sphi 0, %s74
      %s75 = sphi 0, %s72
      %s76 = sphi 0, %s75
      %s92 = sphi 0, %s76
    $region4: #{_lambda_.23} parent=1 // loop_header_branch
      %18 = sbr.rel (%p16) target = $region8
    $region5: #{_lambda_.23} parent=1 // loop_body
      %s20 = ssub.s32 %s15, 1
      %s21 = ssub.s32 %s15, 2
      %s22 = sadd.s32 %s15, 1
      %s23 = ssub.s32 %s15, %s22
      %p24 = scmp.eq.s32.totalorder %s23, 0
      %s26 = sadd.s32 %s25, 1
      %s27 = scalar_select %p24, %s25, %s26
      %p30 = pneg %p24
      %p31 = scmp.eq.s32.totalorder %s15, 1
      %p32 = por %p30, %p31
      %p33 = scmp.ne.s32.totalorder %s25, %s28
      %p34 = scmp.eq.s32.totalorder %s15, 0
      %p35 = por %p33, %p34
      %p36 = scmp.ne.s32.totalorder %s25, %s28
      %p37 = scmp.eq.s32.totalorder %s20, 1
      %p38 = por %p36, %p37
      %p39 = scmp.ne.s32.totalorder %s28, %s29
      %p40 = scmp.eq.s32.totalorder %s20, 0
      %p41 = por %p39, %p40
      %p42 = scmp.ne.s32.totalorder %s28, %s29
      %p43 = scmp.eq.s32.totalorder %s21, 1
      %p44 = por %p42, %p43
      %p46 = scmp.ne.s32.totalorder %s29, %s45
      %p47 = scmp.eq.s32.totalorder %s21, 0
      %p48 = por %p46, %p47
      %s50 = sadd.s32 %s49, 1
      %p53 = scmp.eq.s32.totalorder %s15, 1
      %p54 = scmp.ne.s32.totalorder %s49, %s51
      %p55 = scmp.eq.s32.totalorder %s15, 0
      %p56 = por %p54, %p55
      %p57 = scmp.ne.s32.totalorder %s49, %s51
      %p58 = scmp.eq.s32.totalorder %s20, 1
      %p59 = por %p57, %p58
      %p60 = scmp.ne.s32.totalorder %s51, %s52
      %p61 = scmp.eq.s32.totalorder %s20, 0
      %p62 = por %p60, %p61
      %p63 = scmp.ne.s32.totalorder %s51, %s52
      %p64 = scmp.eq.s32.totalorder %s21, 1
      %p65 = por %p63, %p64
      %p67 = scmp.ne.s32.totalorder %s52, %s66
      %p68 = scmp.eq.s32.totalorder %s21, 0
      %p69 = por %p67, %p68
      %s70 = ssub.s32 %s15, %s22
      %p71 = scmp.eq.s32.totalorder %s70, 0
      %s73 = sadd.s32 %s72, 1
      %s74 = scalar_select %p71, %s72, %s73
      %p77 = pneg %p71
      %p78 = scmp.eq.s32.totalorder %s15, 1
      %p79 = por %p77, %p78
      %p80 = scmp.ne.s32.totalorder %s72, %s75
      %p81 = scmp.eq.s32.totalorder %s15, 0
      %p82 = por %p80, %p81
      %p83 = scmp.ne.s32.totalorder %s72, %s75
      %p84 = scmp.eq.s32.totalorder %s20, 1
      %p85 = por %p83, %p84
      %p86 = scmp.ne.s32.totalorder %s75, %s76
      %p87 = scmp.eq.s32.totalorder %s20, 0
      %p88 = por %p86, %p87
      %p89 = scmp.ne.s32.totalorder %s75, %s76
      %p90 = scmp.eq.s32.totalorder %s21, 1
      %p91 = por %p89, %p90
      %p93 = scmp.ne.s32.totalorder %s76, %s92
      %p94 = scmp.eq.s32.totalorder %s21, 0
      %p95 = por %p93, %p94
      %p96 = scmp.le.s32.totalorder 1, %s15
      %p97 = scmp.lt.s32.totalorder %s15, 3
      %p98 = pnand %p96, %p97
      %p99 = pneg %p98
      // Predicated region
      $region9: #{_lambda_.23} parent=5 // pred_check
        _
      $region10: #{_lambda_.23} parent=5 // pred_check_branch
        %101 = sbr.rel (%p98) target = $region12
      $region11: #{_lambda_.23} parent=5 // pred_region
        %s102 = ssub.s32 %s15, 1
        // Predicated region
        $region13: #{_lambda_.23} parent=11 // pred_check
          %p103 = pneg %p62
        $region14: #{_lambda_.23} parent=11 // pred_check_branch
          %105 = sbr.rel (%p103) target = $region16
        $region15: #{_lambda_.23} parent=11 // pred_region
          %s107 = ssub.s32 3136, 3136
          %108 = vsyncadd [#allocation6], %s107
          %s109 = sshll.u32 [#allocation5], 4
          %s110 = int_to_ptr.vmem [resolvable:$true] %s109
          %115 = dma.hbm_to_vmem [thread:$0]  %s1, 3136, %s110, [#allocation6], 64, 64, 4
        $region16: #{_lambda_.23} parent=11 // pred_fallthru
          _
      $region12: #{_lambda_.23} parent=5 // pred_fallthru
        _
      %p116 = scmp.lt.s32.totalorder %s15, 2
      // Predicated region
      $region17: #{_lambda_.23} parent=5 // pred_check
        %p117 = pneg %p116
      $region18: #{_lambda_.23} parent=5 // pred_check_branch
        %119 = sbr.rel (%p117) target = $region20
      $region19: #{_lambda_.23} parent=5 // pred_region
        // Predicated region
        $region21: #{_lambda_.23} parent=19 // pred_check
          %p120 = pneg %p35
        $region22: #{_lambda_.23} parent=19 // pred_check_branch
          %122 = sbr.rel (%p120) target = $region24
        $region23: #{_lambda_.23} parent=19 // pred_region
          %s123 = sand.u32 %s25, 1
          %s124 = scalar_lea.sflag [#allocation3], %s123
          %s125 = sand.u32 %s25, 1
          %s126 = smul.addr %s125, 512
          %s127 = scalar_lea.vmem [#allocation2], %s126
          %s129 = ssub.s32 8192, 8192
          %130 = vsyncadd %s124, %s129
          %s131 = smul.addr %s15, 128
          %s132 = smul.addr %s131, 64
          %s133 = scalar_lea.hbm %s0, %s132
          %s134 = sshll.u32 %s127, 4
          %s135 = int_to_ptr.vmem [resolvable:$true] %s134
          %140 = dma.hbm_to_vmem [thread:$0]  %s133, 8192, %s135, %s124, 256, 256, 16
        $region24: #{_lambda_.23} parent=19 // pred_fallthru
          _
      $region20: #{_lambda_.23} parent=5 // pred_fallthru
        _
      %p141 = scmp.le.s32.totalorder 1, %s15
      %p142 = scmp.lt.s32.totalorder %s15, 3
      %p143 = pnand %p141, %p142
      %p144 = pneg %p143
      // Predicated region
      $region25: #{_lambda_.23} parent=5 // pred_check
        _
      $region26: #{_lambda_.23} parent=5 // pred_check_branch
        %146 = sbr.rel (%p143) target = $region28
      $region27: #{_lambda_.23} parent=5 // pred_region
        %s147 = ssub.s32 %s15, 1
        %s148 = sand.u32 %s28, 1
        %s149 = scalar_lea.sflag [#allocation3], %s148
        %s150 = sand.u32 %s28, 1
        %s151 = smul.addr %s150, 512
        %s152 = scalar_lea.vmem [#allocation2], %s151
        // Predicated region
        $region29: #{_lambda_.23} parent=27 // pred_check
          %p153 = pneg %p41
        $region30: #{_lambda_.23} parent=27 // pred_check_branch
          %155 = sbr.rel (%p153) target = $region32
        $region31: #{_lambda_.23} parent=27 // pred_region
          %156 = dma.done %s149, 8192
        $region32: #{_lambda_.23} parent=27 // pred_fallthru
          _
        // Predicated region
        $region33: #{_lambda_.23} parent=27 // pred_check
          %p157 = pneg %p62
        $region34: #{_lambda_.23} parent=27 // pred_check_branch
          %159 = sbr.rel (%p157) target = $region36
        $region35: #{_lambda_.23} parent=27 // pred_region
          %160 = dma.done [#allocation6], 3136
        $region36: #{_lambda_.23} parent=27 // pred_fallthru
          _
        %s161 = sand.u32 %s28, 1
        %s162 = scalar_lea.sflag [#allocation3], %s161
        %s163 = sand.u32 %s28, 1
        %s164 = smul.addr %s163, 512
        %s165 = scalar_lea.vmem [#allocation2], %s164
        %p166 = pneg %p41
        %p167 = pneg %p38
        %p168 = pneg %p62
        %p169 = pneg %p59
        %p170 = pneg %p88
        %p171 = pneg %p85
        %s172 = sand.u32 %s75, 1
        %s173 = scalar_lea.sflag [#allocation4], %s172
        %s174 = sand.u32 %s75, 1
        %s175 = smul.addr %s174, 256
        %s176 = scalar_lea.vmem [#allocation7], %s175
        %v178 = vld [vmem:[%s152] sm:$0xff]
        %v179 = vld [vmem:[%s152 + $0x8] sm:$0xff]
        %v180 = vld [vmem:[%s152 + $0x10] sm:$0xff]
        %v181 = vld [vmem:[%s152 + $0x18] sm:$0xff]
        %v182 = vld [vmem:[%s152 + $0x20] sm:$0xff]
        %v183 = vld [vmem:[%s152 + $0x28] sm:$0xff]
        %v184 = vld [vmem:[%s152 + $0x30] sm:$0xff]
        %v185 = vld [vmem:[%s152 + $0x38] sm:$0xff]
        %v186 = vld [vmem:[%s152 + $0x40] sm:$0xff]
        %v187 = vld [vmem:[%s152 + $0x48] sm:$0xff]
        %v188 = vld [vmem:[%s152 + $0x50] sm:$0xff]
        %v189 = vld [vmem:[%s152 + $0x58] sm:$0xff]
        %v190 = vld [vmem:[%s152 + $0x60] sm:$0xff]
        %v191 = vld [vmem:[%s152 + $0x68] sm:$0xff]
        %v192 = vld [vmem:[%s152 + $0x70] sm:$0xff]
        %v193 = vld [vmem:[%s152 + $0x78] sm:$0xff]
        %v194 = vld [vmem:[%s152 + $0x80] sm:$0xff]
        %v195 = vld [vmem:[%s152 + $0x88] sm:$0xff]
        %v196 = vld [vmem:[%s152 + $0x90] sm:$0xff]
        %v197 = vld [vmem:[%s152 + $0x98] sm:$0xff]
        %v198 = vld [vmem:[%s152 + $0xa0] sm:$0xff]
        %v199 = vld [vmem:[%s152 + $0xa8] sm:$0xff]
        %v200 = vld [vmem:[%s152 + $0xb0] sm:$0xff]
        %v201 = vld [vmem:[%s152 + $0xb8] sm:$0xff]
        %v202 = vld [vmem:[%s152 + $0xc0] sm:$0xff]
        %v203 = vld [vmem:[%s152 + $0xc8] sm:$0xff]
        %v204 = vld [vmem:[%s152 + $0xd0] sm:$0xff]
        %v205 = vld [vmem:[%s152 + $0xd8] sm:$0xff]
        %v206 = vld [vmem:[%s152 + $0xe0] sm:$0xff]
        %v207 = vld [vmem:[%s152 + $0xe8] sm:$0xff]
        %v208 = vld [vmem:[%s152 + $0xf0] sm:$0xff]
        %v209 = vld [vmem:[%s152 + $0xf8] sm:$0xff]
        %v210 = vld [vmem:[%s152 + $0x100] sm:$0xff]
        %v211 = vld [vmem:[%s152 + $0x108] sm:$0xff]
        %v212 = vld [vmem:[%s152 + $0x110] sm:$0xff]
        %v213 = vld [vmem:[%s152 + $0x118] sm:$0xff]
        %v214 = vld [vmem:[%s152 + $0x120] sm:$0xff]
        %v215 = vld [vmem:[%s152 + $0x128] sm:$0xff]
        %v216 = vld [vmem:[%s152 + $0x130] sm:$0xff]
        %v217 = vld [vmem:[%s152 + $0x138] sm:$0xff]
        %v218 = vld [vmem:[%s152 + $0x140] sm:$0xff]
        %v219 = vld [vmem:[%s152 + $0x148] sm:$0xff]
        %v220 = vld [vmem:[%s152 + $0x150] sm:$0xff]
        %v221 = vld [vmem:[%s152 + $0x158] sm:$0xff]
        %v222 = vld [vmem:[%s152 + $0x160] sm:$0xff]
        %v223 = vld [vmem:[%s152 + $0x168] sm:$0xff]
        %v224 = vld [vmem:[%s152 + $0x170] sm:$0xff]
        %v225 = vld [vmem:[%s152 + $0x178] sm:$0xff]
        %v226 = vld [vmem:[%s152 + $0x180] sm:$0xff]
        %v227 = vld [vmem:[%s152 + $0x188] sm:$0xff]
        %v228 = vld [vmem:[%s152 + $0x190] sm:$0xff]
        %v229 = vld [vmem:[%s152 + $0x198] sm:$0xff]
        %v230 = vld [vmem:[%s152 + $0x1a0] sm:$0xff]
        %v231 = vld [vmem:[%s152 + $0x1a8] sm:$0xff]
        %v232 = vld [vmem:[%s152 + $0x1b0] sm:$0xff]
        %v233 = vld [vmem:[%s152 + $0x1b8] sm:$0xff]
        %v234 = vld [vmem:[%s152 + $0x1c0] sm:$0xff]
        %v235 = vld [vmem:[%s152 + $0x1c8] sm:$0xff]
        %v236 = vld [vmem:[%s152 + $0x1d0] sm:$0xff]
        %v237 = vld [vmem:[%s152 + $0x1d8] sm:$0xff]
        %v238 = vld [vmem:[%s152 + $0x1e0] sm:$0xff]
        %v239 = vld [vmem:[%s152 + $0x1e8] sm:$0xff]
        %v240 = vld [vmem:[%s152 + $0x1f0] sm:$0xff]
        %v241 = vld [vmem:[%s152 + $0x1f8] sm:$0xff]
        %v242 = vld [vmem:[#allocation5] sm:$0xf]
        %v243 = vld [vmem:[#allocation5 + $0x4] sm:$0xf]
        %v244 = vld [vmem:[#allocation5 + $0x8] sm:$0xf]
        %v245 = vld [vmem:[#allocation5 + $0xc] sm:$0xf]
        %v246 = vld [vmem:[#allocation5 + $0x10] sm:$0xf]
        %v247 = vld [vmem:[#allocation5 + $0x14] sm:$0xf]
        %v248 = vld [vmem:[#allocation5 + $0x18] sm:$0xf]
        %v249 = vld [vmem:[#allocation5 + $0x1c] sm:$0xf]
        %v250 = vld [vmem:[#allocation5 + $0x20] sm:$0xf]
        %v251 = vld [vmem:[#allocation5 + $0x24] sm:$0xf]
        %v252 = vld [vmem:[#allocation5 + $0x28] sm:$0xf]
        %v253 = vld [vmem:[#allocation5 + $0x2c] sm:$0xf]
        %v254 = vld [vmem:[#allocation5 + $0x30] sm:$0xf]
        %v255 = vld [vmem:[#allocation5 + $0x34] sm:$0xf]
        %v256 = vld [vmem:[#allocation5 + $0x38] sm:$0xf]
        %v257 = vld [vmem:[#allocation5 + $0x3c] sm:$0xf]
        %v258 = vld [vmem:[#allocation5 + $0x40] sm:$0xf]
        %v259 = vld [vmem:[#allocation5 + $0x44] sm:$0xf]
        %v260 = vld [vmem:[#allocation5 + $0x48] sm:$0xf]
        %v261 = vld [vmem:[#allocation5 + $0x4c] sm:$0xf]
        %v262 = vld [vmem:[#allocation5 + $0x50] sm:$0xf]
        %v263 = vld [vmem:[#allocation5 + $0x54] sm:$0xf]
        %v264 = vld [vmem:[#allocation5 + $0x58] sm:$0xf]
        %v265 = vld [vmem:[#allocation5 + $0x5c] sm:$0xf]
        %v266 = vld [vmem:[#allocation5 + $0x60] sm:$0xf]
        %v267 = vld [vmem:[#allocation5 + $0x64] sm:$0xf]
        %v268 = vld [vmem:[#allocation5 + $0x68] sm:$0xf]
        %v269 = vld [vmem:[#allocation5 + $0x6c] sm:$0xf]
        %v270 = vld [vmem:[#allocation5 + $0x70] sm:$0xf]
        %v271 = vld [vmem:[#allocation5 + $0x74] sm:$0xf]
        %v272 = vld [vmem:[#allocation5 + $0x78] sm:$0xf]
        %v273 = vld [vmem:[#allocation5 + $0x7c] sm:$0xf]
        %v274 = vld [vmem:[#allocation5 + $0x80] sm:$0xf]
        %v275 = vld [vmem:[#allocation5 + $0x84] sm:$0xf]
        %v276 = vld [vmem:[#allocation5 + $0x88] sm:$0xf]
        %v277 = vld [vmem:[#allocation5 + $0x8c] sm:$0xf]
        %v278 = vld [vmem:[#allocation5 + $0x90] sm:$0xf]
        %v279 = vld [vmem:[#allocation5 + $0x94] sm:$0xf]
        %v280 = vld [vmem:[#allocation5 + $0x98] sm:$0xf]
        %v281 = vld [vmem:[#allocation5 + $0x9c] sm:$0xf]
        %v282 = vld [vmem:[#allocation5 + $0xa0] sm:$0xf]
        %v283 = vld [vmem:[#allocation5 + $0xa4] sm:$0xf]
        %v284 = vld [vmem:[#allocation5 + $0xa8] sm:$0xf]
        %v285 = vld [vmem:[#allocation5 + $0xac] sm:$0xf]
        %v286 = vld [vmem:[#allocation5 + $0xb0] sm:$0xf]
        %v287 = vld [vmem:[#allocation5 + $0xb4] sm:$0xf]
        %v288 = vld [vmem:[#allocation5 + $0xb8] sm:$0xf]
        %v289 = vld [vmem:[#allocation5 + $0xbc] sm:$0xf]
        %v290 = vld [vmem:[#allocation5 + $0xc0] sm:$0xf]
        %v355 = vunpack.c.l.b16 %v178
        %v356 = vunpack.c.h.b16 %v178
        %v357 = vunpack.c.l.b16 %v179
        %v358 = vunpack.c.h.b16 %v179
        %v359 = vunpack.c.l.b16 %v180
        %v360 = vunpack.c.h.b16 %v180
        %v361 = vunpack.c.l.b16 %v181
        %v362 = vunpack.c.h.b16 %v181
        %v363 = vunpack.c.l.b16 %v182
        %v364 = vunpack.c.h.b16 %v182
        %v365 = vunpack.c.l.b16 %v183
        %v366 = vunpack.c.h.b16 %v183
        %v367 = vunpack.c.l.b16 %v184
        %v368 = vunpack.c.h.b16 %v184
        %v369 = vunpack.c.l.b16 %v185
        %v370 = vunpack.c.h.b16 %v185
        %v371 = vunpack.c.l.b16 %v186
        %v372 = vunpack.c.h.b16 %v186
        %v373 = vunpack.c.l.b16 %v187
        %v374 = vunpack.c.h.b16 %v187
        %v375 = vunpack.c.l.b16 %v188
        %v376 = vunpack.c.h.b16 %v188
        %v377 = vunpack.c.l.b16 %v189
        %v378 = vunpack.c.h.b16 %v189
        %v379 = vunpack.c.l.b16 %v190
        %v380 = vunpack.c.h.b16 %v190
        %v381 = vunpack.c.l.b16 %v191
        %v382 = vunpack.c.h.b16 %v191
        %v383 = vunpack.c.l.b16 %v192
        %v384 = vunpack.c.h.b16 %v192
        %v385 = vunpack.c.l.b16 %v193
        %v386 = vunpack.c.h.b16 %v193
        %v387 = vunpack.c.l.b16 %v194
        %v388 = vunpack.c.h.b16 %v194
        %v389 = vunpack.c.l.b16 %v195
        %v390 = vunpack.c.h.b16 %v195
        %v391 = vunpack.c.l.b16 %v196
        %v392 = vunpack.c.h.b16 %v196
        %v393 = vunpack.c.l.b16 %v197
        %v394 = vunpack.c.h.b16 %v197
        %v395 = vunpack.c.l.b16 %v198
        %v396 = vunpack.c.h.b16 %v198
        %v397 = vunpack.c.l.b16 %v199
        %v398 = vunpack.c.h.b16 %v199
        %v399 = vunpack.c.l.b16 %v200
        %v400 = vunpack.c.h.b16 %v200
        %v401 = vunpack.c.l.b16 %v201
        %v402 = vunpack.c.h.b16 %v201
        %v403 = vunpack.c.l.b16 %v202
        %v404 = vunpack.c.h.b16 %v202
        %v405 = vunpack.c.l.b16 %v203
        %v406 = vunpack.c.h.b16 %v203
        %v407 = vunpack.c.l.b16 %v204
        %v408 = vunpack.c.h.b16 %v204
        %v409 = vunpack.c.l.b16 %v205
        %v410 = vunpack.c.h.b16 %v205
        %v411 = vunpack.c.l.b16 %v206
        %v412 = vunpack.c.h.b16 %v206
        %v413 = vunpack.c.l.b16 %v207
        %v414 = vunpack.c.h.b16 %v207
        %v415 = vunpack.c.l.b16 %v208
        %v416 = vunpack.c.h.b16 %v208
        %v417 = vunpack.c.l.b16 %v209
        %v418 = vunpack.c.h.b16 %v209
        %v419 = vunpack.c.l.b16 %v210
        %v420 = vunpack.c.h.b16 %v210
        %v421 = vunpack.c.l.b16 %v211
        %v422 = vunpack.c.h.b16 %v211
        %v423 = vunpack.c.l.b16 %v212
        %v424 = vunpack.c.h.b16 %v212
        %v425 = vunpack.c.l.b16 %v213
        %v426 = vunpack.c.h.b16 %v213
        %v427 = vunpack.c.l.b16 %v214
        %v428 = vunpack.c.h.b16 %v214
        %v429 = vunpack.c.l.b16 %v215
        %v430 = vunpack.c.h.b16 %v215
        %v431 = vunpack.c.l.b16 %v216
        %v432 = vunpack.c.h.b16 %v216
        %v433 = vunpack.c.l.b16 %v217
        %v434 = vunpack.c.h.b16 %v217
        %v435 = vunpack.c.l.b16 %v218
        %v436 = vunpack.c.h.b16 %v218
        %v437 = vunpack.c.l.b16 %v219
        %v438 = vunpack.c.h.b16 %v219
        %v439 = vunpack.c.l.b16 %v220
        %v440 = vunpack.c.h.b16 %v220
        %v441 = vunpack.c.l.b16 %v221
        %v442 = vunpack.c.h.b16 %v221
        %v443 = vunpack.c.l.b16 %v222
        %v444 = vunpack.c.h.b16 %v222
        %v445 = vunpack.c.l.b16 %v223
        %v446 = vunpack.c.h.b16 %v223
        %v447 = vunpack.c.l.b16 %v224
        %v448 = vunpack.c.h.b16 %v224
        %v449 = vunpack.c.l.b16 %v225
        %v450 = vunpack.c.h.b16 %v225
        %v451 = vunpack.c.l.b16 %v226
        %v452 = vunpack.c.h.b16 %v226
        %v453 = vunpack.c.l.b16 %v227
        %v454 = vunpack.c.h.b16 %v227
        %v455 = vunpack.c.l.b16 %v228
        %v456 = vunpack.c.h.b16 %v228
        %v457 = vunpack.c.l.b16 %v229
        %v458 = vunpack.c.h.b16 %v229
        %v459 = vunpack.c.l.b16 %v230
        %v460 = vunpack.c.h.b16 %v230
        %v461 = vunpack.c.l.b16 %v231
        %v462 = vunpack.c.h.b16 %v231
        %v463 = vunpack.c.l.b16 %v232
        %v464 = vunpack.c.h.b16 %v232
        %v465 = vunpack.c.l.b16 %v233
        %v466 = vunpack.c.h.b16 %v233
        %v467 = vunpack.c.l.b16 %v234
        %v468 = vunpack.c.h.b16 %v234
        %v469 = vunpack.c.l.b16 %v235
        %v470 = vunpack.c.h.b16 %v235
        %v471 = vunpack.c.l.b16 %v236
        %v472 = vunpack.c.h.b16 %v236
        %v473 = vunpack.c.l.b16 %v237
        %v474 = vunpack.c.h.b16 %v237
        %v475 = vunpack.c.l.b16 %v238
        %v476 = vunpack.c.h.b16 %v238
        %v477 = vunpack.c.l.b16 %v239
        %v478 = vunpack.c.h.b16 %v239
        %v479 = vunpack.c.l.b16 %v240
        %v480 = vunpack.c.h.b16 %v240
        %v481 = vunpack.c.l.b16 %v241
        %v482 = vunpack.c.h.b16 %v241
        %v483 = vpack.c.b16 %v359, %v355
        %v484 = vpack.c.b16 %v360, %v356
        %v485 = vpack.c.b16 %v361, %v357
        %v486 = vpack.c.b16 %v362, %v358
        %v487 = vpack.c.b16 %v367, %v363
        %v488 = vpack.c.b16 %v368, %v364
        %v489 = vpack.c.b16 %v369, %v365
        %v490 = vpack.c.b16 %v370, %v366
        %v491 = vpack.c.b16 %v375, %v371
        %v492 = vpack.c.b16 %v376, %v372
        %v493 = vpack.c.b16 %v377, %v373
        %v494 = vpack.c.b16 %v378, %v374
        %v495 = vpack.c.b16 %v383, %v379
        %v496 = vpack.c.b16 %v384, %v380
        %v497 = vpack.c.b16 %v385, %v381
        %v498 = vpack.c.b16 %v386, %v382
        %v499 = vpack.c.b16 %v391, %v387
        %v500 = vpack.c.b16 %v392, %v388
        %v501 = vpack.c.b16 %v393, %v389
        %v502 = vpack.c.b16 %v394, %v390
        %v503 = vpack.c.b16 %v399, %v395
        %v504 = vpack.c.b16 %v400, %v396
        %v505 = vpack.c.b16 %v401, %v397
        %v506 = vpack.c.b16 %v402, %v398
        %v507 = vpack.c.b16 %v407, %v403
        %v508 = vpack.c.b16 %v408, %v404
        %v509 = vpack.c.b16 %v409, %v405
        %v510 = vpack.c.b16 %v410, %v406
        %v511 = vpack.c.b16 %v415, %v411
        %v512 = vpack.c.b16 %v416, %v412
        %v513 = vpack.c.b16 %v417, %v413
        %v514 = vpack.c.b16 %v418, %v414
        %v515 = vpack.c.b16 %v423, %v419
        %v516 = vpack.c.b16 %v424, %v420
        %v517 = vpack.c.b16 %v425, %v421
        %v518 = vpack.c.b16 %v426, %v422
        %v519 = vpack.c.b16 %v431, %v427
        %v520 = vpack.c.b16 %v432, %v428
        %v521 = vpack.c.b16 %v433, %v429
        %v522 = vpack.c.b16 %v434, %v430
        %v523 = vpack.c.b16 %v439, %v435
        %v524 = vpack.c.b16 %v440, %v436
        %v525 = vpack.c.b16 %v441, %v437
        %v526 = vpack.c.b16 %v442, %v438
        %v527 = vpack.c.b16 %v447, %v443
        %v528 = vpack.c.b16 %v448, %v444
        %v529 = vpack.c.b16 %v449, %v445
        %v530 = vpack.c.b16 %v450, %v446
        %v531 = vpack.c.b16 %v455, %v451
        %v532 = vpack.c.b16 %v456, %v452
        %v533 = vpack.c.b16 %v457, %v453
        %v534 = vpack.c.b16 %v458, %v454
        %v535 = vpack.c.b16 %v463, %v459
        %v536 = vpack.c.b16 %v464, %v460
        %v537 = vpack.c.b16 %v465, %v461
        %v538 = vpack.c.b16 %v466, %v462
        %v539 = vpack.c.b16 %v471, %v467
        %v540 = vpack.c.b16 %v472, %v468
        %v541 = vpack.c.b16 %v473, %v469
        %v542 = vpack.c.b16 %v474, %v470
        %v543 = vpack.c.b16 %v479, %v475
        %v544 = vpack.c.b16 %v480, %v476
        %v545 = vpack.c.b16 %v481, %v477
        %v546 = vpack.c.b16 %v482, %v478
        %v644 = vunpack.c.l.b16 %v242
        %v645 = vunpack.c.l.b16 %v243
        %v646 = vunpack.c.l.b16 %v244
        %v647 = vunpack.c.l.b16 %v245
        %v648 = vunpack.c.l.b16 %v246
        %v649 = vunpack.c.l.b16 %v247
        %v650 = vunpack.c.l.b16 %v248
        %v651 = vunpack.c.l.b16 %v249
        %v652 = vunpack.c.l.b16 %v250
        %v653 = vunpack.c.l.b16 %v251
        %v654 = vunpack.c.l.b16 %v252
        %v655 = vunpack.c.l.b16 %v253
        %v656 = vunpack.c.l.b16 %v254
        %v657 = vunpack.c.l.b16 %v255
        %v658 = vunpack.c.l.b16 %v256
        %v659 = vunpack.c.l.b16 %v257
        %v660 = vunpack.c.l.b16 %v258
        %v661 = vunpack.c.l.b16 %v259
        %v662 = vunpack.c.l.b16 %v260
        %v663 = vunpack.c.l.b16 %v261
        %v664 = vunpack.c.l.b16 %v262
        %v665 = vunpack.c.l.b16 %v263
        %v666 = vunpack.c.l.b16 %v264
        %v667 = vunpack.c.l.b16 %v265
        %v668 = vunpack.c.l.b16 %v266
        %v669 = vunpack.c.l.b16 %v267
        %v670 = vunpack.c.l.b16 %v268
        %v671 = vunpack.c.l.b16 %v269
        %v672 = vunpack.c.l.b16 %v270
        %v673 = vunpack.c.l.b16 %v271
        %v674 = vunpack.c.l.b16 %v272
        %v675 = vunpack.c.l.b16 %v273
        %v676 = vunpack.c.l.b16 %v274
        %v677 = vunpack.c.l.b16 %v275
        %v678 = vunpack.c.l.b16 %v276
        %v679 = vunpack.c.l.b16 %v277
        %v680 = vunpack.c.l.b16 %v278
        %v681 = vunpack.c.l.b16 %v279
        %v682 = vunpack.c.l.b16 %v280
        %v683 = vunpack.c.l.b16 %v281
        %v684 = vunpack.c.l.b16 %v282
        %v685 = vunpack.c.l.b16 %v283
        %v686 = vunpack.c.l.b16 %v284
        %v687 = vunpack.c.l.b16 %v285
        %v688 = vunpack.c.l.b16 %v286
        %v689 = vunpack.c.l.b16 %v287
        %v690 = vunpack.c.l.b16 %v288
        %v691 = vunpack.c.l.b16 %v289
        %v692 = vunpack.c.l.b16 %v290
        %v693 = vpack.c.b16 %v645, %v644
        %v694 = vpack.c.b16 %v647, %v646
        %v695 = vpack.c.b16 %v649, %v648
        %v696 = vpack.c.b16 %v651, %v650
        %v697 = vpack.c.b16 %v653, %v652
        %v698 = vpack.c.b16 %v655, %v654
        %v699 = vpack.c.b16 %v657, %v656
        %v700 = vpack.c.b16 %v659, %v658
        %v701 = vpack.c.b16 %v661, %v660
        %v702 = vpack.c.b16 %v663, %v662
        %v703 = vpack.c.b16 %v665, %v664
        %v704 = vpack.c.b16 %v667, %v666
        %v705 = vpack.c.b16 %v669, %v668
        %v706 = vpack.c.b16 %v671, %v670
        %v707 = vpack.c.b16 %v673, %v672
        %v708 = vpack.c.b16 %v675, %v674
        %v709 = vpack.c.b16 %v677, %v676
        %v710 = vpack.c.b16 %v679, %v678
        %v711 = vpack.c.b16 %v681, %v680
        %v712 = vpack.c.b16 %v683, %v682
        %v713 = vpack.c.b16 %v685, %v684
        %v714 = vpack.c.b16 %v687, %v686
        %v715 = vpack.c.b16 %v689, %v688
        %v716 = vpack.c.b16 %v691, %v690
        %v717 = vpack.c.b16 %v692, %v692
        %vm742 = vcmask 64512
        %v744 = vsel %vm742, %v486, 0
        %v747 = vsel %vm742, %v490, 0
        %v750 = vsel %vm742, %v494, 0
        %v753 = vsel %vm742, %v498, 0
        %v756 = vsel %vm742, %v502, 0
        %v759 = vsel %vm742, %v506, 0
        %v762 = vsel %vm742, %v510, 0
        %v765 = vsel %vm742, %v514, 0
        %v768 = vsel %vm742, %v518, 0
        %v771 = vsel %vm742, %v522, 0
        %v774 = vsel %vm742, %v526, 0
        %v777 = vsel %vm742, %v530, 0
        %v780 = vsel %vm742, %v534, 0
        %v783 = vsel %vm742, %v538, 0
        %v786 = vsel %vm742, %v542, 0
        %v789 = vsel %vm742, %v546, 0
        %vm791 = vcmask 1043456
        %v793 = vsel %vm791, %v717, 0
        %795 = vmatprep.subr.bf16.mxu0 0
        %796 = vmatpush1.bf16.msra.mxu0 %v693
        %797 = vmatprep.subr.bf16.mxu0 0
        %798 = vmatpush1.bf16.msra.mxu0 %v694
        %799 = vmatprep.subr.bf16.mxu0 0
        %800 = vmatpush1.bf16.msra.mxu0 %v695
        %801 = vmatprep.subr.bf16.mxu0 0
        %802 = vmatpush1.bf16.msra.mxu0 %v696
        %803 = vmatprep.subr.bf16.mxu0 0
        %804 = vmatpush1.bf16.msra.mxu0 %v697
        %805 = vmatprep.subr.bf16.mxu0 0
        %806 = vmatpush1.bf16.msra.mxu0 %v698
        %807 = vmatprep.subr.bf16.mxu0 0
        %808 = vmatpush1.bf16.msra.mxu0 %v699
        %809 = vmatprep.subr.bf16.mxu0 0
        %810 = vmatpush1.bf16.msra.mxu0 %v700
        %811 = vmatprep.subr.bf16.mxu0 0
        %812 = vmatpush1.bf16.msra.mxu0 %v701
        %813 = vmatprep.subr.bf16.mxu0 0
        %814 = vmatpush1.bf16.msra.mxu0 %v702
        %815 = vmatprep.subr.bf16.mxu0 0
        %816 = vmatpush1.bf16.msra.mxu0 %v703
        %817 = vmatprep.subr.bf16.mxu0 0
        %818 = vmatpush1.bf16.msra.mxu0 %v704
        %819 = vmatprep.subr.bf16.mxu0 0
        %820 = vmatpush1.bf16.msra.mxu0 %v705
        %821 = vmatprep.subr.bf16.mxu0 0
        %822 = vmatpush1.bf16.msra.mxu0 %v706
        %823 = vmatprep.subr.bf16.mxu0 0
        %824 = vmatpush1.bf16.msra.mxu0 %v707
        %825 = vmatprep.subr.bf16.mxu0 0
        %826 = vmatpush1.bf16.msra.mxu0 %v708
        %827 = vmatprep.mubr.bf16.mxu0 %v484
        %828 = vmatmul.mubr.bf16.gmra.mrb[0].mxu0 %v483
        %v829 = vpop.f32.mrb[0].mxu0
        %v830 = vadd.f32 0.0, %v829
        %v831 = vpop.f32.mrb[0].mxu0
        %v832 = vpop.f32.mrb[0].mxu0
        %v833 = vadd.f32 0.0, %v832
        %v834 = vpop.f32.mrb[0].mxu0
        %835 = vmatprep.mubr.bf16.mxu0 %v488
        %836 = vmatmul.mubr.bf16.gmra.mrb[0].mxu0 %v487
        %v837 = vpop.f32.mrb[0].mxu0
        %v838 = vadd.f32 0.0, %v837
        %v839 = vpop.f32.mrb[0].mxu0
        %v840 = vpop.f32.mrb[0].mxu0
        %v841 = vadd.f32 0.0, %v840
        %v842 = vpop.f32.mrb[0].mxu0
        %843 = vmatprep.mubr.bf16.mxu0 %v492
        %844 = vmatmul.mubr.bf16.gmra.mrb[0].mxu0 %v491
        %v845 = vpop.f32.mrb[0].mxu0
        %v846 = vadd.f32 0.0, %v845
        %v847 = vpop.f32.mrb[0].mxu0
        %v848 = vpop.f32.mrb[0].mxu0
        %v849 = vadd.f32 0.0, %v848
        %v850 = vpop.f32.mrb[0].mxu0
        %851 = vmatprep.mubr.bf16.mxu0 %v496
        %852 = vmatmul.mubr.bf16.gmra.mrb[0].mxu0 %v495
        %v853 = vpop.f32.mrb[0].mxu0
        %v854 = vadd.f32 0.0, %v853
        %v855 = vpop.f32.mrb[0].mxu0
        %v856 = vpop.f32.mrb[0].mxu0
        %v857 = vadd.f32 0.0, %v856
        %v858 = vpop.f32.mrb[0].mxu0
        %859 = vmatprep.mubr.bf16.mxu0 %v500
        %860 = vmatmul.mubr.bf16.gmra.mrb[0].mxu0 %v499
        %v861 = vpop.f32.mrb[0].mxu0
        %v862 = vadd.f32 0.0, %v861
        %v863 = vpop.f32.mrb[0].mxu0
        %v864 = vpop.f32.mrb[0].mxu0
        %v865 = vadd.f32 0.0, %v864
        %v866 = vpop.f32.mrb[0].mxu0
        %867 = vmatprep.mubr.bf16.mxu0 %v504
        %868 = vmatmul.mubr.bf16.gmra.mrb[0].mxu0 %v503
        %v869 = vpop.f32.mrb[0].mxu0
        %v870 = vadd.f32 0.0, %v869
        %v871 = vpop.f32.mrb[0].mxu0
        %v872 = vpop.f32.mrb[0].mxu0
        %v873 = vadd.f32 0.0, %v872
        %v874 = vpop.f32.mrb[0].mxu0
        %875 = vmatprep.mubr.bf16.mxu0 %v508
        %876 = vmatmul.mubr.bf16.gmra.mrb[0].mxu0 %v507
        %v877 = vpop.f32.mrb[0].mxu0
        %v878 = vadd.f32 0.0, %v877
        %v879 = vpop.f32.mrb[0].mxu0
        %v880 = vpop.f32.mrb[0].mxu0
        %v881 = vadd.f32 0.0, %v880
        %v882 = vpop.f32.mrb[0].mxu0
        %883 = vmatprep.mubr.bf16.mxu0 %v512
        %884 = vmatmul.mubr.bf16.gmra.mrb[0].mxu0 %v511
        %v885 = vpop.f32.mrb[0].mxu0
        %v886 = vadd.f32 0.0, %v885
        %v887 = vpop.f32.mrb[0].mxu0
        %v888 = vpop.f32.mrb[0].mxu0
        %v889 = vadd.f32 0.0, %v888
        %v890 = vpop.f32.mrb[0].mxu0
        %891 = vmatprep.mubr.bf16.mxu0 %v516
        %892 = vmatmul.mubr.bf16.gmra.mrb[0].mxu0 %v515
        %v893 = vpop.f32.mrb[0].mxu0
        %v894 = vadd.f32 0.0, %v893
        %v895 = vpop.f32.mrb[0].mxu0
        %v896 = vpop.f32.mrb[0].mxu0
        %v897 = vadd.f32 0.0, %v896
        %v898 = vpop.f32.mrb[0].mxu0
        %899 = vmatprep.mubr.bf16.mxu0 %v520
        %900 = vmatmul.mubr.bf16.gmra.mrb[0].mxu0 %v519
        %v901 = vpop.f32.mrb[0].mxu0
        %v902 = vadd.f32 0.0, %v901
        %v903 = vpop.f32.mrb[0].mxu0
        %v904 = vpop.f32.mrb[0].mxu0
        %v905 = vadd.f32 0.0, %v904
        %v906 = vpop.f32.mrb[0].mxu0
        %907 = vmatprep.mubr.bf16.mxu0 %v524
        %908 = vmatmul.mubr.bf16.gmra.mrb[0].mxu0 %v523
        %v909 = vpop.f32.mrb[0].mxu0
        %v910 = vadd.f32 0.0, %v909
        %v911 = vpop.f32.mrb[0].mxu0
        %v912 = vpop.f32.mrb[0].mxu0
        %v913 = vadd.f32 0.0, %v912
        %v914 = vpop.f32.mrb[0].mxu0
        %915 = vmatprep.mubr.bf16.mxu0 %v528
        %916 = vmatmul.mubr.bf16.gmra.mrb[0].mxu0 %v527
        %v917 = vpop.f32.mrb[0].mxu0
        %v918 = vadd.f32 0.0, %v917
        %v919 = vpop.f32.mrb[0].mxu0
        %v920 = vpop.f32.mrb[0].mxu0
        %v921 = vadd.f32 0.0, %v920
        %v922 = vpop.f32.mrb[0].mxu0
        %923 = vmatprep.mubr.bf16.mxu0 %v532
        %924 = vmatmul.mubr.bf16.gmra.mrb[0].mxu0 %v531
        %v925 = vpop.f32.mrb[0].mxu0
        %v926 = vadd.f32 0.0, %v925
        %v927 = vpop.f32.mrb[0].mxu0
        %v928 = vpop.f32.mrb[0].mxu0
        %v929 = vadd.f32 0.0, %v928
        %v930 = vpop.f32.mrb[0].mxu0
        %931 = vmatprep.mubr.bf16.mxu0 %v536
        %932 = vmatmul.mubr.bf16.gmra.mrb[0].mxu0 %v535
        %v933 = vpop.f32.mrb[0].mxu0
        %v934 = vadd.f32 0.0, %v933
        %v935 = vpop.f32.mrb[0].mxu0
        %v936 = vpop.f32.mrb[0].mxu0
        %v937 = vadd.f32 0.0, %v936
        %v938 = vpop.f32.mrb[0].mxu0
        %939 = vmatprep.mubr.bf16.mxu0 %v540
        %940 = vmatmul.mubr.bf16.gmra.mrb[0].mxu0 %v539
        %v941 = vpop.f32.mrb[0].mxu0
        %v942 = vadd.f32 0.0, %v941
        %v943 = vpop.f32.mrb[0].mxu0
        %v944 = vpop.f32.mrb[0].mxu0
        %v945 = vadd.f32 0.0, %v944
        %v946 = vpop.f32.mrb[0].mxu0
        %947 = vmatprep.mubr.bf16.mxu0 %v544
        %948 = vmatmul.mubr.bf16.gmra.mrb[0].mxu0 %v543
        %v949 = vpop.f32.mrb[0].mxu0
        %v950 = vadd.f32 0.0, %v949
        %v951 = vpop.f32.mrb[0].mxu0
        %v952 = vpop.f32.mrb[0].mxu0
        %v953 = vadd.f32 0.0, %v952
        %v954 = vpop.f32.mrb[0].mxu0
        %955 = vdwg.mxu0
        %956 = vmatprep.subr.bf16.mxu0 0
        %957 = vmatpush1.bf16.msra.mxu0 %v709
        %958 = vmatprep.subr.bf16.mxu0 0
        %959 = vmatpush1.bf16.msra.mxu0 %v710
        %960 = vmatprep.subr.bf16.mxu0 0
        %961 = vmatpush1.bf16.msra.mxu0 %v711
        %962 = vmatprep.subr.bf16.mxu0 0
        %963 = vmatpush1.bf16.msra.mxu0 %v712
        %964 = vmatprep.subr.bf16.mxu0 0
        %965 = vmatpush1.bf16.msra.mxu0 %v713
        %966 = vmatprep.subr.bf16.mxu0 0
        %967 = vmatpush1.bf16.msra.mxu0 %v714
        %968 = vmatprep.subr.bf16.mxu0 0
        %969 = vmatpush1.bf16.msra.mxu0 %v715
        %970 = vmatprep.subr.bf16.mxu0 0
        %971 = vmatpush1.bf16.msra.mxu0 %v716
        %972 = vmatprep.subr.bf16.mxu0 0
        %973 = vmatpush1.bf16.msra.mxu0 %v793
        %974 = vmatprep.subr.bf16.mxu0 0
        %975 = vmatpush1.bf16.msra.mxu0 0
        %976 = vmatprep.subr.bf16.mxu0 0
        %977 = vmatpush1.bf16.msra.mxu0 0
        %978 = vmatprep.subr.bf16.mxu0 0
        %979 = vmatpush1.bf16.msra.mxu0 0
        %980 = vmatprep.subr.bf16.mxu0 0
        %981 = vmatpush1.bf16.msra.mxu0 0
        %982 = vmatprep.subr.bf16.mxu0 0
        %983 = vmatpush1.bf16.msra.mxu0 0
        %984 = vmatprep.subr.bf16.mxu0 0
        %985 = vmatpush1.bf16.msra.mxu0 0
        %986 = vmatprep.subr.bf16.mxu0 0
        %987 = vmatpush1.bf16.msra.mxu0 0
        %988 = vmatprep.mubr.bf16.mxu0 %v744
        %989 = vmatmul.mubr.bf16.gmra.mrb[0].mxu0 %v485
        %v990 = vpop.f32.mrb[0].mxu0
        %v991 = vadd.f32 %v830, %v990
        %v992 = vpop.f32.mrb[0].mxu0
        %v993 = vpop.f32.mrb[0].mxu0
        %v994 = vadd.f32 %v833, %v993
        %v995 = vpop.f32.mrb[0].mxu0
        %996 = vmatprep.mubr.bf16.mxu0 %v747
        %997 = vmatmul.mubr.bf16.gmra.mrb[0].mxu0 %v489
        %v998 = vpop.f32.mrb[0].mxu0
        %v999 = vadd.f32 %v838, %v998
        %v1000 = vpop.f32.mrb[0].mxu0
        %v1001 = vpop.f32.mrb[0].mxu0
        %v1002 = vadd.f32 %v841, %v1001
        %v1003 = vpop.f32.mrb[0].mxu0
        %1004 = vmatprep.mubr.bf16.mxu0 %v750
        %1005 = vmatmul.mubr.bf16.gmra.mrb[0].mxu0 %v493
        %v1006 = vpop.f32.mrb[0].mxu0
        %v1007 = vadd.f32 %v846, %v1006
        %v1008 = vpop.f32.mrb[0].mxu0
        %v1009 = vpop.f32.mrb[0].mxu0
        %v1010 = vadd.f32 %v849, %v1009
        %v1011 = vpop.f32.mrb[0].mxu0
        %1012 = vmatprep.mubr.bf16.mxu0 %v753
        %1013 = vmatmul.mubr.bf16.gmra.mrb[0].mxu0 %v497
        %v1014 = vpop.f32.mrb[0].mxu0
        %v1015 = vadd.f32 %v854, %v1014
        %v1016 = vpop.f32.mrb[0].mxu0
        %v1017 = vpop.f32.mrb[0].mxu0
        %v1018 = vadd.f32 %v857, %v1017
        %v1019 = vpop.f32.mrb[0].mxu0
        %1020 = vmatprep.mubr.bf16.mxu0 %v756
        %1021 = vmatmul.mubr.bf16.gmra.mrb[0].mxu0 %v501
        %v1022 = vpop.f32.mrb[0].mxu0
        %v1023 = vadd.f32 %v862, %v1022
        %v1024 = vpop.f32.mrb[0].mxu0
        %v1025 = vpop.f32.mrb[0].mxu0
        %v1026 = vadd.f32 %v865, %v1025
        %v1027 = vpop.f32.mrb[0].mxu0
        %1028 = vmatprep.mubr.bf16.mxu0 %v759
        %1029 = vmatmul.mubr.bf16.gmra.mrb[0].mxu0 %v505
        %v1030 = vpop.f32.mrb[0].mxu0
        %v1031 = vadd.f32 %v870, %v1030
        %v1032 = vpop.f32.mrb[0].mxu0
        %v1033 = vpop.f32.mrb[0].mxu0
        %v1034 = vadd.f32 %v873, %v1033
        %v1035 = vpop.f32.mrb[0].mxu0
        %1036 = vmatprep.mubr.bf16.mxu0 %v762
        %1037 = vmatmul.mubr.bf16.gmra.mrb[0].mxu0 %v509
        %v1038 = vpop.f32.mrb[0].mxu0
        %v1039 = vadd.f32 %v878, %v1038
        %v1040 = vpop.f32.mrb[0].mxu0
        %v1041 = vpop.f32.mrb[0].mxu0
        %v1042 = vadd.f32 %v881, %v1041
        %v1043 = vpop.f32.mrb[0].mxu0
        %1044 = vmatprep.mubr.bf16.mxu0 %v765
        %1045 = vmatmul.mubr.bf16.gmra.mrb[0].mxu0 %v513
        %v1046 = vpop.f32.mrb[0].mxu0
        %v1047 = vadd.f32 %v886, %v1046
        %v1048 = vpop.f32.mrb[0].mxu0
        %v1049 = vpop.f32.mrb[0].mxu0
        %v1050 = vadd.f32 %v889, %v1049
        %v1051 = vpop.f32.mrb[0].mxu0
        %1052 = vmatprep.mubr.bf16.mxu0 %v768
        %1053 = vmatmul.mubr.bf16.gmra.mrb[0].mxu0 %v517
        %v1054 = vpop.f32.mrb[0].mxu0
        %v1055 = vadd.f32 %v894, %v1054
        %v1056 = vpop.f32.mrb[0].mxu0
        %v1057 = vpop.f32.mrb[0].mxu0
        %v1058 = vadd.f32 %v897, %v1057
        %v1059 = vpop.f32.mrb[0].mxu0
        %1060 = vmatprep.mubr.bf16.mxu0 %v771
        %1061 = vmatmul.mubr.bf16.gmra.mrb[0].mxu0 %v521
        %v1062 = vpop.f32.mrb[0].mxu0
        %v1063 = vadd.f32 %v902, %v1062
        %v1064 = vpop.f32.mrb[0].mxu0
        %v1065 = vpop.f32.mrb[0].mxu0
        %v1066 = vadd.f32 %v905, %v1065
        %v1067 = vpop.f32.mrb[0].mxu0
        %1068 = vmatprep.mubr.bf16.mxu0 %v774
        %1069 = vmatmul.mubr.bf16.gmra.mrb[0].mxu0 %v525
        %v1070 = vpop.f32.mrb[0].mxu0
        %v1071 = vadd.f32 %v910, %v1070
        %v1072 = vpop.f32.mrb[0].mxu0
        %v1073 = vpop.f32.mrb[0].mxu0
        %v1074 = vadd.f32 %v913, %v1073
        %v1075 = vpop.f32.mrb[0].mxu0
        %1076 = vmatprep.mubr.bf16.mxu0 %v777
        %1077 = vmatmul.mubr.bf16.gmra.mrb[0].mxu0 %v529
        %v1078 = vpop.f32.mrb[0].mxu0
        %v1079 = vadd.f32 %v918, %v1078
        %v1080 = vpop.f32.mrb[0].mxu0
        %v1081 = vpop.f32.mrb[0].mxu0
        %v1082 = vadd.f32 %v921, %v1081
        %v1083 = vpop.f32.mrb[0].mxu0
        %1084 = vmatprep.mubr.bf16.mxu0 %v780
        %1085 = vmatmul.mubr.bf16.gmra.mrb[0].mxu0 %v533
        %v1086 = vpop.f32.mrb[0].mxu0
        %v1087 = vadd.f32 %v926, %v1086
        %v1088 = vpop.f32.mrb[0].mxu0
        %v1089 = vpop.f32.mrb[0].mxu0
        %v1090 = vadd.f32 %v929, %v1089
        %v1091 = vpop.f32.mrb[0].mxu0
        %1092 = vmatprep.mubr.bf16.mxu0 %v783
        %1093 = vmatmul.mubr.bf16.gmra.mrb[0].mxu0 %v537
        %v1094 = vpop.f32.mrb[0].mxu0
        %v1095 = vadd.f32 %v934, %v1094
        %v1096 = vpop.f32.mrb[0].mxu0
        %v1097 = vpop.f32.mrb[0].mxu0
        %v1098 = vadd.f32 %v937, %v1097
        %v1099 = vpop.f32.mrb[0].mxu0
        %1100 = vmatprep.mubr.bf16.mxu0 %v786
        %1101 = vmatmul.mubr.bf16.gmra.mrb[0].mxu0 %v541
        %v1102 = vpop.f32.mrb[0].mxu0
        %v1103 = vadd.f32 %v942, %v1102
        %v1104 = vpop.f32.mrb[0].mxu0
        %v1105 = vpop.f32.mrb[0].mxu0
        %v1106 = vadd.f32 %v945, %v1105
        %v1107 = vpop.f32.mrb[0].mxu0
        %1108 = vmatprep.mubr.bf16.mxu0 %v789
        %1109 = vmatmul.mubr.bf16.gmra.mrb[0].mxu0 %v545
        %v1110 = vpop.f32.mrb[0].mxu0
        %v1111 = vadd.f32 %v950, %v1110
        %v1112 = vpop.f32.mrb[0].mxu0
        %v1113 = vpop.f32.mrb[0].mxu0
        %v1114 = vadd.f32 %v953, %v1113
        %v1115 = vpop.f32.mrb[0].mxu0
        %1116 = vdwg.mxu0
        %v1117 = vtanh.pop %v991
        %v1118 = vtanh.pop %v994
        %v1119 = vtanh.pop %v999
        %v1120 = vtanh.pop %v1002
        %v1121 = vtanh.pop %v1007
        %v1122 = vtanh.pop %v1010
        %v1123 = vtanh.pop %v1015
        %v1124 = vtanh.pop %v1018
        %v1125 = vtanh.pop %v1023
        %v1126 = vtanh.pop %v1026
        %v1127 = vtanh.pop %v1031
        %v1128 = vtanh.pop %v1034
        %v1129 = vtanh.pop %v1039
        %v1130 = vtanh.pop %v1042
        %v1131 = vtanh.pop %v1047
        %v1132 = vtanh.pop %v1050
        %v1133 = vtanh.pop %v1055
        %v1134 = vtanh.pop %v1058
        %v1135 = vtanh.pop %v1063
        %v1136 = vtanh.pop %v1066
        %v1137 = vtanh.pop %v1071
        %v1138 = vtanh.pop %v1074
        %v1139 = vtanh.pop %v1079
        %v1140 = vtanh.pop %v1082
        %v1141 = vtanh.pop %v1087
        %v1142 = vtanh.pop %v1090
        %v1143 = vtanh.pop %v1095
        %v1144 = vtanh.pop %v1098
        %v1145 = vtanh.pop %v1103
        %v1146 = vtanh.pop %v1106
        %v1147 = vtanh.pop %v1111
        %v1148 = vtanh.pop %v1114
        %vm1149 = vcmask 23552
        %1150 = vst.msk [vmem:[%s176] sm:$0xff] %vm1149, %v1117
        %1151 = vst.msk [vmem:[%s176 + $0x8] sm:$0xff] %vm1149, %v1118
        %1152 = vst.msk [vmem:[%s176 + $0x10] sm:$0xff] %vm1149, %v1119
        %1153 = vst.msk [vmem:[%s176 + $0x18] sm:$0xff] %vm1149, %v1120
        %1154 = vst.msk [vmem:[%s176 + $0x20] sm:$0xff] %vm1149, %v1121
        %1155 = vst.msk [vmem:[%s176 + $0x28] sm:$0xff] %vm1149, %v1122
        %1156 = vst.msk [vmem:[%s176 + $0x30] sm:$0xff] %vm1149, %v1123
        %1157 = vst.msk [vmem:[%s176 + $0x38] sm:$0xff] %vm1149, %v1124
        %1158 = vst.msk [vmem:[%s176 + $0x40] sm:$0xff] %vm1149, %v1125
        %1159 = vst.msk [vmem:[%s176 + $0x48] sm:$0xff] %vm1149, %v1126
        %1160 = vst.msk [vmem:[%s176 + $0x50] sm:$0xff] %vm1149, %v1127
        %1161 = vst.msk [vmem:[%s176 + $0x58] sm:$0xff] %vm1149, %v1128
        %1162 = vst.msk [vmem:[%s176 + $0x60] sm:$0xff] %vm1149, %v1129
        %1163 = vst.msk [vmem:[%s176 + $0x68] sm:$0xff] %vm1149, %v1130
        %1164 = vst.msk [vmem:[%s176 + $0x70] sm:$0xff] %vm1149, %v1131
        %1165 = vst.msk [vmem:[%s176 + $0x78] sm:$0xff] %vm1149, %v1132
        %1166 = vst.msk [vmem:[%s176 + $0x80] sm:$0xff] %vm1149, %v1133
        %1167 = vst.msk [vmem:[%s176 + $0x88] sm:$0xff] %vm1149, %v1134
        %1168 = vst.msk [vmem:[%s176 + $0x90] sm:$0xff] %vm1149, %v1135
        %1169 = vst.msk [vmem:[%s176 + $0x98] sm:$0xff] %vm1149, %v1136
        %1170 = vst.msk [vmem:[%s176 + $0xa0] sm:$0xff] %vm1149, %v1137
        %1171 = vst.msk [vmem:[%s176 + $0xa8] sm:$0xff] %vm1149, %v1138
        %1172 = vst.msk [vmem:[%s176 + $0xb0] sm:$0xff] %vm1149, %v1139
        %1173 = vst.msk [vmem:[%s176 + $0xb8] sm:$0xff] %vm1149, %v1140
        %1174 = vst.msk [vmem:[%s176 + $0xc0] sm:$0xff] %vm1149, %v1141
        %1175 = vst.msk [vmem:[%s176 + $0xc8] sm:$0xff] %vm1149, %v1142
        %1176 = vst.msk [vmem:[%s176 + $0xd0] sm:$0xff] %vm1149, %v1143
        %1177 = vst.msk [vmem:[%s176 + $0xd8] sm:$0xff] %vm1149, %v1144
        %1178 = vst.msk [vmem:[%s176 + $0xe0] sm:$0xff] %vm1149, %v1145
        %1179 = vst.msk [vmem:[%s176 + $0xe8] sm:$0xff] %vm1149, %v1146
        %1180 = vst.msk [vmem:[%s176 + $0xf0] sm:$0xff] %vm1149, %v1147
        %1181 = vst.msk [vmem:[%s176 + $0xf8] sm:$0xff] %vm1149, %v1148
        %s1182 = sand.u32 %s75, 1
        %s1183 = scalar_lea.sflag [#allocation4], %s1182
        %s1184 = sand.u32 %s75, 1
        %s1185 = smul.addr %s1184, 256
        %s1186 = scalar_lea.vmem [#allocation7], %s1185
        // Predicated region
        $region37: #{_lambda_.23} parent=27 // pred_check
          %p1187 = pneg %p85
        $region38: #{_lambda_.23} parent=27 // pred_check_branch
          %1189 = sbr.rel (%p1187) target = $region40
        $region39: #{_lambda_.23} parent=27 // pred_region
          %s1191 = ssub.s32 4096, 4096
          %1192 = vsyncadd %s1183, %s1191
          %s1193 = smul.addr %s20, 32
          %s1194 = smul.addr %s1193, 128
          %s1195 = scalar_lea.hbm %s2, %s1194
          %s1196 = sshll.u32 %s1186, 4
          %s1197 = int_to_ptr.vmem [resolvable:$true] %s1196
          %1202 = dma.vmem_to_hbm [thread:$0]  %s1197, 4096, %s1195, %s1183, 128, 128, 8
        $region40: #{_lambda_.23} parent=27 // pred_fallthru
          _
      $region28: #{_lambda_.23} parent=5 // pred_fallthru
        _
      %p1203 = scmp.le.s32.totalorder 2, %s15
      // Predicated region
      $region41: #{_lambda_.23} parent=5 // pred_check
        %p1204 = pneg %p1203
      $region42: #{_lambda_.23} parent=5 // pred_check_branch
        %1206 = sbr.rel (%p1204) target = $region44
      $region43: #{_lambda_.23} parent=5 // pred_region
        %s1207 = ssub.s32 %s15, 2
        // Predicated region
        $region45: #{_lambda_.23} parent=43 // pred_check
          %p1208 = pneg %p91
        $region46: #{_lambda_.23} parent=43 // pred_check_branch
          %1210 = sbr.rel (%p1208) target = $region48
        $region47: #{_lambda_.23} parent=43 // pred_region
          %s1211 = sand.u32 %s76, 1
          %s1212 = scalar_lea.sflag [#allocation4], %s1211
          %s1213 = sand.u32 %s76, 1
          %s1214 = smul.addr %s1213, 256
          %s1215 = scalar_lea.vmem [#allocation7], %s1214
          %1216 = dma.done %s1212, 4096
        $region48: #{_lambda_.23} parent=43 // pred_fallthru
          _
      $region44: #{_lambda_.23} parent=5 // pred_fallthru
        _
    $region6: #{_lambda_.23} parent=1 // loop_footer
      %s19 = sadd.s32 1, %s15
    $region7: #{_lambda_.23} parent=1 // loop_footer_branch
      %14 = sbr.rel target = $region3
    $region8: #{_lambda_.23} parent=1 // loop_exit
      _
    %1217 = vsyncpa [#allocation3], 1
    %s1218 = scalar_lea.sflag [#allocation3], 1
    %1219 = vsyncpa %s1218, 1
    %1220 = vsyncpa [#allocation6], 1
    %1221 = vsyncpa [#allocation4], 1
    %s1222 = scalar_lea.sflag [#allocation4], 1
    %1223 = vsyncpa %s1222, 1

</llo_original>
